<compile_context>
chip_gen: v7x
topology: tpu7x:2x2x1
jax: 0.10.0
libtpu: 0.0.40
codegen_flags: <defaults>
</compile_context>

<pallas_src>
import functools
import math

import jax
import jax.numpy as jnp
from jax.experimental import pallas as pl
from jax.experimental.pallas import tpu as pltpu

R = 2  # The PyTorch module hardcodes torch.nn.PixelShuffle(2).


def _fused_kernel(x_ref, w_ref, b_ref, e_ref, o_ref, *, tile_h, width):
    """One grid step: tile_h input rows -> 2*tile_h fully pixel-shuffled output rows.

    x_ref: (Cin, tile_h*W)      NCHW rows, lane-flattened (lane-dense loads)
    w_ref: (4, Cout, Cin)       BN-folded weights, one (Cout, Cin) slab per shuffle phase p=i*2+j
    b_ref: (4, Cout, 1)         BN-folded biases per phase
    e_ref: (2, W, 2W)           constant 0/1 even/odd lane-interleave matrices
    o_ref: (Cout, tile_h*4W)    == (Cout, 2*tile_h, 2W) of the final output, lane-flattened
    """
    W = width
    for h in range(tile_h):                          # static unroll; tile_h kept small (<=~32)
        xc = x_ref[:, h * W:(h + 1) * W]             # (Cin, W), static lane slice
        # Four phase matmuls (MXU) + bias + ReLU.  Phase p = i*2 + j -> output pixel (2h+i, 2w+j).
        y = []
        for p in range(4):
            yp = jnp.dot(w_ref[p], xc, preferred_element_type=jnp.float32) + b_ref[p]
            y.append(jnp.maximum(yp, 0.0))           # (Cout, W)
        # (w, j) lane interleave via constant 0/1 matmuls: z[c, 2w+j] = y_j[c, w].
        top = (jnp.dot(y[0], e_ref[0], preferred_element_type=jnp.float32)
               + jnp.dot(y[1], e_ref[1], preferred_element_type=jnp.float32))   # out row 2h
        bot = (jnp.dot(y[2], e_ref[0], preferred_element_type=jnp.float32)
               + jnp.dot(y[3], e_ref[1], preferred_element_type=jnp.float32))   # out row 2h+1
        base = h * 4 * W
        o_ref[:, base:base + 2 * W] = top
        o_ref[:, base + 2 * W:base + 4 * W] = bot


def _plan_tiles(B, Cin, Cout, H, W):
    """Pick rows-per-block (tile_h) and a VMEM limit; generation aware."""
    # tile_h*W must be a multiple of 128 so the (Cin, tile_h*W) input block and the
    # (Cout, 4*tile_h*W) output block are lane-dense and BlockSpec-legal (unless full-extent).
    align_h = 128 // math.gcd(W, 128)

    try:
        phys_vmem = pltpu.get_tpu_info().vmem_capacity_bytes
    except Exception:
        phys_vmem = 64 * 1024 * 1024              # conservative default: v7x physical VMEM
    budget = int(phys_vmem * 3 // 4)              # ~48 MiB on v7x, ~96 MiB on v5e/v6e

    # Double-buffered f32 blocks + resident constants.
    const_bytes = 8 * (4 * Cout * Cin + 4 * Cout + 2 * W * 2 * W)

    def step_bytes(th):
        lb = th * W
        return 8 * (Cin * lb + 4 * Cout * lb) + const_bytes

    if align_h > H:
        # Awkward (e.g. odd) W with few rows: single full-extent block is the only legal choice.
        # TODO(synk): unfused fallback / Cout tiling for huge odd-width feature maps.
        tile_h = H
    else:
        # ~16 rows / ~2048 input lanes already reaches ~85% of HBM roofline; bigger tiles only
        # shrink the grid (hurting v7x core balance) and eat VMEM.
        row_cap = max(align_h, 16)
        lane_cap_rows = max(align_h, 2048 // max(W, 1))
        tile_h = min(H, row_cap, lane_cap_rows)
        tile_h = max(align_h, (tile_h // align_h) * align_h)
        while tile_h > align_h and step_bytes(tile_h) > budget:
            tile_h -= align_h
        # v7x megacore: keep >= 4 grid steps (>= 2 per TensorCore) whenever the shape allows.
        while tile_h > align_h and B * pl.cdiv(H, tile_h) < 4:
            tile_h -= align_h

    vmem_limit = min(budget, max(step_bytes(tile_h) + (4 << 20), 16 << 20))
    return tile_h, int(vmem_limit)


def _fused_conv_bn_relu_pixelshuffle(x3, w_phases, b_phases, e_mats, *, W, tile_h, vmem_limit):
    """x3: (B, Cin, H*W) f32 -> (B, Cout, 4*H*W) f32, already in final shuffled order."""
    B, Cin, HW = x3.shape
    Cout = w_phases.shape[1]
    Lb = tile_h * W                         # input lanes per block (multiple of 128, or == HW)
    n_hblk = pl.cdiv(HW, Lb)                # ragged tail allowed; Pallas masks it

    kernel = functools.partial(_fused_kernel, tile_h=tile_h, width=W)

    return pl.pallas_call(
        kernel,
        out_shape=jax.ShapeDtypeStruct((B, Cout, 4 * HW), jnp.float32),
        grid_spec=pltpu.PrefetchScalarGridSpec(
            num_scalar_prefetch=0,
            grid=(B, n_hblk),
            in_specs=[
                pl.BlockSpec((None, Cin, Lb), lambda b, j: (b, 0, j)),
                # Constant index_map -> DMA'd once, resident in VMEM across the whole grid.
                pl.BlockSpec((4, Cout, Cin), lambda b, j: (0, 0, 0)),
                pl.BlockSpec((4, Cout, 1), lambda b, j: (0, 0, 0)),
                pl.BlockSpec((2, W, 2 * W), lambda b, j: (0, 0, 0)),
            ],
            out_specs=pl.BlockSpec((None, Cout, 4 * Lb), lambda b, j: (b, 0, j)),
        ),
        compiler_params=pltpu.CompilerParams(
            dimension_semantics=("parallel", "parallel"),
            vmem_limit_bytes=vmem_limit,
        ),
    )(x3, w_phases, b_phases, e_mats)


def _fold_bn_split_phases(params):
    """Fold inference BN into the 1x1-conv weight and split per PixelShuffle phase."""
    w = params["conv_w"].astype(jnp.float32)                     # (Cout4, Cin)
    g = params["bn_gamma"] / jnp.sqrt(params["bn_var"] + params["bn_eps"])
    w_eff = w * g[:, None]
    bias = params["bn_beta"] - params["bn_mean"] * g
    rr = R * R
    assert w.shape[0] % rr == 0
    w_phases = jnp.stack([w_eff[p::rr] for p in range(rr)]).astype(jnp.float32)      # (4, Cout, Cin)
    b_phases = jnp.stack([bias[p::rr] for p in range(rr)])[:, :, None].astype(jnp.float32)
    return w_phases, b_phases


def _interleave_mats(W):
    """E[j]: (W, 2W) with E[j][w, 2w+j] = 1 (even / odd lane placement)."""
    rows = jnp.arange(W)
    e = jnp.zeros((2, W, 2 * W), jnp.float32)
    e = e.at[0, rows, 2 * rows].set(1.0)
    e = e.at[1, rows, 2 * rows + 1].set(1.0)
    return e


def pixel_shuffle_v2_forward(x_nchw, params, scale=2, *, force_pallas=False):
    """PyTorch-equivalent forward: Conv1x1 -> BN -> ReLU -> PixelShuffle(2), NCHW in/out."""
    assert scale == R, "the PyTorch module hardcodes PixelShuffle(2)"
    B, Cin, H, W = x_nchw.shape
    w_phases, b_phases = _fold_bn_split_phases(params)
    Cout = w_phases.shape[1]

    # Small-problem bypass: below ~1 MiB of traffic the per-step grid overhead dominates and a
    # plain fused XLA path wins on every generation.
    traffic = 4 * (B * Cin * H * W + 4 * B * Cout * H * W)
    if not force_pallas and traffic < (1 << 20):
        return _reference(x_nchw, params)

    tile_h, vmem_limit = _plan_tiles(B, Cin, Cout, H, W)
    e_mats = _interleave_mats(W)

    x3 = x_nchw.reshape(B, Cin, H * W).astype(jnp.float32)       # free contiguous NCHW view
    y = _fused_conv_bn_relu_pixelshuffle(
        x3, w_phases, b_phases, e_mats, W=W, tile_h=tile_h, vmem_limit=vmem_limit)
    # (B, Cout, 4*H*W) row-major IS (B, Cout, 2H, 2W): free reshape, no transpose pass.
    return y.reshape(B, Cout, R * H, R * W)


def make_params(key, in_channels, out_channels, scale=2, eps=1e-3):
    Cout4 = out_channels * scale * scale
    k_w, k_g, k_b, k_m, k_v = jax.random.split(key, 5)
    # Conv2d(in, Cout4, 1, bias=False) weight is (Cout4, in, 1, 1); stored squeezed: (Cout4, in).
    conv_w = jax.random.normal(k_w, (Cout4, in_channels), jnp.float32) * 0.1
    return {
        "conv_w": conv_w,
        "bn_gamma": 1.0 + 0.1 * jax.random.normal(k_g, (Cout4,), jnp.float32),
        "bn_beta": 0.1 * jax.random.normal(k_b, (Cout4,), jnp.float32),
        "bn_mean": 0.05 * jax.random.normal(k_m, (Cout4,), jnp.float32),
        "bn_var": jnp.abs(jax.random.normal(k_v, (Cout4,), jnp.float32)) + 0.5,
        "bn_eps": eps,
    }


def _reference(x_nchw, params):
    """Pure-JAX UNFOLDED reference: conv1x1 -> BatchNorm(inference) -> ReLU -> PixelShuffle(2)."""
    w = params["conv_w"].astype(jnp.float32)
    y = jnp.einsum("bchw,dc->bdhw", x_nchw, w, precision="highest")
    inv = 1.0 / jnp.sqrt(params["bn_var"] + params["bn_eps"])
    scale = (params["bn_gamma"] * inv)[None, :, None, None]
    y = (y - params["bn_mean"][None, :, None, None]) * scale + params["bn_beta"][None, :, None, None]
    y = jnp.maximum(y, 0.0)
    B, Cout4, H, W = y.shape
    Cout = Cout4 // (R * R)
    y = y.reshape(B, Cout, R, R, H, W)
    y = jnp.transpose(y, (0, 1, 4, 2, 5, 3))          # (B, Cout, H, r, W, r)
    return y.reshape(B, Cout, H * R, W * R)


if __name__ == "__main__":
    key = jax.random.PRNGKey(0)
    k_x, k_p = jax.random.split(key)

    B, Cin, H, W = 2, 4, 16, 16
    out_channels, scale = 4, 2

    x = jax.random.normal(k_x, (B, Cin, H, W), jnp.float32)
    params = make_params(k_p, Cin, out_channels, scale=scale)

    out = pixel_shuffle_v2_forward(x, params, scale=scale, force_pallas=True)
    out = jax.block_until_ready(out)

    ref = _reference(x, params)
    assert out.shape == (B, out_channels, H * 2, W * 2), out.shape
    max_err = float(jnp.max(jnp.abs(out - ref)))
    assert jnp.allclose(out, ref, atol=1e-3, rtol=1e-3), max_err

    print("KERNEL_OK")
</pallas_src>

<mosaic_0001>
module attributes {stable_mosaic.version = 11 : i64} {
  func.func @_fused_kernel(%arg0: i32, %arg1: i32, %arg2: memref<1x4x128xf32, #tpu.memory_space<vmem>>, %arg3: memref<4x4x4xf32, #tpu.memory_space<vmem>>, %arg4: memref<4x4x1xf32, #tpu.memory_space<vmem>>, %arg5: memref<2x16x32xf32, #tpu.memory_space<vmem>>, %arg6: memref<1x4x512xf32, #tpu.memory_space<vmem>>) attributes {dimension_semantics = [#tpu.dimension_semantics<parallel>, #tpu.dimension_semantics<parallel>], iteration_bounds = array<i64: 2, 2>, scalar_prefetch = 0 : i64, scratch_operands = 0 : i64, tpu.core_type = #tpu.core_type<tc>, window_params = [{transform_indices = @transform_0, window_bounds = array<i64: 1, 4, 128>}, {pipeline_mode = #tpu.pipeline_mode<synchronous>, transform_indices = @transform_1, window_bounds = array<i64: 4, 4, 4>}, {pipeline_mode = #tpu.pipeline_mode<synchronous>, transform_indices = @transform_2, window_bounds = array<i64: 4, 4, 1>}, {pipeline_mode = #tpu.pipeline_mode<synchronous>, transform_indices = @transform_3, window_bounds = array<i64: 2, 16, 32>}, {transform_indices = @transform_4, window_bounds = array<i64: 1, 4, 512>}]} {
    %c0 = arith.constant 0 : index
    %c0_0 = arith.constant 0 : index
    %c0_1 = arith.constant 0 : index
    %0 = vector.load %arg2[%c0, %c0_0, %c0_1] : memref<1x4x128xf32, #tpu.memory_space<vmem>>, vector<1x4x16xf32>
    %1 = vector.shape_cast %0 : vector<1x4x16xf32> to vector<4x16xf32>
    %c0_2 = arith.constant 0 : index
    %c0_3 = arith.constant 0 : index
    %c0_4 = arith.constant 0 : index
    %2 = vector.load %arg3[%c0_2, %c0_3, %c0_4] : memref<4x4x4xf32, #tpu.memory_space<vmem>>, vector<1x4x4xf32>
    %3 = vector.shape_cast %2 : vector<1x4x4xf32> to vector<4x4xf32>
    %cst = arith.constant dense<0.000000e+00> : vector<4x16xf32>
    %4 = tpu.matmul %3, %1, %cst {dimension_numbers = #tpu.dot_dimension_numbers<[1], [0], [0], [1], [0, 0, 1, 1], [], []>} : vector<4x4xf32>, vector<4x16xf32>, vector<4x16xf32> -> vector<4x16xf32>
    %c0_5 = arith.constant 0 : index
    %c0_6 = arith.constant 0 : index
    %c0_7 = arith.constant 0 : index
    %5 = vector.load %arg4[%c0_5, %c0_6, %c0_7] : memref<4x4x1xf32, #tpu.memory_space<vmem>>, vector<1x4x1xf32>
    %6 = vector.shape_cast %5 : vector<1x4x1xf32> to vector<4x1xf32>
    %7 = vector.broadcast %6 : vector<4x1xf32> to vector<4x16xf32>
    %8 = arith.addf %4, %7 : vector<4x16xf32>
    %cst_8 = arith.constant 0.000000e+00 : f32
    %9 = vector.broadcast %cst_8 : f32 to vector<4x16xf32>
    %10 = arith.maximumf %8, %9 : vector<4x16xf32>
    %c1 = arith.constant 1 : index
    %c0_9 = arith.constant 0 : index
    %c0_10 = arith.constant 0 : index
    %11 = vector.load %arg3[%c1, %c0_9, %c0_10] : memref<4x4x4xf32, #tpu.memory_space<vmem>>, vector<1x4x4xf32>
    %12 = vector.shape_cast %11 : vector<1x4x4xf32> to vector<4x4xf32>
    %cst_11 = arith.constant dense<0.000000e+00> : vector<4x16xf32>
    %13 = tpu.matmul %12, %1, %cst_11 {dimension_numbers = #tpu.dot_dimension_numbers<[1], [0], [0], [1], [0, 0, 1, 1], [], []>} : vector<4x4xf32>, vector<4x16xf32>, vector<4x16xf32> -> vector<4x16xf32>
    %c1_12 = arith.constant 1 : index
    %c0_13 = arith.constant 0 : index
    %c0_14 = arith.constant 0 : index
    %14 = vector.load %arg4[%c1_12, %c0_13, %c0_14] : memref<4x4x1xf32, #tpu.memory_space<vmem>>, vector<1x4x1xf32>
    %15 = vector.shape_cast %14 : vector<1x4x1xf32> to vector<4x1xf32>
    %16 = vector.broadcast %15 : vector<4x1xf32> to vector<4x16xf32>
    %17 = arith.addf %13, %16 : vector<4x16xf32>
    %cst_15 = arith.constant 0.000000e+00 : f32
    %18 = vector.broadcast %cst_15 : f32 to vector<4x16xf32>
    %19 = arith.maximumf %17, %18 : vector<4x16xf32>
    %c2 = arith.constant 2 : index
    %c0_16 = arith.constant 0 : index
    %c0_17 = arith.constant 0 : index
    %20 = vector.load %arg3[%c2, %c0_16, %c0_17] : memref<4x4x4xf32, #tpu.memory_space<vmem>>, vector<1x4x4xf32>
    %21 = vector.shape_cast %20 : vector<1x4x4xf32> to vector<4x4xf32>
    %cst_18 = arith.constant dense<0.000000e+00> : vector<4x16xf32>
    %22 = tpu.matmul %21, %1, %cst_18 {dimension_numbers = #tpu.dot_dimension_numbers<[1], [0], [0], [1], [0, 0, 1, 1], [], []>} : vector<4x4xf32>, vector<4x16xf32>, vector<4x16xf32> -> vector<4x16xf32>
    %c2_19 = arith.constant 2 : index
    %c0_20 = arith.constant 0 : index
    %c0_21 = arith.constant 0 : index
    %23 = vector.load %arg4[%c2_19, %c0_20, %c0_21] : memref<4x4x1xf32, #tpu.memory_space<vmem>>, vector<1x4x1xf32>
    %24 = vector.shape_cast %23 : vector<1x4x1xf32> to vector<4x1xf32>
    %25 = vector.broadcast %24 : vector<4x1xf32> to vector<4x16xf32>
    %26 = arith.addf %22, %25 : vector<4x16xf32>
    %cst_22 = arith.constant 0.000000e+00 : f32
    %27 = vector.broadcast %cst_22 : f32 to vector<4x16xf32>
    %28 = arith.maximumf %26, %27 : vector<4x16xf32>
    %c3 = arith.constant 3 : index
    %c0_23 = arith.constant 0 : index
    %c0_24 = arith.constant 0 : index
    %29 = vector.load %arg3[%c3, %c0_23, %c0_24] : memref<4x4x4xf32, #tpu.memory_space<vmem>>, vector<1x4x4xf32>
    %30 = vector.shape_cast %29 : vector<1x4x4xf32> to vector<4x4xf32>
    %cst_25 = arith.constant dense<0.000000e+00> : vector<4x16xf32>
    %31 = tpu.matmul %30, %1, %cst_25 {dimension_numbers = #tpu.dot_dimension_numbers<[1], [0], [0], [1], [0, 0, 1, 1], [], []>} : vector<4x4xf32>, vector<4x16xf32>, vector<4x16xf32> -> vector<4x16xf32>
    %c3_26 = arith.constant 3 : index
    %c0_27 = arith.constant 0 : index
    %c0_28 = arith.constant 0 : index
    %32 = vector.load %arg4[%c3_26, %c0_27, %c0_28] : memref<4x4x1xf32, #tpu.memory_space<vmem>>, vector<1x4x1xf32>
    %33 = vector.shape_cast %32 : vector<1x4x1xf32> to vector<4x1xf32>
    %34 = vector.broadcast %33 : vector<4x1xf32> to vector<4x16xf32>
    %35 = arith.addf %31, %34 : vector<4x16xf32>
    %cst_29 = arith.constant 0.000000e+00 : f32
    %36 = vector.broadcast %cst_29 : f32 to vector<4x16xf32>
    %37 = arith.maximumf %35, %36 : vector<4x16xf32>
    %c0_30 = arith.constant 0 : index
    %c0_31 = arith.constant 0 : index
    %c0_32 = arith.constant 0 : index
    %38 = vector.load %arg5[%c0_30, %c0_31, %c0_32] : memref<2x16x32xf32, #tpu.memory_space<vmem>>, vector<1x16x32xf32>
    %39 = vector.shape_cast %38 : vector<1x16x32xf32> to vector<16x32xf32>
    %cst_33 = arith.constant dense<0.000000e+00> : vector<4x32xf32>
    %40 = tpu.matmul %10, %39, %cst_33 {dimension_numbers = #tpu.dot_dimension_numbers<[1], [0], [0], [1], [0, 0, 1, 1], [], []>} : vector<4x16xf32>, vector<16x32xf32>, vector<4x32xf32> -> vector<4x32xf32>
    %c1_34 = arith.constant 1 : index
    %c0_35 = arith.constant 0 : index
    %c0_36 = arith.constant 0 : index
    %41 = vector.load %arg5[%c1_34, %c0_35, %c0_36] : memref<2x16x32xf32, #tpu.memory_space<vmem>>, vector<1x16x32xf32>
    %42 = vector.shape_cast %41 : vector<1x16x32xf32> to vector<16x32xf32>
    %cst_37 = arith.constant dense<0.000000e+00> : vector<4x32xf32>
    %43 = tpu.matmul %19, %42, %cst_37 {dimension_numbers = #tpu.dot_dimension_numbers<[1], [0], [0], [1], [0, 0, 1, 1], [], []>} : vector<4x16xf32>, vector<16x32xf32>, vector<4x32xf32> -> vector<4x32xf32>
    %44 = arith.addf %40, %43 : vector<4x32xf32>
    %c0_38 = arith.constant 0 : index
    %c0_39 = arith.constant 0 : index
    %c0_40 = arith.constant 0 : index
    %45 = vector.load %arg5[%c0_38, %c0_39, %c0_40] : memref<2x16x32xf32, #tpu.memory_space<vmem>>, vector<1x16x32xf32>
    %46 = vector.shape_cast %45 : vector<1x16x32xf32> to vector<16x32xf32>
    %cst_41 = arith.constant dense<0.000000e+00> : vector<4x32xf32>
    %47 = tpu.matmul %28, %46, %cst_41 {dimension_numbers = #tpu.dot_dimension_numbers<[1], [0], [0], [1], [0, 0, 1, 1], [], []>} : vector<4x16xf32>, vector<16x32xf32>, vector<4x32xf32> -> vector<4x32xf32>
    %c1_42 = arith.constant 1 : index
    %c0_43 = arith.constant 0 : index
    %c0_44 = arith.constant 0 : index
    %48 = vector.load %arg5[%c1_42, %c0_43, %c0_44] : memref<2x16x32xf32, #tpu.memory_space<vmem>>, vector<1x16x32xf32>
    %49 = vector.shape_cast %48 : vector<1x16x32xf32> to vector<16x32xf32>
    %cst_45 = arith.constant dense<0.000000e+00> : vector<4x32xf32>
    %50 = tpu.matmul %37, %49, %cst_45 {dimension_numbers = #tpu.dot_dimension_numbers<[1], [0], [0], [1], [0, 0, 1, 1], [], []>} : vector<4x16xf32>, vector<16x32xf32>, vector<4x32xf32> -> vector<4x32xf32>
    %51 = arith.addf %47, %50 : vector<4x32xf32>
    %c0_46 = arith.constant 0 : index
    %c0_47 = arith.constant 0 : index
    %c0_48 = arith.constant 0 : index
    %52 = vector.load %arg6[%c0_46, %c0_47, %c0_48] : memref<1x4x512xf32, #tpu.memory_space<vmem>>, vector<1x4x32xf32>
    %53 = vector.shape_cast %52 : vector<1x4x32xf32> to vector<4x32xf32>
    %54 = vector.shape_cast %44 : vector<4x32xf32> to vector<1x4x32xf32>
    tpu.vector_store %arg6[%c0_46, %c0_47, %c0_48], %54 {strides = array<i32>} : memref<1x4x512xf32, #tpu.memory_space<vmem>>, vector<1x4x32xf32>,
    %c0_49 = arith.constant 0 : index
    %c0_50 = arith.constant 0 : index
    %c32 = arith.constant 32 : index
    %55 = vector.load %arg6[%c0_49, %c0_50, %c32] : memref<1x4x512xf32, #tpu.memory_space<vmem>>, vector<1x4x32xf32>
    %56 = vector.shape_cast %55 : vector<1x4x32xf32> to vector<4x32xf32>
    %57 = vector.shape_cast %51 : vector<4x32xf32> to vector<1x4x32xf32>
    tpu.vector_store %arg6[%c0_49, %c0_50, %c32], %57 {strides = array<i32>} : memref<1x4x512xf32, #tpu.memory_space<vmem>>, vector<1x4x32xf32>,
    %c0_51 = arith.constant 0 : index
    %c0_52 = arith.constant 0 : index
    %c16 = arith.constant 16 : index
    %58 = vector.load %arg2[%c0_51, %c0_52, %c16] : memref<1x4x128xf32, #tpu.memory_space<vmem>>, vector<1x4x16xf32>
    %59 = vector.shape_cast %58 : vector<1x4x16xf32> to vector<4x16xf32>
    %c0_53 = arith.constant 0 : index
    %c0_54 = arith.constant 0 : index
    %c0_55 = arith.constant 0 : index
    %60 = vector.load %arg3[%c0_53, %c0_54, %c0_55] : memref<4x4x4xf32, #tpu.memory_space<vmem>>, vector<1x4x4xf32>
    %61 = vector.shape_cast %60 : vector<1x4x4xf32> to vector<4x4xf32>
    %cst_56 = arith.constant dense<0.000000e+00> : vector<4x16xf32>
    %62 = tpu.matmul %61, %59, %cst_56 {dimension_numbers = #tpu.dot_dimension_numbers<[1], [0], [0], [1], [0, 0, 1, 1], [], []>} : vector<4x4xf32>, vector<4x16xf32>, vector<4x16xf32> -> vector<4x16xf32>
    %c0_57 = arith.constant 0 : index
    %c0_58 = arith.constant 0 : index
    %c0_59 = arith.constant 0 : index
    %63 = vector.load %arg4[%c0_57, %c0_58, %c0_59] : memref<4x4x1xf32, #tpu.memory_space<vmem>>, vector<1x4x1xf32>
    %64 = vector.shape_cast %63 : vector<1x4x1xf32> to vector<4x1xf32>
    %65 = vector.broadcast %64 : vector<4x1xf32> to vector<4x16xf32>
    %66 = arith.addf %62, %65 : vector<4x16xf32>
    %cst_60 = arith.constant 0.000000e+00 : f32
    %67 = vector.broadcast %cst_60 : f32 to vector<4x16xf32>
    %68 = arith.maximumf %66, %67 : vector<4x16xf32>
    %c1_61 = arith.constant 1 : index
    %c0_62 = arith.constant 0 : index
    %c0_63 = arith.constant 0 : index
    %69 = vector.load %arg3[%c1_61, %c0_62, %c0_63] : memref<4x4x4xf32, #tpu.memory_space<vmem>>, vector<1x4x4xf32>
    %70 = vector.shape_cast %69 : vector<1x4x4xf32> to vector<4x4xf32>
    %cst_64 = arith.constant dense<0.000000e+00> : vector<4x16xf32>
    %71 = tpu.matmul %70, %59, %cst_64 {dimension_numbers = #tpu.dot_dimension_numbers<[1], [0], [0], [1], [0, 0, 1, 1], [], []>} : vector<4x4xf32>, vector<4x16xf32>, vector<4x16xf32> -> vector<4x16xf32>
    %c1_65 = arith.constant 1 : index
    %c0_66 = arith.constant 0 : index
    %c0_67 = arith.constant 0 : index
    %72 = vector.load %arg4[%c1_65, %c0_66, %c0_67] : memref<4x4x1xf32, #tpu.memory_space<vmem>>, vector<1x4x1xf32>
    %73 = vector.shape_cast %72 : vector<1x4x1xf32> to vector<4x1xf32>
    %74 = vector.broadcast %73 : vector<4x1xf32> to vector<4x16xf32>
    %75 = arith.addf %71, %74 : vector<4x16xf32>
    %cst_68 = arith.constant 0.000000e+00 : f32
    %76 = vector.broadcast %cst_68 : f32 to vector<4x16xf32>
    %77 = arith.maximumf %75, %76 : vector<4x16xf32>
    %c2_69 = arith.constant 2 : index
    %c0_70 = arith.constant 0 : index
    %c0_71 = arith.constant 0 : index
    %78 = vector.load %arg3[%c2_69, %c0_70, %c0_71] : memref<4x4x4xf32, #tpu.memory_space<vmem>>, vector<1x4x4xf32>
    %79 = vector.shape_cast %78 : vector<1x4x4xf32> to vector<4x4xf32>
    %cst_72 = arith.constant dense<0.000000e+00> : vector<4x16xf32>
    %80 = tpu.matmul %79, %59, %cst_72 {dimension_numbers = #tpu.dot_dimension_numbers<[1], [0], [0], [1], [0, 0, 1, 1], [], []>} : vector<4x4xf32>, vector<4x16xf32>, vector<4x16xf32> -> vector<4x16xf32>
    %c2_73 = arith.constant 2 : index
    %c0_74 = arith.constant 0 : index
    %c0_75 = arith.constant 0 : index
    %81 = vector.load %arg4[%c2_73, %c0_74, %c0_75] : memref<4x4x1xf32, #tpu.memory_space<vmem>>, vector<1x4x1xf32>
    %82 = vector.shape_cast %81 : vector<1x4x1xf32> to vector<4x1xf32>
    %83 = vector.broadcast %82 : vector<4x1xf32> to vector<4x16xf32>
    %84 = arith.addf %80, %83 : vector<4x16xf32>
    %cst_76 = arith.constant 0.000000e+00 : f32
    %85 = vector.broadcast %cst_76 : f32 to vector<4x16xf32>
    %86 = arith.maximumf %84, %85 : vector<4x16xf32>
    %c3_77 = arith.constant 3 : index
    %c0_78 = arith.constant 0 : index
    %c0_79 = arith.constant 0 : index
    %87 = vector.load %arg3[%c3_77, %c0_78, %c0_79] : memref<4x4x4xf32, #tpu.memory_space<vmem>>, vector<1x4x4xf32>
    %88 = vector.shape_cast %87 : vector<1x4x4xf32> to vector<4x4xf32>
    %cst_80 = arith.constant dense<0.000000e+00> : vector<4x16xf32>
    %89 = tpu.matmul %88, %59, %cst_80 {dimension_numbers = #tpu.dot_dimension_numbers<[1], [0], [0], [1], [0, 0, 1, 1], [], []>} : vector<4x4xf32>, vector<4x16xf32>, vector<4x16xf32> -> vector<4x16xf32>
    %c3_81 = arith.constant 3 : index
    %c0_82 = arith.constant 0 : index
    %c0_83 = arith.constant 0 : index
    %90 = vector.load %arg4[%c3_81, %c0_82, %c0_83] : memref<4x4x1xf32, #tpu.memory_space<vmem>>, vector<1x4x1xf32>
    %91 = vector.shape_cast %90 : vector<1x4x1xf32> to vector<4x1xf32>
    %92 = vector.broadcast %91 : vector<4x1xf32> to vector<4x16xf32>
    %93 = arith.addf %89, %92 : vector<4x16xf32>
    %cst_84 = arith.constant 0.000000e+00 : f32
    %94 = vector.broadcast %cst_84 : f32 to vector<4x16xf32>
    %95 = arith.maximumf %93, %94 : vector<4x16xf32>
    %c0_85 = arith.constant 0 : index
    %c0_86 = arith.constant 0 : index
    %c0_87 = arith.constant 0 : index
    %96 = vector.load %arg5[%c0_85, %c0_86, %c0_87] : memref<2x16x32xf32, #tpu.memory_space<vmem>>, vector<1x16x32xf32>
    %97 = vector.shape_cast %96 : vector<1x16x32xf32> to vector<16x32xf32>
    %cst_88 = arith.constant dense<0.000000e+00> : vector<4x32xf32>
    %98 = tpu.matmul %68, %97, %cst_88 {dimension_numbers = #tpu.dot_dimension_numbers<[1], [0], [0], [1], [0, 0, 1, 1], [], []>} : vector<4x16xf32>, vector<16x32xf32>, vector<4x32xf32> -> vector<4x32xf32>
    %c1_89 = arith.constant 1 : index
    %c0_90 = arith.constant 0 : index
    %c0_91 = arith.constant 0 : index
    %99 = vector.load %arg5[%c1_89, %c0_90, %c0_91] : memref<2x16x32xf32, #tpu.memory_space<vmem>>, vector<1x16x32xf32>
    %100 = vector.shape_cast %99 : vector<1x16x32xf32> to vector<16x32xf32>
    %cst_92 = arith.constant dense<0.000000e+00> : vector<4x32xf32>
    %101 = tpu.matmul %77, %100, %cst_92 {dimension_numbers = #tpu.dot_dimension_numbers<[1], [0], [0], [1], [0, 0, 1, 1], [], []>} : vector<4x16xf32>, vector<16x32xf32>, vector<4x32xf32> -> vector<4x32xf32>
    %102 = arith.addf %98, %101 : vector<4x32xf32>
    %c0_93 = arith.constant 0 : index
    %c0_94 = arith.constant 0 : index
    %c0_95 = arith.constant 0 : index
    %103 = vector.load %arg5[%c0_93, %c0_94, %c0_95] : memref<2x16x32xf32, #tpu.memory_space<vmem>>, vector<1x16x32xf32>
    %104 = vector.shape_cast %103 : vector<1x16x32xf32> to vector<16x32xf32>
    %cst_96 = arith.constant dense<0.000000e+00> : vector<4x32xf32>
    %105 = tpu.matmul %86, %104, %cst_96 {dimension_numbers = #tpu.dot_dimension_numbers<[1], [0], [0], [1], [0, 0, 1, 1], [], []>} : vector<4x16xf32>, vector<16x32xf32>, vector<4x32xf32> -> vector<4x32xf32>
    %c1_97 = arith.constant 1 : index
    %c0_98 = arith.constant 0 : index
    %c0_99 = arith.constant 0 : index
    %106 = vector.load %arg5[%c1_97, %c0_98, %c0_99] : memref<2x16x32xf32, #tpu.memory_space<vmem>>, vector<1x16x32xf32>
    %107 = vector.shape_cast %106 : vector<1x16x32xf32> to vector<16x32xf32>
    %cst_100 = arith.constant dense<0.000000e+00> : vector<4x32xf32>
    %108 = tpu.matmul %95, %107, %cst_100 {dimension_numbers = #tpu.dot_dimension_numbers<[1], [0], [0], [1], [0, 0, 1, 1], [], []>} : vector<4x16xf32>, vector<16x32xf32>, vector<4x32xf32> -> vector<4x32xf32>
    %109 = arith.addf %105, %108 : vector<4x32xf32>
    %c0_101 = arith.constant 0 : index
    %c0_102 = arith.constant 0 : index
    %c64 = arith.constant 64 : index
    %110 = vector.load %arg6[%c0_101, %c0_102, %c64] : memref<1x4x512xf32, #tpu.memory_space<vmem>>, vector<1x4x32xf32>
    %111 = vector.shape_cast %110 : vector<1x4x32xf32> to vector<4x32xf32>
    %112 = vector.shape_cast %102 : vector<4x32xf32> to vector<1x4x32xf32>
    tpu.vector_store %arg6[%c0_101, %c0_102, %c64], %112 {strides = array<i32>} : memref<1x4x512xf32, #tpu.memory_space<vmem>>, vector<1x4x32xf32>,
    %c0_103 = arith.constant 0 : index
    %c0_104 = arith.constant 0 : index
    %c96 = arith.constant 96 : index
    %113 = vector.load %arg6[%c0_103, %c0_104, %c96] : memref<1x4x512xf32, #tpu.memory_space<vmem>>, vector<1x4x32xf32>
    %114 = vector.shape_cast %113 : vector<1x4x32xf32> to vector<4x32xf32>
    %115 = vector.shape_cast %109 : vector<4x32xf32> to vector<1x4x32xf32>
    tpu.vector_store %arg6[%c0_103, %c0_104, %c96], %115 {strides = array<i32>} : memref<1x4x512xf32, #tpu.memory_space<vmem>>, vector<1x4x32xf32>,
    %c0_105 = arith.constant 0 : index
    %c0_106 = arith.constant 0 : index
    %c32_107 = arith.constant 32 : index
    %116 = vector.load %arg2[%c0_105, %c0_106, %c32_107] : memref<1x4x128xf32, #tpu.memory_space<vmem>>, vector<1x4x16xf32>
    %117 = vector.shape_cast %116 : vector<1x4x16xf32> to vector<4x16xf32>
    %c0_108 = arith.constant 0 : index
    %c0_109 = arith.constant 0 : index
    %c0_110 = arith.constant 0 : index
    %118 = vector.load %arg3[%c0_108, %c0_109, %c0_110] : memref<4x4x4xf32, #tpu.memory_space<vmem>>, vector<1x4x4xf32>
    %119 = vector.shape_cast %118 : vector<1x4x4xf32> to vector<4x4xf32>
    %cst_111 = arith.constant dense<0.000000e+00> : vector<4x16xf32>
    %120 = tpu.matmul %119, %117, %cst_111 {dimension_numbers = #tpu.dot_dimension_numbers<[1], [0], [0], [1], [0, 0, 1, 1], [], []>} : vector<4x4xf32>, vector<4x16xf32>, vector<4x16xf32> -> vector<4x16xf32>
    %c0_112 = arith.constant 0 : index
    %c0_113 = arith.constant 0 : index
    %c0_114 = arith.constant 0 : index
    %121 = vector.load %arg4[%c0_112, %c0_113, %c0_114] : memref<4x4x1xf32, #tpu.memory_space<vmem>>, vector<1x4x1xf32>
    %122 = vector.shape_cast %121 : vector<1x4x1xf32> to vector<4x1xf32>
    %123 = vector.broadcast %122 : vector<4x1xf32> to vector<4x16xf32>
    %124 = arith.addf %120, %123 : vector<4x16xf32>
    %cst_115 = arith.constant 0.000000e+00 : f32
    %125 = vector.broadcast %cst_115 : f32 to vector<4x16xf32>
    %126 = arith.maximumf %124, %125 : vector<4x16xf32>
    %c1_116 = arith.constant 1 : index
    %c0_117 = arith.constant 0 : index
    %c0_118 = arith.constant 0 : index
    %127 = vector.load %arg3[%c1_116, %c0_117, %c0_118] : memref<4x4x4xf32, #tpu.memory_space<vmem>>, vector<1x4x4xf32>
    %128 = vector.shape_cast %127 : vector<1x4x4xf32> to vector<4x4xf32>
    %cst_119 = arith.constant dense<0.000000e+00> : vector<4x16xf32>
    %129 = tpu.matmul %128, %117, %cst_119 {dimension_numbers = #tpu.dot_dimension_numbers<[1], [0], [0], [1], [0, 0, 1, 1], [], []>} : vector<4x4xf32>, vector<4x16xf32>, vector<4x16xf32> -> vector<4x16xf32>
    %c1_120 = arith.constant 1 : index
    %c0_121 = arith.constant 0 : index
    %c0_122 = arith.constant 0 : index
    %130 = vector.load %arg4[%c1_120, %c0_121, %c0_122] : memref<4x4x1xf32, #tpu.memory_space<vmem>>, vector<1x4x1xf32>
    %131 = vector.shape_cast %130 : vector<1x4x1xf32> to vector<4x1xf32>
    %132 = vector.broadcast %131 : vector<4x1xf32> to vector<4x16xf32>
    %133 = arith.addf %129, %132 : vector<4x16xf32>
    %cst_123 = arith.constant 0.000000e+00 : f32
    %134 = vector.broadcast %cst_123 : f32 to vector<4x16xf32>
    %135 = arith.maximumf %133, %134 : vector<4x16xf32>
    %c2_124 = arith.constant 2 : index
    %c0_125 = arith.constant 0 : index
    %c0_126 = arith.constant 0 : index
    %136 = vector.load %arg3[%c2_124, %c0_125, %c0_126] : memref<4x4x4xf32, #tpu.memory_space<vmem>>, vector<1x4x4xf32>
    %137 = vector.shape_cast %136 : vector<1x4x4xf32> to vector<4x4xf32>
    %cst_127 = arith.constant dense<0.000000e+00> : vector<4x16xf32>
    %138 = tpu.matmul %137, %117, %cst_127 {dimension_numbers = #tpu.dot_dimension_numbers<[1], [0], [0], [1], [0, 0, 1, 1], [], []>} : vector<4x4xf32>, vector<4x16xf32>, vector<4x16xf32> -> vector<4x16xf32>
    %c2_128 = arith.constant 2 : index
    %c0_129 = arith.constant 0 : index
    %c0_130 = arith.constant 0 : index
    %139 = vector.load %arg4[%c2_128, %c0_129, %c0_130] : memref<4x4x1xf32, #tpu.memory_space<vmem>>, vector<1x4x1xf32>
    %140 = vector.shape_cast %139 : vector<1x4x1xf32> to vector<4x1xf32>
    %141 = vector.broadcast %140 : vector<4x1xf32> to vector<4x16xf32>
    %142 = arith.addf %138, %141 : vector<4x16xf32>
    %cst_131 = arith.constant 0.000000e+00 : f32
    %143 = vector.broadcast %cst_131 : f32 to vector<4x16xf32>
    %144 = arith.maximumf %142, %143 : vector<4x16xf32>
    %c3_132 = arith.constant 3 : index
    %c0_133 = arith.constant 0 : index
    %c0_134 = arith.constant 0 : index
    %145 = vector.load %arg3[%c3_132, %c0_133, %c0_134] : memref<4x4x4xf32, #tpu.memory_space<vmem>>, vector<1x4x4xf32>
    %146 = vector.shape_cast %145 : vector<1x4x4xf32> to vector<4x4xf32>
    %cst_135 = arith.constant dense<0.000000e+00> : vector<4x16xf32>
    %147 = tpu.matmul %146, %117, %cst_135 {dimension_numbers = #tpu.dot_dimension_numbers<[1], [0], [0], [1], [0, 0, 1, 1], [], []>} : vector<4x4xf32>, vector<4x16xf32>, vector<4x16xf32> -> vector<4x16xf32>
    %c3_136 = arith.constant 3 : index
    %c0_137 = arith.constant 0 : index
    %c0_138 = arith.constant 0 : index
    %148 = vector.load %arg4[%c3_136, %c0_137, %c0_138] : memref<4x4x1xf32, #tpu.memory_space<vmem>>, vector<1x4x1xf32>
    %149 = vector.shape_cast %148 : vector<1x4x1xf32> to vector<4x1xf32>
    %150 = vector.broadcast %149 : vector<4x1xf32> to vector<4x16xf32>
    %151 = arith.addf %147, %150 : vector<4x16xf32>
    %cst_139 = arith.constant 0.000000e+00 : f32
    %152 = vector.broadcast %cst_139 : f32 to vector<4x16xf32>
    %153 = arith.maximumf %151, %152 : vector<4x16xf32>
    %c0_140 = arith.constant 0 : index
    %c0_141 = arith.constant 0 : index
    %c0_142 = arith.constant 0 : index
    %154 = vector.load %arg5[%c0_140, %c0_141, %c0_142] : memref<2x16x32xf32, #tpu.memory_space<vmem>>, vector<1x16x32xf32>
    %155 = vector.shape_cast %154 : vector<1x16x32xf32> to vector<16x32xf32>
    %cst_143 = arith.constant dense<0.000000e+00> : vector<4x32xf32>
    %156 = tpu.matmul %126, %155, %cst_143 {dimension_numbers = #tpu.dot_dimension_numbers<[1], [0], [0], [1], [0, 0, 1, 1], [], []>} : vector<4x16xf32>, vector<16x32xf32>, vector<4x32xf32> -> vector<4x32xf32>
    %c1_144 = arith.constant 1 : index
    %c0_145 = arith.constant 0 : index
    %c0_146 = arith.constant 0 : index
    %157 = vector.load %arg5[%c1_144, %c0_145, %c0_146] : memref<2x16x32xf32, #tpu.memory_space<vmem>>, vector<1x16x32xf32>
    %158 = vector.shape_cast %157 : vector<1x16x32xf32> to vector<16x32xf32>
    %cst_147 = arith.constant dense<0.000000e+00> : vector<4x32xf32>
    %159 = tpu.matmul %135, %158, %cst_147 {dimension_numbers = #tpu.dot_dimension_numbers<[1], [0], [0], [1], [0, 0, 1, 1], [], []>} : vector<4x16xf32>, vector<16x32xf32>, vector<4x32xf32> -> vector<4x32xf32>
    %160 = arith.addf %156, %159 : vector<4x32xf32>
    %c0_148 = arith.constant 0 : index
    %c0_149 = arith.constant 0 : index
    %c0_150 = arith.constant 0 : index
    %161 = vector.load %arg5[%c0_148, %c0_149, %c0_150] : memref<2x16x32xf32, #tpu.memory_space<vmem>>, vector<1x16x32xf32>
    %162 = vector.shape_cast %161 : vector<1x16x32xf32> to vector<16x32xf32>
    %cst_151 = arith.constant dense<0.000000e+00> : vector<4x32xf32>
    %163 = tpu.matmul %144, %162, %cst_151 {dimension_numbers = #tpu.dot_dimension_numbers<[1], [0], [0], [1], [0, 0, 1, 1], [], []>} : vector<4x16xf32>, vector<16x32xf32>, vector<4x32xf32> -> vector<4x32xf32>
    %c1_152 = arith.constant 1 : index
    %c0_153 = arith.constant 0 : index
    %c0_154 = arith.constant 0 : index
    %164 = vector.load %arg5[%c1_152, %c0_153, %c0_154] : memref<2x16x32xf32, #tpu.memory_space<vmem>>, vector<1x16x32xf32>
    %165 = vector.shape_cast %164 : vector<1x16x32xf32> to vector<16x32xf32>
    %cst_155 = arith.constant dense<0.000000e+00> : vector<4x32xf32>
    %166 = tpu.matmul %153, %165, %cst_155 {dimension_numbers = #tpu.dot_dimension_numbers<[1], [0], [0], [1], [0, 0, 1, 1], [], []>} : vector<4x16xf32>, vector<16x32xf32>, vector<4x32xf32> -> vector<4x32xf32>
    %167 = arith.addf %163, %166 : vector<4x32xf32>
    %c0_156 = arith.constant 0 : index
    %c0_157 = arith.constant 0 : index
    %c128 = arith.constant 128 : index
    %168 = vector.load %arg6[%c0_156, %c0_157, %c128] : memref<1x4x512xf32, #tpu.memory_space<vmem>>, vector<1x4x32xf32>
    %169 = vector.shape_cast %168 : vector<1x4x32xf32> to vector<4x32xf32>
    %170 = vector.shape_cast %160 : vector<4x32xf32> to vector<1x4x32xf32>
    tpu.vector_store %arg6[%c0_156, %c0_157, %c128], %170 {strides = array<i32>} : memref<1x4x512xf32, #tpu.memory_space<vmem>>, vector<1x4x32xf32>,
    %c0_158 = arith.constant 0 : index
    %c0_159 = arith.constant 0 : index
    %c160 = arith.constant 160 : index
    %171 = vector.load %arg6[%c0_158, %c0_159, %c160] : memref<1x4x512xf32, #tpu.memory_space<vmem>>, vector<1x4x32xf32>
    %172 = vector.shape_cast %171 : vector<1x4x32xf32> to vector<4x32xf32>
    %173 = vector.shape_cast %167 : vector<4x32xf32> to vector<1x4x32xf32>
    tpu.vector_store %arg6[%c0_158, %c0_159, %c160], %173 {strides = array<i32>} : memref<1x4x512xf32, #tpu.memory_space<vmem>>, vector<1x4x32xf32>,
    %c0_160 = arith.constant 0 : index
    %c0_161 = arith.constant 0 : index
    %c48 = arith.constant 48 : index
    %174 = vector.load %arg2[%c0_160, %c0_161, %c48] : memref<1x4x128xf32, #tpu.memory_space<vmem>>, vector<1x4x16xf32>
    %175 = vector.shape_cast %174 : vector<1x4x16xf32> to vector<4x16xf32>
    %c0_162 = arith.constant 0 : index
    %c0_163 = arith.constant 0 : index
    %c0_164 = arith.constant 0 : index
    %176 = vector.load %arg3[%c0_162, %c0_163, %c0_164] : memref<4x4x4xf32, #tpu.memory_space<vmem>>, vector<1x4x4xf32>
    %177 = vector.shape_cast %176 : vector<1x4x4xf32> to vector<4x4xf32>
    %cst_165 = arith.constant dense<0.000000e+00> : vector<4x16xf32>
    %178 = tpu.matmul %177, %175, %cst_165 {dimension_numbers = #tpu.dot_dimension_numbers<[1], [0], [0], [1], [0, 0, 1, 1], [], []>} : vector<4x4xf32>, vector<4x16xf32>, vector<4x16xf32> -> vector<4x16xf32>
    %c0_166 = arith.constant 0 : index
    %c0_167 = arith.constant 0 : index
    %c0_168 = arith.constant 0 : index
    %179 = vector.load %arg4[%c0_166, %c0_167, %c0_168] : memref<4x4x1xf32, #tpu.memory_space<vmem>>, vector<1x4x1xf32>
    %180 = vector.shape_cast %179 : vector<1x4x1xf32> to vector<4x1xf32>
    %181 = vector.broadcast %180 : vector<4x1xf32> to vector<4x16xf32>
    %182 = arith.addf %178, %181 : vector<4x16xf32>
    %cst_169 = arith.constant 0.000000e+00 : f32
    %183 = vector.broadcast %cst_169 : f32 to vector<4x16xf32>
    %184 = arith.maximumf %182, %183 : vector<4x16xf32>
    %c1_170 = arith.constant 1 : index
    %c0_171 = arith.constant 0 : index
    %c0_172 = arith.constant 0 : index
    %185 = vector.load %arg3[%c1_170, %c0_171, %c0_172] : memref<4x4x4xf32, #tpu.memory_space<vmem>>, vector<1x4x4xf32>
    %186 = vector.shape_cast %185 : vector<1x4x4xf32> to vector<4x4xf32>
    %cst_173 = arith.constant dense<0.000000e+00> : vector<4x16xf32>
    %187 = tpu.matmul %186, %175, %cst_173 {dimension_numbers = #tpu.dot_dimension_numbers<[1], [0], [0], [1], [0, 0, 1, 1], [], []>} : vector<4x4xf32>, vector<4x16xf32>, vector<4x16xf32> -> vector<4x16xf32>
    %c1_174 = arith.constant 1 : index
    %c0_175 = arith.constant 0 : index
    %c0_176 = arith.constant 0 : index
    %188 = vector.load %arg4[%c1_174, %c0_175, %c0_176] : memref<4x4x1xf32, #tpu.memory_space<vmem>>, vector<1x4x1xf32>
    %189 = vector.shape_cast %188 : vector<1x4x1xf32> to vector<4x1xf32>
    %190 = vector.broadcast %189 : vector<4x1xf32> to vector<4x16xf32>
    %191 = arith.addf %187, %190 : vector<4x16xf32>
    %cst_177 = arith.constant 0.000000e+00 : f32
    %192 = vector.broadcast %cst_177 : f32 to vector<4x16xf32>
    %193 = arith.maximumf %191, %192 : vector<4x16xf32>
    %c2_178 = arith.constant 2 : index
    %c0_179 = arith.constant 0 : index
    %c0_180 = arith.constant 0 : index
    %194 = vector.load %arg3[%c2_178, %c0_179, %c0_180] : memref<4x4x4xf32, #tpu.memory_space<vmem>>, vector<1x4x4xf32>
    %195 = vector.shape_cast %194 : vector<1x4x4xf32> to vector<4x4xf32>
    %cst_181 = arith.constant dense<0.000000e+00> : vector<4x16xf32>
    %196 = tpu.matmul %195, %175, %cst_181 {dimension_numbers = #tpu.dot_dimension_numbers<[1], [0], [0], [1], [0, 0, 1, 1], [], []>} : vector<4x4xf32>, vector<4x16xf32>, vector<4x16xf32> -> vector<4x16xf32>
    %c2_182 = arith.constant 2 : index
    %c0_183 = arith.constant 0 : index
    %c0_184 = arith.constant 0 : index
    %197 = vector.load %arg4[%c2_182, %c0_183, %c0_184] : memref<4x4x1xf32, #tpu.memory_space<vmem>>, vector<1x4x1xf32>
    %198 = vector.shape_cast %197 : vector<1x4x1xf32> to vector<4x1xf32>
    %199 = vector.broadcast %198 : vector<4x1xf32> to vector<4x16xf32>
    %200 = arith.addf %196, %199 : vector<4x16xf32>
    %cst_185 = arith.constant 0.000000e+00 : f32
    %201 = vector.broadcast %cst_185 : f32 to vector<4x16xf32>
    %202 = arith.maximumf %200, %201 : vector<4x16xf32>
    %c3_186 = arith.constant 3 : index
    %c0_187 = arith.constant 0 : index
    %c0_188 = arith.constant 0 : index
    %203 = vector.load %arg3[%c3_186, %c0_187, %c0_188] : memref<4x4x4xf32, #tpu.memory_space<vmem>>, vector<1x4x4xf32>
    %204 = vector.shape_cast %203 : vector<1x4x4xf32> to vector<4x4xf32>
    %cst_189 = arith.constant dense<0.000000e+00> : vector<4x16xf32>
    %205 = tpu.matmul %204, %175, %cst_189 {dimension_numbers = #tpu.dot_dimension_numbers<[1], [0], [0], [1], [0, 0, 1, 1], [], []>} : vector<4x4xf32>, vector<4x16xf32>, vector<4x16xf32> -> vector<4x16xf32>
    %c3_190 = arith.constant 3 : index
    %c0_191 = arith.constant 0 : index
    %c0_192 = arith.constant 0 : index
    %206 = vector.load %arg4[%c3_190, %c0_191, %c0_192] : memref<4x4x1xf32, #tpu.memory_space<vmem>>, vector<1x4x1xf32>
    %207 = vector.shape_cast %206 : vector<1x4x1xf32> to vector<4x1xf32>
    %208 = vector.broadcast %207 : vector<4x1xf32> to vector<4x16xf32>
    %209 = arith.addf %205, %208 : vector<4x16xf32>
    %cst_193 = arith.constant 0.000000e+00 : f32
    %210 = vector.broadcast %cst_193 : f32 to vector<4x16xf32>
    %211 = arith.maximumf %209, %210 : vector<4x16xf32>
    %c0_194 = arith.constant 0 : index
    %c0_195 = arith.constant 0 : index
    %c0_196 = arith.constant 0 : index
    %212 = vector.load %arg5[%c0_194, %c0_195, %c0_196] : memref<2x16x32xf32, #tpu.memory_space<vmem>>, vector<1x16x32xf32>
    %213 = vector.shape_cast %212 : vector<1x16x32xf32> to vector<16x32xf32>
    %cst_197 = arith.constant dense<0.000000e+00> : vector<4x32xf32>
    %214 = tpu.matmul %184, %213, %cst_197 {dimension_numbers = #tpu.dot_dimension_numbers<[1], [0], [0], [1], [0, 0, 1, 1], [], []>} : vector<4x16xf32>, vector<16x32xf32>, vector<4x32xf32> -> vector<4x32xf32>
    %c1_198 = arith.constant 1 : index
    %c0_199 = arith.constant 0 : index
    %c0_200 = arith.constant 0 : index
    %215 = vector.load %arg5[%c1_198, %c0_199, %c0_200] : memref<2x16x32xf32, #tpu.memory_space<vmem>>, vector<1x16x32xf32>
    %216 = vector.shape_cast %215 : vector<1x16x32xf32> to vector<16x32xf32>
    %cst_201 = arith.constant dense<0.000000e+00> : vector<4x32xf32>
    %217 = tpu.matmul %193, %216, %cst_201 {dimension_numbers = #tpu.dot_dimension_numbers<[1], [0], [0], [1], [0, 0, 1, 1], [], []>} : vector<4x16xf32>, vector<16x32xf32>, vector<4x32xf32> -> vector<4x32xf32>
    %218 = arith.addf %214, %217 : vector<4x32xf32>
    %c0_202 = arith.constant 0 : index
    %c0_203 = arith.constant 0 : index
    %c0_204 = arith.constant 0 : index
    %219 = vector.load %arg5[%c0_202, %c0_203, %c0_204] : memref<2x16x32xf32, #tpu.memory_space<vmem>>, vector<1x16x32xf32>
    %220 = vector.shape_cast %219 : vector<1x16x32xf32> to vector<16x32xf32>
    %cst_205 = arith.constant dense<0.000000e+00> : vector<4x32xf32>
    %221 = tpu.matmul %202, %220, %cst_205 {dimension_numbers = #tpu.dot_dimension_numbers<[1], [0], [0], [1], [0, 0, 1, 1], [], []>} : vector<4x16xf32>, vector<16x32xf32>, vector<4x32xf32> -> vector<4x32xf32>
    %c1_206 = arith.constant 1 : index
    %c0_207 = arith.constant 0 : index
    %c0_208 = arith.constant 0 : index
    %222 = vector.load %arg5[%c1_206, %c0_207, %c0_208] : memref<2x16x32xf32, #tpu.memory_space<vmem>>, vector<1x16x32xf32>
    %223 = vector.shape_cast %222 : vector<1x16x32xf32> to vector<16x32xf32>
    %cst_209 = arith.constant dense<0.000000e+00> : vector<4x32xf32>
    %224 = tpu.matmul %211, %223, %cst_209 {dimension_numbers = #tpu.dot_dimension_numbers<[1], [0], [0], [1], [0, 0, 1, 1], [], []>} : vector<4x16xf32>, vector<16x32xf32>, vector<4x32xf32> -> vector<4x32xf32>
    %225 = arith.addf %221, %224 : vector<4x32xf32>
    %c0_210 = arith.constant 0 : index
    %c0_211 = arith.constant 0 : index
    %c192 = arith.constant 192 : index
    %226 = vector.load %arg6[%c0_210, %c0_211, %c192] : memref<1x4x512xf32, #tpu.memory_space<vmem>>, vector<1x4x32xf32>
    %227 = vector.shape_cast %226 : vector<1x4x32xf32> to vector<4x32xf32>
    %228 = vector.shape_cast %218 : vector<4x32xf32> to vector<1x4x32xf32>
    tpu.vector_store %arg6[%c0_210, %c0_211, %c192], %228 {strides = array<i32>} : memref<1x4x512xf32, #tpu.memory_space<vmem>>, vector<1x4x32xf32>,
    %c0_212 = arith.constant 0 : index
    %c0_213 = arith.constant 0 : index
    %c224 = arith.constant 224 : index
    %229 = vector.load %arg6[%c0_212, %c0_213, %c224] : memref<1x4x512xf32, #tpu.memory_space<vmem>>, vector<1x4x32xf32>
    %230 = vector.shape_cast %229 : vector<1x4x32xf32> to vector<4x32xf32>
    %231 = vector.shape_cast %225 : vector<4x32xf32> to vector<1x4x32xf32>
    tpu.vector_store %arg6[%c0_212, %c0_213, %c224], %231 {strides = array<i32>} : memref<1x4x512xf32, #tpu.memory_space<vmem>>, vector<1x4x32xf32>,
    %c0_214 = arith.constant 0 : index
    %c0_215 = arith.constant 0 : index
    %c64_216 = arith.constant 64 : index
    %232 = vector.load %arg2[%c0_214, %c0_215, %c64_216] : memref<1x4x128xf32, #tpu.memory_space<vmem>>, vector<1x4x16xf32>
    %233 = vector.shape_cast %232 : vector<1x4x16xf32> to vector<4x16xf32>
    %c0_217 = arith.constant 0 : index
    %c0_218 = arith.constant 0 : index
    %c0_219 = arith.constant 0 : index
    %234 = vector.load %arg3[%c0_217, %c0_218, %c0_219] : memref<4x4x4xf32, #tpu.memory_space<vmem>>, vector<1x4x4xf32>
    %235 = vector.shape_cast %234 : vector<1x4x4xf32> to vector<4x4xf32>
    %cst_220 = arith.constant dense<0.000000e+00> : vector<4x16xf32>
    %236 = tpu.matmul %235, %233, %cst_220 {dimension_numbers = #tpu.dot_dimension_numbers<[1], [0], [0], [1], [0, 0, 1, 1], [], []>} : vector<4x4xf32>, vector<4x16xf32>, vector<4x16xf32> -> vector<4x16xf32>
    %c0_221 = arith.constant 0 : index
    %c0_222 = arith.constant 0 : index
    %c0_223 = arith.constant 0 : index
    %237 = vector.load %arg4[%c0_221, %c0_222, %c0_223] : memref<4x4x1xf32, #tpu.memory_space<vmem>>, vector<1x4x1xf32>
    %238 = vector.shape_cast %237 : vector<1x4x1xf32> to vector<4x1xf32>
    %239 = vector.broadcast %238 : vector<4x1xf32> to vector<4x16xf32>
    %240 = arith.addf %236, %239 : vector<4x16xf32>
    %cst_224 = arith.constant 0.000000e+00 : f32
    %241 = vector.broadcast %cst_224 : f32 to vector<4x16xf32>
    %242 = arith.maximumf %240, %241 : vector<4x16xf32>
    %c1_225 = arith.constant 1 : index
    %c0_226 = arith.constant 0 : index
    %c0_227 = arith.constant 0 : index
    %243 = vector.load %arg3[%c1_225, %c0_226, %c0_227] : memref<4x4x4xf32, #tpu.memory_space<vmem>>, vector<1x4x4xf32>
    %244 = vector.shape_cast %243 : vector<1x4x4xf32> to vector<4x4xf32>
    %cst_228 = arith.constant dense<0.000000e+00> : vector<4x16xf32>
    %245 = tpu.matmul %244, %233, %cst_228 {dimension_numbers = #tpu.dot_dimension_numbers<[1], [0], [0], [1], [0, 0, 1, 1], [], []>} : vector<4x4xf32>, vector<4x16xf32>, vector<4x16xf32> -> vector<4x16xf32>
    %c1_229 = arith.constant 1 : index
    %c0_230 = arith.constant 0 : index
    %c0_231 = arith.constant 0 : index
    %246 = vector.load %arg4[%c1_229, %c0_230, %c0_231] : memref<4x4x1xf32, #tpu.memory_space<vmem>>, vector<1x4x1xf32>
    %247 = vector.shape_cast %246 : vector<1x4x1xf32> to vector<4x1xf32>
    %248 = vector.broadcast %247 : vector<4x1xf32> to vector<4x16xf32>
    %249 = arith.addf %245, %248 : vector<4x16xf32>
    %cst_232 = arith.constant 0.000000e+00 : f32
    %250 = vector.broadcast %cst_232 : f32 to vector<4x16xf32>
    %251 = arith.maximumf %249, %250 : vector<4x16xf32>
    %c2_233 = arith.constant 2 : index
    %c0_234 = arith.constant 0 : index
    %c0_235 = arith.constant 0 : index
    %252 = vector.load %arg3[%c2_233, %c0_234, %c0_235] : memref<4x4x4xf32, #tpu.memory_space<vmem>>, vector<1x4x4xf32>
    %253 = vector.shape_cast %252 : vector<1x4x4xf32> to vector<4x4xf32>
    %cst_236 = arith.constant dense<0.000000e+00> : vector<4x16xf32>
    %254 = tpu.matmul %253, %233, %cst_236 {dimension_numbers = #tpu.dot_dimension_numbers<[1], [0], [0], [1], [0, 0, 1, 1], [], []>} : vector<4x4xf32>, vector<4x16xf32>, vector<4x16xf32> -> vector<4x16xf32>
    %c2_237 = arith.constant 2 : index
    %c0_238 = arith.constant 0 : index
    %c0_239 = arith.constant 0 : index
    %255 = vector.load %arg4[%c2_237, %c0_238, %c0_239] : memref<4x4x1xf32, #tpu.memory_space<vmem>>, vector<1x4x1xf32>
    %256 = vector.shape_cast %255 : vector<1x4x1xf32> to vector<4x1xf32>
    %257 = vector.broadcast %256 : vector<4x1xf32> to vector<4x16xf32>
    %258 = arith.addf %254, %257 : vector<4x16xf32>
    %cst_240 = arith.constant 0.000000e+00 : f32
    %259 = vector.broadcast %cst_240 : f32 to vector<4x16xf32>
    %260 = arith.maximumf %258, %259 : vector<4x16xf32>
    %c3_241 = arith.constant 3 : index
    %c0_242 = arith.constant 0 : index
    %c0_243 = arith.constant 0 : index
    %261 = vector.load %arg3[%c3_241, %c0_242, %c0_243] : memref<4x4x4xf32, #tpu.memory_space<vmem>>, vector<1x4x4xf32>
    %262 = vector.shape_cast %261 : vector<1x4x4xf32> to vector<4x4xf32>
    %cst_244 = arith.constant dense<0.000000e+00> : vector<4x16xf32>
    %263 = tpu.matmul %262, %233, %cst_244 {dimension_numbers = #tpu.dot_dimension_numbers<[1], [0], [0], [1], [0, 0, 1, 1], [], []>} : vector<4x4xf32>, vector<4x16xf32>, vector<4x16xf32> -> vector<4x16xf32>
    %c3_245 = arith.constant 3 : index
    %c0_246 = arith.constant 0 : index
    %c0_247 = arith.constant 0 : index
    %264 = vector.load %arg4[%c3_245, %c0_246, %c0_247] : memref<4x4x1xf32, #tpu.memory_space<vmem>>, vector<1x4x1xf32>
    %265 = vector.shape_cast %264 : vector<1x4x1xf32> to vector<4x1xf32>
    %266 = vector.broadcast %265 : vector<4x1xf32> to vector<4x16xf32>
    %267 = arith.addf %263, %266 : vector<4x16xf32>
    %cst_248 = arith.constant 0.000000e+00 : f32
    %268 = vector.broadcast %cst_248 : f32 to vector<4x16xf32>
    %269 = arith.maximumf %267, %268 : vector<4x16xf32>
    %c0_249 = arith.constant 0 : index
    %c0_250 = arith.constant 0 : index
    %c0_251 = arith.constant 0 : index
    %270 = vector.load %arg5[%c0_249, %c0_250, %c0_251] : memref<2x16x32xf32, #tpu.memory_space<vmem>>, vector<1x16x32xf32>
    %271 = vector.shape_cast %270 : vector<1x16x32xf32> to vector<16x32xf32>
    %cst_252 = arith.constant dense<0.000000e+00> : vector<4x32xf32>
    %272 = tpu.matmul %242, %271, %cst_252 {dimension_numbers = #tpu.dot_dimension_numbers<[1], [0], [0], [1], [0, 0, 1, 1], [], []>} : vector<4x16xf32>, vector<16x32xf32>, vector<4x32xf32> -> vector<4x32xf32>
    %c1_253 = arith.constant 1 : index
    %c0_254 = arith.constant 0 : index
    %c0_255 = arith.constant 0 : index
    %273 = vector.load %arg5[%c1_253, %c0_254, %c0_255] : memref<2x16x32xf32, #tpu.memory_space<vmem>>, vector<1x16x32xf32>
    %274 = vector.shape_cast %273 : vector<1x16x32xf32> to vector<16x32xf32>
    %cst_256 = arith.constant dense<0.000000e+00> : vector<4x32xf32>
    %275 = tpu.matmul %251, %274, %cst_256 {dimension_numbers = #tpu.dot_dimension_numbers<[1], [0], [0], [1], [0, 0, 1, 1], [], []>} : vector<4x16xf32>, vector<16x32xf32>, vector<4x32xf32> -> vector<4x32xf32>
    %276 = arith.addf %272, %275 : vector<4x32xf32>
    %c0_257 = arith.constant 0 : index
    %c0_258 = arith.constant 0 : index
    %c0_259 = arith.constant 0 : index
    %277 = vector.load %arg5[%c0_257, %c0_258, %c0_259] : memref<2x16x32xf32, #tpu.memory_space<vmem>>, vector<1x16x32xf32>
    %278 = vector.shape_cast %277 : vector<1x16x32xf32> to vector<16x32xf32>
    %cst_260 = arith.constant dense<0.000000e+00> : vector<4x32xf32>
    %279 = tpu.matmul %260, %278, %cst_260 {dimension_numbers = #tpu.dot_dimension_numbers<[1], [0], [0], [1], [0, 0, 1, 1], [], []>} : vector<4x16xf32>, vector<16x32xf32>, vector<4x32xf32> -> vector<4x32xf32>
    %c1_261 = arith.constant 1 : index
    %c0_262 = arith.constant 0 : index
    %c0_263 = arith.constant 0 : index
    %280 = vector.load %arg5[%c1_261, %c0_262, %c0_263] : memref<2x16x32xf32, #tpu.memory_space<vmem>>, vector<1x16x32xf32>
    %281 = vector.shape_cast %280 : vector<1x16x32xf32> to vector<16x32xf32>
    %cst_264 = arith.constant dense<0.000000e+00> : vector<4x32xf32>
    %282 = tpu.matmul %269, %281, %cst_264 {dimension_numbers = #tpu.dot_dimension_numbers<[1], [0], [0], [1], [0, 0, 1, 1], [], []>} : vector<4x16xf32>, vector<16x32xf32>, vector<4x32xf32> -> vector<4x32xf32>
    %283 = arith.addf %279, %282 : vector<4x32xf32>
    %c0_265 = arith.constant 0 : index
    %c0_266 = arith.constant 0 : index
    %c256 = arith.constant 256 : index
    %284 = vector.load %arg6[%c0_265, %c0_266, %c256] : memref<1x4x512xf32, #tpu.memory_space<vmem>>, vector<1x4x32xf32>
    %285 = vector.shape_cast %284 : vector<1x4x32xf32> to vector<4x32xf32>
    %286 = vector.shape_cast %276 : vector<4x32xf32> to vector<1x4x32xf32>
    tpu.vector_store %arg6[%c0_265, %c0_266, %c256], %286 {strides = array<i32>} : memref<1x4x512xf32, #tpu.memory_space<vmem>>, vector<1x4x32xf32>,
    %c0_267 = arith.constant 0 : index
    %c0_268 = arith.constant 0 : index
    %c288 = arith.constant 288 : index
    %287 = vector.load %arg6[%c0_267, %c0_268, %c288] : memref<1x4x512xf32, #tpu.memory_space<vmem>>, vector<1x4x32xf32>
    %288 = vector.shape_cast %287 : vector<1x4x32xf32> to vector<4x32xf32>
    %289 = vector.shape_cast %283 : vector<4x32xf32> to vector<1x4x32xf32>
    tpu.vector_store %arg6[%c0_267, %c0_268, %c288], %289 {strides = array<i32>} : memref<1x4x512xf32, #tpu.memory_space<vmem>>, vector<1x4x32xf32>,
    %c0_269 = arith.constant 0 : index
    %c0_270 = arith.constant 0 : index
    %c80 = arith.constant 80 : index
    %290 = vector.load %arg2[%c0_269, %c0_270, %c80] : memref<1x4x128xf32, #tpu.memory_space<vmem>>, vector<1x4x16xf32>
    %291 = vector.shape_cast %290 : vector<1x4x16xf32> to vector<4x16xf32>
    %c0_271 = arith.constant 0 : index
    %c0_272 = arith.constant 0 : index
    %c0_273 = arith.constant 0 : index
    %292 = vector.load %arg3[%c0_271, %c0_272, %c0_273] : memref<4x4x4xf32, #tpu.memory_space<vmem>>, vector<1x4x4xf32>
    %293 = vector.shape_cast %292 : vector<1x4x4xf32> to vector<4x4xf32>
    %cst_274 = arith.constant dense<0.000000e+00> : vector<4x16xf32>
    %294 = tpu.matmul %293, %291, %cst_274 {dimension_numbers = #tpu.dot_dimension_numbers<[1], [0], [0], [1], [0, 0, 1, 1], [], []>} : vector<4x4xf32>, vector<4x16xf32>, vector<4x16xf32> -> vector<4x16xf32>
    %c0_275 = arith.constant 0 : index
    %c0_276 = arith.constant 0 : index
    %c0_277 = arith.constant 0 : index
    %295 = vector.load %arg4[%c0_275, %c0_276, %c0_277] : memref<4x4x1xf32, #tpu.memory_space<vmem>>, vector<1x4x1xf32>
    %296 = vector.shape_cast %295 : vector<1x4x1xf32> to vector<4x1xf32>
    %297 = vector.broadcast %296 : vector<4x1xf32> to vector<4x16xf32>
    %298 = arith.addf %294, %297 : vector<4x16xf32>
    %cst_278 = arith.constant 0.000000e+00 : f32
    %299 = vector.broadcast %cst_278 : f32 to vector<4x16xf32>
    %300 = arith.maximumf %298, %299 : vector<4x16xf32>
    %c1_279 = arith.constant 1 : index
    %c0_280 = arith.constant 0 : index
    %c0_281 = arith.constant 0 : index
    %301 = vector.load %arg3[%c1_279, %c0_280, %c0_281] : memref<4x4x4xf32, #tpu.memory_space<vmem>>, vector<1x4x4xf32>
    %302 = vector.shape_cast %301 : vector<1x4x4xf32> to vector<4x4xf32>
    %cst_282 = arith.constant dense<0.000000e+00> : vector<4x16xf32>
    %303 = tpu.matmul %302, %291, %cst_282 {dimension_numbers = #tpu.dot_dimension_numbers<[1], [0], [0], [1], [0, 0, 1, 1], [], []>} : vector<4x4xf32>, vector<4x16xf32>, vector<4x16xf32> -> vector<4x16xf32>
    %c1_283 = arith.constant 1 : index
    %c0_284 = arith.constant 0 : index
    %c0_285 = arith.constant 0 : index
    %304 = vector.load %arg4[%c1_283, %c0_284, %c0_285] : memref<4x4x1xf32, #tpu.memory_space<vmem>>, vector<1x4x1xf32>
    %305 = vector.shape_cast %304 : vector<1x4x1xf32> to vector<4x1xf32>
    %306 = vector.broadcast %305 : vector<4x1xf32> to vector<4x16xf32>
    %307 = arith.addf %303, %306 : vector<4x16xf32>
    %cst_286 = arith.constant 0.000000e+00 : f32
    %308 = vector.broadcast %cst_286 : f32 to vector<4x16xf32>
    %309 = arith.maximumf %307, %308 : vector<4x16xf32>
    %c2_287 = arith.constant 2 : index
    %c0_288 = arith.constant 0 : index
    %c0_289 = arith.constant 0 : index
    %310 = vector.load %arg3[%c2_287, %c0_288, %c0_289] : memref<4x4x4xf32, #tpu.memory_space<vmem>>, vector<1x4x4xf32>
    %311 = vector.shape_cast %310 : vector<1x4x4xf32> to vector<4x4xf32>
    %cst_290 = arith.constant dense<0.000000e+00> : vector<4x16xf32>
    %312 = tpu.matmul %311, %291, %cst_290 {dimension_numbers = #tpu.dot_dimension_numbers<[1], [0], [0], [1], [0, 0, 1, 1], [], []>} : vector<4x4xf32>, vector<4x16xf32>, vector<4x16xf32> -> vector<4x16xf32>
    %c2_291 = arith.constant 2 : index
    %c0_292 = arith.constant 0 : index
    %c0_293 = arith.constant 0 : index
    %313 = vector.load %arg4[%c2_291, %c0_292, %c0_293] : memref<4x4x1xf32, #tpu.memory_space<vmem>>, vector<1x4x1xf32>
    %314 = vector.shape_cast %313 : vector<1x4x1xf32> to vector<4x1xf32>
    %315 = vector.broadcast %314 : vector<4x1xf32> to vector<4x16xf32>
    %316 = arith.addf %312, %315 : vector<4x16xf32>
    %cst_294 = arith.constant 0.000000e+00 : f32
    %317 = vector.broadcast %cst_294 : f32 to vector<4x16xf32>
    %318 = arith.maximumf %316, %317 : vector<4x16xf32>
    %c3_295 = arith.constant 3 : index
    %c0_296 = arith.constant 0 : index
    %c0_297 = arith.constant 0 : index
    %319 = vector.load %arg3[%c3_295, %c0_296, %c0_297] : memref<4x4x4xf32, #tpu.memory_space<vmem>>, vector<1x4x4xf32>
    %320 = vector.shape_cast %319 : vector<1x4x4xf32> to vector<4x4xf32>
    %cst_298 = arith.constant dense<0.000000e+00> : vector<4x16xf32>
    %321 = tpu.matmul %320, %291, %cst_298 {dimension_numbers = #tpu.dot_dimension_numbers<[1], [0], [0], [1], [0, 0, 1, 1], [], []>} : vector<4x4xf32>, vector<4x16xf32>, vector<4x16xf32> -> vector<4x16xf32>
    %c3_299 = arith.constant 3 : index
    %c0_300 = arith.constant 0 : index
    %c0_301 = arith.constant 0 : index
    %322 = vector.load %arg4[%c3_299, %c0_300, %c0_301] : memref<4x4x1xf32, #tpu.memory_space<vmem>>, vector<1x4x1xf32>
    %323 = vector.shape_cast %322 : vector<1x4x1xf32> to vector<4x1xf32>
    %324 = vector.broadcast %323 : vector<4x1xf32> to vector<4x16xf32>
    %325 = arith.addf %321, %324 : vector<4x16xf32>
    %cst_302 = arith.constant 0.000000e+00 : f32
    %326 = vector.broadcast %cst_302 : f32 to vector<4x16xf32>
    %327 = arith.maximumf %325, %326 : vector<4x16xf32>
    %c0_303 = arith.constant 0 : index
    %c0_304 = arith.constant 0 : index
    %c0_305 = arith.constant 0 : index
    %328 = vector.load %arg5[%c0_303, %c0_304, %c0_305] : memref<2x16x32xf32, #tpu.memory_space<vmem>>, vector<1x16x32xf32>
    %329 = vector.shape_cast %328 : vector<1x16x32xf32> to vector<16x32xf32>
    %cst_306 = arith.constant dense<0.000000e+00> : vector<4x32xf32>
    %330 = tpu.matmul %300, %329, %cst_306 {dimension_numbers = #tpu.dot_dimension_numbers<[1], [0], [0], [1], [0, 0, 1, 1], [], []>} : vector<4x16xf32>, vector<16x32xf32>, vector<4x32xf32> -> vector<4x32xf32>
    %c1_307 = arith.constant 1 : index
    %c0_308 = arith.constant 0 : index
    %c0_309 = arith.constant 0 : index
    %331 = vector.load %arg5[%c1_307, %c0_308, %c0_309] : memref<2x16x32xf32, #tpu.memory_space<vmem>>, vector<1x16x32xf32>
    %332 = vector.shape_cast %331 : vector<1x16x32xf32> to vector<16x32xf32>
    %cst_310 = arith.constant dense<0.000000e+00> : vector<4x32xf32>
    %333 = tpu.matmul %309, %332, %cst_310 {dimension_numbers = #tpu.dot_dimension_numbers<[1], [0], [0], [1], [0, 0, 1, 1], [], []>} : vector<4x16xf32>, vector<16x32xf32>, vector<4x32xf32> -> vector<4x32xf32>
    %334 = arith.addf %330, %333 : vector<4x32xf32>
    %c0_311 = arith.constant 0 : index
    %c0_312 = arith.constant 0 : index
    %c0_313 = arith.constant 0 : index
    %335 = vector.load %arg5[%c0_311, %c0_312, %c0_313] : memref<2x16x32xf32, #tpu.memory_space<vmem>>, vector<1x16x32xf32>
    %336 = vector.shape_cast %335 : vector<1x16x32xf32> to vector<16x32xf32>
    %cst_314 = arith.constant dense<0.000000e+00> : vector<4x32xf32>
    %337 = tpu.matmul %318, %336, %cst_314 {dimension_numbers = #tpu.dot_dimension_numbers<[1], [0], [0], [1], [0, 0, 1, 1], [], []>} : vector<4x16xf32>, vector<16x32xf32>, vector<4x32xf32> -> vector<4x32xf32>
    %c1_315 = arith.constant 1 : index
    %c0_316 = arith.constant 0 : index
    %c0_317 = arith.constant 0 : index
    %338 = vector.load %arg5[%c1_315, %c0_316, %c0_317] : memref<2x16x32xf32, #tpu.memory_space<vmem>>, vector<1x16x32xf32>
    %339 = vector.shape_cast %338 : vector<1x16x32xf32> to vector<16x32xf32>
    %cst_318 = arith.constant dense<0.000000e+00> : vector<4x32xf32>
    %340 = tpu.matmul %327, %339, %cst_318 {dimension_numbers = #tpu.dot_dimension_numbers<[1], [0], [0], [1], [0, 0, 1, 1], [], []>} : vector<4x16xf32>, vector<16x32xf32>, vector<4x32xf32> -> vector<4x32xf32>
    %341 = arith.addf %337, %340 : vector<4x32xf32>
    %c0_319 = arith.constant 0 : index
    %c0_320 = arith.constant 0 : index
    %c320 = arith.constant 320 : index
    %342 = vector.load %arg6[%c0_319, %c0_320, %c320] : memref<1x4x512xf32, #tpu.memory_space<vmem>>, vector<1x4x32xf32>
    %343 = vector.shape_cast %342 : vector<1x4x32xf32> to vector<4x32xf32>
    %344 = vector.shape_cast %334 : vector<4x32xf32> to vector<1x4x32xf32>
    tpu.vector_store %arg6[%c0_319, %c0_320, %c320], %344 {strides = array<i32>} : memref<1x4x512xf32, #tpu.memory_space<vmem>>, vector<1x4x32xf32>,
    %c0_321 = arith.constant 0 : index
    %c0_322 = arith.constant 0 : index
    %c352 = arith.constant 352 : index
    %345 = vector.load %arg6[%c0_321, %c0_322, %c352] : memref<1x4x512xf32, #tpu.memory_space<vmem>>, vector<1x4x32xf32>
    %346 = vector.shape_cast %345 : vector<1x4x32xf32> to vector<4x32xf32>
    %347 = vector.shape_cast %341 : vector<4x32xf32> to vector<1x4x32xf32>
    tpu.vector_store %arg6[%c0_321, %c0_322, %c352], %347 {strides = array<i32>} : memref<1x4x512xf32, #tpu.memory_space<vmem>>, vector<1x4x32xf32>,
    %c0_323 = arith.constant 0 : index
    %c0_324 = arith.constant 0 : index
    %c96_325 = arith.constant 96 : index
    %348 = vector.load %arg2[%c0_323, %c0_324, %c96_325] : memref<1x4x128xf32, #tpu.memory_space<vmem>>, vector<1x4x16xf32>
    %349 = vector.shape_cast %348 : vector<1x4x16xf32> to vector<4x16xf32>
    %c0_326 = arith.constant 0 : index
    %c0_327 = arith.constant 0 : index
    %c0_328 = arith.constant 0 : index
    %350 = vector.load %arg3[%c0_326, %c0_327, %c0_328] : memref<4x4x4xf32, #tpu.memory_space<vmem>>, vector<1x4x4xf32>
    %351 = vector.shape_cast %350 : vector<1x4x4xf32> to vector<4x4xf32>
    %cst_329 = arith.constant dense<0.000000e+00> : vector<4x16xf32>
    %352 = tpu.matmul %351, %349, %cst_329 {dimension_numbers = #tpu.dot_dimension_numbers<[1], [0], [0], [1], [0, 0, 1, 1], [], []>} : vector<4x4xf32>, vector<4x16xf32>, vector<4x16xf32> -> vector<4x16xf32>
    %c0_330 = arith.constant 0 : index
    %c0_331 = arith.constant 0 : index
    %c0_332 = arith.constant 0 : index
    %353 = vector.load %arg4[%c0_330, %c0_331, %c0_332] : memref<4x4x1xf32, #tpu.memory_space<vmem>>, vector<1x4x1xf32>
    %354 = vector.shape_cast %353 : vector<1x4x1xf32> to vector<4x1xf32>
    %355 = vector.broadcast %354 : vector<4x1xf32> to vector<4x16xf32>
    %356 = arith.addf %352, %355 : vector<4x16xf32>
    %cst_333 = arith.constant 0.000000e+00 : f32
    %357 = vector.broadcast %cst_333 : f32 to vector<4x16xf32>
    %358 = arith.maximumf %356, %357 : vector<4x16xf32>
    %c1_334 = arith.constant 1 : index
    %c0_335 = arith.constant 0 : index
    %c0_336 = arith.constant 0 : index
    %359 = vector.load %arg3[%c1_334, %c0_335, %c0_336] : memref<4x4x4xf32, #tpu.memory_space<vmem>>, vector<1x4x4xf32>
    %360 = vector.shape_cast %359 : vector<1x4x4xf32> to vector<4x4xf32>
    %cst_337 = arith.constant dense<0.000000e+00> : vector<4x16xf32>
    %361 = tpu.matmul %360, %349, %cst_337 {dimension_numbers = #tpu.dot_dimension_numbers<[1], [0], [0], [1], [0, 0, 1, 1], [], []>} : vector<4x4xf32>, vector<4x16xf32>, vector<4x16xf32> -> vector<4x16xf32>
    %c1_338 = arith.constant 1 : index
    %c0_339 = arith.constant 0 : index
    %c0_340 = arith.constant 0 : index
    %362 = vector.load %arg4[%c1_338, %c0_339, %c0_340] : memref<4x4x1xf32, #tpu.memory_space<vmem>>, vector<1x4x1xf32>
    %363 = vector.shape_cast %362 : vector<1x4x1xf32> to vector<4x1xf32>
    %364 = vector.broadcast %363 : vector<4x1xf32> to vector<4x16xf32>
    %365 = arith.addf %361, %364 : vector<4x16xf32>
    %cst_341 = arith.constant 0.000000e+00 : f32
    %366 = vector.broadcast %cst_341 : f32 to vector<4x16xf32>
    %367 = arith.maximumf %365, %366 : vector<4x16xf32>
    %c2_342 = arith.constant 2 : index
    %c0_343 = arith.constant 0 : index
    %c0_344 = arith.constant 0 : index
    %368 = vector.load %arg3[%c2_342, %c0_343, %c0_344] : memref<4x4x4xf32, #tpu.memory_space<vmem>>, vector<1x4x4xf32>
    %369 = vector.shape_cast %368 : vector<1x4x4xf32> to vector<4x4xf32>
    %cst_345 = arith.constant dense<0.000000e+00> : vector<4x16xf32>
    %370 = tpu.matmul %369, %349, %cst_345 {dimension_numbers = #tpu.dot_dimension_numbers<[1], [0], [0], [1], [0, 0, 1, 1], [], []>} : vector<4x4xf32>, vector<4x16xf32>, vector<4x16xf32> -> vector<4x16xf32>
    %c2_346 = arith.constant 2 : index
    %c0_347 = arith.constant 0 : index
    %c0_348 = arith.constant 0 : index
    %371 = vector.load %arg4[%c2_346, %c0_347, %c0_348] : memref<4x4x1xf32, #tpu.memory_space<vmem>>, vector<1x4x1xf32>
    %372 = vector.shape_cast %371 : vector<1x4x1xf32> to vector<4x1xf32>
    %373 = vector.broadcast %372 : vector<4x1xf32> to vector<4x16xf32>
    %374 = arith.addf %370, %373 : vector<4x16xf32>
    %cst_349 = arith.constant 0.000000e+00 : f32
    %375 = vector.broadcast %cst_349 : f32 to vector<4x16xf32>
    %376 = arith.maximumf %374, %375 : vector<4x16xf32>
    %c3_350 = arith.constant 3 : index
    %c0_351 = arith.constant 0 : index
    %c0_352 = arith.constant 0 : index
    %377 = vector.load %arg3[%c3_350, %c0_351, %c0_352] : memref<4x4x4xf32, #tpu.memory_space<vmem>>, vector<1x4x4xf32>
    %378 = vector.shape_cast %377 : vector<1x4x4xf32> to vector<4x4xf32>
    %cst_353 = arith.constant dense<0.000000e+00> : vector<4x16xf32>
    %379 = tpu.matmul %378, %349, %cst_353 {dimension_numbers = #tpu.dot_dimension_numbers<[1], [0], [0], [1], [0, 0, 1, 1], [], []>} : vector<4x4xf32>, vector<4x16xf32>, vector<4x16xf32> -> vector<4x16xf32>
    %c3_354 = arith.constant 3 : index
    %c0_355 = arith.constant 0 : index
    %c0_356 = arith.constant 0 : index
    %380 = vector.load %arg4[%c3_354, %c0_355, %c0_356] : memref<4x4x1xf32, #tpu.memory_space<vmem>>, vector<1x4x1xf32>
    %381 = vector.shape_cast %380 : vector<1x4x1xf32> to vector<4x1xf32>
    %382 = vector.broadcast %381 : vector<4x1xf32> to vector<4x16xf32>
    %383 = arith.addf %379, %382 : vector<4x16xf32>
    %cst_357 = arith.constant 0.000000e+00 : f32
    %384 = vector.broadcast %cst_357 : f32 to vector<4x16xf32>
    %385 = arith.maximumf %383, %384 : vector<4x16xf32>
    %c0_358 = arith.constant 0 : index
    %c0_359 = arith.constant 0 : index
    %c0_360 = arith.constant 0 : index
    %386 = vector.load %arg5[%c0_358, %c0_359, %c0_360] : memref<2x16x32xf32, #tpu.memory_space<vmem>>, vector<1x16x32xf32>
    %387 = vector.shape_cast %386 : vector<1x16x32xf32> to vector<16x32xf32>
    %cst_361 = arith.constant dense<0.000000e+00> : vector<4x32xf32>
    %388 = tpu.matmul %358, %387, %cst_361 {dimension_numbers = #tpu.dot_dimension_numbers<[1], [0], [0], [1], [0, 0, 1, 1], [], []>} : vector<4x16xf32>, vector<16x32xf32>, vector<4x32xf32> -> vector<4x32xf32>
    %c1_362 = arith.constant 1 : index
    %c0_363 = arith.constant 0 : index
    %c0_364 = arith.constant 0 : index
    %389 = vector.load %arg5[%c1_362, %c0_363, %c0_364] : memref<2x16x32xf32, #tpu.memory_space<vmem>>, vector<1x16x32xf32>
    %390 = vector.shape_cast %389 : vector<1x16x32xf32> to vector<16x32xf32>
    %cst_365 = arith.constant dense<0.000000e+00> : vector<4x32xf32>
    %391 = tpu.matmul %367, %390, %cst_365 {dimension_numbers = #tpu.dot_dimension_numbers<[1], [0], [0], [1], [0, 0, 1, 1], [], []>} : vector<4x16xf32>, vector<16x32xf32>, vector<4x32xf32> -> vector<4x32xf32>
    %392 = arith.addf %388, %391 : vector<4x32xf32>
    %c0_366 = arith.constant 0 : index
    %c0_367 = arith.constant 0 : index
    %c0_368 = arith.constant 0 : index
    %393 = vector.load %arg5[%c0_366, %c0_367, %c0_368] : memref<2x16x32xf32, #tpu.memory_space<vmem>>, vector<1x16x32xf32>
    %394 = vector.shape_cast %393 : vector<1x16x32xf32> to vector<16x32xf32>
    %cst_369 = arith.constant dense<0.000000e+00> : vector<4x32xf32>
    %395 = tpu.matmul %376, %394, %cst_369 {dimension_numbers = #tpu.dot_dimension_numbers<[1], [0], [0], [1], [0, 0, 1, 1], [], []>} : vector<4x16xf32>, vector<16x32xf32>, vector<4x32xf32> -> vector<4x32xf32>
    %c1_370 = arith.constant 1 : index
    %c0_371 = arith.constant 0 : index
    %c0_372 = arith.constant 0 : index
    %396 = vector.load %arg5[%c1_370, %c0_371, %c0_372] : memref<2x16x32xf32, #tpu.memory_space<vmem>>, vector<1x16x32xf32>
    %397 = vector.shape_cast %396 : vector<1x16x32xf32> to vector<16x32xf32>
    %cst_373 = arith.constant dense<0.000000e+00> : vector<4x32xf32>
    %398 = tpu.matmul %385, %397, %cst_373 {dimension_numbers = #tpu.dot_dimension_numbers<[1], [0], [0], [1], [0, 0, 1, 1], [], []>} : vector<4x16xf32>, vector<16x32xf32>, vector<4x32xf32> -> vector<4x32xf32>
    %399 = arith.addf %395, %398 : vector<4x32xf32>
    %c0_374 = arith.constant 0 : index
    %c0_375 = arith.constant 0 : index
    %c384 = arith.constant 384 : index
    %400 = vector.load %arg6[%c0_374, %c0_375, %c384] : memref<1x4x512xf32, #tpu.memory_space<vmem>>, vector<1x4x32xf32>
    %401 = vector.shape_cast %400 : vector<1x4x32xf32> to vector<4x32xf32>
    %402 = vector.shape_cast %392 : vector<4x32xf32> to vector<1x4x32xf32>
    tpu.vector_store %arg6[%c0_374, %c0_375, %c384], %402 {strides = array<i32>} : memref<1x4x512xf32, #tpu.memory_space<vmem>>, vector<1x4x32xf32>,
    %c0_376 = arith.constant 0 : index
    %c0_377 = arith.constant 0 : index
    %c416 = arith.constant 416 : index
    %403 = vector.load %arg6[%c0_376, %c0_377, %c416] : memref<1x4x512xf32, #tpu.memory_space<vmem>>, vector<1x4x32xf32>
    %404 = vector.shape_cast %403 : vector<1x4x32xf32> to vector<4x32xf32>
    %405 = vector.shape_cast %399 : vector<4x32xf32> to vector<1x4x32xf32>
    tpu.vector_store %arg6[%c0_376, %c0_377, %c416], %405 {strides = array<i32>} : memref<1x4x512xf32, #tpu.memory_space<vmem>>, vector<1x4x32xf32>,
    %c0_378 = arith.constant 0 : index
    %c0_379 = arith.constant 0 : index
    %c112 = arith.constant 112 : index
    %406 = vector.load %arg2[%c0_378, %c0_379, %c112] : memref<1x4x128xf32, #tpu.memory_space<vmem>>, vector<1x4x16xf32>
    %407 = vector.shape_cast %406 : vector<1x4x16xf32> to vector<4x16xf32>
    %c0_380 = arith.constant 0 : index
    %c0_381 = arith.constant 0 : index
    %c0_382 = arith.constant 0 : index
    %408 = vector.load %arg3[%c0_380, %c0_381, %c0_382] : memref<4x4x4xf32, #tpu.memory_space<vmem>>, vector<1x4x4xf32>
    %409 = vector.shape_cast %408 : vector<1x4x4xf32> to vector<4x4xf32>
    %cst_383 = arith.constant dense<0.000000e+00> : vector<4x16xf32>
    %410 = tpu.matmul %409, %407, %cst_383 {dimension_numbers = #tpu.dot_dimension_numbers<[1], [0], [0], [1], [0, 0, 1, 1], [], []>} : vector<4x4xf32>, vector<4x16xf32>, vector<4x16xf32> -> vector<4x16xf32>
    %c0_384 = arith.constant 0 : index
    %c0_385 = arith.constant 0 : index
    %c0_386 = arith.constant 0 : index
    %411 = vector.load %arg4[%c0_384, %c0_385, %c0_386] : memref<4x4x1xf32, #tpu.memory_space<vmem>>, vector<1x4x1xf32>
    %412 = vector.shape_cast %411 : vector<1x4x1xf32> to vector<4x1xf32>
    %413 = vector.broadcast %412 : vector<4x1xf32> to vector<4x16xf32>
    %414 = arith.addf %410, %413 : vector<4x16xf32>
    %cst_387 = arith.constant 0.000000e+00 : f32
    %415 = vector.broadcast %cst_387 : f32 to vector<4x16xf32>
    %416 = arith.maximumf %414, %415 : vector<4x16xf32>
    %c1_388 = arith.constant 1 : index
    %c0_389 = arith.constant 0 : index
    %c0_390 = arith.constant 0 : index
    %417 = vector.load %arg3[%c1_388, %c0_389, %c0_390] : memref<4x4x4xf32, #tpu.memory_space<vmem>>, vector<1x4x4xf32>
    %418 = vector.shape_cast %417 : vector<1x4x4xf32> to vector<4x4xf32>
    %cst_391 = arith.constant dense<0.000000e+00> : vector<4x16xf32>
    %419 = tpu.matmul %418, %407, %cst_391 {dimension_numbers = #tpu.dot_dimension_numbers<[1], [0], [0], [1], [0, 0, 1, 1], [], []>} : vector<4x4xf32>, vector<4x16xf32>, vector<4x16xf32> -> vector<4x16xf32>
    %c1_392 = arith.constant 1 : index
    %c0_393 = arith.constant 0 : index
    %c0_394 = arith.constant 0 : index
    %420 = vector.load %arg4[%c1_392, %c0_393, %c0_394] : memref<4x4x1xf32, #tpu.memory_space<vmem>>, vector<1x4x1xf32>
    %421 = vector.shape_cast %420 : vector<1x4x1xf32> to vector<4x1xf32>
    %422 = vector.broadcast %421 : vector<4x1xf32> to vector<4x16xf32>
    %423 = arith.addf %419, %422 : vector<4x16xf32>
    %cst_395 = arith.constant 0.000000e+00 : f32
    %424 = vector.broadcast %cst_395 : f32 to vector<4x16xf32>
    %425 = arith.maximumf %423, %424 : vector<4x16xf32>
    %c2_396 = arith.constant 2 : index
    %c0_397 = arith.constant 0 : index
    %c0_398 = arith.constant 0 : index
    %426 = vector.load %arg3[%c2_396, %c0_397, %c0_398] : memref<4x4x4xf32, #tpu.memory_space<vmem>>, vector<1x4x4xf32>
    %427 = vector.shape_cast %426 : vector<1x4x4xf32> to vector<4x4xf32>
    %cst_399 = arith.constant dense<0.000000e+00> : vector<4x16xf32>
    %428 = tpu.matmul %427, %407, %cst_399 {dimension_numbers = #tpu.dot_dimension_numbers<[1], [0], [0], [1], [0, 0, 1, 1], [], []>} : vector<4x4xf32>, vector<4x16xf32>, vector<4x16xf32> -> vector<4x16xf32>
    %c2_400 = arith.constant 2 : index
    %c0_401 = arith.constant 0 : index
    %c0_402 = arith.constant 0 : index
    %429 = vector.load %arg4[%c2_400, %c0_401, %c0_402] : memref<4x4x1xf32, #tpu.memory_space<vmem>>, vector<1x4x1xf32>
    %430 = vector.shape_cast %429 : vector<1x4x1xf32> to vector<4x1xf32>
    %431 = vector.broadcast %430 : vector<4x1xf32> to vector<4x16xf32>
    %432 = arith.addf %428, %431 : vector<4x16xf32>
    %cst_403 = arith.constant 0.000000e+00 : f32
    %433 = vector.broadcast %cst_403 : f32 to vector<4x16xf32>
    %434 = arith.maximumf %432, %433 : vector<4x16xf32>
    %c3_404 = arith.constant 3 : index
    %c0_405 = arith.constant 0 : index
    %c0_406 = arith.constant 0 : index
    %435 = vector.load %arg3[%c3_404, %c0_405, %c0_406] : memref<4x4x4xf32, #tpu.memory_space<vmem>>, vector<1x4x4xf32>
    %436 = vector.shape_cast %435 : vector<1x4x4xf32> to vector<4x4xf32>
    %cst_407 = arith.constant dense<0.000000e+00> : vector<4x16xf32>
    %437 = tpu.matmul %436, %407, %cst_407 {dimension_numbers = #tpu.dot_dimension_numbers<[1], [0], [0], [1], [0, 0, 1, 1], [], []>} : vector<4x4xf32>, vector<4x16xf32>, vector<4x16xf32> -> vector<4x16xf32>
    %c3_408 = arith.constant 3 : index
    %c0_409 = arith.constant 0 : index
    %c0_410 = arith.constant 0 : index
    %438 = vector.load %arg4[%c3_408, %c0_409, %c0_410] : memref<4x4x1xf32, #tpu.memory_space<vmem>>, vector<1x4x1xf32>
    %439 = vector.shape_cast %438 : vector<1x4x1xf32> to vector<4x1xf32>
    %440 = vector.broadcast %439 : vector<4x1xf32> to vector<4x16xf32>
    %441 = arith.addf %437, %440 : vector<4x16xf32>
    %cst_411 = arith.constant 0.000000e+00 : f32
    %442 = vector.broadcast %cst_411 : f32 to vector<4x16xf32>
    %443 = arith.maximumf %441, %442 : vector<4x16xf32>
    %c0_412 = arith.constant 0 : index
    %c0_413 = arith.constant 0 : index
    %c0_414 = arith.constant 0 : index
    %444 = vector.load %arg5[%c0_412, %c0_413, %c0_414] : memref<2x16x32xf32, #tpu.memory_space<vmem>>, vector<1x16x32xf32>
    %445 = vector.shape_cast %444 : vector<1x16x32xf32> to vector<16x32xf32>
    %cst_415 = arith.constant dense<0.000000e+00> : vector<4x32xf32>
    %446 = tpu.matmul %416, %445, %cst_415 {dimension_numbers = #tpu.dot_dimension_numbers<[1], [0], [0], [1], [0, 0, 1, 1], [], []>} : vector<4x16xf32>, vector<16x32xf32>, vector<4x32xf32> -> vector<4x32xf32>
    %c1_416 = arith.constant 1 : index
    %c0_417 = arith.constant 0 : index
    %c0_418 = arith.constant 0 : index
    %447 = vector.load %arg5[%c1_416, %c0_417, %c0_418] : memref<2x16x32xf32, #tpu.memory_space<vmem>>, vector<1x16x32xf32>
    %448 = vector.shape_cast %447 : vector<1x16x32xf32> to vector<16x32xf32>
    %cst_419 = arith.constant dense<0.000000e+00> : vector<4x32xf32>
    %449 = tpu.matmul %425, %448, %cst_419 {dimension_numbers = #tpu.dot_dimension_numbers<[1], [0], [0], [1], [0, 0, 1, 1], [], []>} : vector<4x16xf32>, vector<16x32xf32>, vector<4x32xf32> -> vector<4x32xf32>
    %450 = arith.addf %446, %449 : vector<4x32xf32>
    %c0_420 = arith.constant 0 : index
    %c0_421 = arith.constant 0 : index
    %c0_422 = arith.constant 0 : index
    %451 = vector.load %arg5[%c0_420, %c0_421, %c0_422] : memref<2x16x32xf32, #tpu.memory_space<vmem>>, vector<1x16x32xf32>
    %452 = vector.shape_cast %451 : vector<1x16x32xf32> to vector<16x32xf32>
    %cst_423 = arith.constant dense<0.000000e+00> : vector<4x32xf32>
    %453 = tpu.matmul %434, %452, %cst_423 {dimension_numbers = #tpu.dot_dimension_numbers<[1], [0], [0], [1], [0, 0, 1, 1], [], []>} : vector<4x16xf32>, vector<16x32xf32>, vector<4x32xf32> -> vector<4x32xf32>
    %c1_424 = arith.constant 1 : index
    %c0_425 = arith.constant 0 : index
    %c0_426 = arith.constant 0 : index
    %454 = vector.load %arg5[%c1_424, %c0_425, %c0_426] : memref<2x16x32xf32, #tpu.memory_space<vmem>>, vector<1x16x32xf32>
    %455 = vector.shape_cast %454 : vector<1x16x32xf32> to vector<16x32xf32>
    %cst_427 = arith.constant dense<0.000000e+00> : vector<4x32xf32>
    %456 = tpu.matmul %443, %455, %cst_427 {dimension_numbers = #tpu.dot_dimension_numbers<[1], [0], [0], [1], [0, 0, 1, 1], [], []>} : vector<4x16xf32>, vector<16x32xf32>, vector<4x32xf32> -> vector<4x32xf32>
    %457 = arith.addf %453, %456 : vector<4x32xf32>
    %c0_428 = arith.constant 0 : index
    %c0_429 = arith.constant 0 : index
    %c448 = arith.constant 448 : index
    %458 = vector.load %arg6[%c0_428, %c0_429, %c448] : memref<1x4x512xf32, #tpu.memory_space<vmem>>, vector<1x4x32xf32>
    %459 = vector.shape_cast %458 : vector<1x4x32xf32> to vector<4x32xf32>
    %460 = vector.shape_cast %450 : vector<4x32xf32> to vector<1x4x32xf32>
    tpu.vector_store %arg6[%c0_428, %c0_429, %c448], %460 {strides = array<i32>} : memref<1x4x512xf32, #tpu.memory_space<vmem>>, vector<1x4x32xf32>,
    %c0_430 = arith.constant 0 : index
    %c0_431 = arith.constant 0 : index
    %c480 = arith.constant 480 : index
    %461 = vector.load %arg6[%c0_430, %c0_431, %c480] : memref<1x4x512xf32, #tpu.memory_space<vmem>>, vector<1x4x32xf32>
    %462 = vector.shape_cast %461 : vector<1x4x32xf32> to vector<4x32xf32>
    %463 = vector.shape_cast %457 : vector<4x32xf32> to vector<1x4x32xf32>
    tpu.vector_store %arg6[%c0_430, %c0_431, %c480], %463 {strides = array<i32>} : memref<1x4x512xf32, #tpu.memory_space<vmem>>, vector<1x4x32xf32>,
    return
  }
  func.func @transform_0(%arg0: i32, %arg1: i32) -> (i32, i32, i32) {
    %c0_i32 = arith.constant 0 : i32
    %c0_i32_0 = arith.constant 0 : i32
    return %arg0, %c0_i32, %arg1 : i32, i32, i32
  }
  func.func @transform_1(%arg0: i32, %arg1: i32) -> (i32, i32, i32) {
    %c0_i32 = arith.constant 0 : i32
    %c0_i32_0 = arith.constant 0 : i32
    %c0_i32_1 = arith.constant 0 : i32
    %c0_i32_2 = arith.constant 0 : i32
    return %c0_i32, %c0_i32_0, %c0_i32_1 : i32, i32, i32
  }
  func.func @transform_2(%arg0: i32, %arg1: i32) -> (i32, i32, i32) {
    %c0_i32 = arith.constant 0 : i32
    %c0_i32_0 = arith.constant 0 : i32
    %c0_i32_1 = arith.constant 0 : i32
    %c0_i32_2 = arith.constant 0 : i32
    return %c0_i32, %c0_i32_0, %c0_i32_1 : i32, i32, i32
  }
  func.func @transform_3(%arg0: i32, %arg1: i32) -> (i32, i32, i32) {
    %c0_i32 = arith.constant 0 : i32
    %c0_i32_0 = arith.constant 0 : i32
    %c0_i32_1 = arith.constant 0 : i32
    %c0_i32_2 = arith.constant 0 : i32
    return %c0_i32, %c0_i32_0, %c0_i32_1 : i32, i32, i32
  }
  func.func @transform_4(%arg0: i32, %arg1: i32) -> (i32, i32, i32) {
    %c0_i32 = arith.constant 0 : i32
    %c0_i32_0 = arith.constant 0 : i32
    return %arg0, %c0_i32, %arg1 : i32, i32, i32
  }
}

</mosaic_0001>

<llo_original>
// kernel: tpu_custom_call.1
$region0: #{tpu_custom_call.1}
  #allocation0 [shape = 'u32[]', space=smem, size = 0x4, offset = 0x4, fixed_abs, tag = 'smem constant byte address 0x4 - core index']
  #allocation1 [shape = 'u32[144,128]{1,0:T(1,128)}', space=vmem, size = 0x12000, scoped, tag = 'internal scratch']
  %s0 = inlined_call_operand.vmem [shape: f32[2,4,256], index: 0, kind: input, shape index: {}]
  %s1 = inlined_call_operand.hbm [shape: f32[4,4,4], index: 1, kind: input, shape index: {}]
  %s2 = inlined_call_operand.vmem [shape: f32[4,4,1], index: 2, kind: input, shape index: {}]
  %s3 = inlined_call_operand.hbm [shape: f32[2,16,32], index: 3, kind: input, shape index: {}]
  %s4 = inlined_call_operand.hbm [shape: f32[2,4,1024], index: 4, kind: output, shape index: {}]
  %s5 = sld [smem:[#allocation0]]
  $region57: #{tpu_custom_call.1} parent=0
    _
  %s7 = ssub.s32 1, %s5
  %s8 = scalar_select 0, %s7, %s5
  $region1: #{tpu_custom_call.1} parent=0
    #allocation2 [shape = 'u8[8192]{0}', space=vmem, size = 0x2000, scoped, tag = 'input window, operand 1, single buffered']
    #allocation3 [shape = 's32[2]{0}', space=sflag, size = 0x8, scoped, tag = 'scoped memory for tpu_custom_call.1']
    #allocation4 [shape = 's32[2]{0}', space=sflag, size = 0x8, scoped, tag = 'scoped memory for tpu_custom_call.1']
    #allocation5 [shape = 'u8[16384]{0}', space=vmem, size = 0x4000, scoped, tag = 'input window, operand 3, single buffered']
    #allocation6 [shape = 's32[1]{0}', space=sflag, size = 0x4, scoped, tag = 'scoped memory for tpu_custom_call.1']
    #allocation7 [shape = 'u8[16384]{0}', space=vmem, size = 0x4000, scoped, tag = 'output window, operand 0']
    %9 = vsyncpa [#allocation3], 0
    %10 = vsyncpa [#allocation6], 0
    %11 = vsyncpa [#allocation4], 0
    %s12 = scalar_lea.sflag [#allocation4], 1
    %13 = vsyncpa %s12, 0
    loop: start=0, step=1, limit=6
    $region2: #{tpu_custom_call.1} parent=1 // loop_pre_header
      _
    $region3: #{tpu_custom_call.1} parent=1 // loop_header
      %s15 = sphi 0, %s19
      %p16 = scmp.ge.s32.totalorder %s15, 6
      %s22 = sphi 0, %s34
      %s23 = sphi 0, %s30
      %s24 = sphi 0, %s22
      %s25 = sphi 0, %s23
      %s26 = sphi 0, %s24
      %s27 = sphi 0, %s25
      %s39 = sphi 0, %s41
      %s42 = sphi 0, %s39
      %s43 = sphi 0, %s42
      %s59 = sphi 0, %s43
      %s63 = sphi 0, %s63
      %s65 = sphi 0, %s63
      %s66 = sphi 0, %s65
      %s80 = sphi 0, %s66
      %s84 = sphi 0, %s84
      %s86 = sphi 0, %s84
      %s87 = sphi 0, %s86
      %s101 = sphi 0, %s87
      %s105 = sphi 0, %s105
      %s107 = sphi 0, %s105
      %s108 = sphi 0, %s107
      %s122 = sphi 0, %s108
      %s130 = sphi 0, %s132
      %s133 = sphi 0, %s130
      %s134 = sphi 0, %s133
      %s150 = sphi 0, %s134
    $region4: #{tpu_custom_call.1} parent=1 // loop_header_branch
      %18 = sbr.rel (%p16) target = $region8
    $region5: #{tpu_custom_call.1} parent=1 // loop_body
      %s20 = ssub.s32 %s15, 1
      %s21 = ssub.s32 %s15, 2
      %s28 = sadd.s32 1, %s23
      %p29 = scmp.ge.s32.totalorder %s28, 2
      %s30 = scalar_select %p29, 0, %s28
      %s31 = sadd.s32 1, %s22
      %s32 = scalar_select %p29, %s31, %s22
      %p33 = scmp.ge.s32.totalorder %s32, 2
      %s34 = scalar_select %p33, 0, %s32
      %s35 = ssub.s32 %s22, %s34
      %s36 = ssub.s32 %s23, %s30
      %s37 = sor.u32 %s35, %s36
      %p38 = scmp.eq.s32.totalorder %s37, 0
      %s40 = sadd.s32 %s39, 1
      %s41 = scalar_select %p38, %s39, %s40
      %p44 = pneg %p38
      %p45 = scmp.eq.s32.totalorder %s15, 3
      %p46 = por %p44, %p45
      %p47 = scmp.ne.s32.totalorder %s39, %s42
      %p48 = scmp.eq.s32.totalorder %s15, 0
      %p49 = por %p47, %p48
      %p50 = scmp.ne.s32.totalorder %s39, %s42
      %p51 = scmp.eq.s32.totalorder %s20, 3
      %p52 = por %p50, %p51
      %p53 = scmp.ne.s32.totalorder %s42, %s43
      %p54 = scmp.eq.s32.totalorder %s20, 0
      %p55 = por %p53, %p54
      %p56 = scmp.ne.s32.totalorder %s42, %s43
      %p57 = scmp.eq.s32.totalorder %s21, 3
      %p58 = por %p56, %p57
      %p60 = scmp.ne.s32.totalorder %s43, %s59
      %p61 = scmp.eq.s32.totalorder %s21, 0
      %p62 = por %p60, %p61
      %s64 = sadd.s32 %s63, 1
      %p67 = scmp.eq.s32.totalorder %s15, 3
      %p68 = scmp.ne.s32.totalorder %s63, %s65
      %p69 = scmp.eq.s32.totalorder %s15, 0
      %p70 = por %p68, %p69
      %p71 = scmp.ne.s32.totalorder %s63, %s65
      %p72 = scmp.eq.s32.totalorder %s20, 3
      %p73 = por %p71, %p72
      %p74 = scmp.ne.s32.totalorder %s65, %s66
      %p75 = scmp.eq.s32.totalorder %s20, 0
      %p76 = por %p74, %p75
      %p77 = scmp.ne.s32.totalorder %s65, %s66
      %p78 = scmp.eq.s32.totalorder %s21, 3
      %p79 = por %p77, %p78
      %p81 = scmp.ne.s32.totalorder %s66, %s80
      %p82 = scmp.eq.s32.totalorder %s21, 0
      %p83 = por %p81, %p82
      %s85 = sadd.s32 %s84, 1
      %p88 = scmp.eq.s32.totalorder %s15, 3
      %p89 = scmp.ne.s32.totalorder %s84, %s86
      %p90 = scmp.eq.s32.totalorder %s15, 0
      %p91 = por %p89, %p90
      %p92 = scmp.ne.s32.totalorder %s84, %s86
      %p93 = scmp.eq.s32.totalorder %s20, 3
      %p94 = por %p92, %p93
      %p95 = scmp.ne.s32.totalorder %s86, %s87
      %p96 = scmp.eq.s32.totalorder %s20, 0
      %p97 = por %p95, %p96
      %p98 = scmp.ne.s32.totalorder %s86, %s87
      %p99 = scmp.eq.s32.totalorder %s21, 3
      %p100 = por %p98, %p99
      %p102 = scmp.ne.s32.totalorder %s87, %s101
      %p103 = scmp.eq.s32.totalorder %s21, 0
      %p104 = por %p102, %p103
      %s106 = sadd.s32 %s105, 1
      %p109 = scmp.eq.s32.totalorder %s15, 3
      %p110 = scmp.ne.s32.totalorder %s105, %s107
      %p111 = scmp.eq.s32.totalorder %s15, 0
      %p112 = por %p110, %p111
      %p113 = scmp.ne.s32.totalorder %s105, %s107
      %p114 = scmp.eq.s32.totalorder %s20, 3
      %p115 = por %p113, %p114
      %p116 = scmp.ne.s32.totalorder %s107, %s108
      %p117 = scmp.eq.s32.totalorder %s20, 0
      %p118 = por %p116, %p117
      %p119 = scmp.ne.s32.totalorder %s107, %s108
      %p120 = scmp.eq.s32.totalorder %s21, 3
      %p121 = por %p119, %p120
      %p123 = scmp.ne.s32.totalorder %s108, %s122
      %p124 = scmp.eq.s32.totalorder %s21, 0
      %p125 = por %p123, %p124
      %s126 = ssub.s32 %s22, %s34
      %s127 = ssub.s32 %s23, %s30
      %s128 = sor.u32 %s126, %s127
      %p129 = scmp.eq.s32.totalorder %s128, 0
      %s131 = sadd.s32 %s130, 1
      %s132 = scalar_select %p129, %s130, %s131
      %p135 = pneg %p129
      %p136 = scmp.eq.s32.totalorder %s15, 3
      %p137 = por %p135, %p136
      %p138 = scmp.ne.s32.totalorder %s130, %s133
      %p139 = scmp.eq.s32.totalorder %s15, 0
      %p140 = por %p138, %p139
      %p141 = scmp.ne.s32.totalorder %s130, %s133
      %p142 = scmp.eq.s32.totalorder %s20, 3
      %p143 = por %p141, %p142
      %p144 = scmp.ne.s32.totalorder %s133, %s134
      %p145 = scmp.eq.s32.totalorder %s20, 0
      %p146 = por %p144, %p145
      %p147 = scmp.ne.s32.totalorder %s133, %s134
      %p148 = scmp.eq.s32.totalorder %s21, 3
      %p149 = por %p147, %p148
      %p151 = scmp.ne.s32.totalorder %s134, %s150
      %p152 = scmp.eq.s32.totalorder %s21, 0
      %p153 = por %p151, %p152
      %p154 = scmp.le.s32.totalorder 1, %s15
      %p155 = scmp.lt.s32.totalorder %s15, 5
      %p156 = pnand %p154, %p155
      %p157 = pneg %p156
      // Predicated region
      $region9: #{tpu_custom_call.1} parent=5 // pred_check
        _
      $region10: #{tpu_custom_call.1} parent=5 // pred_check_branch
        %159 = sbr.rel (%p156) target = $region12
      $region11: #{tpu_custom_call.1} parent=5 // pred_region
        %s160 = ssub.s32 %s15, 1
        // Predicated region
        $region13: #{tpu_custom_call.1} parent=11 // pred_check
          %p161 = pneg %p76
        $region14: #{tpu_custom_call.1} parent=11 // pred_check_branch
          %163 = sbr.rel (%p161) target = $region16
        $region15: #{tpu_custom_call.1} parent=11 // pred_region
          %s165 = ssub.s32 256, 256
          %166 = vsyncadd [#allocation3], %s165
          %s167 = sshll.u32 [#allocation2], 4
          %s168 = int_to_ptr.vmem [resolvable:$true] %s167
          %173 = dma.hbm_to_vmem [thread:$0]  %s1, 256, %s168, [#allocation3], 64, 64, 4
        $region16: #{tpu_custom_call.1} parent=11 // pred_fallthru
          _
        // Predicated region
        $region17: #{tpu_custom_call.1} parent=11 // pred_check
          %p174 = pneg %p97
        $region18: #{tpu_custom_call.1} parent=11 // pred_check_branch
          %176 = sbr.rel (%p174) target = $region20
        $region19: #{tpu_custom_call.1} parent=11 // pred_region
          _
        $region20: #{tpu_custom_call.1} parent=11 // pred_fallthru
          _
        // Predicated region
        $region21: #{tpu_custom_call.1} parent=11 // pred_check
          %p177 = pneg %p118
        $region22: #{tpu_custom_call.1} parent=11 // pred_check_branch
          %179 = sbr.rel (%p177) target = $region24
        $region23: #{tpu_custom_call.1} parent=11 // pred_region
          %s181 = ssub.s32 512, 512
          %182 = vsyncadd [#allocation6], %s181
          %s183 = sshll.u32 [#allocation5], 4
          %s184 = int_to_ptr.vmem [resolvable:$true] %s183
          %189 = dma.hbm_to_vmem [thread:$0]  %s3, 512, %s184, [#allocation6], 128, 128, 8
        $region24: #{tpu_custom_call.1} parent=11 // pred_fallthru
          _
      $region12: #{tpu_custom_call.1} parent=5 // pred_fallthru
        _
      %p190 = scmp.lt.s32.totalorder %s15, 4
      // Predicated region
      $region25: #{tpu_custom_call.1} parent=5 // pred_check
        %p191 = pneg %p190
      $region26: #{tpu_custom_call.1} parent=5 // pred_check_branch
        %193 = sbr.rel (%p191) target = $region28
      $region27: #{tpu_custom_call.1} parent=5 // pred_region
        // Predicated region
        $region29: #{tpu_custom_call.1} parent=27 // pred_check
          %p194 = pneg %p49
        $region30: #{tpu_custom_call.1} parent=27 // pred_check_branch
          %196 = sbr.rel (%p194) target = $region32
        $region31: #{tpu_custom_call.1} parent=27 // pred_region
          %p197 = scmp.lt.s32.totalorder %s22, 1
          %s198 = scalar_select %p197, %s22, 1
          %p199 = scmp.lt.s32.totalorder %s23, 1
          %s200 = scalar_select %p199, %s23, 1
          %s201 = smul.addr %s198, 2
          %s202 = sadd.s32 %s200, %s201
          %s203 = smul.addr %s202, 4
          %s204 = scalar_lea.vmem %s0, %s203
        $region32: #{tpu_custom_call.1} parent=27 // pred_fallthru
          _
      $region28: #{tpu_custom_call.1} parent=5 // pred_fallthru
        _
      %p205 = scmp.le.s32.totalorder 1, %s15
      %p206 = scmp.lt.s32.totalorder %s15, 5
      %p207 = pnand %p205, %p206
      %p208 = pneg %p207
      // Predicated region
      $region33: #{tpu_custom_call.1} parent=5 // pred_check
        _
      $region34: #{tpu_custom_call.1} parent=5 // pred_check_branch
        %210 = sbr.rel (%p207) target = $region36
      $region35: #{tpu_custom_call.1} parent=5 // pred_region
        %s211 = ssub.s32 %s15, 1
        // Predicated region
        $region37: #{tpu_custom_call.1} parent=35 // pred_check
          %p212 = pneg %p76
        $region38: #{tpu_custom_call.1} parent=35 // pred_check_branch
          %214 = sbr.rel (%p212) target = $region40
        $region39: #{tpu_custom_call.1} parent=35 // pred_region
          %215 = dma.done [#allocation3], 256
        $region40: #{tpu_custom_call.1} parent=35 // pred_fallthru
          _
        // Predicated region
        $region41: #{tpu_custom_call.1} parent=35 // pred_check
          %p216 = pneg %p118
        $region42: #{tpu_custom_call.1} parent=35 // pred_check_branch
          %218 = sbr.rel (%p216) target = $region44
        $region43: #{tpu_custom_call.1} parent=35 // pred_region
          %219 = dma.done [#allocation6], 512
        $region44: #{tpu_custom_call.1} parent=35 // pred_fallthru
          _
        %p220 = scmp.lt.s32.totalorder %s24, 1
        %s221 = scalar_select %p220, %s24, 1
        %p222 = scmp.lt.s32.totalorder %s25, 1
        %s223 = scalar_select %p222, %s25, 1
        %s224 = smul.addr %s221, 2
        %s225 = sadd.s32 %s223, %s224
        %s226 = smul.addr %s225, 4
        %s227 = scalar_lea.vmem %s0, %s226
        %p228 = pneg %p55
        %p229 = pneg %p52
        %p230 = pneg %p76
        %p231 = pneg %p73
        %p232 = pneg %p97
        %p233 = pneg %p94
        %p234 = pneg %p118
        %p235 = pneg %p115
        %p236 = pneg %p146
        %p237 = pneg %p143
        %s238 = sand.u32 %s133, 1
        %s239 = scalar_lea.sflag [#allocation4], %s238
        %s240 = sand.u32 %s133, 1
        %s241 = smul.addr %s240, 16
        %s242 = scalar_lea.vmem [#allocation7], %s241
        %p243 = scmp.lt.s32.totalorder %s24, 1
        %s244 = scalar_select %p243, %s24, 1
        %p245 = scmp.lt.s32.totalorder %s25, 1
        %s246 = scalar_select %p245, %s25, 1
        %s247 = smul.addr %s244, 2
        %s248 = sadd.s32 %s246, %s247
        %s249 = smul.addr %s248, 4
        %s250 = scalar_lea.vmem %s0, %s249
        %s251 = smul.u32 4, %s25
        %v252 = vld [vmem:[%s250] sm:$0xf]
        %v253 = vld [vmem:[#allocation2] sm:$0xf]
        %v254 = vld [vmem:[%s2] sm:$0xf]
        %256 = vset.pattern.permute.xlu0 0
        %257 = vperm.xlu0 %256, %v254
        %v258 = vpop.permute.xlu0 %257
        %vm260 = vcmask 31744
        %v262 = vsel %vm260, %v253, 0
        %vm264 = vcmask 1043456
        %v266 = vsel %vm264, %v252, 0
        %268 = vmatprep.subr.mxu0 0.0
        %269 = vmatpush1.msra.mxu0 %v266
        %270 = vmatprep.subr.mxu0 0.0
        %271 = vmatpush1.msra.mxu0 0.0
        %272 = vmatprep.subr.mxu0 0.0
        %273 = vmatpush1.msra.mxu0 0.0
        %274 = vmatprep.subr.mxu0 0.0
        %275 = vmatpush1.msra.mxu0 0.0
        %276 = vmatprep.subr.mxu0 0.0
        %277 = vmatpush1.msra.mxu0 0.0
        %278 = vmatprep.subr.mxu0 0.0
        %279 = vmatpush1.msra.mxu0 0.0
        %280 = vmatprep.subr.mxu0 0.0
        %281 = vmatpush1.msra.mxu0 0.0
        %282 = vmatprep.subr.mxu0 0.0
        %283 = vmatpush1.msra.mxu0 0.0
        %284 = vmatprep.subr.mxu0 0.0
        %285 = vmatpush1.msra.mxu0 0.0
        %286 = vmatprep.subr.mxu0 0.0
        %287 = vmatpush1.msra.mxu0 0.0
        %288 = vmatprep.subr.mxu0 0.0
        %289 = vmatpush1.msra.mxu0 0.0
        %290 = vmatprep.subr.mxu0 0.0
        %291 = vmatpush1.msra.mxu0 0.0
        %292 = vmatprep.subr.mxu0 0.0
        %293 = vmatpush1.msra.mxu0 0.0
        %294 = vmatprep.subr.mxu0 0.0
        %295 = vmatpush1.msra.mxu0 0.0
        %296 = vmatprep.subr.mxu0 0.0
        %297 = vmatpush1.msra.mxu0 0.0
        %298 = vmatprep.subr.mxu0 0.0
        %299 = vmatpush1.msra.mxu0 0.0
        %300 = vmatprep.subr.mxu0 0.0
        %301 = vmatpush1.msra.mxu0 0.0
        %302 = vmatprep.subr.mxu0 0.0
        %303 = vmatpush1.msra.mxu0 0.0
        %304 = vmatprep.subr.mxu0 0.0
        %305 = vmatpush1.msra.mxu0 0.0
        %306 = vmatprep.subr.mxu0 0.0
        %307 = vmatpush1.msra.mxu0 0.0
        %308 = vmatprep.subr.mxu0 0.0
        %309 = vmatpush1.msra.mxu0 0.0
        %310 = vmatprep.subr.mxu0 0.0
        %311 = vmatpush1.msra.mxu0 0.0
        %312 = vmatprep.subr.mxu0 0.0
        %313 = vmatpush1.msra.mxu0 0.0
        %314 = vmatprep.subr.mxu0 0.0
        %315 = vmatpush1.msra.mxu0 0.0
        %316 = vmatprep.subr.mxu0 0.0
        %317 = vmatpush1.msra.mxu0 0.0
        %318 = vmatprep.subr.mxu0 0.0
        %319 = vmatpush1.msra.mxu0 0.0
        %320 = vmatprep.subr.mxu0 0.0
        %321 = vmatpush1.msra.mxu0 0.0
        %322 = vmatprep.subr.mxu0 0.0
        %323 = vmatpush1.msra.mxu0 0.0
        %324 = vmatprep.subr.mxu0 0.0
        %325 = vmatpush1.msra.mxu0 0.0
        %326 = vmatprep.subr.mxu0 0.0
        %327 = vmatpush1.msra.mxu0 0.0
        %328 = vmatprep.subr.mxu0 0.0
        %329 = vmatpush1.msra.mxu0 0.0
        %330 = vmatprep.subr.mxu0 0.0
        %331 = vmatpush1.msra.mxu0 0.0
        %332 = vmatprep.mubr.f32.mxu0 0.0
        %333 = vmatmul.mubr.f32.gmra.mrb[0].mxu0 %v262
        %v334 = vpop.f32.mrb[0].mxu0
        %v335 = vadd.f32 %v258, %v334
        %v336 = vpop.f32.mrb[0].mxu0
        %337 = vdwg.mxu0
        %v338 = vmax.f32 %v335, 0.0
        %s339 = scalar_lea.vmem [#allocation2], 4
        %v340 = vld [vmem:[%s339] sm:$0xf]
        %s341 = scalar_lea.vmem %s2, 4
        %v342 = vld [vmem:[%s341] sm:$0xf]
        %344 = vset.pattern.permute.xlu0 0
        %345 = vperm.xlu0 %344, %v342
        %v346 = vpop.permute.xlu0 %345
        %v349 = vsel %vm260, %v340, 0
        %351 = vmatprep.subr.mxu0 0.0
        %352 = vmatpush1.msra.mxu0 %v266
        %353 = vmatprep.subr.mxu0 0.0
        %354 = vmatpush1.msra.mxu0 0.0
        %355 = vmatprep.subr.mxu0 0.0
        %356 = vmatpush1.msra.mxu0 0.0
        %357 = vmatprep.subr.mxu0 0.0
        %358 = vmatpush1.msra.mxu0 0.0
        %359 = vmatprep.subr.mxu0 0.0
        %360 = vmatpush1.msra.mxu0 0.0
        %361 = vmatprep.subr.mxu0 0.0
        %362 = vmatpush1.msra.mxu0 0.0
        %363 = vmatprep.subr.mxu0 0.0
        %364 = vmatpush1.msra.mxu0 0.0
        %365 = vmatprep.subr.mxu0 0.0
        %366 = vmatpush1.msra.mxu0 0.0
        %367 = vmatprep.subr.mxu0 0.0
        %368 = vmatpush1.msra.mxu0 0.0
        %369 = vmatprep.subr.mxu0 0.0
        %370 = vmatpush1.msra.mxu0 0.0
        %371 = vmatprep.subr.mxu0 0.0
        %372 = vmatpush1.msra.mxu0 0.0
        %373 = vmatprep.subr.mxu0 0.0
        %374 = vmatpush1.msra.mxu0 0.0
        %375 = vmatprep.subr.mxu0 0.0
        %376 = vmatpush1.msra.mxu0 0.0
        %377 = vmatprep.subr.mxu0 0.0
        %378 = vmatpush1.msra.mxu0 0.0
        %379 = vmatprep.subr.mxu0 0.0
        %380 = vmatpush1.msra.mxu0 0.0
        %381 = vmatprep.subr.mxu0 0.0
        %382 = vmatpush1.msra.mxu0 0.0
        %383 = vmatprep.subr.mxu0 0.0
        %384 = vmatpush1.msra.mxu0 0.0
        %385 = vmatprep.subr.mxu0 0.0
        %386 = vmatpush1.msra.mxu0 0.0
        %387 = vmatprep.subr.mxu0 0.0
        %388 = vmatpush1.msra.mxu0 0.0
        %389 = vmatprep.subr.mxu0 0.0
        %390 = vmatpush1.msra.mxu0 0.0
        %391 = vmatprep.subr.mxu0 0.0
        %392 = vmatpush1.msra.mxu0 0.0
        %393 = vmatprep.subr.mxu0 0.0
        %394 = vmatpush1.msra.mxu0 0.0
        %395 = vmatprep.subr.mxu0 0.0
        %396 = vmatpush1.msra.mxu0 0.0
        %397 = vmatprep.subr.mxu0 0.0
        %398 = vmatpush1.msra.mxu0 0.0
        %399 = vmatprep.subr.mxu0 0.0
        %400 = vmatpush1.msra.mxu0 0.0
        %401 = vmatprep.subr.mxu0 0.0
        %402 = vmatpush1.msra.mxu0 0.0
        %403 = vmatprep.subr.mxu0 0.0
        %404 = vmatpush1.msra.mxu0 0.0
        %405 = vmatprep.subr.mxu0 0.0
        %406 = vmatpush1.msra.mxu0 0.0
        %407 = vmatprep.subr.mxu0 0.0
        %408 = vmatpush1.msra.mxu0 0.0
        %409 = vmatprep.subr.mxu0 0.0
        %410 = vmatpush1.msra.mxu0 0.0
        %411 = vmatprep.subr.mxu0 0.0
        %412 = vmatpush1.msra.mxu0 0.0
        %413 = vmatprep.subr.mxu0 0.0
        %414 = vmatpush1.msra.mxu0 0.0
        %415 = vmatprep.mubr.f32.mxu0 0.0
        %416 = vmatmul.mubr.f32.gmra.mrb[0].mxu0 %v349
        %v417 = vpop.f32.mrb[0].mxu0
        %v418 = vadd.f32 %v346, %v417
        %v419 = vpop.f32.mrb[0].mxu0
        %420 = vdwg.mxu0
        %v421 = vmax.f32 %v418, 0.0
        %s422 = scalar_lea.vmem [#allocation2], 8
        %v423 = vld [vmem:[%s422] sm:$0xf]
        %s424 = scalar_lea.vmem %s2, 8
        %v425 = vld [vmem:[%s424] sm:$0xf]
        %427 = vset.pattern.permute.xlu0 0
        %428 = vperm.xlu0 %427, %v425
        %v429 = vpop.permute.xlu0 %428
        %v432 = vsel %vm260, %v423, 0
        %434 = vmatprep.subr.mxu0 0.0
        %435 = vmatpush1.msra.mxu0 %v266
        %436 = vmatprep.subr.mxu0 0.0
        %437 = vmatpush1.msra.mxu0 0.0
        %438 = vmatprep.subr.mxu0 0.0
        %439 = vmatpush1.msra.mxu0 0.0
        %440 = vmatprep.subr.mxu0 0.0
        %441 = vmatpush1.msra.mxu0 0.0
        %442 = vmatprep.subr.mxu0 0.0
        %443 = vmatpush1.msra.mxu0 0.0
        %444 = vmatprep.subr.mxu0 0.0
        %445 = vmatpush1.msra.mxu0 0.0
        %446 = vmatprep.subr.mxu0 0.0
        %447 = vmatpush1.msra.mxu0 0.0
        %448 = vmatprep.subr.mxu0 0.0
        %449 = vmatpush1.msra.mxu0 0.0
        %450 = vmatprep.subr.mxu0 0.0
        %451 = vmatpush1.msra.mxu0 0.0
        %452 = vmatprep.subr.mxu0 0.0
        %453 = vmatpush1.msra.mxu0 0.0
        %454 = vmatprep.subr.mxu0 0.0
        %455 = vmatpush1.msra.mxu0 0.0
        %456 = vmatprep.subr.mxu0 0.0
        %457 = vmatpush1.msra.mxu0 0.0
        %458 = vmatprep.subr.mxu0 0.0
        %459 = vmatpush1.msra.mxu0 0.0
        %460 = vmatprep.subr.mxu0 0.0
        %461 = vmatpush1.msra.mxu0 0.0
        %462 = vmatprep.subr.mxu0 0.0
        %463 = vmatpush1.msra.mxu0 0.0
        %464 = vmatprep.subr.mxu0 0.0
        %465 = vmatpush1.msra.mxu0 0.0
        %466 = vmatprep.subr.mxu0 0.0
        %467 = vmatpush1.msra.mxu0 0.0
        %468 = vmatprep.subr.mxu0 0.0
        %469 = vmatpush1.msra.mxu0 0.0
        %470 = vmatprep.subr.mxu0 0.0
        %471 = vmatpush1.msra.mxu0 0.0
        %472 = vmatprep.subr.mxu0 0.0
        %473 = vmatpush1.msra.mxu0 0.0
        %474 = vmatprep.subr.mxu0 0.0
        %475 = vmatpush1.msra.mxu0 0.0
        %476 = vmatprep.subr.mxu0 0.0
        %477 = vmatpush1.msra.mxu0 0.0
        %478 = vmatprep.subr.mxu0 0.0
        %479 = vmatpush1.msra.mxu0 0.0
        %480 = vmatprep.subr.mxu0 0.0
        %481 = vmatpush1.msra.mxu0 0.0
        %482 = vmatprep.subr.mxu0 0.0
        %483 = vmatpush1.msra.mxu0 0.0
        %484 = vmatprep.subr.mxu0 0.0
        %485 = vmatpush1.msra.mxu0 0.0
        %486 = vmatprep.subr.mxu0 0.0
        %487 = vmatpush1.msra.mxu0 0.0
        %488 = vmatprep.subr.mxu0 0.0
        %489 = vmatpush1.msra.mxu0 0.0
        %490 = vmatprep.subr.mxu0 0.0
        %491 = vmatpush1.msra.mxu0 0.0
        %492 = vmatprep.subr.mxu0 0.0
        %493 = vmatpush1.msra.mxu0 0.0
        %494 = vmatprep.subr.mxu0 0.0
        %495 = vmatpush1.msra.mxu0 0.0
        %496 = vmatprep.subr.mxu0 0.0
        %497 = vmatpush1.msra.mxu0 0.0
        %498 = vmatprep.mubr.f32.mxu0 0.0
        %499 = vmatmul.mubr.f32.gmra.mrb[0].mxu0 %v432
        %v500 = vpop.f32.mrb[0].mxu0
        %v501 = vadd.f32 %v429, %v500
        %v502 = vpop.f32.mrb[0].mxu0
        %503 = vdwg.mxu0
        %v504 = vmax.f32 %v501, 0.0
        %s505 = scalar_lea.vmem [#allocation2], 12
        %v506 = vld [vmem:[%s505] sm:$0xf]
        %s507 = scalar_lea.vmem %s2, 12
        %v508 = vld [vmem:[%s507] sm:$0xf]
        %510 = vset.pattern.permute.xlu0 0
        %511 = vperm.xlu0 %510, %v508
        %v512 = vpop.permute.xlu0 %511
        %v515 = vsel %vm260, %v506, 0
        %517 = vmatprep.subr.mxu0 0.0
        %518 = vmatpush1.msra.mxu0 %v266
        %519 = vmatprep.subr.mxu0 0.0
        %520 = vmatpush1.msra.mxu0 0.0
        %521 = vmatprep.subr.mxu0 0.0
        %522 = vmatpush1.msra.mxu0 0.0
        %523 = vmatprep.subr.mxu0 0.0
        %524 = vmatpush1.msra.mxu0 0.0
        %525 = vmatprep.subr.mxu0 0.0
        %526 = vmatpush1.msra.mxu0 0.0
        %527 = vmatprep.subr.mxu0 0.0
        %528 = vmatpush1.msra.mxu0 0.0
        %529 = vmatprep.subr.mxu0 0.0
        %530 = vmatpush1.msra.mxu0 0.0
        %531 = vmatprep.subr.mxu0 0.0
        %532 = vmatpush1.msra.mxu0 0.0
        %533 = vmatprep.subr.mxu0 0.0
        %534 = vmatpush1.msra.mxu0 0.0
        %535 = vmatprep.subr.mxu0 0.0
        %536 = vmatpush1.msra.mxu0 0.0
        %537 = vmatprep.subr.mxu0 0.0
        %538 = vmatpush1.msra.mxu0 0.0
        %539 = vmatprep.subr.mxu0 0.0
        %540 = vmatpush1.msra.mxu0 0.0
        %541 = vmatprep.subr.mxu0 0.0
        %542 = vmatpush1.msra.mxu0 0.0
        %543 = vmatprep.subr.mxu0 0.0
        %544 = vmatpush1.msra.mxu0 0.0
        %545 = vmatprep.subr.mxu0 0.0
        %546 = vmatpush1.msra.mxu0 0.0
        %547 = vmatprep.subr.mxu0 0.0
        %548 = vmatpush1.msra.mxu0 0.0
        %549 = vmatprep.subr.mxu0 0.0
        %550 = vmatpush1.msra.mxu0 0.0
        %551 = vmatprep.subr.mxu0 0.0
        %552 = vmatpush1.msra.mxu0 0.0
        %553 = vmatprep.subr.mxu0 0.0
        %554 = vmatpush1.msra.mxu0 0.0
        %555 = vmatprep.subr.mxu0 0.0
        %556 = vmatpush1.msra.mxu0 0.0
        %557 = vmatprep.subr.mxu0 0.0
        %558 = vmatpush1.msra.mxu0 0.0
        %559 = vmatprep.subr.mxu0 0.0
        %560 = vmatpush1.msra.mxu0 0.0
        %561 = vmatprep.subr.mxu0 0.0
        %562 = vmatpush1.msra.mxu0 0.0
        %563 = vmatprep.subr.mxu0 0.0
        %564 = vmatpush1.msra.mxu0 0.0
        %565 = vmatprep.subr.mxu0 0.0
        %566 = vmatpush1.msra.mxu0 0.0
        %567 = vmatprep.subr.mxu0 0.0
        %568 = vmatpush1.msra.mxu0 0.0
        %569 = vmatprep.subr.mxu0 0.0
        %570 = vmatpush1.msra.mxu0 0.0
        %571 = vmatprep.subr.mxu0 0.0
        %572 = vmatpush1.msra.mxu0 0.0
        %573 = vmatprep.subr.mxu0 0.0
        %574 = vmatpush1.msra.mxu0 0.0
        %575 = vmatprep.subr.mxu0 0.0
        %576 = vmatpush1.msra.mxu0 0.0
        %577 = vmatprep.subr.mxu0 0.0
        %578 = vmatpush1.msra.mxu0 0.0
        %579 = vmatprep.subr.mxu0 0.0
        %580 = vmatpush1.msra.mxu0 0.0
        %581 = vmatprep.mubr.f32.mxu0 0.0
        %582 = vmatmul.mubr.f32.gmra.mrb[0].mxu0 %v515
        %v583 = vpop.f32.mrb[0].mxu0
        %v584 = vadd.f32 %v512, %v583
        %v585 = vpop.f32.mrb[0].mxu0
        %586 = vdwg.mxu0
        %v587 = vmax.f32 %v584, 0.0
        %v588 = vld [vmem:[#allocation5] sm:$0xff]
        %v589 = vld [vmem:[#allocation5 + $0x8] sm:$0xff]
        %s590 = scalar_lea.vmem [#allocation5], 16
        %v591 = vld [vmem:[%s590] sm:$0xff]
        %v592 = vld [vmem:[%s590 + $0x8] sm:$0xff]
        %vm593 = vcmask 130048
        %v595 = vsel %vm593, %v421, 0
        %597 = vmatprep.subr.mxu0 0.0
        %598 = vmatpush1.msra.mxu0 %v591
        %599 = vmatprep.subr.mxu0 0.0
        %600 = vmatpush1.msra.mxu0 %v592
        %601 = vmatprep.subr.mxu0 0.0
        %602 = vmatpush1.msra.mxu0 0.0
        %603 = vmatprep.subr.mxu0 0.0
        %604 = vmatpush1.msra.mxu0 0.0
        %605 = vmatprep.subr.mxu0 0.0
        %606 = vmatpush1.msra.mxu0 0.0
        %607 = vmatprep.subr.mxu0 0.0
        %608 = vmatpush1.msra.mxu0 0.0
        %609 = vmatprep.subr.mxu0 0.0
        %610 = vmatpush1.msra.mxu0 0.0
        %611 = vmatprep.subr.mxu0 0.0
        %612 = vmatpush1.msra.mxu0 0.0
        %613 = vmatprep.subr.mxu0 0.0
        %614 = vmatpush1.msra.mxu0 0.0
        %615 = vmatprep.subr.mxu0 0.0
        %616 = vmatpush1.msra.mxu0 0.0
        %617 = vmatprep.subr.mxu0 0.0
        %618 = vmatpush1.msra.mxu0 0.0
        %619 = vmatprep.subr.mxu0 0.0
        %620 = vmatpush1.msra.mxu0 0.0
        %621 = vmatprep.subr.mxu0 0.0
        %622 = vmatpush1.msra.mxu0 0.0
        %623 = vmatprep.subr.mxu0 0.0
        %624 = vmatpush1.msra.mxu0 0.0
        %625 = vmatprep.subr.mxu0 0.0
        %626 = vmatpush1.msra.mxu0 0.0
        %627 = vmatprep.subr.mxu0 0.0
        %628 = vmatpush1.msra.mxu0 0.0
        %629 = vmatprep.subr.mxu0 0.0
        %630 = vmatpush1.msra.mxu0 0.0
        %631 = vmatprep.subr.mxu0 0.0
        %632 = vmatpush1.msra.mxu0 0.0
        %633 = vmatprep.subr.mxu0 0.0
        %634 = vmatpush1.msra.mxu0 0.0
        %635 = vmatprep.subr.mxu0 0.0
        %636 = vmatpush1.msra.mxu0 0.0
        %637 = vmatprep.subr.mxu0 0.0
        %638 = vmatpush1.msra.mxu0 0.0
        %639 = vmatprep.subr.mxu0 0.0
        %640 = vmatpush1.msra.mxu0 0.0
        %641 = vmatprep.subr.mxu0 0.0
        %642 = vmatpush1.msra.mxu0 0.0
        %643 = vmatprep.subr.mxu0 0.0
        %644 = vmatpush1.msra.mxu0 0.0
        %645 = vmatprep.subr.mxu0 0.0
        %646 = vmatpush1.msra.mxu0 0.0
        %647 = vmatprep.subr.mxu0 0.0
        %648 = vmatpush1.msra.mxu0 0.0
        %649 = vmatprep.subr.mxu0 0.0
        %650 = vmatpush1.msra.mxu0 0.0
        %651 = vmatprep.subr.mxu0 0.0
        %652 = vmatpush1.msra.mxu0 0.0
        %653 = vmatprep.subr.mxu0 0.0
        %654 = vmatpush1.msra.mxu0 0.0
        %655 = vmatprep.subr.mxu0 0.0
        %656 = vmatpush1.msra.mxu0 0.0
        %657 = vmatprep.subr.mxu0 0.0
        %658 = vmatpush1.msra.mxu0 0.0
        %659 = vmatprep.subr.mxu0 0.0
        %660 = vmatpush1.msra.mxu0 0.0
        %661 = vmatprep.mubr.f32.mxu0 0.0
        %662 = vmatmul.mubr.f32.gmra.mrb[0].mxu0 %v595
        %v663 = vpop.f32.mrb[0].mxu0
        %v664 = vadd.f32 0.0, %v663
        %v665 = vpop.f32.mrb[0].mxu0
        %666 = vdwg.mxu0
        %v668 = vsel %vm593, %v338, 0
        %670 = vmatprep.subr.mxu0 0.0
        %671 = vmatpush1.msra.mxu0 %v588
        %672 = vmatprep.subr.mxu0 0.0
        %673 = vmatpush1.msra.mxu0 %v589
        %674 = vmatprep.subr.mxu0 0.0
        %675 = vmatpush1.msra.mxu0 0.0
        %676 = vmatprep.subr.mxu0 0.0
        %677 = vmatpush1.msra.mxu0 0.0
        %678 = vmatprep.subr.mxu0 0.0
        %679 = vmatpush1.msra.mxu0 0.0
        %680 = vmatprep.subr.mxu0 0.0
        %681 = vmatpush1.msra.mxu0 0.0
        %682 = vmatprep.subr.mxu0 0.0
        %683 = vmatpush1.msra.mxu0 0.0
        %684 = vmatprep.subr.mxu0 0.0
        %685 = vmatpush1.msra.mxu0 0.0
        %686 = vmatprep.subr.mxu0 0.0
        %687 = vmatpush1.msra.mxu0 0.0
        %688 = vmatprep.subr.mxu0 0.0
        %689 = vmatpush1.msra.mxu0 0.0
        %690 = vmatprep.subr.mxu0 0.0
        %691 = vmatpush1.msra.mxu0 0.0
        %692 = vmatprep.subr.mxu0 0.0
        %693 = vmatpush1.msra.mxu0 0.0
        %694 = vmatprep.subr.mxu0 0.0
        %695 = vmatpush1.msra.mxu0 0.0
        %696 = vmatprep.subr.mxu0 0.0
        %697 = vmatpush1.msra.mxu0 0.0
        %698 = vmatprep.subr.mxu0 0.0
        %699 = vmatpush1.msra.mxu0 0.0
        %700 = vmatprep.subr.mxu0 0.0
        %701 = vmatpush1.msra.mxu0 0.0
        %702 = vmatprep.subr.mxu0 0.0
        %703 = vmatpush1.msra.mxu0 0.0
        %704 = vmatprep.subr.mxu0 0.0
        %705 = vmatpush1.msra.mxu0 0.0
        %706 = vmatprep.subr.mxu0 0.0
        %707 = vmatpush1.msra.mxu0 0.0
        %708 = vmatprep.subr.mxu0 0.0
        %709 = vmatpush1.msra.mxu0 0.0
        %710 = vmatprep.subr.mxu0 0.0
        %711 = vmatpush1.msra.mxu0 0.0
        %712 = vmatprep.subr.mxu0 0.0
        %713 = vmatpush1.msra.mxu0 0.0
        %714 = vmatprep.subr.mxu0 0.0
        %715 = vmatpush1.msra.mxu0 0.0
        %716 = vmatprep.subr.mxu0 0.0
        %717 = vmatpush1.msra.mxu0 0.0
        %718 = vmatprep.subr.mxu0 0.0
        %719 = vmatpush1.msra.mxu0 0.0
        %720 = vmatprep.subr.mxu0 0.0
        %721 = vmatpush1.msra.mxu0 0.0
        %722 = vmatprep.subr.mxu0 0.0
        %723 = vmatpush1.msra.mxu0 0.0
        %724 = vmatprep.subr.mxu0 0.0
        %725 = vmatpush1.msra.mxu0 0.0
        %726 = vmatprep.subr.mxu0 0.0
        %727 = vmatpush1.msra.mxu0 0.0
        %728 = vmatprep.subr.mxu0 0.0
        %729 = vmatpush1.msra.mxu0 0.0
        %730 = vmatprep.subr.mxu0 0.0
        %731 = vmatpush1.msra.mxu0 0.0
        %732 = vmatprep.subr.mxu0 0.0
        %733 = vmatpush1.msra.mxu0 0.0
        %734 = vmatprep.mubr.f32.mxu0 0.0
        %735 = vmatmul.mubr.f32.gmra.mrb[0].mxu0 %v668
        %v736 = vpop.f32.mrb[0].mxu0
        %v737 = vadd.f32 %v664, %v736
        %v738 = vpop.f32.mrb[0].mxu0
        %739 = vdwg.mxu0
        %v741 = vsel %vm593, %v587, 0
        %743 = vmatprep.subr.mxu0 0.0
        %744 = vmatpush1.msra.mxu0 %v591
        %745 = vmatprep.subr.mxu0 0.0
        %746 = vmatpush1.msra.mxu0 %v592
        %747 = vmatprep.subr.mxu0 0.0
        %748 = vmatpush1.msra.mxu0 0.0
        %749 = vmatprep.subr.mxu0 0.0
        %750 = vmatpush1.msra.mxu0 0.0
        %751 = vmatprep.subr.mxu0 0.0
        %752 = vmatpush1.msra.mxu0 0.0
        %753 = vmatprep.subr.mxu0 0.0
        %754 = vmatpush1.msra.mxu0 0.0
        %755 = vmatprep.subr.mxu0 0.0
        %756 = vmatpush1.msra.mxu0 0.0
        %757 = vmatprep.subr.mxu0 0.0
        %758 = vmatpush1.msra.mxu0 0.0
        %759 = vmatprep.subr.mxu0 0.0
        %760 = vmatpush1.msra.mxu0 0.0
        %761 = vmatprep.subr.mxu0 0.0
        %762 = vmatpush1.msra.mxu0 0.0
        %763 = vmatprep.subr.mxu0 0.0
        %764 = vmatpush1.msra.mxu0 0.0
        %765 = vmatprep.subr.mxu0 0.0
        %766 = vmatpush1.msra.mxu0 0.0
        %767 = vmatprep.subr.mxu0 0.0
        %768 = vmatpush1.msra.mxu0 0.0
        %769 = vmatprep.subr.mxu0 0.0
        %770 = vmatpush1.msra.mxu0 0.0
        %771 = vmatprep.subr.mxu0 0.0
        %772 = vmatpush1.msra.mxu0 0.0
        %773 = vmatprep.subr.mxu0 0.0
        %774 = vmatpush1.msra.mxu0 0.0
        %775 = vmatprep.subr.mxu0 0.0
        %776 = vmatpush1.msra.mxu0 0.0
        %777 = vmatprep.subr.mxu0 0.0
        %778 = vmatpush1.msra.mxu0 0.0
        %779 = vmatprep.subr.mxu0 0.0
        %780 = vmatpush1.msra.mxu0 0.0
        %781 = vmatprep.subr.mxu0 0.0
        %782 = vmatpush1.msra.mxu0 0.0
        %783 = vmatprep.subr.mxu0 0.0
        %784 = vmatpush1.msra.mxu0 0.0
        %785 = vmatprep.subr.mxu0 0.0
        %786 = vmatpush1.msra.mxu0 0.0
        %787 = vmatprep.subr.mxu0 0.0
        %788 = vmatpush1.msra.mxu0 0.0
        %789 = vmatprep.subr.mxu0 0.0
        %790 = vmatpush1.msra.mxu0 0.0
        %791 = vmatprep.subr.mxu0 0.0
        %792 = vmatpush1.msra.mxu0 0.0
        %793 = vmatprep.subr.mxu0 0.0
        %794 = vmatpush1.msra.mxu0 0.0
        %795 = vmatprep.subr.mxu0 0.0
        %796 = vmatpush1.msra.mxu0 0.0
        %797 = vmatprep.subr.mxu0 0.0
        %798 = vmatpush1.msra.mxu0 0.0
        %799 = vmatprep.subr.mxu0 0.0
        %800 = vmatpush1.msra.mxu0 0.0
        %801 = vmatprep.subr.mxu0 0.0
        %802 = vmatpush1.msra.mxu0 0.0
        %803 = vmatprep.subr.mxu0 0.0
        %804 = vmatpush1.msra.mxu0 0.0
        %805 = vmatprep.subr.mxu0 0.0
        %806 = vmatpush1.msra.mxu0 0.0
        %807 = vmatprep.mubr.f32.mxu0 0.0
        %808 = vmatmul.mubr.f32.gmra.mrb[0].mxu0 %v741
        %v809 = vpop.f32.mrb[0].mxu0
        %v810 = vadd.f32 0.0, %v809
        %v811 = vpop.f32.mrb[0].mxu0
        %812 = vdwg.mxu0
        %v814 = vsel %vm593, %v504, 0
        %816 = vmatprep.subr.mxu0 0.0
        %817 = vmatpush1.msra.mxu0 %v588
        %818 = vmatprep.subr.mxu0 0.0
        %819 = vmatpush1.msra.mxu0 %v589
        %820 = vmatprep.subr.mxu0 0.0
        %821 = vmatpush1.msra.mxu0 0.0
        %822 = vmatprep.subr.mxu0 0.0
        %823 = vmatpush1.msra.mxu0 0.0
        %824 = vmatprep.subr.mxu0 0.0
        %825 = vmatpush1.msra.mxu0 0.0
        %826 = vmatprep.subr.mxu0 0.0
        %827 = vmatpush1.msra.mxu0 0.0
        %828 = vmatprep.subr.mxu0 0.0
        %829 = vmatpush1.msra.mxu0 0.0
        %830 = vmatprep.subr.mxu0 0.0
        %831 = vmatpush1.msra.mxu0 0.0
        %832 = vmatprep.subr.mxu0 0.0
        %833 = vmatpush1.msra.mxu0 0.0
        %834 = vmatprep.subr.mxu0 0.0
        %835 = vmatpush1.msra.mxu0 0.0
        %836 = vmatprep.subr.mxu0 0.0
        %837 = vmatpush1.msra.mxu0 0.0
        %838 = vmatprep.subr.mxu0 0.0
        %839 = vmatpush1.msra.mxu0 0.0
        %840 = vmatprep.subr.mxu0 0.0
        %841 = vmatpush1.msra.mxu0 0.0
        %842 = vmatprep.subr.mxu0 0.0
        %843 = vmatpush1.msra.mxu0 0.0
        %844 = vmatprep.subr.mxu0 0.0
        %845 = vmatpush1.msra.mxu0 0.0
        %846 = vmatprep.subr.mxu0 0.0
        %847 = vmatpush1.msra.mxu0 0.0
        %848 = vmatprep.subr.mxu0 0.0
        %849 = vmatpush1.msra.mxu0 0.0
        %850 = vmatprep.subr.mxu0 0.0
        %851 = vmatpush1.msra.mxu0 0.0
        %852 = vmatprep.subr.mxu0 0.0
        %853 = vmatpush1.msra.mxu0 0.0
        %854 = vmatprep.subr.mxu0 0.0
        %855 = vmatpush1.msra.mxu0 0.0
        %856 = vmatprep.subr.mxu0 0.0
        %857 = vmatpush1.msra.mxu0 0.0
        %858 = vmatprep.subr.mxu0 0.0
        %859 = vmatpush1.msra.mxu0 0.0
        %860 = vmatprep.subr.mxu0 0.0
        %861 = vmatpush1.msra.mxu0 0.0
        %862 = vmatprep.subr.mxu0 0.0
        %863 = vmatpush1.msra.mxu0 0.0
        %864 = vmatprep.subr.mxu0 0.0
        %865 = vmatpush1.msra.mxu0 0.0
        %866 = vmatprep.subr.mxu0 0.0
        %867 = vmatpush1.msra.mxu0 0.0
        %868 = vmatprep.subr.mxu0 0.0
        %869 = vmatpush1.msra.mxu0 0.0
        %870 = vmatprep.subr.mxu0 0.0
        %871 = vmatpush1.msra.mxu0 0.0
        %872 = vmatprep.subr.mxu0 0.0
        %873 = vmatpush1.msra.mxu0 0.0
        %874 = vmatprep.subr.mxu0 0.0
        %875 = vmatpush1.msra.mxu0 0.0
        %876 = vmatprep.subr.mxu0 0.0
        %877 = vmatpush1.msra.mxu0 0.0
        %878 = vmatprep.subr.mxu0 0.0
        %879 = vmatpush1.msra.mxu0 0.0
        %880 = vmatprep.mubr.f32.mxu0 0.0
        %881 = vmatmul.mubr.f32.gmra.mrb[0].mxu0 %v814
        %v882 = vpop.f32.mrb[0].mxu0
        %v883 = vadd.f32 %v810, %v882
        %v884 = vpop.f32.mrb[0].mxu0
        %885 = vdwg.mxu0
        %vm886 = vcmask 257024
        %887 = vst.msk [vmem:[%s242] sm:$0xf] %vm886, %v737
        %889 = vrot.lane.b32.xlu0 %v883, 32
        %v890 = vpop.permute.xlu0 %889
        %vm892 = vcmask 519424
        %893 = vst.msk [vmem:[%s242] sm:$0xf] %vm892, %v890
        %v894 = vld [vmem:[%s250] sm:$0xf]
        %v895 = vld [vmem:[#allocation2] sm:$0xf]
        %v896 = vld [vmem:[%s2] sm:$0xf]
        %898 = vset.pattern.permute.xlu0 0
        %899 = vperm.xlu0 %898, %v896
        %v900 = vpop.permute.xlu0 %899
        %903 = vrot.lane.b32.xlu0 %v894, 112
        %v904 = vpop.permute.xlu0 %903
        %v906 = vsel %vm260, %v895, 0
        %v908 = vsel %vm264, %v904, 0
        %910 = vmatprep.subr.mxu0 0.0
        %911 = vmatpush1.msra.mxu0 %v908
        %912 = vmatprep.subr.mxu0 0.0
        %913 = vmatpush1.msra.mxu0 0.0
        %914 = vmatprep.subr.mxu0 0.0
        %915 = vmatpush1.msra.mxu0 0.0
        %916 = vmatprep.subr.mxu0 0.0
        %917 = vmatpush1.msra.mxu0 0.0
        %918 = vmatprep.subr.mxu0 0.0
        %919 = vmatpush1.msra.mxu0 0.0
        %920 = vmatprep.subr.mxu0 0.0
        %921 = vmatpush1.msra.mxu0 0.0
        %922 = vmatprep.subr.mxu0 0.0
        %923 = vmatpush1.msra.mxu0 0.0
        %924 = vmatprep.subr.mxu0 0.0
        %925 = vmatpush1.msra.mxu0 0.0
        %926 = vmatprep.subr.mxu0 0.0
        %927 = vmatpush1.msra.mxu0 0.0
        %928 = vmatprep.subr.mxu0 0.0
        %929 = vmatpush1.msra.mxu0 0.0
        %930 = vmatprep.subr.mxu0 0.0
        %931 = vmatpush1.msra.mxu0 0.0
        %932 = vmatprep.subr.mxu0 0.0
        %933 = vmatpush1.msra.mxu0 0.0
        %934 = vmatprep.subr.mxu0 0.0
        %935 = vmatpush1.msra.mxu0 0.0
        %936 = vmatprep.subr.mxu0 0.0
        %937 = vmatpush1.msra.mxu0 0.0
        %938 = vmatprep.subr.mxu0 0.0
        %939 = vmatpush1.msra.mxu0 0.0
        %940 = vmatprep.subr.mxu0 0.0
        %941 = vmatpush1.msra.mxu0 0.0
        %942 = vmatprep.subr.mxu0 0.0
        %943 = vmatpush1.msra.mxu0 0.0
        %944 = vmatprep.subr.mxu0 0.0
        %945 = vmatpush1.msra.mxu0 0.0
        %946 = vmatprep.subr.mxu0 0.0
        %947 = vmatpush1.msra.mxu0 0.0
        %948 = vmatprep.subr.mxu0 0.0
        %949 = vmatpush1.msra.mxu0 0.0
        %950 = vmatprep.subr.mxu0 0.0
        %951 = vmatpush1.msra.mxu0 0.0
        %952 = vmatprep.subr.mxu0 0.0
        %953 = vmatpush1.msra.mxu0 0.0
        %954 = vmatprep.subr.mxu0 0.0
        %955 = vmatpush1.msra.mxu0 0.0
        %956 = vmatprep.subr.mxu0 0.0
        %957 = vmatpush1.msra.mxu0 0.0
        %958 = vmatprep.subr.mxu0 0.0
        %959 = vmatpush1.msra.mxu0 0.0
        %960 = vmatprep.subr.mxu0 0.0
        %961 = vmatpush1.msra.mxu0 0.0
        %962 = vmatprep.subr.mxu0 0.0
        %963 = vmatpush1.msra.mxu0 0.0
        %964 = vmatprep.subr.mxu0 0.0
        %965 = vmatpush1.msra.mxu0 0.0
        %966 = vmatprep.subr.mxu0 0.0
        %967 = vmatpush1.msra.mxu0 0.0
        %968 = vmatprep.subr.mxu0 0.0
        %969 = vmatpush1.msra.mxu0 0.0
        %970 = vmatprep.subr.mxu0 0.0
        %971 = vmatpush1.msra.mxu0 0.0
        %972 = vmatprep.subr.mxu0 0.0
        %973 = vmatpush1.msra.mxu0 0.0
        %974 = vmatprep.mubr.f32.mxu0 0.0
        %975 = vmatmul.mubr.f32.gmra.mrb[0].mxu0 %v906
        %v976 = vpop.f32.mrb[0].mxu0
        %v977 = vadd.f32 %v900, %v976
        %v978 = vpop.f32.mrb[0].mxu0
        %979 = vdwg.mxu0
        %v980 = vmax.f32 %v977, 0.0
        %v981 = vld [vmem:[%s339] sm:$0xf]
        %v982 = vld [vmem:[%s341] sm:$0xf]
        %984 = vset.pattern.permute.xlu0 0
        %985 = vperm.xlu0 %984, %v982
        %v986 = vpop.permute.xlu0 %985
        %v989 = vsel %vm260, %v981, 0
        %991 = vmatprep.subr.mxu0 0.0
        %992 = vmatpush1.msra.mxu0 %v908
        %993 = vmatprep.subr.mxu0 0.0
        %994 = vmatpush1.msra.mxu0 0.0
        %995 = vmatprep.subr.mxu0 0.0
        %996 = vmatpush1.msra.mxu0 0.0
        %997 = vmatprep.subr.mxu0 0.0
        %998 = vmatpush1.msra.mxu0 0.0
        %999 = vmatprep.subr.mxu0 0.0
        %1000 = vmatpush1.msra.mxu0 0.0
        %1001 = vmatprep.subr.mxu0 0.0
        %1002 = vmatpush1.msra.mxu0 0.0
        %1003 = vmatprep.subr.mxu0 0.0
        %1004 = vmatpush1.msra.mxu0 0.0
        %1005 = vmatprep.subr.mxu0 0.0
        %1006 = vmatpush1.msra.mxu0 0.0
        %1007 = vmatprep.subr.mxu0 0.0
        %1008 = vmatpush1.msra.mxu0 0.0
        %1009 = vmatprep.subr.mxu0 0.0
        %1010 = vmatpush1.msra.mxu0 0.0
        %1011 = vmatprep.subr.mxu0 0.0
        %1012 = vmatpush1.msra.mxu0 0.0
        %1013 = vmatprep.subr.mxu0 0.0
        %1014 = vmatpush1.msra.mxu0 0.0
        %1015 = vmatprep.subr.mxu0 0.0
        %1016 = vmatpush1.msra.mxu0 0.0
        %1017 = vmatprep.subr.mxu0 0.0
        %1018 = vmatpush1.msra.mxu0 0.0
        %1019 = vmatprep.subr.mxu0 0.0
        %1020 = vmatpush1.msra.mxu0 0.0
        %1021 = vmatprep.subr.mxu0 0.0
        %1022 = vmatpush1.msra.mxu0 0.0
        %1023 = vmatprep.subr.mxu0 0.0
        %1024 = vmatpush1.msra.mxu0 0.0
        %1025 = vmatprep.subr.mxu0 0.0
        %1026 = vmatpush1.msra.mxu0 0.0
        %1027 = vmatprep.subr.mxu0 0.0
        %1028 = vmatpush1.msra.mxu0 0.0
        %1029 = vmatprep.subr.mxu0 0.0
        %1030 = vmatpush1.msra.mxu0 0.0
        %1031 = vmatprep.subr.mxu0 0.0
        %1032 = vmatpush1.msra.mxu0 0.0
        %1033 = vmatprep.subr.mxu0 0.0
        %1034 = vmatpush1.msra.mxu0 0.0
        %1035 = vmatprep.subr.mxu0 0.0
        %1036 = vmatpush1.msra.mxu0 0.0
        %1037 = vmatprep.subr.mxu0 0.0
        %1038 = vmatpush1.msra.mxu0 0.0
        %1039 = vmatprep.subr.mxu0 0.0
        %1040 = vmatpush1.msra.mxu0 0.0
        %1041 = vmatprep.subr.mxu0 0.0
        %1042 = vmatpush1.msra.mxu0 0.0
        %1043 = vmatprep.subr.mxu0 0.0
        %1044 = vmatpush1.msra.mxu0 0.0
        %1045 = vmatprep.subr.mxu0 0.0
        %1046 = vmatpush1.msra.mxu0 0.0
        %1047 = vmatprep.subr.mxu0 0.0
        %1048 = vmatpush1.msra.mxu0 0.0
        %1049 = vmatprep.subr.mxu0 0.0
        %1050 = vmatpush1.msra.mxu0 0.0
        %1051 = vmatprep.subr.mxu0 0.0
        %1052 = vmatpush1.msra.mxu0 0.0
        %1053 = vmatprep.subr.mxu0 0.0
        %1054 = vmatpush1.msra.mxu0 0.0
        %1055 = vmatprep.mubr.f32.mxu0 0.0
        %1056 = vmatmul.mubr.f32.gmra.mrb[0].mxu0 %v989
        %v1057 = vpop.f32.mrb[0].mxu0
        %v1058 = vadd.f32 %v986, %v1057
        %v1059 = vpop.f32.mrb[0].mxu0
        %1060 = vdwg.mxu0
        %v1061 = vmax.f32 %v1058, 0.0
        %v1062 = vld [vmem:[%s422] sm:$0xf]
        %v1063 = vld [vmem:[%s424] sm:$0xf]
        %1065 = vset.pattern.permute.xlu0 0
        %1066 = vperm.xlu0 %1065, %v1063
        %v1067 = vpop.permute.xlu0 %1066
        %v1070 = vsel %vm260, %v1062, 0
        %1072 = vmatprep.subr.mxu0 0.0
        %1073 = vmatpush1.msra.mxu0 %v908
        %1074 = vmatprep.subr.mxu0 0.0
        %1075 = vmatpush1.msra.mxu0 0.0
        %1076 = vmatprep.subr.mxu0 0.0
        %1077 = vmatpush1.msra.mxu0 0.0
        %1078 = vmatprep.subr.mxu0 0.0
        %1079 = vmatpush1.msra.mxu0 0.0
        %1080 = vmatprep.subr.mxu0 0.0
        %1081 = vmatpush1.msra.mxu0 0.0
        %1082 = vmatprep.subr.mxu0 0.0
        %1083 = vmatpush1.msra.mxu0 0.0
        %1084 = vmatprep.subr.mxu0 0.0
        %1085 = vmatpush1.msra.mxu0 0.0
        %1086 = vmatprep.subr.mxu0 0.0
        %1087 = vmatpush1.msra.mxu0 0.0
        %1088 = vmatprep.subr.mxu0 0.0
        %1089 = vmatpush1.msra.mxu0 0.0
        %1090 = vmatprep.subr.mxu0 0.0
        %1091 = vmatpush1.msra.mxu0 0.0
        %1092 = vmatprep.subr.mxu0 0.0
        %1093 = vmatpush1.msra.mxu0 0.0
        %1094 = vmatprep.subr.mxu0 0.0
        %1095 = vmatpush1.msra.mxu0 0.0
        %1096 = vmatprep.subr.mxu0 0.0
        %1097 = vmatpush1.msra.mxu0 0.0
        %1098 = vmatprep.subr.mxu0 0.0
        %1099 = vmatpush1.msra.mxu0 0.0
        %1100 = vmatprep.subr.mxu0 0.0
        %1101 = vmatpush1.msra.mxu0 0.0
        %1102 = vmatprep.subr.mxu0 0.0
        %1103 = vmatpush1.msra.mxu0 0.0
        %1104 = vmatprep.subr.mxu0 0.0
        %1105 = vmatpush1.msra.mxu0 0.0
        %1106 = vmatprep.subr.mxu0 0.0
        %1107 = vmatpush1.msra.mxu0 0.0
        %1108 = vmatprep.subr.mxu0 0.0
        %1109 = vmatpush1.msra.mxu0 0.0
        %1110 = vmatprep.subr.mxu0 0.0
        %1111 = vmatpush1.msra.mxu0 0.0
        %1112 = vmatprep.subr.mxu0 0.0
        %1113 = vmatpush1.msra.mxu0 0.0
        %1114 = vmatprep.subr.mxu0 0.0
        %1115 = vmatpush1.msra.mxu0 0.0
        %1116 = vmatprep.subr.mxu0 0.0
        %1117 = vmatpush1.msra.mxu0 0.0
        %1118 = vmatprep.subr.mxu0 0.0
        %1119 = vmatpush1.msra.mxu0 0.0
        %1120 = vmatprep.subr.mxu0 0.0
        %1121 = vmatpush1.msra.mxu0 0.0
        %1122 = vmatprep.subr.mxu0 0.0
        %1123 = vmatpush1.msra.mxu0 0.0
        %1124 = vmatprep.subr.mxu0 0.0
        %1125 = vmatpush1.msra.mxu0 0.0
        %1126 = vmatprep.subr.mxu0 0.0
        %1127 = vmatpush1.msra.mxu0 0.0
        %1128 = vmatprep.subr.mxu0 0.0
        %1129 = vmatpush1.msra.mxu0 0.0
        %1130 = vmatprep.subr.mxu0 0.0
        %1131 = vmatpush1.msra.mxu0 0.0
        %1132 = vmatprep.subr.mxu0 0.0
        %1133 = vmatpush1.msra.mxu0 0.0
        %1134 = vmatprep.subr.mxu0 0.0
        %1135 = vmatpush1.msra.mxu0 0.0
        %1136 = vmatprep.mubr.f32.mxu0 0.0
        %1137 = vmatmul.mubr.f32.gmra.mrb[0].mxu0 %v1070
        %v1138 = vpop.f32.mrb[0].mxu0
        %v1139 = vadd.f32 %v1067, %v1138
        %v1140 = vpop.f32.mrb[0].mxu0
        %1141 = vdwg.mxu0
        %v1142 = vmax.f32 %v1139, 0.0
        %v1143 = vld [vmem:[%s505] sm:$0xf]
        %v1144 = vld [vmem:[%s507] sm:$0xf]
        %1146 = vset.pattern.permute.xlu0 0
        %1147 = vperm.xlu0 %1146, %v1144
        %v1148 = vpop.permute.xlu0 %1147
        %v1151 = vsel %vm260, %v1143, 0
        %1153 = vmatprep.subr.mxu0 0.0
        %1154 = vmatpush1.msra.mxu0 %v908
        %1155 = vmatprep.subr.mxu0 0.0
        %1156 = vmatpush1.msra.mxu0 0.0
        %1157 = vmatprep.subr.mxu0 0.0
        %1158 = vmatpush1.msra.mxu0 0.0
        %1159 = vmatprep.subr.mxu0 0.0
        %1160 = vmatpush1.msra.mxu0 0.0
        %1161 = vmatprep.subr.mxu0 0.0
        %1162 = vmatpush1.msra.mxu0 0.0
        %1163 = vmatprep.subr.mxu0 0.0
        %1164 = vmatpush1.msra.mxu0 0.0
        %1165 = vmatprep.subr.mxu0 0.0
        %1166 = vmatpush1.msra.mxu0 0.0
        %1167 = vmatprep.subr.mxu0 0.0
        %1168 = vmatpush1.msra.mxu0 0.0
        %1169 = vmatprep.subr.mxu0 0.0
        %1170 = vmatpush1.msra.mxu0 0.0
        %1171 = vmatprep.subr.mxu0 0.0
        %1172 = vmatpush1.msra.mxu0 0.0
        %1173 = vmatprep.subr.mxu0 0.0
        %1174 = vmatpush1.msra.mxu0 0.0
        %1175 = vmatprep.subr.mxu0 0.0
        %1176 = vmatpush1.msra.mxu0 0.0
        %1177 = vmatprep.subr.mxu0 0.0
        %1178 = vmatpush1.msra.mxu0 0.0
        %1179 = vmatprep.subr.mxu0 0.0
        %1180 = vmatpush1.msra.mxu0 0.0
        %1181 = vmatprep.subr.mxu0 0.0
        %1182 = vmatpush1.msra.mxu0 0.0
        %1183 = vmatprep.subr.mxu0 0.0
        %1184 = vmatpush1.msra.mxu0 0.0
        %1185 = vmatprep.subr.mxu0 0.0
        %1186 = vmatpush1.msra.mxu0 0.0
        %1187 = vmatprep.subr.mxu0 0.0
        %1188 = vmatpush1.msra.mxu0 0.0
        %1189 = vmatprep.subr.mxu0 0.0
        %1190 = vmatpush1.msra.mxu0 0.0
        %1191 = vmatprep.subr.mxu0 0.0
        %1192 = vmatpush1.msra.mxu0 0.0
        %1193 = vmatprep.subr.mxu0 0.0
        %1194 = vmatpush1.msra.mxu0 0.0
        %1195 = vmatprep.subr.mxu0 0.0
        %1196 = vmatpush1.msra.mxu0 0.0
        %1197 = vmatprep.subr.mxu0 0.0
        %1198 = vmatpush1.msra.mxu0 0.0
        %1199 = vmatprep.subr.mxu0 0.0
        %1200 = vmatpush1.msra.mxu0 0.0
        %1201 = vmatprep.subr.mxu0 0.0
        %1202 = vmatpush1.msra.mxu0 0.0
        %1203 = vmatprep.subr.mxu0 0.0
        %1204 = vmatpush1.msra.mxu0 0.0
        %1205 = vmatprep.subr.mxu0 0.0
        %1206 = vmatpush1.msra.mxu0 0.0
        %1207 = vmatprep.subr.mxu0 0.0
        %1208 = vmatpush1.msra.mxu0 0.0
        %1209 = vmatprep.subr.mxu0 0.0
        %1210 = vmatpush1.msra.mxu0 0.0
        %1211 = vmatprep.subr.mxu0 0.0
        %1212 = vmatpush1.msra.mxu0 0.0
        %1213 = vmatprep.subr.mxu0 0.0
        %1214 = vmatpush1.msra.mxu0 0.0
        %1215 = vmatprep.subr.mxu0 0.0
        %1216 = vmatpush1.msra.mxu0 0.0
        %1217 = vmatprep.mubr.f32.mxu0 0.0
        %1218 = vmatmul.mubr.f32.gmra.mrb[0].mxu0 %v1151
        %v1219 = vpop.f32.mrb[0].mxu0
        %v1220 = vadd.f32 %v1148, %v1219
        %v1221 = vpop.f32.mrb[0].mxu0
        %1222 = vdwg.mxu0
        %v1223 = vmax.f32 %v1220, 0.0
        %v1224 = vld [vmem:[#allocation5] sm:$0xff]
        %v1225 = vld [vmem:[#allocation5 + $0x8] sm:$0xff]
        %v1226 = vld [vmem:[%s590] sm:$0xff]
        %v1227 = vld [vmem:[%s590 + $0x8] sm:$0xff]
        %v1229 = vsel %vm593, %v1061, 0
        %1231 = vmatprep.subr.mxu0 0.0
        %1232 = vmatpush1.msra.mxu0 %v1226
        %1233 = vmatprep.subr.mxu0 0.0
        %1234 = vmatpush1.msra.mxu0 %v1227
        %1235 = vmatprep.subr.mxu0 0.0
        %1236 = vmatpush1.msra.mxu0 0.0
        %1237 = vmatprep.subr.mxu0 0.0
        %1238 = vmatpush1.msra.mxu0 0.0
        %1239 = vmatprep.subr.mxu0 0.0
        %1240 = vmatpush1.msra.mxu0 0.0
        %1241 = vmatprep.subr.mxu0 0.0
        %1242 = vmatpush1.msra.mxu0 0.0
        %1243 = vmatprep.subr.mxu0 0.0
        %1244 = vmatpush1.msra.mxu0 0.0
        %1245 = vmatprep.subr.mxu0 0.0
        %1246 = vmatpush1.msra.mxu0 0.0
        %1247 = vmatprep.subr.mxu0 0.0
        %1248 = vmatpush1.msra.mxu0 0.0
        %1249 = vmatprep.subr.mxu0 0.0
        %1250 = vmatpush1.msra.mxu0 0.0
        %1251 = vmatprep.subr.mxu0 0.0
        %1252 = vmatpush1.msra.mxu0 0.0
        %1253 = vmatprep.subr.mxu0 0.0
        %1254 = vmatpush1.msra.mxu0 0.0
        %1255 = vmatprep.subr.mxu0 0.0
        %1256 = vmatpush1.msra.mxu0 0.0
        %1257 = vmatprep.subr.mxu0 0.0
        %1258 = vmatpush1.msra.mxu0 0.0
        %1259 = vmatprep.subr.mxu0 0.0
        %1260 = vmatpush1.msra.mxu0 0.0
        %1261 = vmatprep.subr.mxu0 0.0
        %1262 = vmatpush1.msra.mxu0 0.0
        %1263 = vmatprep.subr.mxu0 0.0
        %1264 = vmatpush1.msra.mxu0 0.0
        %1265 = vmatprep.subr.mxu0 0.0
        %1266 = vmatpush1.msra.mxu0 0.0
        %1267 = vmatprep.subr.mxu0 0.0
        %1268 = vmatpush1.msra.mxu0 0.0
        %1269 = vmatprep.subr.mxu0 0.0
        %1270 = vmatpush1.msra.mxu0 0.0
        %1271 = vmatprep.subr.mxu0 0.0
        %1272 = vmatpush1.msra.mxu0 0.0
        %1273 = vmatprep.subr.mxu0 0.0
        %1274 = vmatpush1.msra.mxu0 0.0
        %1275 = vmatprep.subr.mxu0 0.0
        %1276 = vmatpush1.msra.mxu0 0.0
        %1277 = vmatprep.subr.mxu0 0.0
        %1278 = vmatpush1.msra.mxu0 0.0
        %1279 = vmatprep.subr.mxu0 0.0
        %1280 = vmatpush1.msra.mxu0 0.0
        %1281 = vmatprep.subr.mxu0 0.0
        %1282 = vmatpush1.msra.mxu0 0.0
        %1283 = vmatprep.subr.mxu0 0.0
        %1284 = vmatpush1.msra.mxu0 0.0
        %1285 = vmatprep.subr.mxu0 0.0
        %1286 = vmatpush1.msra.mxu0 0.0
        %1287 = vmatprep.subr.mxu0 0.0
        %1288 = vmatpush1.msra.mxu0 0.0
        %1289 = vmatprep.subr.mxu0 0.0
        %1290 = vmatpush1.msra.mxu0 0.0
        %1291 = vmatprep.subr.mxu0 0.0
        %1292 = vmatpush1.msra.mxu0 0.0
        %1293 = vmatprep.subr.mxu0 0.0
        %1294 = vmatpush1.msra.mxu0 0.0
        %1295 = vmatprep.mubr.f32.mxu0 0.0
        %1296 = vmatmul.mubr.f32.gmra.mrb[0].mxu0 %v1229
        %v1297 = vpop.f32.mrb[0].mxu0
        %v1298 = vadd.f32 0.0, %v1297
        %v1299 = vpop.f32.mrb[0].mxu0
        %1300 = vdwg.mxu0
        %v1302 = vsel %vm593, %v980, 0
        %1304 = vmatprep.subr.mxu0 0.0
        %1305 = vmatpush1.msra.mxu0 %v1224
        %1306 = vmatprep.subr.mxu0 0.0
        %1307 = vmatpush1.msra.mxu0 %v1225
        %1308 = vmatprep.subr.mxu0 0.0
        %1309 = vmatpush1.msra.mxu0 0.0
        %1310 = vmatprep.subr.mxu0 0.0
        %1311 = vmatpush1.msra.mxu0 0.0
        %1312 = vmatprep.subr.mxu0 0.0
        %1313 = vmatpush1.msra.mxu0 0.0
        %1314 = vmatprep.subr.mxu0 0.0
        %1315 = vmatpush1.msra.mxu0 0.0
        %1316 = vmatprep.subr.mxu0 0.0
        %1317 = vmatpush1.msra.mxu0 0.0
        %1318 = vmatprep.subr.mxu0 0.0
        %1319 = vmatpush1.msra.mxu0 0.0
        %1320 = vmatprep.subr.mxu0 0.0
        %1321 = vmatpush1.msra.mxu0 0.0
        %1322 = vmatprep.subr.mxu0 0.0
        %1323 = vmatpush1.msra.mxu0 0.0
        %1324 = vmatprep.subr.mxu0 0.0
        %1325 = vmatpush1.msra.mxu0 0.0
        %1326 = vmatprep.subr.mxu0 0.0
        %1327 = vmatpush1.msra.mxu0 0.0
        %1328 = vmatprep.subr.mxu0 0.0
        %1329 = vmatpush1.msra.mxu0 0.0
        %1330 = vmatprep.subr.mxu0 0.0
        %1331 = vmatpush1.msra.mxu0 0.0
        %1332 = vmatprep.subr.mxu0 0.0
        %1333 = vmatpush1.msra.mxu0 0.0
        %1334 = vmatprep.subr.mxu0 0.0
        %1335 = vmatpush1.msra.mxu0 0.0
        %1336 = vmatprep.subr.mxu0 0.0
        %1337 = vmatpush1.msra.mxu0 0.0
        %1338 = vmatprep.subr.mxu0 0.0
        %1339 = vmatpush1.msra.mxu0 0.0
        %1340 = vmatprep.subr.mxu0 0.0
        %1341 = vmatpush1.msra.mxu0 0.0
        %1342 = vmatprep.subr.mxu0 0.0
        %1343 = vmatpush1.msra.mxu0 0.0
        %1344 = vmatprep.subr.mxu0 0.0
        %1345 = vmatpush1.msra.mxu0 0.0
        %1346 = vmatprep.subr.mxu0 0.0
        %1347 = vmatpush1.msra.mxu0 0.0
        %1348 = vmatprep.subr.mxu0 0.0
        %1349 = vmatpush1.msra.mxu0 0.0
        %1350 = vmatprep.subr.mxu0 0.0
        %1351 = vmatpush1.msra.mxu0 0.0
        %1352 = vmatprep.subr.mxu0 0.0
        %1353 = vmatpush1.msra.mxu0 0.0
        %1354 = vmatprep.subr.mxu0 0.0
        %1355 = vmatpush1.msra.mxu0 0.0
        %1356 = vmatprep.subr.mxu0 0.0
        %1357 = vmatpush1.msra.mxu0 0.0
        %1358 = vmatprep.subr.mxu0 0.0
        %1359 = vmatpush1.msra.mxu0 0.0
        %1360 = vmatprep.subr.mxu0 0.0
        %1361 = vmatpush1.msra.mxu0 0.0
        %1362 = vmatprep.subr.mxu0 0.0
        %1363 = vmatpush1.msra.mxu0 0.0
        %1364 = vmatprep.subr.mxu0 0.0
        %1365 = vmatpush1.msra.mxu0 0.0
        %1366 = vmatprep.subr.mxu0 0.0
        %1367 = vmatpush1.msra.mxu0 0.0
        %1368 = vmatprep.mubr.f32.mxu0 0.0
        %1369 = vmatmul.mubr.f32.gmra.mrb[0].mxu0 %v1302
        %v1370 = vpop.f32.mrb[0].mxu0
        %v1371 = vadd.f32 %v1298, %v1370
        %v1372 = vpop.f32.mrb[0].mxu0
        %1373 = vdwg.mxu0
        %v1375 = vsel %vm593, %v1223, 0
        %1377 = vmatprep.subr.mxu0 0.0
        %1378 = vmatpush1.msra.mxu0 %v1226
        %1379 = vmatprep.subr.mxu0 0.0
        %1380 = vmatpush1.msra.mxu0 %v1227
        %1381 = vmatprep.subr.mxu0 0.0
        %1382 = vmatpush1.msra.mxu0 0.0
        %1383 = vmatprep.subr.mxu0 0.0
        %1384 = vmatpush1.msra.mxu0 0.0
        %1385 = vmatprep.subr.mxu0 0.0
        %1386 = vmatpush1.msra.mxu0 0.0
        %1387 = vmatprep.subr.mxu0 0.0
        %1388 = vmatpush1.msra.mxu0 0.0
        %1389 = vmatprep.subr.mxu0 0.0
        %1390 = vmatpush1.msra.mxu0 0.0
        %1391 = vmatprep.subr.mxu0 0.0
        %1392 = vmatpush1.msra.mxu0 0.0
        %1393 = vmatprep.subr.mxu0 0.0
        %1394 = vmatpush1.msra.mxu0 0.0
        %1395 = vmatprep.subr.mxu0 0.0
        %1396 = vmatpush1.msra.mxu0 0.0
        %1397 = vmatprep.subr.mxu0 0.0
        %1398 = vmatpush1.msra.mxu0 0.0
        %1399 = vmatprep.subr.mxu0 0.0
        %1400 = vmatpush1.msra.mxu0 0.0
        %1401 = vmatprep.subr.mxu0 0.0
        %1402 = vmatpush1.msra.mxu0 0.0
        %1403 = vmatprep.subr.mxu0 0.0
        %1404 = vmatpush1.msra.mxu0 0.0
        %1405 = vmatprep.subr.mxu0 0.0
        %1406 = vmatpush1.msra.mxu0 0.0
        %1407 = vmatprep.subr.mxu0 0.0
        %1408 = vmatpush1.msra.mxu0 0.0
        %1409 = vmatprep.subr.mxu0 0.0
        %1410 = vmatpush1.msra.mxu0 0.0
        %1411 = vmatprep.subr.mxu0 0.0
        %1412 = vmatpush1.msra.mxu0 0.0
        %1413 = vmatprep.subr.mxu0 0.0
        %1414 = vmatpush1.msra.mxu0 0.0
        %1415 = vmatprep.subr.mxu0 0.0
        %1416 = vmatpush1.msra.mxu0 0.0
        %1417 = vmatprep.subr.mxu0 0.0
        %1418 = vmatpush1.msra.mxu0 0.0
        %1419 = vmatprep.subr.mxu0 0.0
        %1420 = vmatpush1.msra.mxu0 0.0
        %1421 = vmatprep.subr.mxu0 0.0
        %1422 = vmatpush1.msra.mxu0 0.0
        %1423 = vmatprep.subr.mxu0 0.0
        %1424 = vmatpush1.msra.mxu0 0.0
        %1425 = vmatprep.subr.mxu0 0.0
        %1426 = vmatpush1.msra.mxu0 0.0
        %1427 = vmatprep.subr.mxu0 0.0
        %1428 = vmatpush1.msra.mxu0 0.0
        %1429 = vmatprep.subr.mxu0 0.0
        %1430 = vmatpush1.msra.mxu0 0.0
        %1431 = vmatprep.subr.mxu0 0.0
        %1432 = vmatpush1.msra.mxu0 0.0
        %1433 = vmatprep.subr.mxu0 0.0
        %1434 = vmatpush1.msra.mxu0 0.0
        %1435 = vmatprep.subr.mxu0 0.0
        %1436 = vmatpush1.msra.mxu0 0.0
        %1437 = vmatprep.subr.mxu0 0.0
        %1438 = vmatpush1.msra.mxu0 0.0
        %1439 = vmatprep.subr.mxu0 0.0
        %1440 = vmatpush1.msra.mxu0 0.0
        %1441 = vmatprep.mubr.f32.mxu0 0.0
        %1442 = vmatmul.mubr.f32.gmra.mrb[0].mxu0 %v1375
        %v1443 = vpop.f32.mrb[0].mxu0
        %v1444 = vadd.f32 0.0, %v1443
        %v1445 = vpop.f32.mrb[0].mxu0
        %1446 = vdwg.mxu0
        %v1448 = vsel %vm593, %v1142, 0
        %1450 = vmatprep.subr.mxu0 0.0
        %1451 = vmatpush1.msra.mxu0 %v1224
        %1452 = vmatprep.subr.mxu0 0.0
        %1453 = vmatpush1.msra.mxu0 %v1225
        %1454 = vmatprep.subr.mxu0 0.0
        %1455 = vmatpush1.msra.mxu0 0.0
        %1456 = vmatprep.subr.mxu0 0.0
        %1457 = vmatpush1.msra.mxu0 0.0
        %1458 = vmatprep.subr.mxu0 0.0
        %1459 = vmatpush1.msra.mxu0 0.0
        %1460 = vmatprep.subr.mxu0 0.0
        %1461 = vmatpush1.msra.mxu0 0.0
        %1462 = vmatprep.subr.mxu0 0.0
        %1463 = vmatpush1.msra.mxu0 0.0
        %1464 = vmatprep.subr.mxu0 0.0
        %1465 = vmatpush1.msra.mxu0 0.0
        %1466 = vmatprep.subr.mxu0 0.0
        %1467 = vmatpush1.msra.mxu0 0.0
        %1468 = vmatprep.subr.mxu0 0.0
        %1469 = vmatpush1.msra.mxu0 0.0
        %1470 = vmatprep.subr.mxu0 0.0
        %1471 = vmatpush1.msra.mxu0 0.0
        %1472 = vmatprep.subr.mxu0 0.0
        %1473 = vmatpush1.msra.mxu0 0.0
        %1474 = vmatprep.subr.mxu0 0.0
        %1475 = vmatpush1.msra.mxu0 0.0
        %1476 = vmatprep.subr.mxu0 0.0
        %1477 = vmatpush1.msra.mxu0 0.0
        %1478 = vmatprep.subr.mxu0 0.0
        %1479 = vmatpush1.msra.mxu0 0.0
        %1480 = vmatprep.subr.mxu0 0.0
        %1481 = vmatpush1.msra.mxu0 0.0
        %1482 = vmatprep.subr.mxu0 0.0
        %1483 = vmatpush1.msra.mxu0 0.0
        %1484 = vmatprep.subr.mxu0 0.0
        %1485 = vmatpush1.msra.mxu0 0.0
        %1486 = vmatprep.subr.mxu0 0.0
        %1487 = vmatpush1.msra.mxu0 0.0
        %1488 = vmatprep.subr.mxu0 0.0
        %1489 = vmatpush1.msra.mxu0 0.0
        %1490 = vmatprep.subr.mxu0 0.0
        %1491 = vmatpush1.msra.mxu0 0.0
        %1492 = vmatprep.subr.mxu0 0.0
        %1493 = vmatpush1.msra.mxu0 0.0
        %1494 = vmatprep.subr.mxu0 0.0
        %1495 = vmatpush1.msra.mxu0 0.0
        %1496 = vmatprep.subr.mxu0 0.0
        %1497 = vmatpush1.msra.mxu0 0.0
        %1498 = vmatprep.subr.mxu0 0.0
        %1499 = vmatpush1.msra.mxu0 0.0
        %1500 = vmatprep.subr.mxu0 0.0
        %1501 = vmatpush1.msra.mxu0 0.0
        %1502 = vmatprep.subr.mxu0 0.0
        %1503 = vmatpush1.msra.mxu0 0.0
        %1504 = vmatprep.subr.mxu0 0.0
        %1505 = vmatpush1.msra.mxu0 0.0
        %1506 = vmatprep.subr.mxu0 0.0
        %1507 = vmatpush1.msra.mxu0 0.0
        %1508 = vmatprep.subr.mxu0 0.0
        %1509 = vmatpush1.msra.mxu0 0.0
        %1510 = vmatprep.subr.mxu0 0.0
        %1511 = vmatpush1.msra.mxu0 0.0
        %1512 = vmatprep.subr.mxu0 0.0
        %1513 = vmatpush1.msra.mxu0 0.0
        %1514 = vmatprep.mubr.f32.mxu0 0.0
        %1515 = vmatmul.mubr.f32.gmra.mrb[0].mxu0 %v1448
        %v1516 = vpop.f32.mrb[0].mxu0
        %v1517 = vadd.f32 %v1444, %v1516
        %v1518 = vpop.f32.mrb[0].mxu0
        %1519 = vdwg.mxu0
        %1521 = vrot.lane.b32.xlu0 %v1371, 64
        %v1522 = vpop.permute.xlu0 %1521
        %vm1524 = vcmask 781824
        %1525 = vst.msk [vmem:[%s242] sm:$0xf] %vm1524, %v1522
        %1527 = vrot.lane.b32.xlu0 %v1517, 96
        %v1528 = vpop.permute.xlu0 %1527
        %vm1530 = vcmask 1044224
        %1531 = vst.msk [vmem:[%s242] sm:$0xf] %vm1530, %v1528
        %v1532 = vld [vmem:[%s250] sm:$0xf]
        %v1533 = vld [vmem:[#allocation2] sm:$0xf]
        %v1534 = vld [vmem:[%s2] sm:$0xf]
        %1536 = vset.pattern.permute.xlu0 0
        %1537 = vperm.xlu0 %1536, %v1534
        %v1538 = vpop.permute.xlu0 %1537
        %1541 = vrot.lane.b32.xlu0 %v1532, 96
        %v1542 = vpop.permute.xlu0 %1541
        %v1544 = vsel %vm260, %v1533, 0
        %v1546 = vsel %vm264, %v1542, 0
        %1548 = vmatprep.subr.mxu0 0.0
        %1549 = vmatpush1.msra.mxu0 %v1546
        %1550 = vmatprep.subr.mxu0 0.0
        %1551 = vmatpush1.msra.mxu0 0.0
        %1552 = vmatprep.subr.mxu0 0.0
        %1553 = vmatpush1.msra.mxu0 0.0
        %1554 = vmatprep.subr.mxu0 0.0
        %1555 = vmatpush1.msra.mxu0 0.0
        %1556 = vmatprep.subr.mxu0 0.0
        %1557 = vmatpush1.msra.mxu0 0.0
        %1558 = vmatprep.subr.mxu0 0.0
        %1559 = vmatpush1.msra.mxu0 0.0
        %1560 = vmatprep.subr.mxu0 0.0
        %1561 = vmatpush1.msra.mxu0 0.0
        %1562 = vmatprep.subr.mxu0 0.0
        %1563 = vmatpush1.msra.mxu0 0.0
        %1564 = vmatprep.subr.mxu0 0.0
        %1565 = vmatpush1.msra.mxu0 0.0
        %1566 = vmatprep.subr.mxu0 0.0
        %1567 = vmatpush1.msra.mxu0 0.0
        %1568 = vmatprep.subr.mxu0 0.0
        %1569 = vmatpush1.msra.mxu0 0.0
        %1570 = vmatprep.subr.mxu0 0.0
        %1571 = vmatpush1.msra.mxu0 0.0
        %1572 = vmatprep.subr.mxu0 0.0
        %1573 = vmatpush1.msra.mxu0 0.0
        %1574 = vmatprep.subr.mxu0 0.0
        %1575 = vmatpush1.msra.mxu0 0.0
        %1576 = vmatprep.subr.mxu0 0.0
        %1577 = vmatpush1.msra.mxu0 0.0
        %1578 = vmatprep.subr.mxu0 0.0
        %1579 = vmatpush1.msra.mxu0 0.0
        %1580 = vmatprep.subr.mxu0 0.0
        %1581 = vmatpush1.msra.mxu0 0.0
        %1582 = vmatprep.subr.mxu0 0.0
        %1583 = vmatpush1.msra.mxu0 0.0
        %1584 = vmatprep.subr.mxu0 0.0
        %1585 = vmatpush1.msra.mxu0 0.0
        %1586 = vmatprep.subr.mxu0 0.0
        %1587 = vmatpush1.msra.mxu0 0.0
        %1588 = vmatprep.subr.mxu0 0.0
        %1589 = vmatpush1.msra.mxu0 0.0
        %1590 = vmatprep.subr.mxu0 0.0
        %1591 = vmatpush1.msra.mxu0 0.0
        %1592 = vmatprep.subr.mxu0 0.0
        %1593 = vmatpush1.msra.mxu0 0.0
        %1594 = vmatprep.subr.mxu0 0.0
        %1595 = vmatpush1.msra.mxu0 0.0
        %1596 = vmatprep.subr.mxu0 0.0
        %1597 = vmatpush1.msra.mxu0 0.0
        %1598 = vmatprep.subr.mxu0 0.0
        %1599 = vmatpush1.msra.mxu0 0.0
        %1600 = vmatprep.subr.mxu0 0.0
        %1601 = vmatpush1.msra.mxu0 0.0
        %1602 = vmatprep.subr.mxu0 0.0
        %1603 = vmatpush1.msra.mxu0 0.0
        %1604 = vmatprep.subr.mxu0 0.0
        %1605 = vmatpush1.msra.mxu0 0.0
        %1606 = vmatprep.subr.mxu0 0.0
        %1607 = vmatpush1.msra.mxu0 0.0
        %1608 = vmatprep.subr.mxu0 0.0
        %1609 = vmatpush1.msra.mxu0 0.0
        %1610 = vmatprep.subr.mxu0 0.0
        %1611 = vmatpush1.msra.mxu0 0.0
        %1612 = vmatprep.mubr.f32.mxu0 0.0
        %1613 = vmatmul.mubr.f32.gmra.mrb[0].mxu0 %v1544
        %v1614 = vpop.f32.mrb[0].mxu0
        %v1615 = vadd.f32 %v1538, %v1614
        %v1616 = vpop.f32.mrb[0].mxu0
        %1617 = vdwg.mxu0
        %v1618 = vmax.f32 %v1615, 0.0
        %v1619 = vld [vmem:[%s339] sm:$0xf]
        %v1620 = vld [vmem:[%s341] sm:$0xf]
        %1622 = vset.pattern.permute.xlu0 0
        %1623 = vperm.xlu0 %1622, %v1620
        %v1624 = vpop.permute.xlu0 %1623
        %v1627 = vsel %vm260, %v1619, 0
        %1629 = vmatprep.subr.mxu0 0.0
        %1630 = vmatpush1.msra.mxu0 %v1546
        %1631 = vmatprep.subr.mxu0 0.0
        %1632 = vmatpush1.msra.mxu0 0.0
        %1633 = vmatprep.subr.mxu0 0.0
        %1634 = vmatpush1.msra.mxu0 0.0
        %1635 = vmatprep.subr.mxu0 0.0
        %1636 = vmatpush1.msra.mxu0 0.0
        %1637 = vmatprep.subr.mxu0 0.0
        %1638 = vmatpush1.msra.mxu0 0.0
        %1639 = vmatprep.subr.mxu0 0.0
        %1640 = vmatpush1.msra.mxu0 0.0
        %1641 = vmatprep.subr.mxu0 0.0
        %1642 = vmatpush1.msra.mxu0 0.0
        %1643 = vmatprep.subr.mxu0 0.0
        %1644 = vmatpush1.msra.mxu0 0.0
        %1645 = vmatprep.subr.mxu0 0.0
        %1646 = vmatpush1.msra.mxu0 0.0
        %1647 = vmatprep.subr.mxu0 0.0
        %1648 = vmatpush1.msra.mxu0 0.0
        %1649 = vmatprep.subr.mxu0 0.0
        %1650 = vmatpush1.msra.mxu0 0.0
        %1651 = vmatprep.subr.mxu0 0.0
        %1652 = vmatpush1.msra.mxu0 0.0
        %1653 = vmatprep.subr.mxu0 0.0
        %1654 = vmatpush1.msra.mxu0 0.0
        %1655 = vmatprep.subr.mxu0 0.0
        %1656 = vmatpush1.msra.mxu0 0.0
        %1657 = vmatprep.subr.mxu0 0.0
        %1658 = vmatpush1.msra.mxu0 0.0
        %1659 = vmatprep.subr.mxu0 0.0
        %1660 = vmatpush1.msra.mxu0 0.0
        %1661 = vmatprep.subr.mxu0 0.0
        %1662 = vmatpush1.msra.mxu0 0.0
        %1663 = vmatprep.subr.mxu0 0.0
        %1664 = vmatpush1.msra.mxu0 0.0
        %1665 = vmatprep.subr.mxu0 0.0
        %1666 = vmatpush1.msra.mxu0 0.0
        %1667 = vmatprep.subr.mxu0 0.0
        %1668 = vmatpush1.msra.mxu0 0.0
        %1669 = vmatprep.subr.mxu0 0.0
        %1670 = vmatpush1.msra.mxu0 0.0
        %1671 = vmatprep.subr.mxu0 0.0
        %1672 = vmatpush1.msra.mxu0 0.0
        %1673 = vmatprep.subr.mxu0 0.0
        %1674 = vmatpush1.msra.mxu0 0.0
        %1675 = vmatprep.subr.mxu0 0.0
        %1676 = vmatpush1.msra.mxu0 0.0
        %1677 = vmatprep.subr.mxu0 0.0
        %1678 = vmatpush1.msra.mxu0 0.0
        %1679 = vmatprep.subr.mxu0 0.0
        %1680 = vmatpush1.msra.mxu0 0.0
        %1681 = vmatprep.subr.mxu0 0.0
        %1682 = vmatpush1.msra.mxu0 0.0
        %1683 = vmatprep.subr.mxu0 0.0
        %1684 = vmatpush1.msra.mxu0 0.0
        %1685 = vmatprep.subr.mxu0 0.0
        %1686 = vmatpush1.msra.mxu0 0.0
        %1687 = vmatprep.subr.mxu0 0.0
        %1688 = vmatpush1.msra.mxu0 0.0
        %1689 = vmatprep.subr.mxu0 0.0
        %1690 = vmatpush1.msra.mxu0 0.0
        %1691 = vmatprep.subr.mxu0 0.0
        %1692 = vmatpush1.msra.mxu0 0.0
        %1693 = vmatprep.mubr.f32.mxu0 0.0
        %1694 = vmatmul.mubr.f32.gmra.mrb[0].mxu0 %v1627
        %v1695 = vpop.f32.mrb[0].mxu0
        %v1696 = vadd.f32 %v1624, %v1695
        %v1697 = vpop.f32.mrb[0].mxu0
        %1698 = vdwg.mxu0
        %v1699 = vmax.f32 %v1696, 0.0
        %v1700 = vld [vmem:[%s422] sm:$0xf]
        %v1701 = vld [vmem:[%s424] sm:$0xf]
        %1703 = vset.pattern.permute.xlu0 0
        %1704 = vperm.xlu0 %1703, %v1701
        %v1705 = vpop.permute.xlu0 %1704
        %v1708 = vsel %vm260, %v1700, 0
        %1710 = vmatprep.subr.mxu0 0.0
        %1711 = vmatpush1.msra.mxu0 %v1546
        %1712 = vmatprep.subr.mxu0 0.0
        %1713 = vmatpush1.msra.mxu0 0.0
        %1714 = vmatprep.subr.mxu0 0.0
        %1715 = vmatpush1.msra.mxu0 0.0
        %1716 = vmatprep.subr.mxu0 0.0
        %1717 = vmatpush1.msra.mxu0 0.0
        %1718 = vmatprep.subr.mxu0 0.0
        %1719 = vmatpush1.msra.mxu0 0.0
        %1720 = vmatprep.subr.mxu0 0.0
        %1721 = vmatpush1.msra.mxu0 0.0
        %1722 = vmatprep.subr.mxu0 0.0
        %1723 = vmatpush1.msra.mxu0 0.0
        %1724 = vmatprep.subr.mxu0 0.0
        %1725 = vmatpush1.msra.mxu0 0.0
        %1726 = vmatprep.subr.mxu0 0.0
        %1727 = vmatpush1.msra.mxu0 0.0
        %1728 = vmatprep.subr.mxu0 0.0
        %1729 = vmatpush1.msra.mxu0 0.0
        %1730 = vmatprep.subr.mxu0 0.0
        %1731 = vmatpush1.msra.mxu0 0.0
        %1732 = vmatprep.subr.mxu0 0.0
        %1733 = vmatpush1.msra.mxu0 0.0
        %1734 = vmatprep.subr.mxu0 0.0
        %1735 = vmatpush1.msra.mxu0 0.0
        %1736 = vmatprep.subr.mxu0 0.0
        %1737 = vmatpush1.msra.mxu0 0.0
        %1738 = vmatprep.subr.mxu0 0.0
        %1739 = vmatpush1.msra.mxu0 0.0
        %1740 = vmatprep.subr.mxu0 0.0
        %1741 = vmatpush1.msra.mxu0 0.0
        %1742 = vmatprep.subr.mxu0 0.0
        %1743 = vmatpush1.msra.mxu0 0.0
        %1744 = vmatprep.subr.mxu0 0.0
        %1745 = vmatpush1.msra.mxu0 0.0
        %1746 = vmatprep.subr.mxu0 0.0
        %1747 = vmatpush1.msra.mxu0 0.0
        %1748 = vmatprep.subr.mxu0 0.0
        %1749 = vmatpush1.msra.mxu0 0.0
        %1750 = vmatprep.subr.mxu0 0.0
        %1751 = vmatpush1.msra.mxu0 0.0
        %1752 = vmatprep.subr.mxu0 0.0
        %1753 = vmatpush1.msra.mxu0 0.0
        %1754 = vmatprep.subr.mxu0 0.0
        %1755 = vmatpush1.msra.mxu0 0.0
        %1756 = vmatprep.subr.mxu0 0.0
        %1757 = vmatpush1.msra.mxu0 0.0
        %1758 = vmatprep.subr.mxu0 0.0
        %1759 = vmatpush1.msra.mxu0 0.0
        %1760 = vmatprep.subr.mxu0 0.0
        %1761 = vmatpush1.msra.mxu0 0.0
        %1762 = vmatprep.subr.mxu0 0.0
        %1763 = vmatpush1.msra.mxu0 0.0
        %1764 = vmatprep.subr.mxu0 0.0
        %1765 = vmatpush1.msra.mxu0 0.0
        %1766 = vmatprep.subr.mxu0 0.0
        %1767 = vmatpush1.msra.mxu0 0.0
        %1768 = vmatprep.subr.mxu0 0.0
        %1769 = vmatpush1.msra.mxu0 0.0
        %1770 = vmatprep.subr.mxu0 0.0
        %1771 = vmatpush1.msra.mxu0 0.0
        %1772 = vmatprep.subr.mxu0 0.0
        %1773 = vmatpush1.msra.mxu0 0.0
        %1774 = vmatprep.mubr.f32.mxu0 0.0
        %1775 = vmatmul.mubr.f32.gmra.mrb[0].mxu0 %v1708
        %v1776 = vpop.f32.mrb[0].mxu0
        %v1777 = vadd.f32 %v1705, %v1776
        %v1778 = vpop.f32.mrb[0].mxu0
        %1779 = vdwg.mxu0
        %v1780 = vmax.f32 %v1777, 0.0
        %v1781 = vld [vmem:[%s505] sm:$0xf]
        %v1782 = vld [vmem:[%s507] sm:$0xf]
        %1784 = vset.pattern.permute.xlu0 0
        %1785 = vperm.xlu0 %1784, %v1782
        %v1786 = vpop.permute.xlu0 %1785
        %v1789 = vsel %vm260, %v1781, 0
        %1791 = vmatprep.subr.mxu0 0.0
        %1792 = vmatpush1.msra.mxu0 %v1546
        %1793 = vmatprep.subr.mxu0 0.0
        %1794 = vmatpush1.msra.mxu0 0.0
        %1795 = vmatprep.subr.mxu0 0.0
        %1796 = vmatpush1.msra.mxu0 0.0
        %1797 = vmatprep.subr.mxu0 0.0
        %1798 = vmatpush1.msra.mxu0 0.0
        %1799 = vmatprep.subr.mxu0 0.0
        %1800 = vmatpush1.msra.mxu0 0.0
        %1801 = vmatprep.subr.mxu0 0.0
        %1802 = vmatpush1.msra.mxu0 0.0
        %1803 = vmatprep.subr.mxu0 0.0
        %1804 = vmatpush1.msra.mxu0 0.0
        %1805 = vmatprep.subr.mxu0 0.0
        %1806 = vmatpush1.msra.mxu0 0.0
        %1807 = vmatprep.subr.mxu0 0.0
        %1808 = vmatpush1.msra.mxu0 0.0
        %1809 = vmatprep.subr.mxu0 0.0
        %1810 = vmatpush1.msra.mxu0 0.0
        %1811 = vmatprep.subr.mxu0 0.0
        %1812 = vmatpush1.msra.mxu0 0.0
        %1813 = vmatprep.subr.mxu0 0.0
        %1814 = vmatpush1.msra.mxu0 0.0
        %1815 = vmatprep.subr.mxu0 0.0
        %1816 = vmatpush1.msra.mxu0 0.0
        %1817 = vmatprep.subr.mxu0 0.0
        %1818 = vmatpush1.msra.mxu0 0.0
        %1819 = vmatprep.subr.mxu0 0.0
        %1820 = vmatpush1.msra.mxu0 0.0
        %1821 = vmatprep.subr.mxu0 0.0
        %1822 = vmatpush1.msra.mxu0 0.0
        %1823 = vmatprep.subr.mxu0 0.0
        %1824 = vmatpush1.msra.mxu0 0.0
        %1825 = vmatprep.subr.mxu0 0.0
        %1826 = vmatpush1.msra.mxu0 0.0
        %1827 = vmatprep.subr.mxu0 0.0
        %1828 = vmatpush1.msra.mxu0 0.0
        %1829 = vmatprep.subr.mxu0 0.0
        %1830 = vmatpush1.msra.mxu0 0.0
        %1831 = vmatprep.subr.mxu0 0.0
        %1832 = vmatpush1.msra.mxu0 0.0
        %1833 = vmatprep.subr.mxu0 0.0
        %1834 = vmatpush1.msra.mxu0 0.0
        %1835 = vmatprep.subr.mxu0 0.0
        %1836 = vmatpush1.msra.mxu0 0.0
        %1837 = vmatprep.subr.mxu0 0.0
        %1838 = vmatpush1.msra.mxu0 0.0
        %1839 = vmatprep.subr.mxu0 0.0
        %1840 = vmatpush1.msra.mxu0 0.0
        %1841 = vmatprep.subr.mxu0 0.0
        %1842 = vmatpush1.msra.mxu0 0.0
        %1843 = vmatprep.subr.mxu0 0.0
        %1844 = vmatpush1.msra.mxu0 0.0
        %1845 = vmatprep.subr.mxu0 0.0
        %1846 = vmatpush1.msra.mxu0 0.0
        %1847 = vmatprep.subr.mxu0 0.0
        %1848 = vmatpush1.msra.mxu0 0.0
        %1849 = vmatprep.subr.mxu0 0.0
        %1850 = vmatpush1.msra.mxu0 0.0
        %1851 = vmatprep.subr.mxu0 0.0
        %1852 = vmatpush1.msra.mxu0 0.0
        %1853 = vmatprep.subr.mxu0 0.0
        %1854 = vmatpush1.msra.mxu0 0.0
        %1855 = vmatprep.mubr.f32.mxu0 0.0
        %1856 = vmatmul.mubr.f32.gmra.mrb[0].mxu0 %v1789
        %v1857 = vpop.f32.mrb[0].mxu0
        %v1858 = vadd.f32 %v1786, %v1857
        %v1859 = vpop.f32.mrb[0].mxu0
        %1860 = vdwg.mxu0
        %v1861 = vmax.f32 %v1858, 0.0
        %v1862 = vld [vmem:[#allocation5] sm:$0xff]
        %v1863 = vld [vmem:[#allocation5 + $0x8] sm:$0xff]
        %v1864 = vld [vmem:[%s590] sm:$0xff]
        %v1865 = vld [vmem:[%s590 + $0x8] sm:$0xff]
        %v1867 = vsel %vm593, %v1699, 0
        %1869 = vmatprep.subr.mxu0 0.0
        %1870 = vmatpush1.msra.mxu0 %v1864
        %1871 = vmatprep.subr.mxu0 0.0
        %1872 = vmatpush1.msra.mxu0 %v1865
        %1873 = vmatprep.subr.mxu0 0.0
        %1874 = vmatpush1.msra.mxu0 0.0
        %1875 = vmatprep.subr.mxu0 0.0
        %1876 = vmatpush1.msra.mxu0 0.0
        %1877 = vmatprep.subr.mxu0 0.0
        %1878 = vmatpush1.msra.mxu0 0.0
        %1879 = vmatprep.subr.mxu0 0.0
        %1880 = vmatpush1.msra.mxu0 0.0
        %1881 = vmatprep.subr.mxu0 0.0
        %1882 = vmatpush1.msra.mxu0 0.0
        %1883 = vmatprep.subr.mxu0 0.0
        %1884 = vmatpush1.msra.mxu0 0.0
        %1885 = vmatprep.subr.mxu0 0.0
        %1886 = vmatpush1.msra.mxu0 0.0
        %1887 = vmatprep.subr.mxu0 0.0
        %1888 = vmatpush1.msra.mxu0 0.0
        %1889 = vmatprep.subr.mxu0 0.0
        %1890 = vmatpush1.msra.mxu0 0.0
        %1891 = vmatprep.subr.mxu0 0.0
        %1892 = vmatpush1.msra.mxu0 0.0
        %1893 = vmatprep.subr.mxu0 0.0
        %1894 = vmatpush1.msra.mxu0 0.0
        %1895 = vmatprep.subr.mxu0 0.0
        %1896 = vmatpush1.msra.mxu0 0.0
        %1897 = vmatprep.subr.mxu0 0.0
        %1898 = vmatpush1.msra.mxu0 0.0
        %1899 = vmatprep.subr.mxu0 0.0
        %1900 = vmatpush1.msra.mxu0 0.0
        %1901 = vmatprep.subr.mxu0 0.0
        %1902 = vmatpush1.msra.mxu0 0.0
        %1903 = vmatprep.subr.mxu0 0.0
        %1904 = vmatpush1.msra.mxu0 0.0
        %1905 = vmatprep.subr.mxu0 0.0
        %1906 = vmatpush1.msra.mxu0 0.0
        %1907 = vmatprep.subr.mxu0 0.0
        %1908 = vmatpush1.msra.mxu0 0.0
        %1909 = vmatprep.subr.mxu0 0.0
        %1910 = vmatpush1.msra.mxu0 0.0
        %1911 = vmatprep.subr.mxu0 0.0
        %1912 = vmatpush1.msra.mxu0 0.0
        %1913 = vmatprep.subr.mxu0 0.0
        %1914 = vmatpush1.msra.mxu0 0.0
        %1915 = vmatprep.subr.mxu0 0.0
        %1916 = vmatpush1.msra.mxu0 0.0
        %1917 = vmatprep.subr.mxu0 0.0
        %1918 = vmatpush1.msra.mxu0 0.0
        %1919 = vmatprep.subr.mxu0 0.0
        %1920 = vmatpush1.msra.mxu0 0.0
        %1921 = vmatprep.subr.mxu0 0.0
        %1922 = vmatpush1.msra.mxu0 0.0
        %1923 = vmatprep.subr.mxu0 0.0
        %1924 = vmatpush1.msra.mxu0 0.0
        %1925 = vmatprep.subr.mxu0 0.0
        %1926 = vmatpush1.msra.mxu0 0.0
        %1927 = vmatprep.subr.mxu0 0.0
        %1928 = vmatpush1.msra.mxu0 0.0
        %1929 = vmatprep.subr.mxu0 0.0
        %1930 = vmatpush1.msra.mxu0 0.0
        %1931 = vmatprep.subr.mxu0 0.0
        %1932 = vmatpush1.msra.mxu0 0.0
        %1933 = vmatprep.mubr.f32.mxu0 0.0
        %1934 = vmatmul.mubr.f32.gmra.mrb[0].mxu0 %v1867
        %v1935 = vpop.f32.mrb[0].mxu0
        %v1936 = vadd.f32 0.0, %v1935
        %v1937 = vpop.f32.mrb[0].mxu0
        %1938 = vdwg.mxu0
        %v1940 = vsel %vm593, %v1618, 0
        %1942 = vmatprep.subr.mxu0 0.0
        %1943 = vmatpush1.msra.mxu0 %v1862
        %1944 = vmatprep.subr.mxu0 0.0
        %1945 = vmatpush1.msra.mxu0 %v1863
        %1946 = vmatprep.subr.mxu0 0.0
        %1947 = vmatpush1.msra.mxu0 0.0
        %1948 = vmatprep.subr.mxu0 0.0
        %1949 = vmatpush1.msra.mxu0 0.0
        %1950 = vmatprep.subr.mxu0 0.0
        %1951 = vmatpush1.msra.mxu0 0.0
        %1952 = vmatprep.subr.mxu0 0.0
        %1953 = vmatpush1.msra.mxu0 0.0
        %1954 = vmatprep.subr.mxu0 0.0
        %1955 = vmatpush1.msra.mxu0 0.0
        %1956 = vmatprep.subr.mxu0 0.0
        %1957 = vmatpush1.msra.mxu0 0.0
        %1958 = vmatprep.subr.mxu0 0.0
        %1959 = vmatpush1.msra.mxu0 0.0
        %1960 = vmatprep.subr.mxu0 0.0
        %1961 = vmatpush1.msra.mxu0 0.0
        %1962 = vmatprep.subr.mxu0 0.0
        %1963 = vmatpush1.msra.mxu0 0.0
        %1964 = vmatprep.subr.mxu0 0.0
        %1965 = vmatpush1.msra.mxu0 0.0
        %1966 = vmatprep.subr.mxu0 0.0
        %1967 = vmatpush1.msra.mxu0 0.0
        %1968 = vmatprep.subr.mxu0 0.0
        %1969 = vmatpush1.msra.mxu0 0.0
        %1970 = vmatprep.subr.mxu0 0.0
        %1971 = vmatpush1.msra.mxu0 0.0
        %1972 = vmatprep.subr.mxu0 0.0
        %1973 = vmatpush1.msra.mxu0 0.0
        %1974 = vmatprep.subr.mxu0 0.0
        %1975 = vmatpush1.msra.mxu0 0.0
        %1976 = vmatprep.subr.mxu0 0.0
        %1977 = vmatpush1.msra.mxu0 0.0
        %1978 = vmatprep.subr.mxu0 0.0
        %1979 = vmatpush1.msra.mxu0 0.0
        %1980 = vmatprep.subr.mxu0 0.0
        %1981 = vmatpush1.msra.mxu0 0.0
        %1982 = vmatprep.subr.mxu0 0.0
        %1983 = vmatpush1.msra.mxu0 0.0
        %1984 = vmatprep.subr.mxu0 0.0
        %1985 = vmatpush1.msra.mxu0 0.0
        %1986 = vmatprep.subr.mxu0 0.0
        %1987 = vmatpush1.msra.mxu0 0.0
        %1988 = vmatprep.subr.mxu0 0.0
        %1989 = vmatpush1.msra.mxu0 0.0
        %1990 = vmatprep.subr.mxu0 0.0
        %1991 = vmatpush1.msra.mxu0 0.0
        %1992 = vmatprep.subr.mxu0 0.0
        %1993 = vmatpush1.msra.mxu0 0.0
        %1994 = vmatprep.subr.mxu0 0.0
        %1995 = vmatpush1.msra.mxu0 0.0
        %1996 = vmatprep.subr.mxu0 0.0
        %1997 = vmatpush1.msra.mxu0 0.0
        %1998 = vmatprep.subr.mxu0 0.0
        %1999 = vmatpush1.msra.mxu0 0.0
        %2000 = vmatprep.subr.mxu0 0.0
        %2001 = vmatpush1.msra.mxu0 0.0
        %2002 = vmatprep.subr.mxu0 0.0
        %2003 = vmatpush1.msra.mxu0 0.0
        %2004 = vmatprep.subr.mxu0 0.0
        %2005 = vmatpush1.msra.mxu0 0.0
        %2006 = vmatprep.mubr.f32.mxu0 0.0
        %2007 = vmatmul.mubr.f32.gmra.mrb[0].mxu0 %v1940
        %v2008 = vpop.f32.mrb[0].mxu0
        %v2009 = vadd.f32 %v1936, %v2008
        %v2010 = vpop.f32.mrb[0].mxu0
        %2011 = vdwg.mxu0
        %v2013 = vsel %vm593, %v1861, 0
        %2015 = vmatprep.subr.mxu0 0.0
        %2016 = vmatpush1.msra.mxu0 %v1864
        %2017 = vmatprep.subr.mxu0 0.0
        %2018 = vmatpush1.msra.mxu0 %v1865
        %2019 = vmatprep.subr.mxu0 0.0
        %2020 = vmatpush1.msra.mxu0 0.0
        %2021 = vmatprep.subr.mxu0 0.0
        %2022 = vmatpush1.msra.mxu0 0.0
        %2023 = vmatprep.subr.mxu0 0.0
        %2024 = vmatpush1.msra.mxu0 0.0
        %2025 = vmatprep.subr.mxu0 0.0
        %2026 = vmatpush1.msra.mxu0 0.0
        %2027 = vmatprep.subr.mxu0 0.0
        %2028 = vmatpush1.msra.mxu0 0.0
        %2029 = vmatprep.subr.mxu0 0.0
        %2030 = vmatpush1.msra.mxu0 0.0
        %2031 = vmatprep.subr.mxu0 0.0
        %2032 = vmatpush1.msra.mxu0 0.0
        %2033 = vmatprep.subr.mxu0 0.0
        %2034 = vmatpush1.msra.mxu0 0.0
        %2035 = vmatprep.subr.mxu0 0.0
        %2036 = vmatpush1.msra.mxu0 0.0
        %2037 = vmatprep.subr.mxu0 0.0
        %2038 = vmatpush1.msra.mxu0 0.0
        %2039 = vmatprep.subr.mxu0 0.0
        %2040 = vmatpush1.msra.mxu0 0.0
        %2041 = vmatprep.subr.mxu0 0.0
        %2042 = vmatpush1.msra.mxu0 0.0
        %2043 = vmatprep.subr.mxu0 0.0
        %2044 = vmatpush1.msra.mxu0 0.0
        %2045 = vmatprep.subr.mxu0 0.0
        %2046 = vmatpush1.msra.mxu0 0.0
        %2047 = vmatprep.subr.mxu0 0.0
        %2048 = vmatpush1.msra.mxu0 0.0
        %2049 = vmatprep.subr.mxu0 0.0
        %2050 = vmatpush1.msra.mxu0 0.0
        %2051 = vmatprep.subr.mxu0 0.0
        %2052 = vmatpush1.msra.mxu0 0.0
        %2053 = vmatprep.subr.mxu0 0.0
        %2054 = vmatpush1.msra.mxu0 0.0
        %2055 = vmatprep.subr.mxu0 0.0
        %2056 = vmatpush1.msra.mxu0 0.0
        %2057 = vmatprep.subr.mxu0 0.0
        %2058 = vmatpush1.msra.mxu0 0.0
        %2059 = vmatprep.subr.mxu0 0.0
        %2060 = vmatpush1.msra.mxu0 0.0
        %2061 = vmatprep.subr.mxu0 0.0
        %2062 = vmatpush1.msra.mxu0 0.0
        %2063 = vmatprep.subr.mxu0 0.0
        %2064 = vmatpush1.msra.mxu0 0.0
        %2065 = vmatprep.subr.mxu0 0.0
        %2066 = vmatpush1.msra.mxu0 0.0
        %2067 = vmatprep.subr.mxu0 0.0
        %2068 = vmatpush1.msra.mxu0 0.0
        %2069 = vmatprep.subr.mxu0 0.0
        %2070 = vmatpush1.msra.mxu0 0.0
        %2071 = vmatprep.subr.mxu0 0.0
        %2072 = vmatpush1.msra.mxu0 0.0
        %2073 = vmatprep.subr.mxu0 0.0
        %2074 = vmatpush1.msra.mxu0 0.0
        %2075 = vmatprep.subr.mxu0 0.0
        %2076 = vmatpush1.msra.mxu0 0.0
        %2077 = vmatprep.subr.mxu0 0.0
        %2078 = vmatpush1.msra.mxu0 0.0
        %2079 = vmatprep.mubr.f32.mxu0 0.0
        %2080 = vmatmul.mubr.f32.gmra.mrb[0].mxu0 %v2013
        %v2081 = vpop.f32.mrb[0].mxu0
        %v2082 = vadd.f32 0.0, %v2081
        %v2083 = vpop.f32.mrb[0].mxu0
        %2084 = vdwg.mxu0
        %v2086 = vsel %vm593, %v1780, 0
        %2088 = vmatprep.subr.mxu0 0.0
        %2089 = vmatpush1.msra.mxu0 %v1862
        %2090 = vmatprep.subr.mxu0 0.0
        %2091 = vmatpush1.msra.mxu0 %v1863
        %2092 = vmatprep.subr.mxu0 0.0
        %2093 = vmatpush1.msra.mxu0 0.0
        %2094 = vmatprep.subr.mxu0 0.0
        %2095 = vmatpush1.msra.mxu0 0.0
        %2096 = vmatprep.subr.mxu0 0.0
        %2097 = vmatpush1.msra.mxu0 0.0
        %2098 = vmatprep.subr.mxu0 0.0
        %2099 = vmatpush1.msra.mxu0 0.0
        %2100 = vmatprep.subr.mxu0 0.0
        %2101 = vmatpush1.msra.mxu0 0.0
        %2102 = vmatprep.subr.mxu0 0.0
        %2103 = vmatpush1.msra.mxu0 0.0
        %2104 = vmatprep.subr.mxu0 0.0
        %2105 = vmatpush1.msra.mxu0 0.0
        %2106 = vmatprep.subr.mxu0 0.0
        %2107 = vmatpush1.msra.mxu0 0.0
        %2108 = vmatprep.subr.mxu0 0.0
        %2109 = vmatpush1.msra.mxu0 0.0
        %2110 = vmatprep.subr.mxu0 0.0
        %2111 = vmatpush1.msra.mxu0 0.0
        %2112 = vmatprep.subr.mxu0 0.0
        %2113 = vmatpush1.msra.mxu0 0.0
        %2114 = vmatprep.subr.mxu0 0.0
        %2115 = vmatpush1.msra.mxu0 0.0
        %2116 = vmatprep.subr.mxu0 0.0
        %2117 = vmatpush1.msra.mxu0 0.0
        %2118 = vmatprep.subr.mxu0 0.0
        %2119 = vmatpush1.msra.mxu0 0.0
        %2120 = vmatprep.subr.mxu0 0.0
        %2121 = vmatpush1.msra.mxu0 0.0
        %2122 = vmatprep.subr.mxu0 0.0
        %2123 = vmatpush1.msra.mxu0 0.0
        %2124 = vmatprep.subr.mxu0 0.0
        %2125 = vmatpush1.msra.mxu0 0.0
        %2126 = vmatprep.subr.mxu0 0.0
        %2127 = vmatpush1.msra.mxu0 0.0
        %2128 = vmatprep.subr.mxu0 0.0
        %2129 = vmatpush1.msra.mxu0 0.0
        %2130 = vmatprep.subr.mxu0 0.0
        %2131 = vmatpush1.msra.mxu0 0.0
        %2132 = vmatprep.subr.mxu0 0.0
        %2133 = vmatpush1.msra.mxu0 0.0
        %2134 = vmatprep.subr.mxu0 0.0
        %2135 = vmatpush1.msra.mxu0 0.0
        %2136 = vmatprep.subr.mxu0 0.0
        %2137 = vmatpush1.msra.mxu0 0.0
        %2138 = vmatprep.subr.mxu0 0.0
        %2139 = vmatpush1.msra.mxu0 0.0
        %2140 = vmatprep.subr.mxu0 0.0
        %2141 = vmatpush1.msra.mxu0 0.0
        %2142 = vmatprep.subr.mxu0 0.0
        %2143 = vmatpush1.msra.mxu0 0.0
        %2144 = vmatprep.subr.mxu0 0.0
        %2145 = vmatpush1.msra.mxu0 0.0
        %2146 = vmatprep.subr.mxu0 0.0
        %2147 = vmatpush1.msra.mxu0 0.0
        %2148 = vmatprep.subr.mxu0 0.0
        %2149 = vmatpush1.msra.mxu0 0.0
        %2150 = vmatprep.subr.mxu0 0.0
        %2151 = vmatpush1.msra.mxu0 0.0
        %2152 = vmatprep.mubr.f32.mxu0 0.0
        %2153 = vmatmul.mubr.f32.gmra.mrb[0].mxu0 %v2086
        %v2154 = vpop.f32.mrb[0].mxu0
        %v2155 = vadd.f32 %v2082, %v2154
        %v2156 = vpop.f32.mrb[0].mxu0
        %2157 = vdwg.mxu0
        %2158 = vst.msk [vmem:[%s242 + $0x4] sm:$0xf] %vm886, %v2009
        %2160 = vrot.lane.b32.xlu0 %v2155, 32
        %v2161 = vpop.permute.xlu0 %2160
        %2163 = vst.msk [vmem:[%s242 + $0x4] sm:$0xf] %vm892, %v2161
        %v2164 = vld [vmem:[%s250] sm:$0xf]
        %v2165 = vld [vmem:[#allocation2] sm:$0xf]
        %v2166 = vld [vmem:[%s2] sm:$0xf]
        %2168 = vset.pattern.permute.xlu0 0
        %2169 = vperm.xlu0 %2168, %v2166
        %v2170 = vpop.permute.xlu0 %2169
        %2173 = vrot.lane.b32.xlu0 %v2164, 80
        %v2174 = vpop.permute.xlu0 %2173
        %v2176 = vsel %vm260, %v2165, 0
        %v2178 = vsel %vm264, %v2174, 0
        %2180 = vmatprep.subr.mxu0 0.0
        %2181 = vmatpush1.msra.mxu0 %v2178
        %2182 = vmatprep.subr.mxu0 0.0
        %2183 = vmatpush1.msra.mxu0 0.0
        %2184 = vmatprep.subr.mxu0 0.0
        %2185 = vmatpush1.msra.mxu0 0.0
        %2186 = vmatprep.subr.mxu0 0.0
        %2187 = vmatpush1.msra.mxu0 0.0
        %2188 = vmatprep.subr.mxu0 0.0
        %2189 = vmatpush1.msra.mxu0 0.0
        %2190 = vmatprep.subr.mxu0 0.0
        %2191 = vmatpush1.msra.mxu0 0.0
        %2192 = vmatprep.subr.mxu0 0.0
        %2193 = vmatpush1.msra.mxu0 0.0
        %2194 = vmatprep.subr.mxu0 0.0
        %2195 = vmatpush1.msra.mxu0 0.0
        %2196 = vmatprep.subr.mxu0 0.0
        %2197 = vmatpush1.msra.mxu0 0.0
        %2198 = vmatprep.subr.mxu0 0.0
        %2199 = vmatpush1.msra.mxu0 0.0
        %2200 = vmatprep.subr.mxu0 0.0
        %2201 = vmatpush1.msra.mxu0 0.0
        %2202 = vmatprep.subr.mxu0 0.0
        %2203 = vmatpush1.msra.mxu0 0.0
        %2204 = vmatprep.subr.mxu0 0.0
        %2205 = vmatpush1.msra.mxu0 0.0
        %2206 = vmatprep.subr.mxu0 0.0
        %2207 = vmatpush1.msra.mxu0 0.0
        %2208 = vmatprep.subr.mxu0 0.0
        %2209 = vmatpush1.msra.mxu0 0.0
        %2210 = vmatprep.subr.mxu0 0.0
        %2211 = vmatpush1.msra.mxu0 0.0
        %2212 = vmatprep.subr.mxu0 0.0
        %2213 = vmatpush1.msra.mxu0 0.0
        %2214 = vmatprep.subr.mxu0 0.0
        %2215 = vmatpush1.msra.mxu0 0.0
        %2216 = vmatprep.subr.mxu0 0.0
        %2217 = vmatpush1.msra.mxu0 0.0
        %2218 = vmatprep.subr.mxu0 0.0
        %2219 = vmatpush1.msra.mxu0 0.0
        %2220 = vmatprep.subr.mxu0 0.0
        %2221 = vmatpush1.msra.mxu0 0.0
        %2222 = vmatprep.subr.mxu0 0.0
        %2223 = vmatpush1.msra.mxu0 0.0
        %2224 = vmatprep.subr.mxu0 0.0
        %2225 = vmatpush1.msra.mxu0 0.0
        %2226 = vmatprep.subr.mxu0 0.0
        %2227 = vmatpush1.msra.mxu0 0.0
        %2228 = vmatprep.subr.mxu0 0.0
        %2229 = vmatpush1.msra.mxu0 0.0
        %2230 = vmatprep.subr.mxu0 0.0
        %2231 = vmatpush1.msra.mxu0 0.0
        %2232 = vmatprep.subr.mxu0 0.0
        %2233 = vmatpush1.msra.mxu0 0.0
        %2234 = vmatprep.subr.mxu0 0.0
        %2235 = vmatpush1.msra.mxu0 0.0
        %2236 = vmatprep.subr.mxu0 0.0
        %2237 = vmatpush1.msra.mxu0 0.0
        %2238 = vmatprep.subr.mxu0 0.0
        %2239 = vmatpush1.msra.mxu0 0.0
        %2240 = vmatprep.subr.mxu0 0.0
        %2241 = vmatpush1.msra.mxu0 0.0
        %2242 = vmatprep.subr.mxu0 0.0
        %2243 = vmatpush1.msra.mxu0 0.0
        %2244 = vmatprep.mubr.f32.mxu0 0.0
        %2245 = vmatmul.mubr.f32.gmra.mrb[0].mxu0 %v2176
        %v2246 = vpop.f32.mrb[0].mxu0
        %v2247 = vadd.f32 %v2170, %v2246
        %v2248 = vpop.f32.mrb[0].mxu0
        %2249 = vdwg.mxu0
        %v2250 = vmax.f32 %v2247, 0.0
        %v2251 = vld [vmem:[%s339] sm:$0xf]
        %v2252 = vld [vmem:[%s341] sm:$0xf]
        %2254 = vset.pattern.permute.xlu0 0
        %2255 = vperm.xlu0 %2254, %v2252
        %v2256 = vpop.permute.xlu0 %2255
        %v2259 = vsel %vm260, %v2251, 0
        %2261 = vmatprep.subr.mxu0 0.0
        %2262 = vmatpush1.msra.mxu0 %v2178
        %2263 = vmatprep.subr.mxu0 0.0
        %2264 = vmatpush1.msra.mxu0 0.0
        %2265 = vmatprep.subr.mxu0 0.0
        %2266 = vmatpush1.msra.mxu0 0.0
        %2267 = vmatprep.subr.mxu0 0.0
        %2268 = vmatpush1.msra.mxu0 0.0
        %2269 = vmatprep.subr.mxu0 0.0
        %2270 = vmatpush1.msra.mxu0 0.0
        %2271 = vmatprep.subr.mxu0 0.0
        %2272 = vmatpush1.msra.mxu0 0.0
        %2273 = vmatprep.subr.mxu0 0.0
        %2274 = vmatpush1.msra.mxu0 0.0
        %2275 = vmatprep.subr.mxu0 0.0
        %2276 = vmatpush1.msra.mxu0 0.0
        %2277 = vmatprep.subr.mxu0 0.0
        %2278 = vmatpush1.msra.mxu0 0.0
        %2279 = vmatprep.subr.mxu0 0.0
        %2280 = vmatpush1.msra.mxu0 0.0
        %2281 = vmatprep.subr.mxu0 0.0
        %2282 = vmatpush1.msra.mxu0 0.0
        %2283 = vmatprep.subr.mxu0 0.0
        %2284 = vmatpush1.msra.mxu0 0.0
        %2285 = vmatprep.subr.mxu0 0.0
        %2286 = vmatpush1.msra.mxu0 0.0
        %2287 = vmatprep.subr.mxu0 0.0
        %2288 = vmatpush1.msra.mxu0 0.0
        %2289 = vmatprep.subr.mxu0 0.0
        %2290 = vmatpush1.msra.mxu0 0.0
        %2291 = vmatprep.subr.mxu0 0.0
        %2292 = vmatpush1.msra.mxu0 0.0
        %2293 = vmatprep.subr.mxu0 0.0
        %2294 = vmatpush1.msra.mxu0 0.0
        %2295 = vmatprep.subr.mxu0 0.0
        %2296 = vmatpush1.msra.mxu0 0.0
        %2297 = vmatprep.subr.mxu0 0.0
        %2298 = vmatpush1.msra.mxu0 0.0
        %2299 = vmatprep.subr.mxu0 0.0
        %2300 = vmatpush1.msra.mxu0 0.0
        %2301 = vmatprep.subr.mxu0 0.0
        %2302 = vmatpush1.msra.mxu0 0.0
        %2303 = vmatprep.subr.mxu0 0.0
        %2304 = vmatpush1.msra.mxu0 0.0
        %2305 = vmatprep.subr.mxu0 0.0
        %2306 = vmatpush1.msra.mxu0 0.0
        %2307 = vmatprep.subr.mxu0 0.0
        %2308 = vmatpush1.msra.mxu0 0.0
        %2309 = vmatprep.subr.mxu0 0.0
        %2310 = vmatpush1.msra.mxu0 0.0
        %2311 = vmatprep.subr.mxu0 0.0
        %2312 = vmatpush1.msra.mxu0 0.0
        %2313 = vmatprep.subr.mxu0 0.0
        %2314 = vmatpush1.msra.mxu0 0.0
        %2315 = vmatprep.subr.mxu0 0.0
        %2316 = vmatpush1.msra.mxu0 0.0
        %2317 = vmatprep.subr.mxu0 0.0
        %2318 = vmatpush1.msra.mxu0 0.0
        %2319 = vmatprep.subr.mxu0 0.0
        %2320 = vmatpush1.msra.mxu0 0.0
        %2321 = vmatprep.subr.mxu0 0.0
        %2322 = vmatpush1.msra.mxu0 0.0
        %2323 = vmatprep.subr.mxu0 0.0
        %2324 = vmatpush1.msra.mxu0 0.0
        %2325 = vmatprep.mubr.f32.mxu0 0.0
        %2326 = vmatmul.mubr.f32.gmra.mrb[0].mxu0 %v2259
        %v2327 = vpop.f32.mrb[0].mxu0
        %v2328 = vadd.f32 %v2256, %v2327
        %v2329 = vpop.f32.mrb[0].mxu0
        %2330 = vdwg.mxu0
        %v2331 = vmax.f32 %v2328, 0.0
        %v2332 = vld [vmem:[%s422] sm:$0xf]
        %v2333 = vld [vmem:[%s424] sm:$0xf]
        %2335 = vset.pattern.permute.xlu0 0
        %2336 = vperm.xlu0 %2335, %v2333
        %v2337 = vpop.permute.xlu0 %2336
        %v2340 = vsel %vm260, %v2332, 0
        %2342 = vmatprep.subr.mxu0 0.0
        %2343 = vmatpush1.msra.mxu0 %v2178
        %2344 = vmatprep.subr.mxu0 0.0
        %2345 = vmatpush1.msra.mxu0 0.0
        %2346 = vmatprep.subr.mxu0 0.0
        %2347 = vmatpush1.msra.mxu0 0.0
        %2348 = vmatprep.subr.mxu0 0.0
        %2349 = vmatpush1.msra.mxu0 0.0
        %2350 = vmatprep.subr.mxu0 0.0
        %2351 = vmatpush1.msra.mxu0 0.0
        %2352 = vmatprep.subr.mxu0 0.0
        %2353 = vmatpush1.msra.mxu0 0.0
        %2354 = vmatprep.subr.mxu0 0.0
        %2355 = vmatpush1.msra.mxu0 0.0
        %2356 = vmatprep.subr.mxu0 0.0
        %2357 = vmatpush1.msra.mxu0 0.0
        %2358 = vmatprep.subr.mxu0 0.0
        %2359 = vmatpush1.msra.mxu0 0.0
        %2360 = vmatprep.subr.mxu0 0.0
        %2361 = vmatpush1.msra.mxu0 0.0
        %2362 = vmatprep.subr.mxu0 0.0
        %2363 = vmatpush1.msra.mxu0 0.0
        %2364 = vmatprep.subr.mxu0 0.0
        %2365 = vmatpush1.msra.mxu0 0.0
        %2366 = vmatprep.subr.mxu0 0.0
        %2367 = vmatpush1.msra.mxu0 0.0
        %2368 = vmatprep.subr.mxu0 0.0
        %2369 = vmatpush1.msra.mxu0 0.0
        %2370 = vmatprep.subr.mxu0 0.0
        %2371 = vmatpush1.msra.mxu0 0.0
        %2372 = vmatprep.subr.mxu0 0.0
        %2373 = vmatpush1.msra.mxu0 0.0
        %2374 = vmatprep.subr.mxu0 0.0
        %2375 = vmatpush1.msra.mxu0 0.0
        %2376 = vmatprep.subr.mxu0 0.0
        %2377 = vmatpush1.msra.mxu0 0.0
        %2378 = vmatprep.subr.mxu0 0.0
        %2379 = vmatpush1.msra.mxu0 0.0
        %2380 = vmatprep.subr.mxu0 0.0
        %2381 = vmatpush1.msra.mxu0 0.0
        %2382 = vmatprep.subr.mxu0 0.0
        %2383 = vmatpush1.msra.mxu0 0.0
        %2384 = vmatprep.subr.mxu0 0.0
        %2385 = vmatpush1.msra.mxu0 0.0
        %2386 = vmatprep.subr.mxu0 0.0
        %2387 = vmatpush1.msra.mxu0 0.0
        %2388 = vmatprep.subr.mxu0 0.0
        %2389 = vmatpush1.msra.mxu0 0.0
        %2390 = vmatprep.subr.mxu0 0.0
        %2391 = vmatpush1.msra.mxu0 0.0
        %2392 = vmatprep.subr.mxu0 0.0
        %2393 = vmatpush1.msra.mxu0 0.0
        %2394 = vmatprep.subr.mxu0 0.0
        %2395 = vmatpush1.msra.mxu0 0.0
        %2396 = vmatprep.subr.mxu0 0.0
        %2397 = vmatpush1.msra.mxu0 0.0
        %2398 = vmatprep.subr.mxu0 0.0
        %2399 = vmatpush1.msra.mxu0 0.0
        %2400 = vmatprep.subr.mxu0 0.0
        %2401 = vmatpush1.msra.mxu0 0.0
        %2402 = vmatprep.subr.mxu0 0.0
        %2403 = vmatpush1.msra.mxu0 0.0
        %2404 = vmatprep.subr.mxu0 0.0
        %2405 = vmatpush1.msra.mxu0 0.0
        %2406 = vmatprep.mubr.f32.mxu0 0.0
        %2407 = vmatmul.mubr.f32.gmra.mrb[0].mxu0 %v2340
        %v2408 = vpop.f32.mrb[0].mxu0
        %v2409 = vadd.f32 %v2337, %v2408
        %v2410 = vpop.f32.mrb[0].mxu0
        %2411 = vdwg.mxu0
        %v2412 = vmax.f32 %v2409, 0.0
        %v2413 = vld [vmem:[%s505] sm:$0xf]
        %v2414 = vld [vmem:[%s507] sm:$0xf]
        %2416 = vset.pattern.permute.xlu0 0
        %2417 = vperm.xlu0 %2416, %v2414
        %v2418 = vpop.permute.xlu0 %2417
        %v2421 = vsel %vm260, %v2413, 0
        %2423 = vmatprep.subr.mxu0 0.0
        %2424 = vmatpush1.msra.mxu0 %v2178
        %2425 = vmatprep.subr.mxu0 0.0
        %2426 = vmatpush1.msra.mxu0 0.0
        %2427 = vmatprep.subr.mxu0 0.0
        %2428 = vmatpush1.msra.mxu0 0.0
        %2429 = vmatprep.subr.mxu0 0.0
        %2430 = vmatpush1.msra.mxu0 0.0
        %2431 = vmatprep.subr.mxu0 0.0
        %2432 = vmatpush1.msra.mxu0 0.0
        %2433 = vmatprep.subr.mxu0 0.0
        %2434 = vmatpush1.msra.mxu0 0.0
        %2435 = vmatprep.subr.mxu0 0.0
        %2436 = vmatpush1.msra.mxu0 0.0
        %2437 = vmatprep.subr.mxu0 0.0
        %2438 = vmatpush1.msra.mxu0 0.0
        %2439 = vmatprep.subr.mxu0 0.0
        %2440 = vmatpush1.msra.mxu0 0.0
        %2441 = vmatprep.subr.mxu0 0.0
        %2442 = vmatpush1.msra.mxu0 0.0
        %2443 = vmatprep.subr.mxu0 0.0
        %2444 = vmatpush1.msra.mxu0 0.0
        %2445 = vmatprep.subr.mxu0 0.0
        %2446 = vmatpush1.msra.mxu0 0.0
        %2447 = vmatprep.subr.mxu0 0.0
        %2448 = vmatpush1.msra.mxu0 0.0
        %2449 = vmatprep.subr.mxu0 0.0
        %2450 = vmatpush1.msra.mxu0 0.0
        %2451 = vmatprep.subr.mxu0 0.0
        %2452 = vmatpush1.msra.mxu0 0.0
        %2453 = vmatprep.subr.mxu0 0.0
        %2454 = vmatpush1.msra.mxu0 0.0
        %2455 = vmatprep.subr.mxu0 0.0
        %2456 = vmatpush1.msra.mxu0 0.0
        %2457 = vmatprep.subr.mxu0 0.0
        %2458 = vmatpush1.msra.mxu0 0.0
        %2459 = vmatprep.subr.mxu0 0.0
        %2460 = vmatpush1.msra.mxu0 0.0
        %2461 = vmatprep.subr.mxu0 0.0
        %2462 = vmatpush1.msra.mxu0 0.0
        %2463 = vmatprep.subr.mxu0 0.0
        %2464 = vmatpush1.msra.mxu0 0.0
        %2465 = vmatprep.subr.mxu0 0.0
        %2466 = vmatpush1.msra.mxu0 0.0
        %2467 = vmatprep.subr.mxu0 0.0
        %2468 = vmatpush1.msra.mxu0 0.0
        %2469 = vmatprep.subr.mxu0 0.0
        %2470 = vmatpush1.msra.mxu0 0.0
        %2471 = vmatprep.subr.mxu0 0.0
        %2472 = vmatpush1.msra.mxu0 0.0
        %2473 = vmatprep.subr.mxu0 0.0
        %2474 = vmatpush1.msra.mxu0 0.0
        %2475 = vmatprep.subr.mxu0 0.0
        %2476 = vmatpush1.msra.mxu0 0.0
        %2477 = vmatprep.subr.mxu0 0.0
        %2478 = vmatpush1.msra.mxu0 0.0
        %2479 = vmatprep.subr.mxu0 0.0
        %2480 = vmatpush1.msra.mxu0 0.0
        %2481 = vmatprep.subr.mxu0 0.0
        %2482 = vmatpush1.msra.mxu0 0.0
        %2483 = vmatprep.subr.mxu0 0.0
        %2484 = vmatpush1.msra.mxu0 0.0
        %2485 = vmatprep.subr.mxu0 0.0
        %2486 = vmatpush1.msra.mxu0 0.0
        %2487 = vmatprep.mubr.f32.mxu0 0.0
        %2488 = vmatmul.mubr.f32.gmra.mrb[0].mxu0 %v2421
        %v2489 = vpop.f32.mrb[0].mxu0
        %v2490 = vadd.f32 %v2418, %v2489
        %v2491 = vpop.f32.mrb[0].mxu0
        %2492 = vdwg.mxu0
        %v2493 = vmax.f32 %v2490, 0.0
        %v2494 = vld [vmem:[#allocation5] sm:$0xff]
        %v2495 = vld [vmem:[#allocation5 + $0x8] sm:$0xff]
        %v2496 = vld [vmem:[%s590] sm:$0xff]
        %v2497 = vld [vmem:[%s590 + $0x8] sm:$0xff]
        %v2499 = vsel %vm593, %v2331, 0
        %2501 = vmatprep.subr.mxu0 0.0
        %2502 = vmatpush1.msra.mxu0 %v2496
        %2503 = vmatprep.subr.mxu0 0.0
        %2504 = vmatpush1.msra.mxu0 %v2497
        %2505 = vmatprep.subr.mxu0 0.0
        %2506 = vmatpush1.msra.mxu0 0.0
        %2507 = vmatprep.subr.mxu0 0.0
        %2508 = vmatpush1.msra.mxu0 0.0
        %2509 = vmatprep.subr.mxu0 0.0
        %2510 = vmatpush1.msra.mxu0 0.0
        %2511 = vmatprep.subr.mxu0 0.0
        %2512 = vmatpush1.msra.mxu0 0.0
        %2513 = vmatprep.subr.mxu0 0.0
        %2514 = vmatpush1.msra.mxu0 0.0
        %2515 = vmatprep.subr.mxu0 0.0
        %2516 = vmatpush1.msra.mxu0 0.0
        %2517 = vmatprep.subr.mxu0 0.0
        %2518 = vmatpush1.msra.mxu0 0.0
        %2519 = vmatprep.subr.mxu0 0.0
        %2520 = vmatpush1.msra.mxu0 0.0
        %2521 = vmatprep.subr.mxu0 0.0
        %2522 = vmatpush1.msra.mxu0 0.0
        %2523 = vmatprep.subr.mxu0 0.0
        %2524 = vmatpush1.msra.mxu0 0.0
        %2525 = vmatprep.subr.mxu0 0.0
        %2526 = vmatpush1.msra.mxu0 0.0
        %2527 = vmatprep.subr.mxu0 0.0
        %2528 = vmatpush1.msra.mxu0 0.0
        %2529 = vmatprep.subr.mxu0 0.0
        %2530 = vmatpush1.msra.mxu0 0.0
        %2531 = vmatprep.subr.mxu0 0.0
        %2532 = vmatpush1.msra.mxu0 0.0
        %2533 = vmatprep.subr.mxu0 0.0
        %2534 = vmatpush1.msra.mxu0 0.0
        %2535 = vmatprep.subr.mxu0 0.0
        %2536 = vmatpush1.msra.mxu0 0.0
        %2537 = vmatprep.subr.mxu0 0.0
        %2538 = vmatpush1.msra.mxu0 0.0
        %2539 = vmatprep.subr.mxu0 0.0
        %2540 = vmatpush1.msra.mxu0 0.0
        %2541 = vmatprep.subr.mxu0 0.0
        %2542 = vmatpush1.msra.mxu0 0.0
        %2543 = vmatprep.subr.mxu0 0.0
        %2544 = vmatpush1.msra.mxu0 0.0
        %2545 = vmatprep.subr.mxu0 0.0
        %2546 = vmatpush1.msra.mxu0 0.0
        %2547 = vmatprep.subr.mxu0 0.0
        %2548 = vmatpush1.msra.mxu0 0.0
        %2549 = vmatprep.subr.mxu0 0.0
        %2550 = vmatpush1.msra.mxu0 0.0
        %2551 = vmatprep.subr.mxu0 0.0
        %2552 = vmatpush1.msra.mxu0 0.0
        %2553 = vmatprep.subr.mxu0 0.0
        %2554 = vmatpush1.msra.mxu0 0.0
        %2555 = vmatprep.subr.mxu0 0.0
        %2556 = vmatpush1.msra.mxu0 0.0
        %2557 = vmatprep.subr.mxu0 0.0
        %2558 = vmatpush1.msra.mxu0 0.0
        %2559 = vmatprep.subr.mxu0 0.0
        %2560 = vmatpush1.msra.mxu0 0.0
        %2561 = vmatprep.subr.mxu0 0.0
        %2562 = vmatpush1.msra.mxu0 0.0
        %2563 = vmatprep.subr.mxu0 0.0
        %2564 = vmatpush1.msra.mxu0 0.0
        %2565 = vmatprep.mubr.f32.mxu0 0.0
        %2566 = vmatmul.mubr.f32.gmra.mrb[0].mxu0 %v2499
        %v2567 = vpop.f32.mrb[0].mxu0
        %v2568 = vadd.f32 0.0, %v2567
        %v2569 = vpop.f32.mrb[0].mxu0
        %2570 = vdwg.mxu0
        %v2572 = vsel %vm593, %v2250, 0
        %2574 = vmatprep.subr.mxu0 0.0
        %2575 = vmatpush1.msra.mxu0 %v2494
        %2576 = vmatprep.subr.mxu0 0.0
        %2577 = vmatpush1.msra.mxu0 %v2495
        %2578 = vmatprep.subr.mxu0 0.0
        %2579 = vmatpush1.msra.mxu0 0.0
        %2580 = vmatprep.subr.mxu0 0.0
        %2581 = vmatpush1.msra.mxu0 0.0
        %2582 = vmatprep.subr.mxu0 0.0
        %2583 = vmatpush1.msra.mxu0 0.0
        %2584 = vmatprep.subr.mxu0 0.0
        %2585 = vmatpush1.msra.mxu0 0.0
        %2586 = vmatprep.subr.mxu0 0.0
        %2587 = vmatpush1.msra.mxu0 0.0
        %2588 = vmatprep.subr.mxu0 0.0
        %2589 = vmatpush1.msra.mxu0 0.0
        %2590 = vmatprep.subr.mxu0 0.0
        %2591 = vmatpush1.msra.mxu0 0.0
        %2592 = vmatprep.subr.mxu0 0.0
        %2593 = vmatpush1.msra.mxu0 0.0
        %2594 = vmatprep.subr.mxu0 0.0
        %2595 = vmatpush1.msra.mxu0 0.0
        %2596 = vmatprep.subr.mxu0 0.0
        %2597 = vmatpush1.msra.mxu0 0.0
        %2598 = vmatprep.subr.mxu0 0.0
        %2599 = vmatpush1.msra.mxu0 0.0
        %2600 = vmatprep.subr.mxu0 0.0
        %2601 = vmatpush1.msra.mxu0 0.0
        %2602 = vmatprep.subr.mxu0 0.0
        %2603 = vmatpush1.msra.mxu0 0.0
        %2604 = vmatprep.subr.mxu0 0.0
        %2605 = vmatpush1.msra.mxu0 0.0
        %2606 = vmatprep.subr.mxu0 0.0
        %2607 = vmatpush1.msra.mxu0 0.0
        %2608 = vmatprep.subr.mxu0 0.0
        %2609 = vmatpush1.msra.mxu0 0.0
        %2610 = vmatprep.subr.mxu0 0.0
        %2611 = vmatpush1.msra.mxu0 0.0
        %2612 = vmatprep.subr.mxu0 0.0
        %2613 = vmatpush1.msra.mxu0 0.0
        %2614 = vmatprep.subr.mxu0 0.0
        %2615 = vmatpush1.msra.mxu0 0.0
        %2616 = vmatprep.subr.mxu0 0.0
        %2617 = vmatpush1.msra.mxu0 0.0
        %2618 = vmatprep.subr.mxu0 0.0
        %2619 = vmatpush1.msra.mxu0 0.0
        %2620 = vmatprep.subr.mxu0 0.0
        %2621 = vmatpush1.msra.mxu0 0.0
        %2622 = vmatprep.subr.mxu0 0.0
        %2623 = vmatpush1.msra.mxu0 0.0
        %2624 = vmatprep.subr.mxu0 0.0
        %2625 = vmatpush1.msra.mxu0 0.0
        %2626 = vmatprep.subr.mxu0 0.0
        %2627 = vmatpush1.msra.mxu0 0.0
        %2628 = vmatprep.subr.mxu0 0.0
        %2629 = vmatpush1.msra.mxu0 0.0
        %2630 = vmatprep.subr.mxu0 0.0
        %2631 = vmatpush1.msra.mxu0 0.0
        %2632 = vmatprep.subr.mxu0 0.0
        %2633 = vmatpush1.msra.mxu0 0.0
        %2634 = vmatprep.subr.mxu0 0.0
        %2635 = vmatpush1.msra.mxu0 0.0
        %2636 = vmatprep.subr.mxu0 0.0
        %2637 = vmatpush1.msra.mxu0 0.0
        %2638 = vmatprep.mubr.f32.mxu0 0.0
        %2639 = vmatmul.mubr.f32.gmra.mrb[0].mxu0 %v2572
        %v2640 = vpop.f32.mrb[0].mxu0
        %v2641 = vadd.f32 %v2568, %v2640
        %v2642 = vpop.f32.mrb[0].mxu0
        %2643 = vdwg.mxu0
        %v2645 = vsel %vm593, %v2493, 0
        %2647 = vmatprep.subr.mxu0 0.0
        %2648 = vmatpush1.msra.mxu0 %v2496
        %2649 = vmatprep.subr.mxu0 0.0
        %2650 = vmatpush1.msra.mxu0 %v2497
        %2651 = vmatprep.subr.mxu0 0.0
        %2652 = vmatpush1.msra.mxu0 0.0
        %2653 = vmatprep.subr.mxu0 0.0
        %2654 = vmatpush1.msra.mxu0 0.0
        %2655 = vmatprep.subr.mxu0 0.0
        %2656 = vmatpush1.msra.mxu0 0.0
        %2657 = vmatprep.subr.mxu0 0.0
        %2658 = vmatpush1.msra.mxu0 0.0
        %2659 = vmatprep.subr.mxu0 0.0
        %2660 = vmatpush1.msra.mxu0 0.0
        %2661 = vmatprep.subr.mxu0 0.0
        %2662 = vmatpush1.msra.mxu0 0.0
        %2663 = vmatprep.subr.mxu0 0.0
        %2664 = vmatpush1.msra.mxu0 0.0
        %2665 = vmatprep.subr.mxu0 0.0
        %2666 = vmatpush1.msra.mxu0 0.0
        %2667 = vmatprep.subr.mxu0 0.0
        %2668 = vmatpush1.msra.mxu0 0.0
        %2669 = vmatprep.subr.mxu0 0.0
        %2670 = vmatpush1.msra.mxu0 0.0
        %2671 = vmatprep.subr.mxu0 0.0
        %2672 = vmatpush1.msra.mxu0 0.0
        %2673 = vmatprep.subr.mxu0 0.0
        %2674 = vmatpush1.msra.mxu0 0.0
        %2675 = vmatprep.subr.mxu0 0.0
        %2676 = vmatpush1.msra.mxu0 0.0
        %2677 = vmatprep.subr.mxu0 0.0
        %2678 = vmatpush1.msra.mxu0 0.0
        %2679 = vmatprep.subr.mxu0 0.0
        %2680 = vmatpush1.msra.mxu0 0.0
        %2681 = vmatprep.subr.mxu0 0.0
        %2682 = vmatpush1.msra.mxu0 0.0
        %2683 = vmatprep.subr.mxu0 0.0
        %2684 = vmatpush1.msra.mxu0 0.0
        %2685 = vmatprep.subr.mxu0 0.0
        %2686 = vmatpush1.msra.mxu0 0.0
        %2687 = vmatprep.subr.mxu0 0.0
        %2688 = vmatpush1.msra.mxu0 0.0
        %2689 = vmatprep.subr.mxu0 0.0
        %2690 = vmatpush1.msra.mxu0 0.0
        %2691 = vmatprep.subr.mxu0 0.0
        %2692 = vmatpush1.msra.mxu0 0.0
        %2693 = vmatprep.subr.mxu0 0.0
        %2694 = vmatpush1.msra.mxu0 0.0
        %2695 = vmatprep.subr.mxu0 0.0
        %2696 = vmatpush1.msra.mxu0 0.0
        %2697 = vmatprep.subr.mxu0 0.0
        %2698 = vmatpush1.msra.mxu0 0.0
        %2699 = vmatprep.subr.mxu0 0.0
        %2700 = vmatpush1.msra.mxu0 0.0
        %2701 = vmatprep.subr.mxu0 0.0
        %2702 = vmatpush1.msra.mxu0 0.0
        %2703 = vmatprep.subr.mxu0 0.0
        %2704 = vmatpush1.msra.mxu0 0.0
        %2705 = vmatprep.subr.mxu0 0.0
        %2706 = vmatpush1.msra.mxu0 0.0
        %2707 = vmatprep.subr.mxu0 0.0
        %2708 = vmatpush1.msra.mxu0 0.0
        %2709 = vmatprep.subr.mxu0 0.0
        %2710 = vmatpush1.msra.mxu0 0.0
        %2711 = vmatprep.mubr.f32.mxu0 0.0
        %2712 = vmatmul.mubr.f32.gmra.mrb[0].mxu0 %v2645
        %v2713 = vpop.f32.mrb[0].mxu0
        %v2714 = vadd.f32 0.0, %v2713
        %v2715 = vpop.f32.mrb[0].mxu0
        %2716 = vdwg.mxu0
        %v2718 = vsel %vm593, %v2412, 0
        %2720 = vmatprep.subr.mxu0 0.0
        %2721 = vmatpush1.msra.mxu0 %v2494
        %2722 = vmatprep.subr.mxu0 0.0
        %2723 = vmatpush1.msra.mxu0 %v2495
        %2724 = vmatprep.subr.mxu0 0.0
        %2725 = vmatpush1.msra.mxu0 0.0
        %2726 = vmatprep.subr.mxu0 0.0
        %2727 = vmatpush1.msra.mxu0 0.0
        %2728 = vmatprep.subr.mxu0 0.0
        %2729 = vmatpush1.msra.mxu0 0.0
        %2730 = vmatprep.subr.mxu0 0.0
        %2731 = vmatpush1.msra.mxu0 0.0
        %2732 = vmatprep.subr.mxu0 0.0
        %2733 = vmatpush1.msra.mxu0 0.0
        %2734 = vmatprep.subr.mxu0 0.0
        %2735 = vmatpush1.msra.mxu0 0.0
        %2736 = vmatprep.subr.mxu0 0.0
        %2737 = vmatpush1.msra.mxu0 0.0
        %2738 = vmatprep.subr.mxu0 0.0
        %2739 = vmatpush1.msra.mxu0 0.0
        %2740 = vmatprep.subr.mxu0 0.0
        %2741 = vmatpush1.msra.mxu0 0.0
        %2742 = vmatprep.subr.mxu0 0.0
        %2743 = vmatpush1.msra.mxu0 0.0
        %2744 = vmatprep.subr.mxu0 0.0
        %2745 = vmatpush1.msra.mxu0 0.0
        %2746 = vmatprep.subr.mxu0 0.0
        %2747 = vmatpush1.msra.mxu0 0.0
        %2748 = vmatprep.subr.mxu0 0.0
        %2749 = vmatpush1.msra.mxu0 0.0
        %2750 = vmatprep.subr.mxu0 0.0
        %2751 = vmatpush1.msra.mxu0 0.0
        %2752 = vmatprep.subr.mxu0 0.0
        %2753 = vmatpush1.msra.mxu0 0.0
        %2754 = vmatprep.subr.mxu0 0.0
        %2755 = vmatpush1.msra.mxu0 0.0
        %2756 = vmatprep.subr.mxu0 0.0
        %2757 = vmatpush1.msra.mxu0 0.0
        %2758 = vmatprep.subr.mxu0 0.0
        %2759 = vmatpush1.msra.mxu0 0.0
        %2760 = vmatprep.subr.mxu0 0.0
        %2761 = vmatpush1.msra.mxu0 0.0
        %2762 = vmatprep.subr.mxu0 0.0
        %2763 = vmatpush1.msra.mxu0 0.0
        %2764 = vmatprep.subr.mxu0 0.0
        %2765 = vmatpush1.msra.mxu0 0.0
        %2766 = vmatprep.subr.mxu0 0.0
        %2767 = vmatpush1.msra.mxu0 0.0
        %2768 = vmatprep.subr.mxu0 0.0
        %2769 = vmatpush1.msra.mxu0 0.0
        %2770 = vmatprep.subr.mxu0 0.0
        %2771 = vmatpush1.msra.mxu0 0.0
        %2772 = vmatprep.subr.mxu0 0.0
        %2773 = vmatpush1.msra.mxu0 0.0
        %2774 = vmatprep.subr.mxu0 0.0
        %2775 = vmatpush1.msra.mxu0 0.0
        %2776 = vmatprep.subr.mxu0 0.0
        %2777 = vmatpush1.msra.mxu0 0.0
        %2778 = vmatprep.subr.mxu0 0.0
        %2779 = vmatpush1.msra.mxu0 0.0
        %2780 = vmatprep.subr.mxu0 0.0
        %2781 = vmatpush1.msra.mxu0 0.0
        %2782 = vmatprep.subr.mxu0 0.0
        %2783 = vmatpush1.msra.mxu0 0.0
        %2784 = vmatprep.mubr.f32.mxu0 0.0
        %2785 = vmatmul.mubr.f32.gmra.mrb[0].mxu0 %v2718
        %v2786 = vpop.f32.mrb[0].mxu0
        %v2787 = vadd.f32 %v2714, %v2786
        %v2788 = vpop.f32.mrb[0].mxu0
        %2789 = vdwg.mxu0
        %2791 = vrot.lane.b32.xlu0 %v2641, 64
        %v2792 = vpop.permute.xlu0 %2791
        %2794 = vst.msk [vmem:[%s242 + $0x4] sm:$0xf] %vm1524, %v2792
        %2796 = vrot.lane.b32.xlu0 %v2787, 96
        %v2797 = vpop.permute.xlu0 %2796
        %2799 = vst.msk [vmem:[%s242 + $0x4] sm:$0xf] %vm1530, %v2797
        %v2800 = vld [vmem:[%s250] sm:$0xf]
        %v2801 = vld [vmem:[#allocation2] sm:$0xf]
        %v2802 = vld [vmem:[%s2] sm:$0xf]
        %2804 = vset.pattern.permute.xlu0 0
        %2805 = vperm.xlu0 %2804, %v2802
        %v2806 = vpop.permute.xlu0 %2805
        %2809 = vrot.lane.b32.xlu0 %v2800, 64
        %v2810 = vpop.permute.xlu0 %2809
        %v2812 = vsel %vm260, %v2801, 0
        %v2814 = vsel %vm264, %v2810, 0
        %2816 = vmatprep.subr.mxu0 0.0
        %2817 = vmatpush1.msra.mxu0 %v2814
        %2818 = vmatprep.subr.mxu0 0.0
        %2819 = vmatpush1.msra.mxu0 0.0
        %2820 = vmatprep.subr.mxu0 0.0
        %2821 = vmatpush1.msra.mxu0 0.0
        %2822 = vmatprep.subr.mxu0 0.0
        %2823 = vmatpush1.msra.mxu0 0.0
        %2824 = vmatprep.subr.mxu0 0.0
        %2825 = vmatpush1.msra.mxu0 0.0
        %2826 = vmatprep.subr.mxu0 0.0
        %2827 = vmatpush1.msra.mxu0 0.0
        %2828 = vmatprep.subr.mxu0 0.0
        %2829 = vmatpush1.msra.mxu0 0.0
        %2830 = vmatprep.subr.mxu0 0.0
        %2831 = vmatpush1.msra.mxu0 0.0
        %2832 = vmatprep.subr.mxu0 0.0
        %2833 = vmatpush1.msra.mxu0 0.0
        %2834 = vmatprep.subr.mxu0 0.0
        %2835 = vmatpush1.msra.mxu0 0.0
        %2836 = vmatprep.subr.mxu0 0.0
        %2837 = vmatpush1.msra.mxu0 0.0
        %2838 = vmatprep.subr.mxu0 0.0
        %2839 = vmatpush1.msra.mxu0 0.0
        %2840 = vmatprep.subr.mxu0 0.0
        %2841 = vmatpush1.msra.mxu0 0.0
        %2842 = vmatprep.subr.mxu0 0.0
        %2843 = vmatpush1.msra.mxu0 0.0
        %2844 = vmatprep.subr.mxu0 0.0
        %2845 = vmatpush1.msra.mxu0 0.0
        %2846 = vmatprep.subr.mxu0 0.0
        %2847 = vmatpush1.msra.mxu0 0.0
        %2848 = vmatprep.subr.mxu0 0.0
        %2849 = vmatpush1.msra.mxu0 0.0
        %2850 = vmatprep.subr.mxu0 0.0
        %2851 = vmatpush1.msra.mxu0 0.0
        %2852 = vmatprep.subr.mxu0 0.0
        %2853 = vmatpush1.msra.mxu0 0.0
        %2854 = vmatprep.subr.mxu0 0.0
        %2855 = vmatpush1.msra.mxu0 0.0
        %2856 = vmatprep.subr.mxu0 0.0
        %2857 = vmatpush1.msra.mxu0 0.0
        %2858 = vmatprep.subr.mxu0 0.0
        %2859 = vmatpush1.msra.mxu0 0.0
        %2860 = vmatprep.subr.mxu0 0.0
        %2861 = vmatpush1.msra.mxu0 0.0
        %2862 = vmatprep.subr.mxu0 0.0
        %2863 = vmatpush1.msra.mxu0 0.0
        %2864 = vmatprep.subr.mxu0 0.0
        %2865 = vmatpush1.msra.mxu0 0.0
        %2866 = vmatprep.subr.mxu0 0.0
        %2867 = vmatpush1.msra.mxu0 0.0
        %2868 = vmatprep.subr.mxu0 0.0
        %2869 = vmatpush1.msra.mxu0 0.0
        %2870 = vmatprep.subr.mxu0 0.0
        %2871 = vmatpush1.msra.mxu0 0.0
        %2872 = vmatprep.subr.mxu0 0.0
        %2873 = vmatpush1.msra.mxu0 0.0
        %2874 = vmatprep.subr.mxu0 0.0
        %2875 = vmatpush1.msra.mxu0 0.0
        %2876 = vmatprep.subr.mxu0 0.0
        %2877 = vmatpush1.msra.mxu0 0.0
        %2878 = vmatprep.subr.mxu0 0.0
        %2879 = vmatpush1.msra.mxu0 0.0
        %2880 = vmatprep.mubr.f32.mxu0 0.0
        %2881 = vmatmul.mubr.f32.gmra.mrb[0].mxu0 %v2812
        %v2882 = vpop.f32.mrb[0].mxu0
        %v2883 = vadd.f32 %v2806, %v2882
        %v2884 = vpop.f32.mrb[0].mxu0
        %2885 = vdwg.mxu0
        %v2886 = vmax.f32 %v2883, 0.0
        %v2887 = vld [vmem:[%s339] sm:$0xf]
        %v2888 = vld [vmem:[%s341] sm:$0xf]
        %2890 = vset.pattern.permute.xlu0 0
        %2891 = vperm.xlu0 %2890, %v2888
        %v2892 = vpop.permute.xlu0 %2891
        %v2895 = vsel %vm260, %v2887, 0
        %2897 = vmatprep.subr.mxu0 0.0
        %2898 = vmatpush1.msra.mxu0 %v2814
        %2899 = vmatprep.subr.mxu0 0.0
        %2900 = vmatpush1.msra.mxu0 0.0
        %2901 = vmatprep.subr.mxu0 0.0
        %2902 = vmatpush1.msra.mxu0 0.0
        %2903 = vmatprep.subr.mxu0 0.0
        %2904 = vmatpush1.msra.mxu0 0.0
        %2905 = vmatprep.subr.mxu0 0.0
        %2906 = vmatpush1.msra.mxu0 0.0
        %2907 = vmatprep.subr.mxu0 0.0
        %2908 = vmatpush1.msra.mxu0 0.0
        %2909 = vmatprep.subr.mxu0 0.0
        %2910 = vmatpush1.msra.mxu0 0.0
        %2911 = vmatprep.subr.mxu0 0.0
        %2912 = vmatpush1.msra.mxu0 0.0
        %2913 = vmatprep.subr.mxu0 0.0
        %2914 = vmatpush1.msra.mxu0 0.0
        %2915 = vmatprep.subr.mxu0 0.0
        %2916 = vmatpush1.msra.mxu0 0.0
        %2917 = vmatprep.subr.mxu0 0.0
        %2918 = vmatpush1.msra.mxu0 0.0
        %2919 = vmatprep.subr.mxu0 0.0
        %2920 = vmatpush1.msra.mxu0 0.0
        %2921 = vmatprep.subr.mxu0 0.0
        %2922 = vmatpush1.msra.mxu0 0.0
        %2923 = vmatprep.subr.mxu0 0.0
        %2924 = vmatpush1.msra.mxu0 0.0
        %2925 = vmatprep.subr.mxu0 0.0
        %2926 = vmatpush1.msra.mxu0 0.0
        %2927 = vmatprep.subr.mxu0 0.0
        %2928 = vmatpush1.msra.mxu0 0.0
        %2929 = vmatprep.subr.mxu0 0.0
        %2930 = vmatpush1.msra.mxu0 0.0
        %2931 = vmatprep.subr.mxu0 0.0
        %2932 = vmatpush1.msra.mxu0 0.0
        %2933 = vmatprep.subr.mxu0 0.0
        %2934 = vmatpush1.msra.mxu0 0.0
        %2935 = vmatprep.subr.mxu0 0.0
        %2936 = vmatpush1.msra.mxu0 0.0
        %2937 = vmatprep.subr.mxu0 0.0
        %2938 = vmatpush1.msra.mxu0 0.0
        %2939 = vmatprep.subr.mxu0 0.0
        %2940 = vmatpush1.msra.mxu0 0.0
        %2941 = vmatprep.subr.mxu0 0.0
        %2942 = vmatpush1.msra.mxu0 0.0
        %2943 = vmatprep.subr.mxu0 0.0
        %2944 = vmatpush1.msra.mxu0 0.0
        %2945 = vmatprep.subr.mxu0 0.0
        %2946 = vmatpush1.msra.mxu0 0.0
        %2947 = vmatprep.subr.mxu0 0.0
        %2948 = vmatpush1.msra.mxu0 0.0
        %2949 = vmatprep.subr.mxu0 0.0
        %2950 = vmatpush1.msra.mxu0 0.0
        %2951 = vmatprep.subr.mxu0 0.0
        %2952 = vmatpush1.msra.mxu0 0.0
        %2953 = vmatprep.subr.mxu0 0.0
        %2954 = vmatpush1.msra.mxu0 0.0
        %2955 = vmatprep.subr.mxu0 0.0
        %2956 = vmatpush1.msra.mxu0 0.0
        %2957 = vmatprep.subr.mxu0 0.0
        %2958 = vmatpush1.msra.mxu0 0.0
        %2959 = vmatprep.subr.mxu0 0.0
        %2960 = vmatpush1.msra.mxu0 0.0
        %2961 = vmatprep.mubr.f32.mxu0 0.0
        %2962 = vmatmul.mubr.f32.gmra.mrb[0].mxu0 %v2895
        %v2963 = vpop.f32.mrb[0].mxu0
        %v2964 = vadd.f32 %v2892, %v2963
        %v2965 = vpop.f32.mrb[0].mxu0
        %2966 = vdwg.mxu0
        %v2967 = vmax.f32 %v2964, 0.0
        %v2968 = vld [vmem:[%s422] sm:$0xf]
        %v2969 = vld [vmem:[%s424] sm:$0xf]
        %2971 = vset.pattern.permute.xlu0 0
        %2972 = vperm.xlu0 %2971, %v2969
        %v2973 = vpop.permute.xlu0 %2972
        %v2976 = vsel %vm260, %v2968, 0
        %2978 = vmatprep.subr.mxu0 0.0
        %2979 = vmatpush1.msra.mxu0 %v2814
        %2980 = vmatprep.subr.mxu0 0.0
        %2981 = vmatpush1.msra.mxu0 0.0
        %2982 = vmatprep.subr.mxu0 0.0
        %2983 = vmatpush1.msra.mxu0 0.0
        %2984 = vmatprep.subr.mxu0 0.0
        %2985 = vmatpush1.msra.mxu0 0.0
        %2986 = vmatprep.subr.mxu0 0.0
        %2987 = vmatpush1.msra.mxu0 0.0
        %2988 = vmatprep.subr.mxu0 0.0
        %2989 = vmatpush1.msra.mxu0 0.0
        %2990 = vmatprep.subr.mxu0 0.0
        %2991 = vmatpush1.msra.mxu0 0.0
        %2992 = vmatprep.subr.mxu0 0.0
        %2993 = vmatpush1.msra.mxu0 0.0
        %2994 = vmatprep.subr.mxu0 0.0
        %2995 = vmatpush1.msra.mxu0 0.0
        %2996 = vmatprep.subr.mxu0 0.0
        %2997 = vmatpush1.msra.mxu0 0.0
        %2998 = vmatprep.subr.mxu0 0.0
        %2999 = vmatpush1.msra.mxu0 0.0
        %3000 = vmatprep.subr.mxu0 0.0
        %3001 = vmatpush1.msra.mxu0 0.0
        %3002 = vmatprep.subr.mxu0 0.0
        %3003 = vmatpush1.msra.mxu0 0.0
        %3004 = vmatprep.subr.mxu0 0.0
        %3005 = vmatpush1.msra.mxu0 0.0
        %3006 = vmatprep.subr.mxu0 0.0
        %3007 = vmatpush1.msra.mxu0 0.0
        %3008 = vmatprep.subr.mxu0 0.0
        %3009 = vmatpush1.msra.mxu0 0.0
        %3010 = vmatprep.subr.mxu0 0.0
        %3011 = vmatpush1.msra.mxu0 0.0
        %3012 = vmatprep.subr.mxu0 0.0
        %3013 = vmatpush1.msra.mxu0 0.0
        %3014 = vmatprep.subr.mxu0 0.0
        %3015 = vmatpush1.msra.mxu0 0.0
        %3016 = vmatprep.subr.mxu0 0.0
        %3017 = vmatpush1.msra.mxu0 0.0
        %3018 = vmatprep.subr.mxu0 0.0
        %3019 = vmatpush1.msra.mxu0 0.0
        %3020 = vmatprep.subr.mxu0 0.0
        %3021 = vmatpush1.msra.mxu0 0.0
        %3022 = vmatprep.subr.mxu0 0.0
        %3023 = vmatpush1.msra.mxu0 0.0
        %3024 = vmatprep.subr.mxu0 0.0
        %3025 = vmatpush1.msra.mxu0 0.0
        %3026 = vmatprep.subr.mxu0 0.0
        %3027 = vmatpush1.msra.mxu0 0.0
        %3028 = vmatprep.subr.mxu0 0.0
        %3029 = vmatpush1.msra.mxu0 0.0
        %3030 = vmatprep.subr.mxu0 0.0
        %3031 = vmatpush1.msra.mxu0 0.0
        %3032 = vmatprep.subr.mxu0 0.0
        %3033 = vmatpush1.msra.mxu0 0.0
        %3034 = vmatprep.subr.mxu0 0.0
        %3035 = vmatpush1.msra.mxu0 0.0
        %3036 = vmatprep.subr.mxu0 0.0
        %3037 = vmatpush1.msra.mxu0 0.0
        %3038 = vmatprep.subr.mxu0 0.0
        %3039 = vmatpush1.msra.mxu0 0.0
        %3040 = vmatprep.subr.mxu0 0.0
        %3041 = vmatpush1.msra.mxu0 0.0
        %3042 = vmatprep.mubr.f32.mxu0 0.0
        %3043 = vmatmul.mubr.f32.gmra.mrb[0].mxu0 %v2976
        %v3044 = vpop.f32.mrb[0].mxu0
        %v3045 = vadd.f32 %v2973, %v3044
        %v3046 = vpop.f32.mrb[0].mxu0
        %3047 = vdwg.mxu0
        %v3048 = vmax.f32 %v3045, 0.0
        %v3049 = vld [vmem:[%s505] sm:$0xf]
        %v3050 = vld [vmem:[%s507] sm:$0xf]
        %3052 = vset.pattern.permute.xlu0 0
        %3053 = vperm.xlu0 %3052, %v3050
        %v3054 = vpop.permute.xlu0 %3053
        %v3057 = vsel %vm260, %v3049, 0
        %3059 = vmatprep.subr.mxu0 0.0
        %3060 = vmatpush1.msra.mxu0 %v2814
        %3061 = vmatprep.subr.mxu0 0.0
        %3062 = vmatpush1.msra.mxu0 0.0
        %3063 = vmatprep.subr.mxu0 0.0
        %3064 = vmatpush1.msra.mxu0 0.0
        %3065 = vmatprep.subr.mxu0 0.0
        %3066 = vmatpush1.msra.mxu0 0.0
        %3067 = vmatprep.subr.mxu0 0.0
        %3068 = vmatpush1.msra.mxu0 0.0
        %3069 = vmatprep.subr.mxu0 0.0
        %3070 = vmatpush1.msra.mxu0 0.0
        %3071 = vmatprep.subr.mxu0 0.0
        %3072 = vmatpush1.msra.mxu0 0.0
        %3073 = vmatprep.subr.mxu0 0.0
        %3074 = vmatpush1.msra.mxu0 0.0
        %3075 = vmatprep.subr.mxu0 0.0
        %3076 = vmatpush1.msra.mxu0 0.0
        %3077 = vmatprep.subr.mxu0 0.0
        %3078 = vmatpush1.msra.mxu0 0.0
        %3079 = vmatprep.subr.mxu0 0.0
        %3080 = vmatpush1.msra.mxu0 0.0
        %3081 = vmatprep.subr.mxu0 0.0
        %3082 = vmatpush1.msra.mxu0 0.0
        %3083 = vmatprep.subr.mxu0 0.0
        %3084 = vmatpush1.msra.mxu0 0.0
        %3085 = vmatprep.subr.mxu0 0.0
        %3086 = vmatpush1.msra.mxu0 0.0
        %3087 = vmatprep.subr.mxu0 0.0
        %3088 = vmatpush1.msra.mxu0 0.0
        %3089 = vmatprep.subr.mxu0 0.0
        %3090 = vmatpush1.msra.mxu0 0.0
        %3091 = vmatprep.subr.mxu0 0.0
        %3092 = vmatpush1.msra.mxu0 0.0
        %3093 = vmatprep.subr.mxu0 0.0
        %3094 = vmatpush1.msra.mxu0 0.0
        %3095 = vmatprep.subr.mxu0 0.0
        %3096 = vmatpush1.msra.mxu0 0.0
        %3097 = vmatprep.subr.mxu0 0.0
        %3098 = vmatpush1.msra.mxu0 0.0
        %3099 = vmatprep.subr.mxu0 0.0
        %3100 = vmatpush1.msra.mxu0 0.0
        %3101 = vmatprep.subr.mxu0 0.0
        %3102 = vmatpush1.msra.mxu0 0.0
        %3103 = vmatprep.subr.mxu0 0.0
        %3104 = vmatpush1.msra.mxu0 0.0
        %3105 = vmatprep.subr.mxu0 0.0
        %3106 = vmatpush1.msra.mxu0 0.0
        %3107 = vmatprep.subr.mxu0 0.0
        %3108 = vmatpush1.msra.mxu0 0.0
        %3109 = vmatprep.subr.mxu0 0.0
        %3110 = vmatpush1.msra.mxu0 0.0
        %3111 = vmatprep.subr.mxu0 0.0
        %3112 = vmatpush1.msra.mxu0 0.0
        %3113 = vmatprep.subr.mxu0 0.0
        %3114 = vmatpush1.msra.mxu0 0.0
        %3115 = vmatprep.subr.mxu0 0.0
        %3116 = vmatpush1.msra.mxu0 0.0
        %3117 = vmatprep.subr.mxu0 0.0
        %3118 = vmatpush1.msra.mxu0 0.0
        %3119 = vmatprep.subr.mxu0 0.0
        %3120 = vmatpush1.msra.mxu0 0.0
        %3121 = vmatprep.subr.mxu0 0.0
        %3122 = vmatpush1.msra.mxu0 0.0
        %3123 = vmatprep.mubr.f32.mxu0 0.0
        %3124 = vmatmul.mubr.f32.gmra.mrb[0].mxu0 %v3057
        %v3125 = vpop.f32.mrb[0].mxu0
        %v3126 = vadd.f32 %v3054, %v3125
        %v3127 = vpop.f32.mrb[0].mxu0
        %3128 = vdwg.mxu0
        %v3129 = vmax.f32 %v3126, 0.0
        %v3130 = vld [vmem:[#allocation5] sm:$0xff]
        %v3131 = vld [vmem:[#allocation5 + $0x8] sm:$0xff]
        %v3132 = vld [vmem:[%s590] sm:$0xff]
        %v3133 = vld [vmem:[%s590 + $0x8] sm:$0xff]
        %v3135 = vsel %vm593, %v2967, 0
        %3137 = vmatprep.subr.mxu0 0.0
        %3138 = vmatpush1.msra.mxu0 %v3132
        %3139 = vmatprep.subr.mxu0 0.0
        %3140 = vmatpush1.msra.mxu0 %v3133
        %3141 = vmatprep.subr.mxu0 0.0
        %3142 = vmatpush1.msra.mxu0 0.0
        %3143 = vmatprep.subr.mxu0 0.0
        %3144 = vmatpush1.msra.mxu0 0.0
        %3145 = vmatprep.subr.mxu0 0.0
        %3146 = vmatpush1.msra.mxu0 0.0
        %3147 = vmatprep.subr.mxu0 0.0
        %3148 = vmatpush1.msra.mxu0 0.0
        %3149 = vmatprep.subr.mxu0 0.0
        %3150 = vmatpush1.msra.mxu0 0.0
        %3151 = vmatprep.subr.mxu0 0.0
        %3152 = vmatpush1.msra.mxu0 0.0
        %3153 = vmatprep.subr.mxu0 0.0
        %3154 = vmatpush1.msra.mxu0 0.0
        %3155 = vmatprep.subr.mxu0 0.0
        %3156 = vmatpush1.msra.mxu0 0.0
        %3157 = vmatprep.subr.mxu0 0.0
        %3158 = vmatpush1.msra.mxu0 0.0
        %3159 = vmatprep.subr.mxu0 0.0
        %3160 = vmatpush1.msra.mxu0 0.0
        %3161 = vmatprep.subr.mxu0 0.0
        %3162 = vmatpush1.msra.mxu0 0.0
        %3163 = vmatprep.subr.mxu0 0.0
        %3164 = vmatpush1.msra.mxu0 0.0
        %3165 = vmatprep.subr.mxu0 0.0
        %3166 = vmatpush1.msra.mxu0 0.0
        %3167 = vmatprep.subr.mxu0 0.0
        %3168 = vmatpush1.msra.mxu0 0.0
        %3169 = vmatprep.subr.mxu0 0.0
        %3170 = vmatpush1.msra.mxu0 0.0
        %3171 = vmatprep.subr.mxu0 0.0
        %3172 = vmatpush1.msra.mxu0 0.0
        %3173 = vmatprep.subr.mxu0 0.0
        %3174 = vmatpush1.msra.mxu0 0.0
        %3175 = vmatprep.subr.mxu0 0.0
        %3176 = vmatpush1.msra.mxu0 0.0
        %3177 = vmatprep.subr.mxu0 0.0
        %3178 = vmatpush1.msra.mxu0 0.0
        %3179 = vmatprep.subr.mxu0 0.0
        %3180 = vmatpush1.msra.mxu0 0.0
        %3181 = vmatprep.subr.mxu0 0.0
        %3182 = vmatpush1.msra.mxu0 0.0
        %3183 = vmatprep.subr.mxu0 0.0
        %3184 = vmatpush1.msra.mxu0 0.0
        %3185 = vmatprep.subr.mxu0 0.0
        %3186 = vmatpush1.msra.mxu0 0.0
        %3187 = vmatprep.subr.mxu0 0.0
        %3188 = vmatpush1.msra.mxu0 0.0
        %3189 = vmatprep.subr.mxu0 0.0
        %3190 = vmatpush1.msra.mxu0 0.0
        %3191 = vmatprep.subr.mxu0 0.0
        %3192 = vmatpush1.msra.mxu0 0.0
        %3193 = vmatprep.subr.mxu0 0.0
        %3194 = vmatpush1.msra.mxu0 0.0
        %3195 = vmatprep.subr.mxu0 0.0
        %3196 = vmatpush1.msra.mxu0 0.0
        %3197 = vmatprep.subr.mxu0 0.0
        %3198 = vmatpush1.msra.mxu0 0.0
        %3199 = vmatprep.subr.mxu0 0.0
        %3200 = vmatpush1.msra.mxu0 0.0
        %3201 = vmatprep.mubr.f32.mxu0 0.0
        %3202 = vmatmul.mubr.f32.gmra.mrb[0].mxu0 %v3135
        %v3203 = vpop.f32.mrb[0].mxu0
        %v3204 = vadd.f32 0.0, %v3203
        %v3205 = vpop.f32.mrb[0].mxu0
        %3206 = vdwg.mxu0
        %v3208 = vsel %vm593, %v2886, 0
        %3210 = vmatprep.subr.mxu0 0.0
        %3211 = vmatpush1.msra.mxu0 %v3130
        %3212 = vmatprep.subr.mxu0 0.0
        %3213 = vmatpush1.msra.mxu0 %v3131
        %3214 = vmatprep.subr.mxu0 0.0
        %3215 = vmatpush1.msra.mxu0 0.0
        %3216 = vmatprep.subr.mxu0 0.0
        %3217 = vmatpush1.msra.mxu0 0.0
        %3218 = vmatprep.subr.mxu0 0.0
        %3219 = vmatpush1.msra.mxu0 0.0
        %3220 = vmatprep.subr.mxu0 0.0
        %3221 = vmatpush1.msra.mxu0 0.0
        %3222 = vmatprep.subr.mxu0 0.0
        %3223 = vmatpush1.msra.mxu0 0.0
        %3224 = vmatprep.subr.mxu0 0.0
        %3225 = vmatpush1.msra.mxu0 0.0
        %3226 = vmatprep.subr.mxu0 0.0
        %3227 = vmatpush1.msra.mxu0 0.0
        %3228 = vmatprep.subr.mxu0 0.0
        %3229 = vmatpush1.msra.mxu0 0.0
        %3230 = vmatprep.subr.mxu0 0.0
        %3231 = vmatpush1.msra.mxu0 0.0
        %3232 = vmatprep.subr.mxu0 0.0
        %3233 = vmatpush1.msra.mxu0 0.0
        %3234 = vmatprep.subr.mxu0 0.0
        %3235 = vmatpush1.msra.mxu0 0.0
        %3236 = vmatprep.subr.mxu0 0.0
        %3237 = vmatpush1.msra.mxu0 0.0
        %3238 = vmatprep.subr.mxu0 0.0
        %3239 = vmatpush1.msra.mxu0 0.0
        %3240 = vmatprep.subr.mxu0 0.0
        %3241 = vmatpush1.msra.mxu0 0.0
        %3242 = vmatprep.subr.mxu0 0.0
        %3243 = vmatpush1.msra.mxu0 0.0
        %3244 = vmatprep.subr.mxu0 0.0
        %3245 = vmatpush1.msra.mxu0 0.0
        %3246 = vmatprep.subr.mxu0 0.0
        %3247 = vmatpush1.msra.mxu0 0.0
        %3248 = vmatprep.subr.mxu0 0.0
        %3249 = vmatpush1.msra.mxu0 0.0
        %3250 = vmatprep.subr.mxu0 0.0
        %3251 = vmatpush1.msra.mxu0 0.0
        %3252 = vmatprep.subr.mxu0 0.0
        %3253 = vmatpush1.msra.mxu0 0.0
        %3254 = vmatprep.subr.mxu0 0.0
        %3255 = vmatpush1.msra.mxu0 0.0
        %3256 = vmatprep.subr.mxu0 0.0
        %3257 = vmatpush1.msra.mxu0 0.0
        %3258 = vmatprep.subr.mxu0 0.0
        %3259 = vmatpush1.msra.mxu0 0.0
        %3260 = vmatprep.subr.mxu0 0.0
        %3261 = vmatpush1.msra.mxu0 0.0
        %3262 = vmatprep.subr.mxu0 0.0
        %3263 = vmatpush1.msra.mxu0 0.0
        %3264 = vmatprep.subr.mxu0 0.0
        %3265 = vmatpush1.msra.mxu0 0.0
        %3266 = vmatprep.subr.mxu0 0.0
        %3267 = vmatpush1.msra.mxu0 0.0
        %3268 = vmatprep.subr.mxu0 0.0
        %3269 = vmatpush1.msra.mxu0 0.0
        %3270 = vmatprep.subr.mxu0 0.0
        %3271 = vmatpush1.msra.mxu0 0.0
        %3272 = vmatprep.subr.mxu0 0.0
        %3273 = vmatpush1.msra.mxu0 0.0
        %3274 = vmatprep.mubr.f32.mxu0 0.0
        %3275 = vmatmul.mubr.f32.gmra.mrb[0].mxu0 %v3208
        %v3276 = vpop.f32.mrb[0].mxu0
        %v3277 = vadd.f32 %v3204, %v3276
        %v3278 = vpop.f32.mrb[0].mxu0
        %3279 = vdwg.mxu0
        %v3281 = vsel %vm593, %v3129, 0
        %3283 = vmatprep.subr.mxu0 0.0
        %3284 = vmatpush1.msra.mxu0 %v3132
        %3285 = vmatprep.subr.mxu0 0.0
        %3286 = vmatpush1.msra.mxu0 %v3133
        %3287 = vmatprep.subr.mxu0 0.0
        %3288 = vmatpush1.msra.mxu0 0.0
        %3289 = vmatprep.subr.mxu0 0.0
        %3290 = vmatpush1.msra.mxu0 0.0
        %3291 = vmatprep.subr.mxu0 0.0
        %3292 = vmatpush1.msra.mxu0 0.0
        %3293 = vmatprep.subr.mxu0 0.0
        %3294 = vmatpush1.msra.mxu0 0.0
        %3295 = vmatprep.subr.mxu0 0.0
        %3296 = vmatpush1.msra.mxu0 0.0
        %3297 = vmatprep.subr.mxu0 0.0
        %3298 = vmatpush1.msra.mxu0 0.0
        %3299 = vmatprep.subr.mxu0 0.0
        %3300 = vmatpush1.msra.mxu0 0.0
        %3301 = vmatprep.subr.mxu0 0.0
        %3302 = vmatpush1.msra.mxu0 0.0
        %3303 = vmatprep.subr.mxu0 0.0
        %3304 = vmatpush1.msra.mxu0 0.0
        %3305 = vmatprep.subr.mxu0 0.0
        %3306 = vmatpush1.msra.mxu0 0.0
        %3307 = vmatprep.subr.mxu0 0.0
        %3308 = vmatpush1.msra.mxu0 0.0
        %3309 = vmatprep.subr.mxu0 0.0
        %3310 = vmatpush1.msra.mxu0 0.0
        %3311 = vmatprep.subr.mxu0 0.0
        %3312 = vmatpush1.msra.mxu0 0.0
        %3313 = vmatprep.subr.mxu0 0.0
        %3314 = vmatpush1.msra.mxu0 0.0
        %3315 = vmatprep.subr.mxu0 0.0
        %3316 = vmatpush1.msra.mxu0 0.0
        %3317 = vmatprep.subr.mxu0 0.0
        %3318 = vmatpush1.msra.mxu0 0.0
        %3319 = vmatprep.subr.mxu0 0.0
        %3320 = vmatpush1.msra.mxu0 0.0
        %3321 = vmatprep.subr.mxu0 0.0
        %3322 = vmatpush1.msra.mxu0 0.0
        %3323 = vmatprep.subr.mxu0 0.0
        %3324 = vmatpush1.msra.mxu0 0.0
        %3325 = vmatprep.subr.mxu0 0.0
        %3326 = vmatpush1.msra.mxu0 0.0
        %3327 = vmatprep.subr.mxu0 0.0
        %3328 = vmatpush1.msra.mxu0 0.0
        %3329 = vmatprep.subr.mxu0 0.0
        %3330 = vmatpush1.msra.mxu0 0.0
        %3331 = vmatprep.subr.mxu0 0.0
        %3332 = vmatpush1.msra.mxu0 0.0
        %3333 = vmatprep.subr.mxu0 0.0
        %3334 = vmatpush1.msra.mxu0 0.0
        %3335 = vmatprep.subr.mxu0 0.0
        %3336 = vmatpush1.msra.mxu0 0.0
        %3337 = vmatprep.subr.mxu0 0.0
        %3338 = vmatpush1.msra.mxu0 0.0
        %3339 = vmatprep.subr.mxu0 0.0
        %3340 = vmatpush1.msra.mxu0 0.0
        %3341 = vmatprep.subr.mxu0 0.0
        %3342 = vmatpush1.msra.mxu0 0.0
        %3343 = vmatprep.subr.mxu0 0.0
        %3344 = vmatpush1.msra.mxu0 0.0
        %3345 = vmatprep.subr.mxu0 0.0
        %3346 = vmatpush1.msra.mxu0 0.0
        %3347 = vmatprep.mubr.f32.mxu0 0.0
        %3348 = vmatmul.mubr.f32.gmra.mrb[0].mxu0 %v3281
        %v3349 = vpop.f32.mrb[0].mxu0
        %v3350 = vadd.f32 0.0, %v3349
        %v3351 = vpop.f32.mrb[0].mxu0
        %3352 = vdwg.mxu0
        %v3354 = vsel %vm593, %v3048, 0
        %3356 = vmatprep.subr.mxu0 0.0
        %3357 = vmatpush1.msra.mxu0 %v3130
        %3358 = vmatprep.subr.mxu0 0.0
        %3359 = vmatpush1.msra.mxu0 %v3131
        %3360 = vmatprep.subr.mxu0 0.0
        %3361 = vmatpush1.msra.mxu0 0.0
        %3362 = vmatprep.subr.mxu0 0.0
        %3363 = vmatpush1.msra.mxu0 0.0
        %3364 = vmatprep.subr.mxu0 0.0
        %3365 = vmatpush1.msra.mxu0 0.0
        %3366 = vmatprep.subr.mxu0 0.0
        %3367 = vmatpush1.msra.mxu0 0.0
        %3368 = vmatprep.subr.mxu0 0.0
        %3369 = vmatpush1.msra.mxu0 0.0
        %3370 = vmatprep.subr.mxu0 0.0
        %3371 = vmatpush1.msra.mxu0 0.0
        %3372 = vmatprep.subr.mxu0 0.0
        %3373 = vmatpush1.msra.mxu0 0.0
        %3374 = vmatprep.subr.mxu0 0.0
        %3375 = vmatpush1.msra.mxu0 0.0
        %3376 = vmatprep.subr.mxu0 0.0
        %3377 = vmatpush1.msra.mxu0 0.0
        %3378 = vmatprep.subr.mxu0 0.0
        %3379 = vmatpush1.msra.mxu0 0.0
        %3380 = vmatprep.subr.mxu0 0.0
        %3381 = vmatpush1.msra.mxu0 0.0
        %3382 = vmatprep.subr.mxu0 0.0
        %3383 = vmatpush1.msra.mxu0 0.0
        %3384 = vmatprep.subr.mxu0 0.0
        %3385 = vmatpush1.msra.mxu0 0.0
        %3386 = vmatprep.subr.mxu0 0.0
        %3387 = vmatpush1.msra.mxu0 0.0
        %3388 = vmatprep.subr.mxu0 0.0
        %3389 = vmatpush1.msra.mxu0 0.0
        %3390 = vmatprep.subr.mxu0 0.0
        %3391 = vmatpush1.msra.mxu0 0.0
        %3392 = vmatprep.subr.mxu0 0.0
        %3393 = vmatpush1.msra.mxu0 0.0
        %3394 = vmatprep.subr.mxu0 0.0
        %3395 = vmatpush1.msra.mxu0 0.0
        %3396 = vmatprep.subr.mxu0 0.0
        %3397 = vmatpush1.msra.mxu0 0.0
        %3398 = vmatprep.subr.mxu0 0.0
        %3399 = vmatpush1.msra.mxu0 0.0
        %3400 = vmatprep.subr.mxu0 0.0
        %3401 = vmatpush1.msra.mxu0 0.0
        %3402 = vmatprep.subr.mxu0 0.0
        %3403 = vmatpush1.msra.mxu0 0.0
        %3404 = vmatprep.subr.mxu0 0.0
        %3405 = vmatpush1.msra.mxu0 0.0
        %3406 = vmatprep.subr.mxu0 0.0
        %3407 = vmatpush1.msra.mxu0 0.0
        %3408 = vmatprep.subr.mxu0 0.0
        %3409 = vmatpush1.msra.mxu0 0.0
        %3410 = vmatprep.subr.mxu0 0.0
        %3411 = vmatpush1.msra.mxu0 0.0
        %3412 = vmatprep.subr.mxu0 0.0
        %3413 = vmatpush1.msra.mxu0 0.0
        %3414 = vmatprep.subr.mxu0 0.0
        %3415 = vmatpush1.msra.mxu0 0.0
        %3416 = vmatprep.subr.mxu0 0.0
        %3417 = vmatpush1.msra.mxu0 0.0
        %3418 = vmatprep.subr.mxu0 0.0
        %3419 = vmatpush1.msra.mxu0 0.0
        %3420 = vmatprep.mubr.f32.mxu0 0.0
        %3421 = vmatmul.mubr.f32.gmra.mrb[0].mxu0 %v3354
        %v3422 = vpop.f32.mrb[0].mxu0
        %v3423 = vadd.f32 %v3350, %v3422
        %v3424 = vpop.f32.mrb[0].mxu0
        %3425 = vdwg.mxu0
        %3426 = vst.msk [vmem:[%s242 + $0x8] sm:$0xf] %vm886, %v3277
        %3428 = vrot.lane.b32.xlu0 %v3423, 32
        %v3429 = vpop.permute.xlu0 %3428
        %3431 = vst.msk [vmem:[%s242 + $0x8] sm:$0xf] %vm892, %v3429
        %v3432 = vld [vmem:[%s250] sm:$0xf]
        %v3433 = vld [vmem:[#allocation2] sm:$0xf]
        %v3434 = vld [vmem:[%s2] sm:$0xf]
        %3436 = vset.pattern.permute.xlu0 0
        %3437 = vperm.xlu0 %3436, %v3434
        %v3438 = vpop.permute.xlu0 %3437
        %3441 = vrot.lane.b32.xlu0 %v3432, 48
        %v3442 = vpop.permute.xlu0 %3441
        %v3444 = vsel %vm260, %v3433, 0
        %v3446 = vsel %vm264, %v3442, 0
        %3448 = vmatprep.subr.mxu0 0.0
        %3449 = vmatpush1.msra.mxu0 %v3446
        %3450 = vmatprep.subr.mxu0 0.0
        %3451 = vmatpush1.msra.mxu0 0.0
        %3452 = vmatprep.subr.mxu0 0.0
        %3453 = vmatpush1.msra.mxu0 0.0
        %3454 = vmatprep.subr.mxu0 0.0
        %3455 = vmatpush1.msra.mxu0 0.0
        %3456 = vmatprep.subr.mxu0 0.0
        %3457 = vmatpush1.msra.mxu0 0.0
        %3458 = vmatprep.subr.mxu0 0.0
        %3459 = vmatpush1.msra.mxu0 0.0
        %3460 = vmatprep.subr.mxu0 0.0
        %3461 = vmatpush1.msra.mxu0 0.0
        %3462 = vmatprep.subr.mxu0 0.0
        %3463 = vmatpush1.msra.mxu0 0.0
        %3464 = vmatprep.subr.mxu0 0.0
        %3465 = vmatpush1.msra.mxu0 0.0
        %3466 = vmatprep.subr.mxu0 0.0
        %3467 = vmatpush1.msra.mxu0 0.0
        %3468 = vmatprep.subr.mxu0 0.0
        %3469 = vmatpush1.msra.mxu0 0.0
        %3470 = vmatprep.subr.mxu0 0.0
        %3471 = vmatpush1.msra.mxu0 0.0
        %3472 = vmatprep.subr.mxu0 0.0
        %3473 = vmatpush1.msra.mxu0 0.0
        %3474 = vmatprep.subr.mxu0 0.0
        %3475 = vmatpush1.msra.mxu0 0.0
        %3476 = vmatprep.subr.mxu0 0.0
        %3477 = vmatpush1.msra.mxu0 0.0
        %3478 = vmatprep.subr.mxu0 0.0
        %3479 = vmatpush1.msra.mxu0 0.0
        %3480 = vmatprep.subr.mxu0 0.0
        %3481 = vmatpush1.msra.mxu0 0.0
        %3482 = vmatprep.subr.mxu0 0.0
        %3483 = vmatpush1.msra.mxu0 0.0
        %3484 = vmatprep.subr.mxu0 0.0
        %3485 = vmatpush1.msra.mxu0 0.0
        %3486 = vmatprep.subr.mxu0 0.0
        %3487 = vmatpush1.msra.mxu0 0.0
        %3488 = vmatprep.subr.mxu0 0.0
        %3489 = vmatpush1.msra.mxu0 0.0
        %3490 = vmatprep.subr.mxu0 0.0
        %3491 = vmatpush1.msra.mxu0 0.0
        %3492 = vmatprep.subr.mxu0 0.0
        %3493 = vmatpush1.msra.mxu0 0.0
        %3494 = vmatprep.subr.mxu0 0.0
        %3495 = vmatpush1.msra.mxu0 0.0
        %3496 = vmatprep.subr.mxu0 0.0
        %3497 = vmatpush1.msra.mxu0 0.0
        %3498 = vmatprep.subr.mxu0 0.0
        %3499 = vmatpush1.msra.mxu0 0.0
        %3500 = vmatprep.subr.mxu0 0.0
        %3501 = vmatpush1.msra.mxu0 0.0
        %3502 = vmatprep.subr.mxu0 0.0
        %3503 = vmatpush1.msra.mxu0 0.0
        %3504 = vmatprep.subr.mxu0 0.0
        %3505 = vmatpush1.msra.mxu0 0.0
        %3506 = vmatprep.subr.mxu0 0.0
        %3507 = vmatpush1.msra.mxu0 0.0
        %3508 = vmatprep.subr.mxu0 0.0
        %3509 = vmatpush1.msra.mxu0 0.0
        %3510 = vmatprep.subr.mxu0 0.0
        %3511 = vmatpush1.msra.mxu0 0.0
        %3512 = vmatprep.mubr.f32.mxu0 0.0
        %3513 = vmatmul.mubr.f32.gmra.mrb[0].mxu0 %v3444
        %v3514 = vpop.f32.mrb[0].mxu0
        %v3515 = vadd.f32 %v3438, %v3514
        %v3516 = vpop.f32.mrb[0].mxu0
        %3517 = vdwg.mxu0
        %v3518 = vmax.f32 %v3515, 0.0
        %v3519 = vld [vmem:[%s339] sm:$0xf]
        %v3520 = vld [vmem:[%s341] sm:$0xf]
        %3522 = vset.pattern.permute.xlu0 0
        %3523 = vperm.xlu0 %3522, %v3520
        %v3524 = vpop.permute.xlu0 %3523
        %v3527 = vsel %vm260, %v3519, 0
        %3529 = vmatprep.subr.mxu0 0.0
        %3530 = vmatpush1.msra.mxu0 %v3446
        %3531 = vmatprep.subr.mxu0 0.0
        %3532 = vmatpush1.msra.mxu0 0.0
        %3533 = vmatprep.subr.mxu0 0.0
        %3534 = vmatpush1.msra.mxu0 0.0
        %3535 = vmatprep.subr.mxu0 0.0
        %3536 = vmatpush1.msra.mxu0 0.0
        %3537 = vmatprep.subr.mxu0 0.0
        %3538 = vmatpush1.msra.mxu0 0.0
        %3539 = vmatprep.subr.mxu0 0.0
        %3540 = vmatpush1.msra.mxu0 0.0
        %3541 = vmatprep.subr.mxu0 0.0
        %3542 = vmatpush1.msra.mxu0 0.0
        %3543 = vmatprep.subr.mxu0 0.0
        %3544 = vmatpush1.msra.mxu0 0.0
        %3545 = vmatprep.subr.mxu0 0.0
        %3546 = vmatpush1.msra.mxu0 0.0
        %3547 = vmatprep.subr.mxu0 0.0
        %3548 = vmatpush1.msra.mxu0 0.0
        %3549 = vmatprep.subr.mxu0 0.0
        %3550 = vmatpush1.msra.mxu0 0.0
        %3551 = vmatprep.subr.mxu0 0.0
        %3552 = vmatpush1.msra.mxu0 0.0
        %3553 = vmatprep.subr.mxu0 0.0
        %3554 = vmatpush1.msra.mxu0 0.0
        %3555 = vmatprep.subr.mxu0 0.0
        %3556 = vmatpush1.msra.mxu0 0.0
        %3557 = vmatprep.subr.mxu0 0.0
        %3558 = vmatpush1.msra.mxu0 0.0
        %3559 = vmatprep.subr.mxu0 0.0
        %3560 = vmatpush1.msra.mxu0 0.0
        %3561 = vmatprep.subr.mxu0 0.0
        %3562 = vmatpush1.msra.mxu0 0.0
        %3563 = vmatprep.subr.mxu0 0.0
        %3564 = vmatpush1.msra.mxu0 0.0
        %3565 = vmatprep.subr.mxu0 0.0
        %3566 = vmatpush1.msra.mxu0 0.0
        %3567 = vmatprep.subr.mxu0 0.0
        %3568 = vmatpush1.msra.mxu0 0.0
        %3569 = vmatprep.subr.mxu0 0.0
        %3570 = vmatpush1.msra.mxu0 0.0
        %3571 = vmatprep.subr.mxu0 0.0
        %3572 = vmatpush1.msra.mxu0 0.0
        %3573 = vmatprep.subr.mxu0 0.0
        %3574 = vmatpush1.msra.mxu0 0.0
        %3575 = vmatprep.subr.mxu0 0.0
        %3576 = vmatpush1.msra.mxu0 0.0
        %3577 = vmatprep.subr.mxu0 0.0
        %3578 = vmatpush1.msra.mxu0 0.0
        %3579 = vmatprep.subr.mxu0 0.0
        %3580 = vmatpush1.msra.mxu0 0.0
        %3581 = vmatprep.subr.mxu0 0.0
        %3582 = vmatpush1.msra.mxu0 0.0
        %3583 = vmatprep.subr.mxu0 0.0
        %3584 = vmatpush1.msra.mxu0 0.0
        %3585 = vmatprep.subr.mxu0 0.0
        %3586 = vmatpush1.msra.mxu0 0.0
        %3587 = vmatprep.subr.mxu0 0.0
        %3588 = vmatpush1.msra.mxu0 0.0
        %3589 = vmatprep.subr.mxu0 0.0
        %3590 = vmatpush1.msra.mxu0 0.0
        %3591 = vmatprep.subr.mxu0 0.0
        %3592 = vmatpush1.msra.mxu0 0.0
        %3593 = vmatprep.mubr.f32.mxu0 0.0
        %3594 = vmatmul.mubr.f32.gmra.mrb[0].mxu0 %v3527
        %v3595 = vpop.f32.mrb[0].mxu0
        %v3596 = vadd.f32 %v3524, %v3595
        %v3597 = vpop.f32.mrb[0].mxu0
        %3598 = vdwg.mxu0
        %v3599 = vmax.f32 %v3596, 0.0
        %v3600 = vld [vmem:[%s422] sm:$0xf]
        %v3601 = vld [vmem:[%s424] sm:$0xf]
        %3603 = vset.pattern.permute.xlu0 0
        %3604 = vperm.xlu0 %3603, %v3601
        %v3605 = vpop.permute.xlu0 %3604
        %v3608 = vsel %vm260, %v3600, 0
        %3610 = vmatprep.subr.mxu0 0.0
        %3611 = vmatpush1.msra.mxu0 %v3446
        %3612 = vmatprep.subr.mxu0 0.0
        %3613 = vmatpush1.msra.mxu0 0.0
        %3614 = vmatprep.subr.mxu0 0.0
        %3615 = vmatpush1.msra.mxu0 0.0
        %3616 = vmatprep.subr.mxu0 0.0
        %3617 = vmatpush1.msra.mxu0 0.0
        %3618 = vmatprep.subr.mxu0 0.0
        %3619 = vmatpush1.msra.mxu0 0.0
        %3620 = vmatprep.subr.mxu0 0.0
        %3621 = vmatpush1.msra.mxu0 0.0
        %3622 = vmatprep.subr.mxu0 0.0
        %3623 = vmatpush1.msra.mxu0 0.0
        %3624 = vmatprep.subr.mxu0 0.0
        %3625 = vmatpush1.msra.mxu0 0.0
        %3626 = vmatprep.subr.mxu0 0.0
        %3627 = vmatpush1.msra.mxu0 0.0
        %3628 = vmatprep.subr.mxu0 0.0
        %3629 = vmatpush1.msra.mxu0 0.0
        %3630 = vmatprep.subr.mxu0 0.0
        %3631 = vmatpush1.msra.mxu0 0.0
        %3632 = vmatprep.subr.mxu0 0.0
        %3633 = vmatpush1.msra.mxu0 0.0
        %3634 = vmatprep.subr.mxu0 0.0
        %3635 = vmatpush1.msra.mxu0 0.0
        %3636 = vmatprep.subr.mxu0 0.0
        %3637 = vmatpush1.msra.mxu0 0.0
        %3638 = vmatprep.subr.mxu0 0.0
        %3639 = vmatpush1.msra.mxu0 0.0
        %3640 = vmatprep.subr.mxu0 0.0
        %3641 = vmatpush1.msra.mxu0 0.0
        %3642 = vmatprep.subr.mxu0 0.0
        %3643 = vmatpush1.msra.mxu0 0.0
        %3644 = vmatprep.subr.mxu0 0.0
        %3645 = vmatpush1.msra.mxu0 0.0
        %3646 = vmatprep.subr.mxu0 0.0
        %3647 = vmatpush1.msra.mxu0 0.0
        %3648 = vmatprep.subr.mxu0 0.0
        %3649 = vmatpush1.msra.mxu0 0.0
        %3650 = vmatprep.subr.mxu0 0.0
        %3651 = vmatpush1.msra.mxu0 0.0
        %3652 = vmatprep.subr.mxu0 0.0
        %3653 = vmatpush1.msra.mxu0 0.0
        %3654 = vmatprep.subr.mxu0 0.0
        %3655 = vmatpush1.msra.mxu0 0.0
        %3656 = vmatprep.subr.mxu0 0.0
        %3657 = vmatpush1.msra.mxu0 0.0
        %3658 = vmatprep.subr.mxu0 0.0
        %3659 = vmatpush1.msra.mxu0 0.0
        %3660 = vmatprep.subr.mxu0 0.0
        %3661 = vmatpush1.msra.mxu0 0.0
        %3662 = vmatprep.subr.mxu0 0.0
        %3663 = vmatpush1.msra.mxu0 0.0
        %3664 = vmatprep.subr.mxu0 0.0
        %3665 = vmatpush1.msra.mxu0 0.0
        %3666 = vmatprep.subr.mxu0 0.0
        %3667 = vmatpush1.msra.mxu0 0.0
        %3668 = vmatprep.subr.mxu0 0.0
        %3669 = vmatpush1.msra.mxu0 0.0
        %3670 = vmatprep.subr.mxu0 0.0
        %3671 = vmatpush1.msra.mxu0 0.0
        %3672 = vmatprep.subr.mxu0 0.0
        %3673 = vmatpush1.msra.mxu0 0.0
        %3674 = vmatprep.mubr.f32.mxu0 0.0
        %3675 = vmatmul.mubr.f32.gmra.mrb[0].mxu0 %v3608
        %v3676 = vpop.f32.mrb[0].mxu0
        %v3677 = vadd.f32 %v3605, %v3676
        %v3678 = vpop.f32.mrb[0].mxu0
        %3679 = vdwg.mxu0
        %v3680 = vmax.f32 %v3677, 0.0
        %v3681 = vld [vmem:[%s505] sm:$0xf]
        %v3682 = vld [vmem:[%s507] sm:$0xf]
        %3684 = vset.pattern.permute.xlu0 0
        %3685 = vperm.xlu0 %3684, %v3682
        %v3686 = vpop.permute.xlu0 %3685
        %v3689 = vsel %vm260, %v3681, 0
        %3691 = vmatprep.subr.mxu0 0.0
        %3692 = vmatpush1.msra.mxu0 %v3446
        %3693 = vmatprep.subr.mxu0 0.0
        %3694 = vmatpush1.msra.mxu0 0.0
        %3695 = vmatprep.subr.mxu0 0.0
        %3696 = vmatpush1.msra.mxu0 0.0
        %3697 = vmatprep.subr.mxu0 0.0
        %3698 = vmatpush1.msra.mxu0 0.0
        %3699 = vmatprep.subr.mxu0 0.0
        %3700 = vmatpush1.msra.mxu0 0.0
        %3701 = vmatprep.subr.mxu0 0.0
        %3702 = vmatpush1.msra.mxu0 0.0
        %3703 = vmatprep.subr.mxu0 0.0
        %3704 = vmatpush1.msra.mxu0 0.0
        %3705 = vmatprep.subr.mxu0 0.0
        %3706 = vmatpush1.msra.mxu0 0.0
        %3707 = vmatprep.subr.mxu0 0.0
        %3708 = vmatpush1.msra.mxu0 0.0
        %3709 = vmatprep.subr.mxu0 0.0
        %3710 = vmatpush1.msra.mxu0 0.0
        %3711 = vmatprep.subr.mxu0 0.0
        %3712 = vmatpush1.msra.mxu0 0.0
        %3713 = vmatprep.subr.mxu0 0.0
        %3714 = vmatpush1.msra.mxu0 0.0
        %3715 = vmatprep.subr.mxu0 0.0
        %3716 = vmatpush1.msra.mxu0 0.0
        %3717 = vmatprep.subr.mxu0 0.0
        %3718 = vmatpush1.msra.mxu0 0.0
        %3719 = vmatprep.subr.mxu0 0.0
        %3720 = vmatpush1.msra.mxu0 0.0
        %3721 = vmatprep.subr.mxu0 0.0
        %3722 = vmatpush1.msra.mxu0 0.0
        %3723 = vmatprep.subr.mxu0 0.0
        %3724 = vmatpush1.msra.mxu0 0.0
        %3725 = vmatprep.subr.mxu0 0.0
        %3726 = vmatpush1.msra.mxu0 0.0
        %3727 = vmatprep.subr.mxu0 0.0
        %3728 = vmatpush1.msra.mxu0 0.0
        %3729 = vmatprep.subr.mxu0 0.0
        %3730 = vmatpush1.msra.mxu0 0.0
        %3731 = vmatprep.subr.mxu0 0.0
        %3732 = vmatpush1.msra.mxu0 0.0
        %3733 = vmatprep.subr.mxu0 0.0
        %3734 = vmatpush1.msra.mxu0 0.0
        %3735 = vmatprep.subr.mxu0 0.0
        %3736 = vmatpush1.msra.mxu0 0.0
        %3737 = vmatprep.subr.mxu0 0.0
        %3738 = vmatpush1.msra.mxu0 0.0
        %3739 = vmatprep.subr.mxu0 0.0
        %3740 = vmatpush1.msra.mxu0 0.0
        %3741 = vmatprep.subr.mxu0 0.0
        %3742 = vmatpush1.msra.mxu0 0.0
        %3743 = vmatprep.subr.mxu0 0.0
        %3744 = vmatpush1.msra.mxu0 0.0
        %3745 = vmatprep.subr.mxu0 0.0
        %3746 = vmatpush1.msra.mxu0 0.0
        %3747 = vmatprep.subr.mxu0 0.0
        %3748 = vmatpush1.msra.mxu0 0.0
        %3749 = vmatprep.subr.mxu0 0.0
        %3750 = vmatpush1.msra.mxu0 0.0
        %3751 = vmatprep.subr.mxu0 0.0
        %3752 = vmatpush1.msra.mxu0 0.0
        %3753 = vmatprep.subr.mxu0 0.0
        %3754 = vmatpush1.msra.mxu0 0.0
        %3755 = vmatprep.mubr.f32.mxu0 0.0
        %3756 = vmatmul.mubr.f32.gmra.mrb[0].mxu0 %v3689
        %v3757 = vpop.f32.mrb[0].mxu0
        %v3758 = vadd.f32 %v3686, %v3757
        %v3759 = vpop.f32.mrb[0].mxu0
        %3760 = vdwg.mxu0
        %v3761 = vmax.f32 %v3758, 0.0
        %v3762 = vld [vmem:[#allocation5] sm:$0xff]
        %v3763 = vld [vmem:[#allocation5 + $0x8] sm:$0xff]
        %v3764 = vld [vmem:[%s590] sm:$0xff]
        %v3765 = vld [vmem:[%s590 + $0x8] sm:$0xff]
        %v3767 = vsel %vm593, %v3599, 0
        %3769 = vmatprep.subr.mxu0 0.0
        %3770 = vmatpush1.msra.mxu0 %v3764
        %3771 = vmatprep.subr.mxu0 0.0
        %3772 = vmatpush1.msra.mxu0 %v3765
        %3773 = vmatprep.subr.mxu0 0.0
        %3774 = vmatpush1.msra.mxu0 0.0
        %3775 = vmatprep.subr.mxu0 0.0
        %3776 = vmatpush1.msra.mxu0 0.0
        %3777 = vmatprep.subr.mxu0 0.0
        %3778 = vmatpush1.msra.mxu0 0.0
        %3779 = vmatprep.subr.mxu0 0.0
        %3780 = vmatpush1.msra.mxu0 0.0
        %3781 = vmatprep.subr.mxu0 0.0
        %3782 = vmatpush1.msra.mxu0 0.0
        %3783 = vmatprep.subr.mxu0 0.0
        %3784 = vmatpush1.msra.mxu0 0.0
        %3785 = vmatprep.subr.mxu0 0.0
        %3786 = vmatpush1.msra.mxu0 0.0
        %3787 = vmatprep.subr.mxu0 0.0
        %3788 = vmatpush1.msra.mxu0 0.0
        %3789 = vmatprep.subr.mxu0 0.0
        %3790 = vmatpush1.msra.mxu0 0.0
        %3791 = vmatprep.subr.mxu0 0.0
        %3792 = vmatpush1.msra.mxu0 0.0
        %3793 = vmatprep.subr.mxu0 0.0
        %3794 = vmatpush1.msra.mxu0 0.0
        %3795 = vmatprep.subr.mxu0 0.0
        %3796 = vmatpush1.msra.mxu0 0.0
        %3797 = vmatprep.subr.mxu0 0.0
        %3798 = vmatpush1.msra.mxu0 0.0
        %3799 = vmatprep.subr.mxu0 0.0
        %3800 = vmatpush1.msra.mxu0 0.0
        %3801 = vmatprep.subr.mxu0 0.0
        %3802 = vmatpush1.msra.mxu0 0.0
        %3803 = vmatprep.subr.mxu0 0.0
        %3804 = vmatpush1.msra.mxu0 0.0
        %3805 = vmatprep.subr.mxu0 0.0
        %3806 = vmatpush1.msra.mxu0 0.0
        %3807 = vmatprep.subr.mxu0 0.0
        %3808 = vmatpush1.msra.mxu0 0.0
        %3809 = vmatprep.subr.mxu0 0.0
        %3810 = vmatpush1.msra.mxu0 0.0
        %3811 = vmatprep.subr.mxu0 0.0
        %3812 = vmatpush1.msra.mxu0 0.0
        %3813 = vmatprep.subr.mxu0 0.0
        %3814 = vmatpush1.msra.mxu0 0.0
        %3815 = vmatprep.subr.mxu0 0.0
        %3816 = vmatpush1.msra.mxu0 0.0
        %3817 = vmatprep.subr.mxu0 0.0
        %3818 = vmatpush1.msra.mxu0 0.0
        %3819 = vmatprep.subr.mxu0 0.0
        %3820 = vmatpush1.msra.mxu0 0.0
        %3821 = vmatprep.subr.mxu0 0.0
        %3822 = vmatpush1.msra.mxu0 0.0
        %3823 = vmatprep.subr.mxu0 0.0
        %3824 = vmatpush1.msra.mxu0 0.0
        %3825 = vmatprep.subr.mxu0 0.0
        %3826 = vmatpush1.msra.mxu0 0.0
        %3827 = vmatprep.subr.mxu0 0.0
        %3828 = vmatpush1.msra.mxu0 0.0
        %3829 = vmatprep.subr.mxu0 0.0
        %3830 = vmatpush1.msra.mxu0 0.0
        %3831 = vmatprep.subr.mxu0 0.0
        %3832 = vmatpush1.msra.mxu0 0.0
        %3833 = vmatprep.mubr.f32.mxu0 0.0
        %3834 = vmatmul.mubr.f32.gmra.mrb[0].mxu0 %v3767
        %v3835 = vpop.f32.mrb[0].mxu0
        %v3836 = vadd.f32 0.0, %v3835
        %v3837 = vpop.f32.mrb[0].mxu0
        %3838 = vdwg.mxu0
        %v3840 = vsel %vm593, %v3518, 0
        %3842 = vmatprep.subr.mxu0 0.0
        %3843 = vmatpush1.msra.mxu0 %v3762
        %3844 = vmatprep.subr.mxu0 0.0
        %3845 = vmatpush1.msra.mxu0 %v3763
        %3846 = vmatprep.subr.mxu0 0.0
        %3847 = vmatpush1.msra.mxu0 0.0
        %3848 = vmatprep.subr.mxu0 0.0
        %3849 = vmatpush1.msra.mxu0 0.0
        %3850 = vmatprep.subr.mxu0 0.0
        %3851 = vmatpush1.msra.mxu0 0.0
        %3852 = vmatprep.subr.mxu0 0.0
        %3853 = vmatpush1.msra.mxu0 0.0
        %3854 = vmatprep.subr.mxu0 0.0
        %3855 = vmatpush1.msra.mxu0 0.0
        %3856 = vmatprep.subr.mxu0 0.0
        %3857 = vmatpush1.msra.mxu0 0.0
        %3858 = vmatprep.subr.mxu0 0.0
        %3859 = vmatpush1.msra.mxu0 0.0
        %3860 = vmatprep.subr.mxu0 0.0
        %3861 = vmatpush1.msra.mxu0 0.0
        %3862 = vmatprep.subr.mxu0 0.0
        %3863 = vmatpush1.msra.mxu0 0.0
        %3864 = vmatprep.subr.mxu0 0.0
        %3865 = vmatpush1.msra.mxu0 0.0
        %3866 = vmatprep.subr.mxu0 0.0
        %3867 = vmatpush1.msra.mxu0 0.0
        %3868 = vmatprep.subr.mxu0 0.0
        %3869 = vmatpush1.msra.mxu0 0.0
        %3870 = vmatprep.subr.mxu0 0.0
        %3871 = vmatpush1.msra.mxu0 0.0
        %3872 = vmatprep.subr.mxu0 0.0
        %3873 = vmatpush1.msra.mxu0 0.0
        %3874 = vmatprep.subr.mxu0 0.0
        %3875 = vmatpush1.msra.mxu0 0.0
        %3876 = vmatprep.subr.mxu0 0.0
        %3877 = vmatpush1.msra.mxu0 0.0
        %3878 = vmatprep.subr.mxu0 0.0
        %3879 = vmatpush1.msra.mxu0 0.0
        %3880 = vmatprep.subr.mxu0 0.0
        %3881 = vmatpush1.msra.mxu0 0.0
        %3882 = vmatprep.subr.mxu0 0.0
        %3883 = vmatpush1.msra.mxu0 0.0
        %3884 = vmatprep.subr.mxu0 0.0
        %3885 = vmatpush1.msra.mxu0 0.0
        %3886 = vmatprep.subr.mxu0 0.0
        %3887 = vmatpush1.msra.mxu0 0.0
        %3888 = vmatprep.subr.mxu0 0.0
        %3889 = vmatpush1.msra.mxu0 0.0
        %3890 = vmatprep.subr.mxu0 0.0
        %3891 = vmatpush1.msra.mxu0 0.0
        %3892 = vmatprep.subr.mxu0 0.0
        %3893 = vmatpush1.msra.mxu0 0.0
        %3894 = vmatprep.subr.mxu0 0.0
        %3895 = vmatpush1.msra.mxu0 0.0
        %3896 = vmatprep.subr.mxu0 0.0
        %3897 = vmatpush1.msra.mxu0 0.0
        %3898 = vmatprep.subr.mxu0 0.0
        %3899 = vmatpush1.msra.mxu0 0.0
        %3900 = vmatprep.subr.mxu0 0.0
        %3901 = vmatpush1.msra.mxu0 0.0
        %3902 = vmatprep.subr.mxu0 0.0
        %3903 = vmatpush1.msra.mxu0 0.0
        %3904 = vmatprep.subr.mxu0 0.0
        %3905 = vmatpush1.msra.mxu0 0.0
        %3906 = vmatprep.mubr.f32.mxu0 0.0
        %3907 = vmatmul.mubr.f32.gmra.mrb[0].mxu0 %v3840
        %v3908 = vpop.f32.mrb[0].mxu0
        %v3909 = vadd.f32 %v3836, %v3908
        %v3910 = vpop.f32.mrb[0].mxu0
        %3911 = vdwg.mxu0
        %v3913 = vsel %vm593, %v3761, 0
        %3915 = vmatprep.subr.mxu0 0.0
        %3916 = vmatpush1.msra.mxu0 %v3764
        %3917 = vmatprep.subr.mxu0 0.0
        %3918 = vmatpush1.msra.mxu0 %v3765
        %3919 = vmatprep.subr.mxu0 0.0
        %3920 = vmatpush1.msra.mxu0 0.0
        %3921 = vmatprep.subr.mxu0 0.0
        %3922 = vmatpush1.msra.mxu0 0.0
        %3923 = vmatprep.subr.mxu0 0.0
        %3924 = vmatpush1.msra.mxu0 0.0
        %3925 = vmatprep.subr.mxu0 0.0
        %3926 = vmatpush1.msra.mxu0 0.0
        %3927 = vmatprep.subr.mxu0 0.0
        %3928 = vmatpush1.msra.mxu0 0.0
        %3929 = vmatprep.subr.mxu0 0.0
        %3930 = vmatpush1.msra.mxu0 0.0
        %3931 = vmatprep.subr.mxu0 0.0
        %3932 = vmatpush1.msra.mxu0 0.0
        %3933 = vmatprep.subr.mxu0 0.0
        %3934 = vmatpush1.msra.mxu0 0.0
        %3935 = vmatprep.subr.mxu0 0.0
        %3936 = vmatpush1.msra.mxu0 0.0
        %3937 = vmatprep.subr.mxu0 0.0
        %3938 = vmatpush1.msra.mxu0 0.0
        %3939 = vmatprep.subr.mxu0 0.0
        %3940 = vmatpush1.msra.mxu0 0.0
        %3941 = vmatprep.subr.mxu0 0.0
        %3942 = vmatpush1.msra.mxu0 0.0
        %3943 = vmatprep.subr.mxu0 0.0
        %3944 = vmatpush1.msra.mxu0 0.0
        %3945 = vmatprep.subr.mxu0 0.0
        %3946 = vmatpush1.msra.mxu0 0.0
        %3947 = vmatprep.subr.mxu0 0.0
        %3948 = vmatpush1.msra.mxu0 0.0
        %3949 = vmatprep.subr.mxu0 0.0
        %3950 = vmatpush1.msra.mxu0 0.0
        %3951 = vmatprep.subr.mxu0 0.0
        %3952 = vmatpush1.msra.mxu0 0.0
        %3953 = vmatprep.subr.mxu0 0.0
        %3954 = vmatpush1.msra.mxu0 0.0
        %3955 = vmatprep.subr.mxu0 0.0
        %3956 = vmatpush1.msra.mxu0 0.0
        %3957 = vmatprep.subr.mxu0 0.0
        %3958 = vmatpush1.msra.mxu0 0.0
        %3959 = vmatprep.subr.mxu0 0.0
        %3960 = vmatpush1.msra.mxu0 0.0
        %3961 = vmatprep.subr.mxu0 0.0
        %3962 = vmatpush1.msra.mxu0 0.0
        %3963 = vmatprep.subr.mxu0 0.0
        %3964 = vmatpush1.msra.mxu0 0.0
        %3965 = vmatprep.subr.mxu0 0.0
        %3966 = vmatpush1.msra.mxu0 0.0
        %3967 = vmatprep.subr.mxu0 0.0
        %3968 = vmatpush1.msra.mxu0 0.0
        %3969 = vmatprep.subr.mxu0 0.0
        %3970 = vmatpush1.msra.mxu0 0.0
        %3971 = vmatprep.subr.mxu0 0.0
        %3972 = vmatpush1.msra.mxu0 0.0
        %3973 = vmatprep.subr.mxu0 0.0
        %3974 = vmatpush1.msra.mxu0 0.0
        %3975 = vmatprep.subr.mxu0 0.0
        %3976 = vmatpush1.msra.mxu0 0.0
        %3977 = vmatprep.subr.mxu0 0.0
        %3978 = vmatpush1.msra.mxu0 0.0
        %3979 = vmatprep.mubr.f32.mxu0 0.0
        %3980 = vmatmul.mubr.f32.gmra.mrb[0].mxu0 %v3913
        %v3981 = vpop.f32.mrb[0].mxu0
        %v3982 = vadd.f32 0.0, %v3981
        %v3983 = vpop.f32.mrb[0].mxu0
        %3984 = vdwg.mxu0
        %v3986 = vsel %vm593, %v3680, 0
        %3988 = vmatprep.subr.mxu0 0.0
        %3989 = vmatpush1.msra.mxu0 %v3762
        %3990 = vmatprep.subr.mxu0 0.0
        %3991 = vmatpush1.msra.mxu0 %v3763
        %3992 = vmatprep.subr.mxu0 0.0
        %3993 = vmatpush1.msra.mxu0 0.0
        %3994 = vmatprep.subr.mxu0 0.0
        %3995 = vmatpush1.msra.mxu0 0.0
        %3996 = vmatprep.subr.mxu0 0.0
        %3997 = vmatpush1.msra.mxu0 0.0
        %3998 = vmatprep.subr.mxu0 0.0
        %3999 = vmatpush1.msra.mxu0 0.0
        %4000 = vmatprep.subr.mxu0 0.0
        %4001 = vmatpush1.msra.mxu0 0.0
        %4002 = vmatprep.subr.mxu0 0.0
        %4003 = vmatpush1.msra.mxu0 0.0
        %4004 = vmatprep.subr.mxu0 0.0
        %4005 = vmatpush1.msra.mxu0 0.0
        %4006 = vmatprep.subr.mxu0 0.0
        %4007 = vmatpush1.msra.mxu0 0.0
        %4008 = vmatprep.subr.mxu0 0.0
        %4009 = vmatpush1.msra.mxu0 0.0
        %4010 = vmatprep.subr.mxu0 0.0
        %4011 = vmatpush1.msra.mxu0 0.0
        %4012 = vmatprep.subr.mxu0 0.0
        %4013 = vmatpush1.msra.mxu0 0.0
        %4014 = vmatprep.subr.mxu0 0.0
        %4015 = vmatpush1.msra.mxu0 0.0
        %4016 = vmatprep.subr.mxu0 0.0
        %4017 = vmatpush1.msra.mxu0 0.0
        %4018 = vmatprep.subr.mxu0 0.0
        %4019 = vmatpush1.msra.mxu0 0.0
        %4020 = vmatprep.subr.mxu0 0.0
        %4021 = vmatpush1.msra.mxu0 0.0
        %4022 = vmatprep.subr.mxu0 0.0
        %4023 = vmatpush1.msra.mxu0 0.0
        %4024 = vmatprep.subr.mxu0 0.0
        %4025 = vmatpush1.msra.mxu0 0.0
        %4026 = vmatprep.subr.mxu0 0.0
        %4027 = vmatpush1.msra.mxu0 0.0
        %4028 = vmatprep.subr.mxu0 0.0
        %4029 = vmatpush1.msra.mxu0 0.0
        %4030 = vmatprep.subr.mxu0 0.0
        %4031 = vmatpush1.msra.mxu0 0.0
        %4032 = vmatprep.subr.mxu0 0.0
        %4033 = vmatpush1.msra.mxu0 0.0
        %4034 = vmatprep.subr.mxu0 0.0
        %4035 = vmatpush1.msra.mxu0 0.0
        %4036 = vmatprep.subr.mxu0 0.0
        %4037 = vmatpush1.msra.mxu0 0.0
        %4038 = vmatprep.subr.mxu0 0.0
        %4039 = vmatpush1.msra.mxu0 0.0
        %4040 = vmatprep.subr.mxu0 0.0
        %4041 = vmatpush1.msra.mxu0 0.0
        %4042 = vmatprep.subr.mxu0 0.0
        %4043 = vmatpush1.msra.mxu0 0.0
        %4044 = vmatprep.subr.mxu0 0.0
        %4045 = vmatpush1.msra.mxu0 0.0
        %4046 = vmatprep.subr.mxu0 0.0
        %4047 = vmatpush1.msra.mxu0 0.0
        %4048 = vmatprep.subr.mxu0 0.0
        %4049 = vmatpush1.msra.mxu0 0.0
        %4050 = vmatprep.subr.mxu0 0.0
        %4051 = vmatpush1.msra.mxu0 0.0
        %4052 = vmatprep.mubr.f32.mxu0 0.0
        %4053 = vmatmul.mubr.f32.gmra.mrb[0].mxu0 %v3986
        %v4054 = vpop.f32.mrb[0].mxu0
        %v4055 = vadd.f32 %v3982, %v4054
        %v4056 = vpop.f32.mrb[0].mxu0
        %4057 = vdwg.mxu0
        %4059 = vrot.lane.b32.xlu0 %v3909, 64
        %v4060 = vpop.permute.xlu0 %4059
        %4062 = vst.msk [vmem:[%s242 + $0x8] sm:$0xf] %vm1524, %v4060
        %4064 = vrot.lane.b32.xlu0 %v4055, 96
        %v4065 = vpop.permute.xlu0 %4064
        %4067 = vst.msk [vmem:[%s242 + $0x8] sm:$0xf] %vm1530, %v4065
        %v4068 = vld [vmem:[%s250] sm:$0xf]
        %v4069 = vld [vmem:[#allocation2] sm:$0xf]
        %v4070 = vld [vmem:[%s2] sm:$0xf]
        %4072 = vset.pattern.permute.xlu0 0
        %4073 = vperm.xlu0 %4072, %v4070
        %v4074 = vpop.permute.xlu0 %4073
        %4077 = vrot.lane.b32.xlu0 %v4068, 32
        %v4078 = vpop.permute.xlu0 %4077
        %v4080 = vsel %vm260, %v4069, 0
        %v4082 = vsel %vm264, %v4078, 0
        %4084 = vmatprep.subr.mxu0 0.0
        %4085 = vmatpush1.msra.mxu0 %v4082
        %4086 = vmatprep.subr.mxu0 0.0
        %4087 = vmatpush1.msra.mxu0 0.0
        %4088 = vmatprep.subr.mxu0 0.0
        %4089 = vmatpush1.msra.mxu0 0.0
        %4090 = vmatprep.subr.mxu0 0.0
        %4091 = vmatpush1.msra.mxu0 0.0
        %4092 = vmatprep.subr.mxu0 0.0
        %4093 = vmatpush1.msra.mxu0 0.0
        %4094 = vmatprep.subr.mxu0 0.0
        %4095 = vmatpush1.msra.mxu0 0.0
        %4096 = vmatprep.subr.mxu0 0.0
        %4097 = vmatpush1.msra.mxu0 0.0
        %4098 = vmatprep.subr.mxu0 0.0
        %4099 = vmatpush1.msra.mxu0 0.0
        %4100 = vmatprep.subr.mxu0 0.0
        %4101 = vmatpush1.msra.mxu0 0.0
        %4102 = vmatprep.subr.mxu0 0.0
        %4103 = vmatpush1.msra.mxu0 0.0
        %4104 = vmatprep.subr.mxu0 0.0
        %4105 = vmatpush1.msra.mxu0 0.0
        %4106 = vmatprep.subr.mxu0 0.0
        %4107 = vmatpush1.msra.mxu0 0.0
        %4108 = vmatprep.subr.mxu0 0.0
        %4109 = vmatpush1.msra.mxu0 0.0
        %4110 = vmatprep.subr.mxu0 0.0
        %4111 = vmatpush1.msra.mxu0 0.0
        %4112 = vmatprep.subr.mxu0 0.0
        %4113 = vmatpush1.msra.mxu0 0.0
        %4114 = vmatprep.subr.mxu0 0.0
        %4115 = vmatpush1.msra.mxu0 0.0
        %4116 = vmatprep.subr.mxu0 0.0
        %4117 = vmatpush1.msra.mxu0 0.0
        %4118 = vmatprep.subr.mxu0 0.0
        %4119 = vmatpush1.msra.mxu0 0.0
        %4120 = vmatprep.subr.mxu0 0.0
        %4121 = vmatpush1.msra.mxu0 0.0
        %4122 = vmatprep.subr.mxu0 0.0
        %4123 = vmatpush1.msra.mxu0 0.0
        %4124 = vmatprep.subr.mxu0 0.0
        %4125 = vmatpush1.msra.mxu0 0.0
        %4126 = vmatprep.subr.mxu0 0.0
        %4127 = vmatpush1.msra.mxu0 0.0
        %4128 = vmatprep.subr.mxu0 0.0
        %4129 = vmatpush1.msra.mxu0 0.0
        %4130 = vmatprep.subr.mxu0 0.0
        %4131 = vmatpush1.msra.mxu0 0.0
        %4132 = vmatprep.subr.mxu0 0.0
        %4133 = vmatpush1.msra.mxu0 0.0
        %4134 = vmatprep.subr.mxu0 0.0
        %4135 = vmatpush1.msra.mxu0 0.0
        %4136 = vmatprep.subr.mxu0 0.0
        %4137 = vmatpush1.msra.mxu0 0.0
        %4138 = vmatprep.subr.mxu0 0.0
        %4139 = vmatpush1.msra.mxu0 0.0
        %4140 = vmatprep.subr.mxu0 0.0
        %4141 = vmatpush1.msra.mxu0 0.0
        %4142 = vmatprep.subr.mxu0 0.0
        %4143 = vmatpush1.msra.mxu0 0.0
        %4144 = vmatprep.subr.mxu0 0.0
        %4145 = vmatpush1.msra.mxu0 0.0
        %4146 = vmatprep.subr.mxu0 0.0
        %4147 = vmatpush1.msra.mxu0 0.0
        %4148 = vmatprep.mubr.f32.mxu0 0.0
        %4149 = vmatmul.mubr.f32.gmra.mrb[0].mxu0 %v4080
        %v4150 = vpop.f32.mrb[0].mxu0
        %v4151 = vadd.f32 %v4074, %v4150
        %v4152 = vpop.f32.mrb[0].mxu0
        %4153 = vdwg.mxu0
        %v4154 = vmax.f32 %v4151, 0.0
        %v4155 = vld [vmem:[%s339] sm:$0xf]
        %v4156 = vld [vmem:[%s341] sm:$0xf]
        %4158 = vset.pattern.permute.xlu0 0
        %4159 = vperm.xlu0 %4158, %v4156
        %v4160 = vpop.permute.xlu0 %4159
        %v4163 = vsel %vm260, %v4155, 0
        %4165 = vmatprep.subr.mxu0 0.0
        %4166 = vmatpush1.msra.mxu0 %v4082
        %4167 = vmatprep.subr.mxu0 0.0
        %4168 = vmatpush1.msra.mxu0 0.0
        %4169 = vmatprep.subr.mxu0 0.0
        %4170 = vmatpush1.msra.mxu0 0.0
        %4171 = vmatprep.subr.mxu0 0.0
        %4172 = vmatpush1.msra.mxu0 0.0
        %4173 = vmatprep.subr.mxu0 0.0
        %4174 = vmatpush1.msra.mxu0 0.0
        %4175 = vmatprep.subr.mxu0 0.0
        %4176 = vmatpush1.msra.mxu0 0.0
        %4177 = vmatprep.subr.mxu0 0.0
        %4178 = vmatpush1.msra.mxu0 0.0
        %4179 = vmatprep.subr.mxu0 0.0
        %4180 = vmatpush1.msra.mxu0 0.0
        %4181 = vmatprep.subr.mxu0 0.0
        %4182 = vmatpush1.msra.mxu0 0.0
        %4183 = vmatprep.subr.mxu0 0.0
        %4184 = vmatpush1.msra.mxu0 0.0
        %4185 = vmatprep.subr.mxu0 0.0
        %4186 = vmatpush1.msra.mxu0 0.0
        %4187 = vmatprep.subr.mxu0 0.0
        %4188 = vmatpush1.msra.mxu0 0.0
        %4189 = vmatprep.subr.mxu0 0.0
        %4190 = vmatpush1.msra.mxu0 0.0
        %4191 = vmatprep.subr.mxu0 0.0
        %4192 = vmatpush1.msra.mxu0 0.0
        %4193 = vmatprep.subr.mxu0 0.0
        %4194 = vmatpush1.msra.mxu0 0.0
        %4195 = vmatprep.subr.mxu0 0.0
        %4196 = vmatpush1.msra.mxu0 0.0
        %4197 = vmatprep.subr.mxu0 0.0
        %4198 = vmatpush1.msra.mxu0 0.0
        %4199 = vmatprep.subr.mxu0 0.0
        %4200 = vmatpush1.msra.mxu0 0.0
        %4201 = vmatprep.subr.mxu0 0.0
        %4202 = vmatpush1.msra.mxu0 0.0
        %4203 = vmatprep.subr.mxu0 0.0
        %4204 = vmatpush1.msra.mxu0 0.0
        %4205 = vmatprep.subr.mxu0 0.0
        %4206 = vmatpush1.msra.mxu0 0.0
        %4207 = vmatprep.subr.mxu0 0.0
        %4208 = vmatpush1.msra.mxu0 0.0
        %4209 = vmatprep.subr.mxu0 0.0
        %4210 = vmatpush1.msra.mxu0 0.0
        %4211 = vmatprep.subr.mxu0 0.0
        %4212 = vmatpush1.msra.mxu0 0.0
        %4213 = vmatprep.subr.mxu0 0.0
        %4214 = vmatpush1.msra.mxu0 0.0
        %4215 = vmatprep.subr.mxu0 0.0
        %4216 = vmatpush1.msra.mxu0 0.0
        %4217 = vmatprep.subr.mxu0 0.0
        %4218 = vmatpush1.msra.mxu0 0.0
        %4219 = vmatprep.subr.mxu0 0.0
        %4220 = vmatpush1.msra.mxu0 0.0
        %4221 = vmatprep.subr.mxu0 0.0
        %4222 = vmatpush1.msra.mxu0 0.0
        %4223 = vmatprep.subr.mxu0 0.0
        %4224 = vmatpush1.msra.mxu0 0.0
        %4225 = vmatprep.subr.mxu0 0.0
        %4226 = vmatpush1.msra.mxu0 0.0
        %4227 = vmatprep.subr.mxu0 0.0
        %4228 = vmatpush1.msra.mxu0 0.0
        %4229 = vmatprep.mubr.f32.mxu0 0.0
        %4230 = vmatmul.mubr.f32.gmra.mrb[0].mxu0 %v4163
        %v4231 = vpop.f32.mrb[0].mxu0
        %v4232 = vadd.f32 %v4160, %v4231
        %v4233 = vpop.f32.mrb[0].mxu0
        %4234 = vdwg.mxu0
        %v4235 = vmax.f32 %v4232, 0.0
        %v4236 = vld [vmem:[%s422] sm:$0xf]
        %v4237 = vld [vmem:[%s424] sm:$0xf]
        %4239 = vset.pattern.permute.xlu0 0
        %4240 = vperm.xlu0 %4239, %v4237
        %v4241 = vpop.permute.xlu0 %4240
        %v4244 = vsel %vm260, %v4236, 0
        %4246 = vmatprep.subr.mxu0 0.0
        %4247 = vmatpush1.msra.mxu0 %v4082
        %4248 = vmatprep.subr.mxu0 0.0
        %4249 = vmatpush1.msra.mxu0 0.0
        %4250 = vmatprep.subr.mxu0 0.0
        %4251 = vmatpush1.msra.mxu0 0.0
        %4252 = vmatprep.subr.mxu0 0.0
        %4253 = vmatpush1.msra.mxu0 0.0
        %4254 = vmatprep.subr.mxu0 0.0
        %4255 = vmatpush1.msra.mxu0 0.0
        %4256 = vmatprep.subr.mxu0 0.0
        %4257 = vmatpush1.msra.mxu0 0.0
        %4258 = vmatprep.subr.mxu0 0.0
        %4259 = vmatpush1.msra.mxu0 0.0
        %4260 = vmatprep.subr.mxu0 0.0
        %4261 = vmatpush1.msra.mxu0 0.0
        %4262 = vmatprep.subr.mxu0 0.0
        %4263 = vmatpush1.msra.mxu0 0.0
        %4264 = vmatprep.subr.mxu0 0.0
        %4265 = vmatpush1.msra.mxu0 0.0
        %4266 = vmatprep.subr.mxu0 0.0
        %4267 = vmatpush1.msra.mxu0 0.0
        %4268 = vmatprep.subr.mxu0 0.0
        %4269 = vmatpush1.msra.mxu0 0.0
        %4270 = vmatprep.subr.mxu0 0.0
        %4271 = vmatpush1.msra.mxu0 0.0
        %4272 = vmatprep.subr.mxu0 0.0
        %4273 = vmatpush1.msra.mxu0 0.0
        %4274 = vmatprep.subr.mxu0 0.0
        %4275 = vmatpush1.msra.mxu0 0.0
        %4276 = vmatprep.subr.mxu0 0.0
        %4277 = vmatpush1.msra.mxu0 0.0
        %4278 = vmatprep.subr.mxu0 0.0
        %4279 = vmatpush1.msra.mxu0 0.0
        %4280 = vmatprep.subr.mxu0 0.0
        %4281 = vmatpush1.msra.mxu0 0.0
        %4282 = vmatprep.subr.mxu0 0.0
        %4283 = vmatpush1.msra.mxu0 0.0
        %4284 = vmatprep.subr.mxu0 0.0
        %4285 = vmatpush1.msra.mxu0 0.0
        %4286 = vmatprep.subr.mxu0 0.0
        %4287 = vmatpush1.msra.mxu0 0.0
        %4288 = vmatprep.subr.mxu0 0.0
        %4289 = vmatpush1.msra.mxu0 0.0
        %4290 = vmatprep.subr.mxu0 0.0
        %4291 = vmatpush1.msra.mxu0 0.0
        %4292 = vmatprep.subr.mxu0 0.0
        %4293 = vmatpush1.msra.mxu0 0.0
        %4294 = vmatprep.subr.mxu0 0.0
        %4295 = vmatpush1.msra.mxu0 0.0
        %4296 = vmatprep.subr.mxu0 0.0
        %4297 = vmatpush1.msra.mxu0 0.0
        %4298 = vmatprep.subr.mxu0 0.0
        %4299 = vmatpush1.msra.mxu0 0.0
        %4300 = vmatprep.subr.mxu0 0.0
        %4301 = vmatpush1.msra.mxu0 0.0
        %4302 = vmatprep.subr.mxu0 0.0
        %4303 = vmatpush1.msra.mxu0 0.0
        %4304 = vmatprep.subr.mxu0 0.0
        %4305 = vmatpush1.msra.mxu0 0.0
        %4306 = vmatprep.subr.mxu0 0.0
        %4307 = vmatpush1.msra.mxu0 0.0
        %4308 = vmatprep.subr.mxu0 0.0
        %4309 = vmatpush1.msra.mxu0 0.0
        %4310 = vmatprep.mubr.f32.mxu0 0.0
        %4311 = vmatmul.mubr.f32.gmra.mrb[0].mxu0 %v4244
        %v4312 = vpop.f32.mrb[0].mxu0
        %v4313 = vadd.f32 %v4241, %v4312
        %v4314 = vpop.f32.mrb[0].mxu0
        %4315 = vdwg.mxu0
        %v4316 = vmax.f32 %v4313, 0.0
        %v4317 = vld [vmem:[%s505] sm:$0xf]
        %v4318 = vld [vmem:[%s507] sm:$0xf]
        %4320 = vset.pattern.permute.xlu0 0
        %4321 = vperm.xlu0 %4320, %v4318
        %v4322 = vpop.permute.xlu0 %4321
        %v4325 = vsel %vm260, %v4317, 0
        %4327 = vmatprep.subr.mxu0 0.0
        %4328 = vmatpush1.msra.mxu0 %v4082
        %4329 = vmatprep.subr.mxu0 0.0
        %4330 = vmatpush1.msra.mxu0 0.0
        %4331 = vmatprep.subr.mxu0 0.0
        %4332 = vmatpush1.msra.mxu0 0.0
        %4333 = vmatprep.subr.mxu0 0.0
        %4334 = vmatpush1.msra.mxu0 0.0
        %4335 = vmatprep.subr.mxu0 0.0
        %4336 = vmatpush1.msra.mxu0 0.0
        %4337 = vmatprep.subr.mxu0 0.0
        %4338 = vmatpush1.msra.mxu0 0.0
        %4339 = vmatprep.subr.mxu0 0.0
        %4340 = vmatpush1.msra.mxu0 0.0
        %4341 = vmatprep.subr.mxu0 0.0
        %4342 = vmatpush1.msra.mxu0 0.0
        %4343 = vmatprep.subr.mxu0 0.0
        %4344 = vmatpush1.msra.mxu0 0.0
        %4345 = vmatprep.subr.mxu0 0.0
        %4346 = vmatpush1.msra.mxu0 0.0
        %4347 = vmatprep.subr.mxu0 0.0
        %4348 = vmatpush1.msra.mxu0 0.0
        %4349 = vmatprep.subr.mxu0 0.0
        %4350 = vmatpush1.msra.mxu0 0.0
        %4351 = vmatprep.subr.mxu0 0.0
        %4352 = vmatpush1.msra.mxu0 0.0
        %4353 = vmatprep.subr.mxu0 0.0
        %4354 = vmatpush1.msra.mxu0 0.0
        %4355 = vmatprep.subr.mxu0 0.0
        %4356 = vmatpush1.msra.mxu0 0.0
        %4357 = vmatprep.subr.mxu0 0.0
        %4358 = vmatpush1.msra.mxu0 0.0
        %4359 = vmatprep.subr.mxu0 0.0
        %4360 = vmatpush1.msra.mxu0 0.0
        %4361 = vmatprep.subr.mxu0 0.0
        %4362 = vmatpush1.msra.mxu0 0.0
        %4363 = vmatprep.subr.mxu0 0.0
        %4364 = vmatpush1.msra.mxu0 0.0
        %4365 = vmatprep.subr.mxu0 0.0
        %4366 = vmatpush1.msra.mxu0 0.0
        %4367 = vmatprep.subr.mxu0 0.0
        %4368 = vmatpush1.msra.mxu0 0.0
        %4369 = vmatprep.subr.mxu0 0.0
        %4370 = vmatpush1.msra.mxu0 0.0
        %4371 = vmatprep.subr.mxu0 0.0
        %4372 = vmatpush1.msra.mxu0 0.0
        %4373 = vmatprep.subr.mxu0 0.0
        %4374 = vmatpush1.msra.mxu0 0.0
        %4375 = vmatprep.subr.mxu0 0.0
        %4376 = vmatpush1.msra.mxu0 0.0
        %4377 = vmatprep.subr.mxu0 0.0
        %4378 = vmatpush1.msra.mxu0 0.0
        %4379 = vmatprep.subr.mxu0 0.0
        %4380 = vmatpush1.msra.mxu0 0.0
        %4381 = vmatprep.subr.mxu0 0.0
        %4382 = vmatpush1.msra.mxu0 0.0
        %4383 = vmatprep.subr.mxu0 0.0
        %4384 = vmatpush1.msra.mxu0 0.0
        %4385 = vmatprep.subr.mxu0 0.0
        %4386 = vmatpush1.msra.mxu0 0.0
        %4387 = vmatprep.subr.mxu0 0.0
        %4388 = vmatpush1.msra.mxu0 0.0
        %4389 = vmatprep.subr.mxu0 0.0
        %4390 = vmatpush1.msra.mxu0 0.0
        %4391 = vmatprep.mubr.f32.mxu0 0.0
        %4392 = vmatmul.mubr.f32.gmra.mrb[0].mxu0 %v4325
        %v4393 = vpop.f32.mrb[0].mxu0
        %v4394 = vadd.f32 %v4322, %v4393
        %v4395 = vpop.f32.mrb[0].mxu0
        %4396 = vdwg.mxu0
        %v4397 = vmax.f32 %v4394, 0.0
        %v4398 = vld [vmem:[#allocation5] sm:$0xff]
        %v4399 = vld [vmem:[#allocation5 + $0x8] sm:$0xff]
        %v4400 = vld [vmem:[%s590] sm:$0xff]
        %v4401 = vld [vmem:[%s590 + $0x8] sm:$0xff]
        %v4403 = vsel %vm593, %v4235, 0
        %4405 = vmatprep.subr.mxu0 0.0
        %4406 = vmatpush1.msra.mxu0 %v4400
        %4407 = vmatprep.subr.mxu0 0.0
        %4408 = vmatpush1.msra.mxu0 %v4401
        %4409 = vmatprep.subr.mxu0 0.0
        %4410 = vmatpush1.msra.mxu0 0.0
        %4411 = vmatprep.subr.mxu0 0.0
        %4412 = vmatpush1.msra.mxu0 0.0
        %4413 = vmatprep.subr.mxu0 0.0
        %4414 = vmatpush1.msra.mxu0 0.0
        %4415 = vmatprep.subr.mxu0 0.0
        %4416 = vmatpush1.msra.mxu0 0.0
        %4417 = vmatprep.subr.mxu0 0.0
        %4418 = vmatpush1.msra.mxu0 0.0
        %4419 = vmatprep.subr.mxu0 0.0
        %4420 = vmatpush1.msra.mxu0 0.0
        %4421 = vmatprep.subr.mxu0 0.0
        %4422 = vmatpush1.msra.mxu0 0.0
        %4423 = vmatprep.subr.mxu0 0.0
        %4424 = vmatpush1.msra.mxu0 0.0
        %4425 = vmatprep.subr.mxu0 0.0
        %4426 = vmatpush1.msra.mxu0 0.0
        %4427 = vmatprep.subr.mxu0 0.0
        %4428 = vmatpush1.msra.mxu0 0.0
        %4429 = vmatprep.subr.mxu0 0.0
        %4430 = vmatpush1.msra.mxu0 0.0
        %4431 = vmatprep.subr.mxu0 0.0
        %4432 = vmatpush1.msra.mxu0 0.0
        %4433 = vmatprep.subr.mxu0 0.0
        %4434 = vmatpush1.msra.mxu0 0.0
        %4435 = vmatprep.subr.mxu0 0.0
        %4436 = vmatpush1.msra.mxu0 0.0
        %4437 = vmatprep.subr.mxu0 0.0
        %4438 = vmatpush1.msra.mxu0 0.0
        %4439 = vmatprep.subr.mxu0 0.0
        %4440 = vmatpush1.msra.mxu0 0.0
        %4441 = vmatprep.subr.mxu0 0.0
        %4442 = vmatpush1.msra.mxu0 0.0
        %4443 = vmatprep.subr.mxu0 0.0
        %4444 = vmatpush1.msra.mxu0 0.0
        %4445 = vmatprep.subr.mxu0 0.0
        %4446 = vmatpush1.msra.mxu0 0.0
        %4447 = vmatprep.subr.mxu0 0.0
        %4448 = vmatpush1.msra.mxu0 0.0
        %4449 = vmatprep.subr.mxu0 0.0
        %4450 = vmatpush1.msra.mxu0 0.0
        %4451 = vmatprep.subr.mxu0 0.0
        %4452 = vmatpush1.msra.mxu0 0.0
        %4453 = vmatprep.subr.mxu0 0.0
        %4454 = vmatpush1.msra.mxu0 0.0
        %4455 = vmatprep.subr.mxu0 0.0
        %4456 = vmatpush1.msra.mxu0 0.0
        %4457 = vmatprep.subr.mxu0 0.0
        %4458 = vmatpush1.msra.mxu0 0.0
        %4459 = vmatprep.subr.mxu0 0.0
        %4460 = vmatpush1.msra.mxu0 0.0
        %4461 = vmatprep.subr.mxu0 0.0
        %4462 = vmatpush1.msra.mxu0 0.0
        %4463 = vmatprep.subr.mxu0 0.0
        %4464 = vmatpush1.msra.mxu0 0.0
        %4465 = vmatprep.subr.mxu0 0.0
        %4466 = vmatpush1.msra.mxu0 0.0
        %4467 = vmatprep.subr.mxu0 0.0
        %4468 = vmatpush1.msra.mxu0 0.0
        %4469 = vmatprep.mubr.f32.mxu0 0.0
        %4470 = vmatmul.mubr.f32.gmra.mrb[0].mxu0 %v4403
        %v4471 = vpop.f32.mrb[0].mxu0
        %v4472 = vadd.f32 0.0, %v4471
        %v4473 = vpop.f32.mrb[0].mxu0
        %4474 = vdwg.mxu0
        %v4476 = vsel %vm593, %v4154, 0
        %4478 = vmatprep.subr.mxu0 0.0
        %4479 = vmatpush1.msra.mxu0 %v4398
        %4480 = vmatprep.subr.mxu0 0.0
        %4481 = vmatpush1.msra.mxu0 %v4399
        %4482 = vmatprep.subr.mxu0 0.0
        %4483 = vmatpush1.msra.mxu0 0.0
        %4484 = vmatprep.subr.mxu0 0.0
        %4485 = vmatpush1.msra.mxu0 0.0
        %4486 = vmatprep.subr.mxu0 0.0
        %4487 = vmatpush1.msra.mxu0 0.0
        %4488 = vmatprep.subr.mxu0 0.0
        %4489 = vmatpush1.msra.mxu0 0.0
        %4490 = vmatprep.subr.mxu0 0.0
        %4491 = vmatpush1.msra.mxu0 0.0
        %4492 = vmatprep.subr.mxu0 0.0
        %4493 = vmatpush1.msra.mxu0 0.0
        %4494 = vmatprep.subr.mxu0 0.0
        %4495 = vmatpush1.msra.mxu0 0.0
        %4496 = vmatprep.subr.mxu0 0.0
        %4497 = vmatpush1.msra.mxu0 0.0
        %4498 = vmatprep.subr.mxu0 0.0
        %4499 = vmatpush1.msra.mxu0 0.0
        %4500 = vmatprep.subr.mxu0 0.0
        %4501 = vmatpush1.msra.mxu0 0.0
        %4502 = vmatprep.subr.mxu0 0.0
        %4503 = vmatpush1.msra.mxu0 0.0
        %4504 = vmatprep.subr.mxu0 0.0
        %4505 = vmatpush1.msra.mxu0 0.0
        %4506 = vmatprep.subr.mxu0 0.0
        %4507 = vmatpush1.msra.mxu0 0.0
        %4508 = vmatprep.subr.mxu0 0.0
        %4509 = vmatpush1.msra.mxu0 0.0
        %4510 = vmatprep.subr.mxu0 0.0
        %4511 = vmatpush1.msra.mxu0 0.0
        %4512 = vmatprep.subr.mxu0 0.0
        %4513 = vmatpush1.msra.mxu0 0.0
        %4514 = vmatprep.subr.mxu0 0.0
        %4515 = vmatpush1.msra.mxu0 0.0
        %4516 = vmatprep.subr.mxu0 0.0
        %4517 = vmatpush1.msra.mxu0 0.0
        %4518 = vmatprep.subr.mxu0 0.0
        %4519 = vmatpush1.msra.mxu0 0.0
        %4520 = vmatprep.subr.mxu0 0.0
        %4521 = vmatpush1.msra.mxu0 0.0
        %4522 = vmatprep.subr.mxu0 0.0
        %4523 = vmatpush1.msra.mxu0 0.0
        %4524 = vmatprep.subr.mxu0 0.0
        %4525 = vmatpush1.msra.mxu0 0.0
        %4526 = vmatprep.subr.mxu0 0.0
        %4527 = vmatpush1.msra.mxu0 0.0
        %4528 = vmatprep.subr.mxu0 0.0
        %4529 = vmatpush1.msra.mxu0 0.0
        %4530 = vmatprep.subr.mxu0 0.0
        %4531 = vmatpush1.msra.mxu0 0.0
        %4532 = vmatprep.subr.mxu0 0.0
        %4533 = vmatpush1.msra.mxu0 0.0
        %4534 = vmatprep.subr.mxu0 0.0
        %4535 = vmatpush1.msra.mxu0 0.0
        %4536 = vmatprep.subr.mxu0 0.0
        %4537 = vmatpush1.msra.mxu0 0.0
        %4538 = vmatprep.subr.mxu0 0.0
        %4539 = vmatpush1.msra.mxu0 0.0
        %4540 = vmatprep.subr.mxu0 0.0
        %4541 = vmatpush1.msra.mxu0 0.0
        %4542 = vmatprep.mubr.f32.mxu0 0.0
        %4543 = vmatmul.mubr.f32.gmra.mrb[0].mxu0 %v4476
        %v4544 = vpop.f32.mrb[0].mxu0
        %v4545 = vadd.f32 %v4472, %v4544
        %v4546 = vpop.f32.mrb[0].mxu0
        %4547 = vdwg.mxu0
        %v4549 = vsel %vm593, %v4397, 0
        %4551 = vmatprep.subr.mxu0 0.0
        %4552 = vmatpush1.msra.mxu0 %v4400
        %4553 = vmatprep.subr.mxu0 0.0
        %4554 = vmatpush1.msra.mxu0 %v4401
        %4555 = vmatprep.subr.mxu0 0.0
        %4556 = vmatpush1.msra.mxu0 0.0
        %4557 = vmatprep.subr.mxu0 0.0
        %4558 = vmatpush1.msra.mxu0 0.0
        %4559 = vmatprep.subr.mxu0 0.0
        %4560 = vmatpush1.msra.mxu0 0.0
        %4561 = vmatprep.subr.mxu0 0.0
        %4562 = vmatpush1.msra.mxu0 0.0
        %4563 = vmatprep.subr.mxu0 0.0
        %4564 = vmatpush1.msra.mxu0 0.0
        %4565 = vmatprep.subr.mxu0 0.0
        %4566 = vmatpush1.msra.mxu0 0.0
        %4567 = vmatprep.subr.mxu0 0.0
        %4568 = vmatpush1.msra.mxu0 0.0
        %4569 = vmatprep.subr.mxu0 0.0
        %4570 = vmatpush1.msra.mxu0 0.0
        %4571 = vmatprep.subr.mxu0 0.0
        %4572 = vmatpush1.msra.mxu0 0.0
        %4573 = vmatprep.subr.mxu0 0.0
        %4574 = vmatpush1.msra.mxu0 0.0
        %4575 = vmatprep.subr.mxu0 0.0
        %4576 = vmatpush1.msra.mxu0 0.0
        %4577 = vmatprep.subr.mxu0 0.0
        %4578 = vmatpush1.msra.mxu0 0.0
        %4579 = vmatprep.subr.mxu0 0.0
        %4580 = vmatpush1.msra.mxu0 0.0
        %4581 = vmatprep.subr.mxu0 0.0
        %4582 = vmatpush1.msra.mxu0 0.0
        %4583 = vmatprep.subr.mxu0 0.0
        %4584 = vmatpush1.msra.mxu0 0.0
        %4585 = vmatprep.subr.mxu0 0.0
        %4586 = vmatpush1.msra.mxu0 0.0
        %4587 = vmatprep.subr.mxu0 0.0
        %4588 = vmatpush1.msra.mxu0 0.0
        %4589 = vmatprep.subr.mxu0 0.0
        %4590 = vmatpush1.msra.mxu0 0.0
        %4591 = vmatprep.subr.mxu0 0.0
        %4592 = vmatpush1.msra.mxu0 0.0
        %4593 = vmatprep.subr.mxu0 0.0
        %4594 = vmatpush1.msra.mxu0 0.0
        %4595 = vmatprep.subr.mxu0 0.0
        %4596 = vmatpush1.msra.mxu0 0.0
        %4597 = vmatprep.subr.mxu0 0.0
        %4598 = vmatpush1.msra.mxu0 0.0
        %4599 = vmatprep.subr.mxu0 0.0
        %4600 = vmatpush1.msra.mxu0 0.0
        %4601 = vmatprep.subr.mxu0 0.0
        %4602 = vmatpush1.msra.mxu0 0.0
        %4603 = vmatprep.subr.mxu0 0.0
        %4604 = vmatpush1.msra.mxu0 0.0
        %4605 = vmatprep.subr.mxu0 0.0
        %4606 = vmatpush1.msra.mxu0 0.0
        %4607 = vmatprep.subr.mxu0 0.0
        %4608 = vmatpush1.msra.mxu0 0.0
        %4609 = vmatprep.subr.mxu0 0.0
        %4610 = vmatpush1.msra.mxu0 0.0
        %4611 = vmatprep.subr.mxu0 0.0
        %4612 = vmatpush1.msra.mxu0 0.0
        %4613 = vmatprep.subr.mxu0 0.0
        %4614 = vmatpush1.msra.mxu0 0.0
        %4615 = vmatprep.mubr.f32.mxu0 0.0
        %4616 = vmatmul.mubr.f32.gmra.mrb[0].mxu0 %v4549
        %v4617 = vpop.f32.mrb[0].mxu0
        %v4618 = vadd.f32 0.0, %v4617
        %v4619 = vpop.f32.mrb[0].mxu0
        %4620 = vdwg.mxu0
        %v4622 = vsel %vm593, %v4316, 0
        %4624 = vmatprep.subr.mxu0 0.0
        %4625 = vmatpush1.msra.mxu0 %v4398
        %4626 = vmatprep.subr.mxu0 0.0
        %4627 = vmatpush1.msra.mxu0 %v4399
        %4628 = vmatprep.subr.mxu0 0.0
        %4629 = vmatpush1.msra.mxu0 0.0
        %4630 = vmatprep.subr.mxu0 0.0
        %4631 = vmatpush1.msra.mxu0 0.0
        %4632 = vmatprep.subr.mxu0 0.0
        %4633 = vmatpush1.msra.mxu0 0.0
        %4634 = vmatprep.subr.mxu0 0.0
        %4635 = vmatpush1.msra.mxu0 0.0
        %4636 = vmatprep.subr.mxu0 0.0
        %4637 = vmatpush1.msra.mxu0 0.0
        %4638 = vmatprep.subr.mxu0 0.0
        %4639 = vmatpush1.msra.mxu0 0.0
        %4640 = vmatprep.subr.mxu0 0.0
        %4641 = vmatpush1.msra.mxu0 0.0
        %4642 = vmatprep.subr.mxu0 0.0
        %4643 = vmatpush1.msra.mxu0 0.0
        %4644 = vmatprep.subr.mxu0 0.0
        %4645 = vmatpush1.msra.mxu0 0.0
        %4646 = vmatprep.subr.mxu0 0.0
        %4647 = vmatpush1.msra.mxu0 0.0
        %4648 = vmatprep.subr.mxu0 0.0
        %4649 = vmatpush1.msra.mxu0 0.0
        %4650 = vmatprep.subr.mxu0 0.0
        %4651 = vmatpush1.msra.mxu0 0.0
        %4652 = vmatprep.subr.mxu0 0.0
        %4653 = vmatpush1.msra.mxu0 0.0
        %4654 = vmatprep.subr.mxu0 0.0
        %4655 = vmatpush1.msra.mxu0 0.0
        %4656 = vmatprep.subr.mxu0 0.0
        %4657 = vmatpush1.msra.mxu0 0.0
        %4658 = vmatprep.subr.mxu0 0.0
        %4659 = vmatpush1.msra.mxu0 0.0
        %4660 = vmatprep.subr.mxu0 0.0
        %4661 = vmatpush1.msra.mxu0 0.0
        %4662 = vmatprep.subr.mxu0 0.0
        %4663 = vmatpush1.msra.mxu0 0.0
        %4664 = vmatprep.subr.mxu0 0.0
        %4665 = vmatpush1.msra.mxu0 0.0
        %4666 = vmatprep.subr.mxu0 0.0
        %4667 = vmatpush1.msra.mxu0 0.0
        %4668 = vmatprep.subr.mxu0 0.0
        %4669 = vmatpush1.msra.mxu0 0.0
        %4670 = vmatprep.subr.mxu0 0.0
        %4671 = vmatpush1.msra.mxu0 0.0
        %4672 = vmatprep.subr.mxu0 0.0
        %4673 = vmatpush1.msra.mxu0 0.0
        %4674 = vmatprep.subr.mxu0 0.0
        %4675 = vmatpush1.msra.mxu0 0.0
        %4676 = vmatprep.subr.mxu0 0.0
        %4677 = vmatpush1.msra.mxu0 0.0
        %4678 = vmatprep.subr.mxu0 0.0
        %4679 = vmatpush1.msra.mxu0 0.0
        %4680 = vmatprep.subr.mxu0 0.0
        %4681 = vmatpush1.msra.mxu0 0.0
        %4682 = vmatprep.subr.mxu0 0.0
        %4683 = vmatpush1.msra.mxu0 0.0
        %4684 = vmatprep.subr.mxu0 0.0
        %4685 = vmatpush1.msra.mxu0 0.0
        %4686 = vmatprep.subr.mxu0 0.0
        %4687 = vmatpush1.msra.mxu0 0.0
        %4688 = vmatprep.mubr.f32.mxu0 0.0
        %4689 = vmatmul.mubr.f32.gmra.mrb[0].mxu0 %v4622
        %v4690 = vpop.f32.mrb[0].mxu0
        %v4691 = vadd.f32 %v4618, %v4690
        %v4692 = vpop.f32.mrb[0].mxu0
        %4693 = vdwg.mxu0
        %4694 = vst.msk [vmem:[%s242 + $0xc] sm:$0xf] %vm886, %v4545
        %4696 = vrot.lane.b32.xlu0 %v4691, 32
        %v4697 = vpop.permute.xlu0 %4696
        %4699 = vst.msk [vmem:[%s242 + $0xc] sm:$0xf] %vm892, %v4697
        %v4700 = vld [vmem:[%s250] sm:$0xf]
        %v4701 = vld [vmem:[#allocation2] sm:$0xf]
        %v4702 = vld [vmem:[%s2] sm:$0xf]
        %4704 = vset.pattern.permute.xlu0 0
        %4705 = vperm.xlu0 %4704, %v4702
        %v4706 = vpop.permute.xlu0 %4705
        %4709 = vrot.lane.b32.xlu0 %v4700, 16
        %v4710 = vpop.permute.xlu0 %4709
        %v4712 = vsel %vm260, %v4701, 0
        %v4714 = vsel %vm264, %v4710, 0
        %4716 = vmatprep.subr.mxu0 0.0
        %4717 = vmatpush1.msra.mxu0 %v4714
        %4718 = vmatprep.subr.mxu0 0.0
        %4719 = vmatpush1.msra.mxu0 0.0
        %4720 = vmatprep.subr.mxu0 0.0
        %4721 = vmatpush1.msra.mxu0 0.0
        %4722 = vmatprep.subr.mxu0 0.0
        %4723 = vmatpush1.msra.mxu0 0.0
        %4724 = vmatprep.subr.mxu0 0.0
        %4725 = vmatpush1.msra.mxu0 0.0
        %4726 = vmatprep.subr.mxu0 0.0
        %4727 = vmatpush1.msra.mxu0 0.0
        %4728 = vmatprep.subr.mxu0 0.0
        %4729 = vmatpush1.msra.mxu0 0.0
        %4730 = vmatprep.subr.mxu0 0.0
        %4731 = vmatpush1.msra.mxu0 0.0
        %4732 = vmatprep.subr.mxu0 0.0
        %4733 = vmatpush1.msra.mxu0 0.0
        %4734 = vmatprep.subr.mxu0 0.0
        %4735 = vmatpush1.msra.mxu0 0.0
        %4736 = vmatprep.subr.mxu0 0.0
        %4737 = vmatpush1.msra.mxu0 0.0
        %4738 = vmatprep.subr.mxu0 0.0
        %4739 = vmatpush1.msra.mxu0 0.0
        %4740 = vmatprep.subr.mxu0 0.0
        %4741 = vmatpush1.msra.mxu0 0.0
        %4742 = vmatprep.subr.mxu0 0.0
        %4743 = vmatpush1.msra.mxu0 0.0
        %4744 = vmatprep.subr.mxu0 0.0
        %4745 = vmatpush1.msra.mxu0 0.0
        %4746 = vmatprep.subr.mxu0 0.0
        %4747 = vmatpush1.msra.mxu0 0.0
        %4748 = vmatprep.subr.mxu0 0.0
        %4749 = vmatpush1.msra.mxu0 0.0
        %4750 = vmatprep.subr.mxu0 0.0
        %4751 = vmatpush1.msra.mxu0 0.0
        %4752 = vmatprep.subr.mxu0 0.0
        %4753 = vmatpush1.msra.mxu0 0.0
        %4754 = vmatprep.subr.mxu0 0.0
        %4755 = vmatpush1.msra.mxu0 0.0
        %4756 = vmatprep.subr.mxu0 0.0
        %4757 = vmatpush1.msra.mxu0 0.0
        %4758 = vmatprep.subr.mxu0 0.0
        %4759 = vmatpush1.msra.mxu0 0.0
        %4760 = vmatprep.subr.mxu0 0.0
        %4761 = vmatpush1.msra.mxu0 0.0
        %4762 = vmatprep.subr.mxu0 0.0
        %4763 = vmatpush1.msra.mxu0 0.0
        %4764 = vmatprep.subr.mxu0 0.0
        %4765 = vmatpush1.msra.mxu0 0.0
        %4766 = vmatprep.subr.mxu0 0.0
        %4767 = vmatpush1.msra.mxu0 0.0
        %4768 = vmatprep.subr.mxu0 0.0
        %4769 = vmatpush1.msra.mxu0 0.0
        %4770 = vmatprep.subr.mxu0 0.0
        %4771 = vmatpush1.msra.mxu0 0.0
        %4772 = vmatprep.subr.mxu0 0.0
        %4773 = vmatpush1.msra.mxu0 0.0
        %4774 = vmatprep.subr.mxu0 0.0
        %4775 = vmatpush1.msra.mxu0 0.0
        %4776 = vmatprep.subr.mxu0 0.0
        %4777 = vmatpush1.msra.mxu0 0.0
        %4778 = vmatprep.subr.mxu0 0.0
        %4779 = vmatpush1.msra.mxu0 0.0
        %4780 = vmatprep.mubr.f32.mxu0 0.0
        %4781 = vmatmul.mubr.f32.gmra.mrb[0].mxu0 %v4712
        %v4782 = vpop.f32.mrb[0].mxu0
        %v4783 = vadd.f32 %v4706, %v4782
        %v4784 = vpop.f32.mrb[0].mxu0
        %4785 = vdwg.mxu0
        %v4786 = vmax.f32 %v4783, 0.0
        %v4787 = vld [vmem:[%s339] sm:$0xf]
        %v4788 = vld [vmem:[%s341] sm:$0xf]
        %4790 = vset.pattern.permute.xlu0 0
        %4791 = vperm.xlu0 %4790, %v4788
        %v4792 = vpop.permute.xlu0 %4791
        %v4795 = vsel %vm260, %v4787, 0
        %4797 = vmatprep.subr.mxu0 0.0
        %4798 = vmatpush1.msra.mxu0 %v4714
        %4799 = vmatprep.subr.mxu0 0.0
        %4800 = vmatpush1.msra.mxu0 0.0
        %4801 = vmatprep.subr.mxu0 0.0
        %4802 = vmatpush1.msra.mxu0 0.0
        %4803 = vmatprep.subr.mxu0 0.0
        %4804 = vmatpush1.msra.mxu0 0.0
        %4805 = vmatprep.subr.mxu0 0.0
        %4806 = vmatpush1.msra.mxu0 0.0
        %4807 = vmatprep.subr.mxu0 0.0
        %4808 = vmatpush1.msra.mxu0 0.0
        %4809 = vmatprep.subr.mxu0 0.0
        %4810 = vmatpush1.msra.mxu0 0.0
        %4811 = vmatprep.subr.mxu0 0.0
        %4812 = vmatpush1.msra.mxu0 0.0
        %4813 = vmatprep.subr.mxu0 0.0
        %4814 = vmatpush1.msra.mxu0 0.0
        %4815 = vmatprep.subr.mxu0 0.0
        %4816 = vmatpush1.msra.mxu0 0.0
        %4817 = vmatprep.subr.mxu0 0.0
        %4818 = vmatpush1.msra.mxu0 0.0
        %4819 = vmatprep.subr.mxu0 0.0
        %4820 = vmatpush1.msra.mxu0 0.0
        %4821 = vmatprep.subr.mxu0 0.0
        %4822 = vmatpush1.msra.mxu0 0.0
        %4823 = vmatprep.subr.mxu0 0.0
        %4824 = vmatpush1.msra.mxu0 0.0
        %4825 = vmatprep.subr.mxu0 0.0
        %4826 = vmatpush1.msra.mxu0 0.0
        %4827 = vmatprep.subr.mxu0 0.0
        %4828 = vmatpush1.msra.mxu0 0.0
        %4829 = vmatprep.subr.mxu0 0.0
        %4830 = vmatpush1.msra.mxu0 0.0
        %4831 = vmatprep.subr.mxu0 0.0
        %4832 = vmatpush1.msra.mxu0 0.0
        %4833 = vmatprep.subr.mxu0 0.0
        %4834 = vmatpush1.msra.mxu0 0.0
        %4835 = vmatprep.subr.mxu0 0.0
        %4836 = vmatpush1.msra.mxu0 0.0
        %4837 = vmatprep.subr.mxu0 0.0
        %4838 = vmatpush1.msra.mxu0 0.0
        %4839 = vmatprep.subr.mxu0 0.0
        %4840 = vmatpush1.msra.mxu0 0.0
        %4841 = vmatprep.subr.mxu0 0.0
        %4842 = vmatpush1.msra.mxu0 0.0
        %4843 = vmatprep.subr.mxu0 0.0
        %4844 = vmatpush1.msra.mxu0 0.0
        %4845 = vmatprep.subr.mxu0 0.0
        %4846 = vmatpush1.msra.mxu0 0.0
        %4847 = vmatprep.subr.mxu0 0.0
        %4848 = vmatpush1.msra.mxu0 0.0
        %4849 = vmatprep.subr.mxu0 0.0
        %4850 = vmatpush1.msra.mxu0 0.0
        %4851 = vmatprep.subr.mxu0 0.0
        %4852 = vmatpush1.msra.mxu0 0.0
        %4853 = vmatprep.subr.mxu0 0.0
        %4854 = vmatpush1.msra.mxu0 0.0
        %4855 = vmatprep.subr.mxu0 0.0
        %4856 = vmatpush1.msra.mxu0 0.0
        %4857 = vmatprep.subr.mxu0 0.0
        %4858 = vmatpush1.msra.mxu0 0.0
        %4859 = vmatprep.subr.mxu0 0.0
        %4860 = vmatpush1.msra.mxu0 0.0
        %4861 = vmatprep.mubr.f32.mxu0 0.0
        %4862 = vmatmul.mubr.f32.gmra.mrb[0].mxu0 %v4795
        %v4863 = vpop.f32.mrb[0].mxu0
        %v4864 = vadd.f32 %v4792, %v4863
        %v4865 = vpop.f32.mrb[0].mxu0
        %4866 = vdwg.mxu0
        %v4867 = vmax.f32 %v4864, 0.0
        %v4868 = vld [vmem:[%s422] sm:$0xf]
        %v4869 = vld [vmem:[%s424] sm:$0xf]
        %4871 = vset.pattern.permute.xlu0 0
        %4872 = vperm.xlu0 %4871, %v4869
        %v4873 = vpop.permute.xlu0 %4872
        %v4876 = vsel %vm260, %v4868, 0
        %4878 = vmatprep.subr.mxu0 0.0
        %4879 = vmatpush1.msra.mxu0 %v4714
        %4880 = vmatprep.subr.mxu0 0.0
        %4881 = vmatpush1.msra.mxu0 0.0
        %4882 = vmatprep.subr.mxu0 0.0
        %4883 = vmatpush1.msra.mxu0 0.0
        %4884 = vmatprep.subr.mxu0 0.0
        %4885 = vmatpush1.msra.mxu0 0.0
        %4886 = vmatprep.subr.mxu0 0.0
        %4887 = vmatpush1.msra.mxu0 0.0
        %4888 = vmatprep.subr.mxu0 0.0
        %4889 = vmatpush1.msra.mxu0 0.0
        %4890 = vmatprep.subr.mxu0 0.0
        %4891 = vmatpush1.msra.mxu0 0.0
        %4892 = vmatprep.subr.mxu0 0.0
        %4893 = vmatpush1.msra.mxu0 0.0
        %4894 = vmatprep.subr.mxu0 0.0
        %4895 = vmatpush1.msra.mxu0 0.0
        %4896 = vmatprep.subr.mxu0 0.0
        %4897 = vmatpush1.msra.mxu0 0.0
        %4898 = vmatprep.subr.mxu0 0.0
        %4899 = vmatpush1.msra.mxu0 0.0
        %4900 = vmatprep.subr.mxu0 0.0
        %4901 = vmatpush1.msra.mxu0 0.0
        %4902 = vmatprep.subr.mxu0 0.0
        %4903 = vmatpush1.msra.mxu0 0.0
        %4904 = vmatprep.subr.mxu0 0.0
        %4905 = vmatpush1.msra.mxu0 0.0
        %4906 = vmatprep.subr.mxu0 0.0
        %4907 = vmatpush1.msra.mxu0 0.0
        %4908 = vmatprep.subr.mxu0 0.0
        %4909 = vmatpush1.msra.mxu0 0.0
        %4910 = vmatprep.subr.mxu0 0.0
        %4911 = vmatpush1.msra.mxu0 0.0
        %4912 = vmatprep.subr.mxu0 0.0
        %4913 = vmatpush1.msra.mxu0 0.0
        %4914 = vmatprep.subr.mxu0 0.0
        %4915 = vmatpush1.msra.mxu0 0.0
        %4916 = vmatprep.subr.mxu0 0.0
        %4917 = vmatpush1.msra.mxu0 0.0
        %4918 = vmatprep.subr.mxu0 0.0
        %4919 = vmatpush1.msra.mxu0 0.0
        %4920 = vmatprep.subr.mxu0 0.0
        %4921 = vmatpush1.msra.mxu0 0.0
        %4922 = vmatprep.subr.mxu0 0.0
        %4923 = vmatpush1.msra.mxu0 0.0
        %4924 = vmatprep.subr.mxu0 0.0
        %4925 = vmatpush1.msra.mxu0 0.0
        %4926 = vmatprep.subr.mxu0 0.0
        %4927 = vmatpush1.msra.mxu0 0.0
        %4928 = vmatprep.subr.mxu0 0.0
        %4929 = vmatpush1.msra.mxu0 0.0
        %4930 = vmatprep.subr.mxu0 0.0
        %4931 = vmatpush1.msra.mxu0 0.0
        %4932 = vmatprep.subr.mxu0 0.0
        %4933 = vmatpush1.msra.mxu0 0.0
        %4934 = vmatprep.subr.mxu0 0.0
        %4935 = vmatpush1.msra.mxu0 0.0
        %4936 = vmatprep.subr.mxu0 0.0
        %4937 = vmatpush1.msra.mxu0 0.0
        %4938 = vmatprep.subr.mxu0 0.0
        %4939 = vmatpush1.msra.mxu0 0.0
        %4940 = vmatprep.subr.mxu0 0.0
        %4941 = vmatpush1.msra.mxu0 0.0
        %4942 = vmatprep.mubr.f32.mxu0 0.0
        %4943 = vmatmul.mubr.f32.gmra.mrb[0].mxu0 %v4876
        %v4944 = vpop.f32.mrb[0].mxu0
        %v4945 = vadd.f32 %v4873, %v4944
        %v4946 = vpop.f32.mrb[0].mxu0
        %4947 = vdwg.mxu0
        %v4948 = vmax.f32 %v4945, 0.0
        %v4949 = vld [vmem:[%s505] sm:$0xf]
        %v4950 = vld [vmem:[%s507] sm:$0xf]
        %4952 = vset.pattern.permute.xlu0 0
        %4953 = vperm.xlu0 %4952, %v4950
        %v4954 = vpop.permute.xlu0 %4953
        %v4957 = vsel %vm260, %v4949, 0
        %4959 = vmatprep.subr.mxu0 0.0
        %4960 = vmatpush1.msra.mxu0 %v4714
        %4961 = vmatprep.subr.mxu0 0.0
        %4962 = vmatpush1.msra.mxu0 0.0
        %4963 = vmatprep.subr.mxu0 0.0
        %4964 = vmatpush1.msra.mxu0 0.0
        %4965 = vmatprep.subr.mxu0 0.0
        %4966 = vmatpush1.msra.mxu0 0.0
        %4967 = vmatprep.subr.mxu0 0.0
        %4968 = vmatpush1.msra.mxu0 0.0
        %4969 = vmatprep.subr.mxu0 0.0
        %4970 = vmatpush1.msra.mxu0 0.0
        %4971 = vmatprep.subr.mxu0 0.0
        %4972 = vmatpush1.msra.mxu0 0.0
        %4973 = vmatprep.subr.mxu0 0.0
        %4974 = vmatpush1.msra.mxu0 0.0
        %4975 = vmatprep.subr.mxu0 0.0
        %4976 = vmatpush1.msra.mxu0 0.0
        %4977 = vmatprep.subr.mxu0 0.0
        %4978 = vmatpush1.msra.mxu0 0.0
        %4979 = vmatprep.subr.mxu0 0.0
        %4980 = vmatpush1.msra.mxu0 0.0
        %4981 = vmatprep.subr.mxu0 0.0
        %4982 = vmatpush1.msra.mxu0 0.0
        %4983 = vmatprep.subr.mxu0 0.0
        %4984 = vmatpush1.msra.mxu0 0.0
        %4985 = vmatprep.subr.mxu0 0.0
        %4986 = vmatpush1.msra.mxu0 0.0
        %4987 = vmatprep.subr.mxu0 0.0
        %4988 = vmatpush1.msra.mxu0 0.0
        %4989 = vmatprep.subr.mxu0 0.0
        %4990 = vmatpush1.msra.mxu0 0.0
        %4991 = vmatprep.subr.mxu0 0.0
        %4992 = vmatpush1.msra.mxu0 0.0
        %4993 = vmatprep.subr.mxu0 0.0
        %4994 = vmatpush1.msra.mxu0 0.0
        %4995 = vmatprep.subr.mxu0 0.0
        %4996 = vmatpush1.msra.mxu0 0.0
        %4997 = vmatprep.subr.mxu0 0.0
        %4998 = vmatpush1.msra.mxu0 0.0
        %4999 = vmatprep.subr.mxu0 0.0
        %5000 = vmatpush1.msra.mxu0 0.0
        %5001 = vmatprep.subr.mxu0 0.0
        %5002 = vmatpush1.msra.mxu0 0.0
        %5003 = vmatprep.subr.mxu0 0.0
        %5004 = vmatpush1.msra.mxu0 0.0
        %5005 = vmatprep.subr.mxu0 0.0
        %5006 = vmatpush1.msra.mxu0 0.0
        %5007 = vmatprep.subr.mxu0 0.0
        %5008 = vmatpush1.msra.mxu0 0.0
        %5009 = vmatprep.subr.mxu0 0.0
        %5010 = vmatpush1.msra.mxu0 0.0
        %5011 = vmatprep.subr.mxu0 0.0
        %5012 = vmatpush1.msra.mxu0 0.0
        %5013 = vmatprep.subr.mxu0 0.0
        %5014 = vmatpush1.msra.mxu0 0.0
        %5015 = vmatprep.subr.mxu0 0.0
        %5016 = vmatpush1.msra.mxu0 0.0
        %5017 = vmatprep.subr.mxu0 0.0
        %5018 = vmatpush1.msra.mxu0 0.0
        %5019 = vmatprep.subr.mxu0 0.0
        %5020 = vmatpush1.msra.mxu0 0.0
        %5021 = vmatprep.subr.mxu0 0.0
        %5022 = vmatpush1.msra.mxu0 0.0
        %5023 = vmatprep.mubr.f32.mxu0 0.0
        %5024 = vmatmul.mubr.f32.gmra.mrb[0].mxu0 %v4957
        %v5025 = vpop.f32.mrb[0].mxu0
        %v5026 = vadd.f32 %v4954, %v5025
        %v5027 = vpop.f32.mrb[0].mxu0
        %5028 = vdwg.mxu0
        %v5029 = vmax.f32 %v5026, 0.0
        %v5030 = vld [vmem:[#allocation5] sm:$0xff]
        %v5031 = vld [vmem:[#allocation5 + $0x8] sm:$0xff]
        %v5032 = vld [vmem:[%s590] sm:$0xff]
        %v5033 = vld [vmem:[%s590 + $0x8] sm:$0xff]
        %v5035 = vsel %vm593, %v4867, 0
        %5037 = vmatprep.subr.mxu0 0.0
        %5038 = vmatpush1.msra.mxu0 %v5032
        %5039 = vmatprep.subr.mxu0 0.0
        %5040 = vmatpush1.msra.mxu0 %v5033
        %5041 = vmatprep.subr.mxu0 0.0
        %5042 = vmatpush1.msra.mxu0 0.0
        %5043 = vmatprep.subr.mxu0 0.0
        %5044 = vmatpush1.msra.mxu0 0.0
        %5045 = vmatprep.subr.mxu0 0.0
        %5046 = vmatpush1.msra.mxu0 0.0
        %5047 = vmatprep.subr.mxu0 0.0
        %5048 = vmatpush1.msra.mxu0 0.0
        %5049 = vmatprep.subr.mxu0 0.0
        %5050 = vmatpush1.msra.mxu0 0.0
        %5051 = vmatprep.subr.mxu0 0.0
        %5052 = vmatpush1.msra.mxu0 0.0
        %5053 = vmatprep.subr.mxu0 0.0
        %5054 = vmatpush1.msra.mxu0 0.0
        %5055 = vmatprep.subr.mxu0 0.0
        %5056 = vmatpush1.msra.mxu0 0.0
        %5057 = vmatprep.subr.mxu0 0.0
        %5058 = vmatpush1.msra.mxu0 0.0
        %5059 = vmatprep.subr.mxu0 0.0
        %5060 = vmatpush1.msra.mxu0 0.0
        %5061 = vmatprep.subr.mxu0 0.0
        %5062 = vmatpush1.msra.mxu0 0.0
        %5063 = vmatprep.subr.mxu0 0.0
        %5064 = vmatpush1.msra.mxu0 0.0
        %5065 = vmatprep.subr.mxu0 0.0
        %5066 = vmatpush1.msra.mxu0 0.0
        %5067 = vmatprep.subr.mxu0 0.0
        %5068 = vmatpush1.msra.mxu0 0.0
        %5069 = vmatprep.subr.mxu0 0.0
        %5070 = vmatpush1.msra.mxu0 0.0
        %5071 = vmatprep.subr.mxu0 0.0
        %5072 = vmatpush1.msra.mxu0 0.0
        %5073 = vmatprep.subr.mxu0 0.0
        %5074 = vmatpush1.msra.mxu0 0.0
        %5075 = vmatprep.subr.mxu0 0.0
        %5076 = vmatpush1.msra.mxu0 0.0
        %5077 = vmatprep.subr.mxu0 0.0
        %5078 = vmatpush1.msra.mxu0 0.0
        %5079 = vmatprep.subr.mxu0 0.0
        %5080 = vmatpush1.msra.mxu0 0.0
        %5081 = vmatprep.subr.mxu0 0.0
        %5082 = vmatpush1.msra.mxu0 0.0
        %5083 = vmatprep.subr.mxu0 0.0
        %5084 = vmatpush1.msra.mxu0 0.0
        %5085 = vmatprep.subr.mxu0 0.0
        %5086 = vmatpush1.msra.mxu0 0.0
        %5087 = vmatprep.subr.mxu0 0.0
        %5088 = vmatpush1.msra.mxu0 0.0
        %5089 = vmatprep.subr.mxu0 0.0
        %5090 = vmatpush1.msra.mxu0 0.0
        %5091 = vmatprep.subr.mxu0 0.0
        %5092 = vmatpush1.msra.mxu0 0.0
        %5093 = vmatprep.subr.mxu0 0.0
        %5094 = vmatpush1.msra.mxu0 0.0
        %5095 = vmatprep.subr.mxu0 0.0
        %5096 = vmatpush1.msra.mxu0 0.0
        %5097 = vmatprep.subr.mxu0 0.0
        %5098 = vmatpush1.msra.mxu0 0.0
        %5099 = vmatprep.subr.mxu0 0.0
        %5100 = vmatpush1.msra.mxu0 0.0
        %5101 = vmatprep.mubr.f32.mxu0 0.0
        %5102 = vmatmul.mubr.f32.gmra.mrb[0].mxu0 %v5035
        %v5103 = vpop.f32.mrb[0].mxu0
        %v5104 = vadd.f32 0.0, %v5103
        %v5105 = vpop.f32.mrb[0].mxu0
        %5106 = vdwg.mxu0
        %v5108 = vsel %vm593, %v4786, 0
        %5110 = vmatprep.subr.mxu0 0.0
        %5111 = vmatpush1.msra.mxu0 %v5030
        %5112 = vmatprep.subr.mxu0 0.0
        %5113 = vmatpush1.msra.mxu0 %v5031
        %5114 = vmatprep.subr.mxu0 0.0
        %5115 = vmatpush1.msra.mxu0 0.0
        %5116 = vmatprep.subr.mxu0 0.0
        %5117 = vmatpush1.msra.mxu0 0.0
        %5118 = vmatprep.subr.mxu0 0.0
        %5119 = vmatpush1.msra.mxu0 0.0
        %5120 = vmatprep.subr.mxu0 0.0
        %5121 = vmatpush1.msra.mxu0 0.0
        %5122 = vmatprep.subr.mxu0 0.0
        %5123 = vmatpush1.msra.mxu0 0.0
        %5124 = vmatprep.subr.mxu0 0.0
        %5125 = vmatpush1.msra.mxu0 0.0
        %5126 = vmatprep.subr.mxu0 0.0
        %5127 = vmatpush1.msra.mxu0 0.0
        %5128 = vmatprep.subr.mxu0 0.0
        %5129 = vmatpush1.msra.mxu0 0.0
        %5130 = vmatprep.subr.mxu0 0.0
        %5131 = vmatpush1.msra.mxu0 0.0
        %5132 = vmatprep.subr.mxu0 0.0
        %5133 = vmatpush1.msra.mxu0 0.0
        %5134 = vmatprep.subr.mxu0 0.0
        %5135 = vmatpush1.msra.mxu0 0.0
        %5136 = vmatprep.subr.mxu0 0.0
        %5137 = vmatpush1.msra.mxu0 0.0
        %5138 = vmatprep.subr.mxu0 0.0
        %5139 = vmatpush1.msra.mxu0 0.0
        %5140 = vmatprep.subr.mxu0 0.0
        %5141 = vmatpush1.msra.mxu0 0.0
        %5142 = vmatprep.subr.mxu0 0.0
        %5143 = vmatpush1.msra.mxu0 0.0
        %5144 = vmatprep.subr.mxu0 0.0
        %5145 = vmatpush1.msra.mxu0 0.0
        %5146 = vmatprep.subr.mxu0 0.0
        %5147 = vmatpush1.msra.mxu0 0.0
        %5148 = vmatprep.subr.mxu0 0.0
        %5149 = vmatpush1.msra.mxu0 0.0
        %5150 = vmatprep.subr.mxu0 0.0
        %5151 = vmatpush1.msra.mxu0 0.0
        %5152 = vmatprep.subr.mxu0 0.0
        %5153 = vmatpush1.msra.mxu0 0.0
        %5154 = vmatprep.subr.mxu0 0.0
        %5155 = vmatpush1.msra.mxu0 0.0
        %5156 = vmatprep.subr.mxu0 0.0
        %5157 = vmatpush1.msra.mxu0 0.0
        %5158 = vmatprep.subr.mxu0 0.0
        %5159 = vmatpush1.msra.mxu0 0.0
        %5160 = vmatprep.subr.mxu0 0.0
        %5161 = vmatpush1.msra.mxu0 0.0
        %5162 = vmatprep.subr.mxu0 0.0
        %5163 = vmatpush1.msra.mxu0 0.0
        %5164 = vmatprep.subr.mxu0 0.0
        %5165 = vmatpush1.msra.mxu0 0.0
        %5166 = vmatprep.subr.mxu0 0.0
        %5167 = vmatpush1.msra.mxu0 0.0
        %5168 = vmatprep.subr.mxu0 0.0
        %5169 = vmatpush1.msra.mxu0 0.0
        %5170 = vmatprep.subr.mxu0 0.0
        %5171 = vmatpush1.msra.mxu0 0.0
        %5172 = vmatprep.subr.mxu0 0.0
        %5173 = vmatpush1.msra.mxu0 0.0
        %5174 = vmatprep.mubr.f32.mxu0 0.0
        %5175 = vmatmul.mubr.f32.gmra.mrb[0].mxu0 %v5108
        %v5176 = vpop.f32.mrb[0].mxu0
        %v5177 = vadd.f32 %v5104, %v5176
        %v5178 = vpop.f32.mrb[0].mxu0
        %5179 = vdwg.mxu0
        %v5181 = vsel %vm593, %v5029, 0
        %5183 = vmatprep.subr.mxu0 0.0
        %5184 = vmatpush1.msra.mxu0 %v5032
        %5185 = vmatprep.subr.mxu0 0.0
        %5186 = vmatpush1.msra.mxu0 %v5033
        %5187 = vmatprep.subr.mxu0 0.0
        %5188 = vmatpush1.msra.mxu0 0.0
        %5189 = vmatprep.subr.mxu0 0.0
        %5190 = vmatpush1.msra.mxu0 0.0
        %5191 = vmatprep.subr.mxu0 0.0
        %5192 = vmatpush1.msra.mxu0 0.0
        %5193 = vmatprep.subr.mxu0 0.0
        %5194 = vmatpush1.msra.mxu0 0.0
        %5195 = vmatprep.subr.mxu0 0.0
        %5196 = vmatpush1.msra.mxu0 0.0
        %5197 = vmatprep.subr.mxu0 0.0
        %5198 = vmatpush1.msra.mxu0 0.0
        %5199 = vmatprep.subr.mxu0 0.0
        %5200 = vmatpush1.msra.mxu0 0.0
        %5201 = vmatprep.subr.mxu0 0.0
        %5202 = vmatpush1.msra.mxu0 0.0
        %5203 = vmatprep.subr.mxu0 0.0
        %5204 = vmatpush1.msra.mxu0 0.0
        %5205 = vmatprep.subr.mxu0 0.0
        %5206 = vmatpush1.msra.mxu0 0.0
        %5207 = vmatprep.subr.mxu0 0.0
        %5208 = vmatpush1.msra.mxu0 0.0
        %5209 = vmatprep.subr.mxu0 0.0
        %5210 = vmatpush1.msra.mxu0 0.0
        %5211 = vmatprep.subr.mxu0 0.0
        %5212 = vmatpush1.msra.mxu0 0.0
        %5213 = vmatprep.subr.mxu0 0.0
        %5214 = vmatpush1.msra.mxu0 0.0
        %5215 = vmatprep.subr.mxu0 0.0
        %5216 = vmatpush1.msra.mxu0 0.0
        %5217 = vmatprep.subr.mxu0 0.0
        %5218 = vmatpush1.msra.mxu0 0.0
        %5219 = vmatprep.subr.mxu0 0.0
        %5220 = vmatpush1.msra.mxu0 0.0
        %5221 = vmatprep.subr.mxu0 0.0
        %5222 = vmatpush1.msra.mxu0 0.0
        %5223 = vmatprep.subr.mxu0 0.0
        %5224 = vmatpush1.msra.mxu0 0.0
        %5225 = vmatprep.subr.mxu0 0.0
        %5226 = vmatpush1.msra.mxu0 0.0
        %5227 = vmatprep.subr.mxu0 0.0
        %5228 = vmatpush1.msra.mxu0 0.0
        %5229 = vmatprep.subr.mxu0 0.0
        %5230 = vmatpush1.msra.mxu0 0.0
        %5231 = vmatprep.subr.mxu0 0.0
        %5232 = vmatpush1.msra.mxu0 0.0
        %5233 = vmatprep.subr.mxu0 0.0
        %5234 = vmatpush1.msra.mxu0 0.0
        %5235 = vmatprep.subr.mxu0 0.0
        %5236 = vmatpush1.msra.mxu0 0.0
        %5237 = vmatprep.subr.mxu0 0.0
        %5238 = vmatpush1.msra.mxu0 0.0
        %5239 = vmatprep.subr.mxu0 0.0
        %5240 = vmatpush1.msra.mxu0 0.0
        %5241 = vmatprep.subr.mxu0 0.0
        %5242 = vmatpush1.msra.mxu0 0.0
        %5243 = vmatprep.subr.mxu0 0.0
        %5244 = vmatpush1.msra.mxu0 0.0
        %5245 = vmatprep.subr.mxu0 0.0
        %5246 = vmatpush1.msra.mxu0 0.0
        %5247 = vmatprep.mubr.f32.mxu0 0.0
        %5248 = vmatmul.mubr.f32.gmra.mrb[0].mxu0 %v5181
        %v5249 = vpop.f32.mrb[0].mxu0
        %v5250 = vadd.f32 0.0, %v5249
        %v5251 = vpop.f32.mrb[0].mxu0
        %5252 = vdwg.mxu0
        %v5254 = vsel %vm593, %v4948, 0
        %5256 = vmatprep.subr.mxu0 0.0
        %5257 = vmatpush1.msra.mxu0 %v5030
        %5258 = vmatprep.subr.mxu0 0.0
        %5259 = vmatpush1.msra.mxu0 %v5031
        %5260 = vmatprep.subr.mxu0 0.0
        %5261 = vmatpush1.msra.mxu0 0.0
        %5262 = vmatprep.subr.mxu0 0.0
        %5263 = vmatpush1.msra.mxu0 0.0
        %5264 = vmatprep.subr.mxu0 0.0
        %5265 = vmatpush1.msra.mxu0 0.0
        %5266 = vmatprep.subr.mxu0 0.0
        %5267 = vmatpush1.msra.mxu0 0.0
        %5268 = vmatprep.subr.mxu0 0.0
        %5269 = vmatpush1.msra.mxu0 0.0
        %5270 = vmatprep.subr.mxu0 0.0
        %5271 = vmatpush1.msra.mxu0 0.0
        %5272 = vmatprep.subr.mxu0 0.0
        %5273 = vmatpush1.msra.mxu0 0.0
        %5274 = vmatprep.subr.mxu0 0.0
        %5275 = vmatpush1.msra.mxu0 0.0
        %5276 = vmatprep.subr.mxu0 0.0
        %5277 = vmatpush1.msra.mxu0 0.0
        %5278 = vmatprep.subr.mxu0 0.0
        %5279 = vmatpush1.msra.mxu0 0.0
        %5280 = vmatprep.subr.mxu0 0.0
        %5281 = vmatpush1.msra.mxu0 0.0
        %5282 = vmatprep.subr.mxu0 0.0
        %5283 = vmatpush1.msra.mxu0 0.0
        %5284 = vmatprep.subr.mxu0 0.0
        %5285 = vmatpush1.msra.mxu0 0.0
        %5286 = vmatprep.subr.mxu0 0.0
        %5287 = vmatpush1.msra.mxu0 0.0
        %5288 = vmatprep.subr.mxu0 0.0
        %5289 = vmatpush1.msra.mxu0 0.0
        %5290 = vmatprep.subr.mxu0 0.0
        %5291 = vmatpush1.msra.mxu0 0.0
        %5292 = vmatprep.subr.mxu0 0.0
        %5293 = vmatpush1.msra.mxu0 0.0
        %5294 = vmatprep.subr.mxu0 0.0
        %5295 = vmatpush1.msra.mxu0 0.0
        %5296 = vmatprep.subr.mxu0 0.0
        %5297 = vmatpush1.msra.mxu0 0.0
        %5298 = vmatprep.subr.mxu0 0.0
        %5299 = vmatpush1.msra.mxu0 0.0
        %5300 = vmatprep.subr.mxu0 0.0
        %5301 = vmatpush1.msra.mxu0 0.0
        %5302 = vmatprep.subr.mxu0 0.0
        %5303 = vmatpush1.msra.mxu0 0.0
        %5304 = vmatprep.subr.mxu0 0.0
        %5305 = vmatpush1.msra.mxu0 0.0
        %5306 = vmatprep.subr.mxu0 0.0
        %5307 = vmatpush1.msra.mxu0 0.0
        %5308 = vmatprep.subr.mxu0 0.0
        %5309 = vmatpush1.msra.mxu0 0.0
        %5310 = vmatprep.subr.mxu0 0.0
        %5311 = vmatpush1.msra.mxu0 0.0
        %5312 = vmatprep.subr.mxu0 0.0
        %5313 = vmatpush1.msra.mxu0 0.0
        %5314 = vmatprep.subr.mxu0 0.0
        %5315 = vmatpush1.msra.mxu0 0.0
        %5316 = vmatprep.subr.mxu0 0.0
        %5317 = vmatpush1.msra.mxu0 0.0
        %5318 = vmatprep.subr.mxu0 0.0
        %5319 = vmatpush1.msra.mxu0 0.0
        %5320 = vmatprep.mubr.f32.mxu0 0.0
        %5321 = vmatmul.mubr.f32.gmra.mrb[0].mxu0 %v5254
        %v5322 = vpop.f32.mrb[0].mxu0
        %v5323 = vadd.f32 %v5250, %v5322
        %v5324 = vpop.f32.mrb[0].mxu0
        %5325 = vdwg.mxu0
        %5327 = vrot.lane.b32.xlu0 %v5177, 64
        %v5328 = vpop.permute.xlu0 %5327
        %5330 = vst.msk [vmem:[%s242 + $0xc] sm:$0xf] %vm1524, %v5328
        %5332 = vrot.lane.b32.xlu0 %v5323, 96
        %v5333 = vpop.permute.xlu0 %5332
        %5335 = vst.msk [vmem:[%s242 + $0xc] sm:$0xf] %vm1530, %v5333
        %s5336 = sand.u32 %s133, 1
        %s5337 = scalar_lea.sflag [#allocation4], %s5336
        %s5338 = sand.u32 %s133, 1
        %s5339 = smul.addr %s5338, 16
        %s5340 = scalar_lea.vmem [#allocation7], %s5339
        // Predicated region
        $region45: #{tpu_custom_call.1} parent=35 // pred_check
          %p5341 = pneg %p143
        $region46: #{tpu_custom_call.1} parent=35 // pred_check_branch
          %5343 = sbr.rel (%p5341) target = $region48
        $region47: #{tpu_custom_call.1} parent=35 // pred_region
          %s5344 = smul.u32 4, %s25
          %s5346 = ssub.s32 256, 256
          %5347 = vsyncadd %s5337, %s5346
          %s5348 = smul.addr %s24, 8
          %s5349 = sadd.s32 %s5344, %s5348
          %s5350 = smul.addr %s5349, 64
          %s5351 = scalar_lea.hbm %s4, %s5350
          %s5353 = sshll.u32 %s5340, 4
          %s5354 = int_to_ptr.vmem [resolvable:$true] %s5353
          %5356 = dma.vmem_to_hbm [thread:$0]  %s5354, 256, %s5351, %s5337
        $region48: #{tpu_custom_call.1} parent=35 // pred_fallthru
          _
      $region36: #{tpu_custom_call.1} parent=5 // pred_fallthru
        _
      %p5357 = scmp.le.s32.totalorder 2, %s15
      // Predicated region
      $region49: #{tpu_custom_call.1} parent=5 // pred_check
        %p5358 = pneg %p5357
      $region50: #{tpu_custom_call.1} parent=5 // pred_check_branch
        %5360 = sbr.rel (%p5358) target = $region52
      $region51: #{tpu_custom_call.1} parent=5 // pred_region
        %s5361 = ssub.s32 %s15, 2
        // Predicated region
        $region53: #{tpu_custom_call.1} parent=51 // pred_check
          %p5362 = pneg %p149
        $region54: #{tpu_custom_call.1} parent=51 // pred_check_branch
          %5364 = sbr.rel (%p5362) target = $region56
        $region55: #{tpu_custom_call.1} parent=51 // pred_region
          %s5365 = sand.u32 %s134, 1
          %s5366 = scalar_lea.sflag [#allocation4], %s5365
          %s5367 = sand.u32 %s134, 1
          %s5368 = smul.addr %s5367, 16
          %s5369 = scalar_lea.vmem [#allocation7], %s5368
          %5370 = dma.done %s5366, 256
        $region56: #{tpu_custom_call.1} parent=51 // pred_fallthru
          _
      $region52: #{tpu_custom_call.1} parent=5 // pred_fallthru
        _
    $region6: #{tpu_custom_call.1} parent=1 // loop_footer
      %s19 = sadd.s32 1, %s15
    $region7: #{tpu_custom_call.1} parent=1 // loop_footer_branch
      %14 = sbr.rel target = $region3
    $region8: #{tpu_custom_call.1} parent=1 // loop_exit
      _
    %5371 = vsyncpa [#allocation3], 1
    %s5372 = scalar_lea.sflag [#allocation3], 1
    %5373 = vsyncpa %s5372, 1
    %5374 = vsyncpa [#allocation6], 1
    %5375 = vsyncpa [#allocation4], 1
    %s5376 = scalar_lea.sflag [#allocation4], 1
    %5377 = vsyncpa %s5376, 1

</llo_original>
